<compile_context>
chip_gen: v6e
topology: v6e:2x2x1
jax: 0.10.0
libtpu: 0.0.40
codegen_flags: <defaults>
</compile_context>

<pallas_src>
import functools

import jax
import jax.numpy as jnp
from jax.experimental import pallas as pl
from jax.experimental.pallas import tpu as pltpu

VMEM_SPEC = pl.BlockSpec(memory_space=pltpu.MemorySpace.VMEM)


# ----------------------------------------------------------------------------
# Shared GRU cell math (PyTorch semantics; both directions updated at once).
# Lane layout of gi/gh/bias: [r_f r_b | z_f z_b | n_f n_b], each block H wide.
# Hidden state h: (B, 2H) = [h_f | h_b].
# ----------------------------------------------------------------------------
def _bigru_update(gi, gh, h, H):
    r = jax.nn.sigmoid(gi[:, 0:2 * H] + gh[:, 0:2 * H])
    z = jax.nn.sigmoid(gi[:, 2 * H:4 * H] + gh[:, 2 * H:4 * H])
    n = jnp.tanh(gi[:, 4 * H:6 * H] + r * gh[:, 4 * H:6 * H])
    return (1.0 - z) * n + z * h


# ----------------------------------------------------------------------------
# Encoder layer: fused input projection + fwd/bwd recurrence, grid-less.
# ----------------------------------------------------------------------------
def _make_encoder_layer_kernel(T, B, H):
    def kernel(x_ref, wi_ref, bi_ref, wh_ref, bh_ref, out_ref, hn_ref, gi_scr):
        f32 = jnp.float32
        # One fat input-side gate projection for the whole sequence.
        gi_scr[...] = (jnp.dot(x_ref[...], wi_ref[...],
                               preferred_element_type=f32) + bi_ref[...])

        # Hoisted lane mask: True on fwd gate lanes, False on bwd gate lanes.
        lane = jax.lax.broadcasted_iota(jnp.int32, (B, 6 * H), 1)
        fwd_mask = (lane % (2 * H)) < H

        h = jnp.zeros((B, 2 * H), f32)        # [h_f | h_b], torch zero init
        # Static unroll over time (T small & static; == fori_loop(unroll=True)).
        for t in range(T):
            tb = T - 1 - t
            gi_t = gi_scr[t * B:(t + 1) * B, :]      # fwd reads timestep t
            gi_tb = gi_scr[tb * B:(tb + 1) * B, :]   # bwd reads timestep T-1-t
            gi = jnp.where(fwd_mask, gi_t, gi_tb)
            gh = (jnp.dot(h, wh_ref[...], preferred_element_type=f32)
                  + bh_ref[...])                     # ONE dot for both dirs
            h = _bigru_update(gi, gh, h, H)
            out_ref[t, :, 0:H] = h[:, 0:H]           # fwd output at t
            out_ref[tb, :, H:2 * H] = h[:, H:2 * H]  # bwd output at T-1-t

        hn_ref[...] = h                              # final [h_f | h_b]

    return kernel


def encoder_layer(x_seq, p, hidden_dim):
    """x_seq: (T, B, In) -> (out (T, B, 2H), h_n (B, 2H))."""
    T, B, In = x_seq.shape
    H = hidden_dim
    x_flat = x_seq.reshape(T * B, In)                # plain-JAX glue reshape
    out, hn = pl.pallas_call(
        _make_encoder_layer_kernel(T, B, H),
        out_shape=(jax.ShapeDtypeStruct((T, B, 2 * H), jnp.float32),
                   jax.ShapeDtypeStruct((B, 2 * H), jnp.float32)),
        in_specs=[VMEM_SPEC] * 5,
        out_specs=(VMEM_SPEC, VMEM_SPEC),
        scratch_shapes=[pltpu.VMEM((T * B, 6 * H), jnp.float32)],
    )(x_flat, p['wi'], p['bi'], p['wh'], p['bh'])
    return out, hn


# ----------------------------------------------------------------------------
# Decoder: whole greedy decode loop + fused relu(l1)->l2 head, grid-less.
# ----------------------------------------------------------------------------
def _make_decoder_kernel(T, B, S, H, O, L):
    n_fixed = 13

    def kernel(*refs):
        f32 = jnp.float32
        (emb_ref, hs_ref, st0_ref, wat_ref, wcc_ref, wct_ref, ba_ref,
         wo_ref, bo_ref, wl1_ref, bl1_ref, wl2_ref, bl2_ref) = refs[:n_fixed]
        layer_refs = [refs[n_fixed + 4 * l: n_fixed + 4 * (l + 1)]
                      for l in range(L)]
        out_ref = refs[n_fixed + 4 * L]
        flat_scr = refs[n_fixed + 4 * L + 1]          # (B, T*O) head input

        # Hoisted constants.
        col = jax.lax.broadcasted_iota(jnp.int32, (B, O), 1)
        hs = hs_ref[...]                              # (B, S, 2H), resident

        states = [st0_ref[l] for l in range(L)]       # (B, 2H) per layer
        onehot = (col == 0).astype(f32)               # start token id 0

        # Static unroll over decode steps (== fori_loop(unroll=True)).
        for d in range(T):
            # Embedding lookup as one-hot @ table (fine at O=12; see TODO).
            x_in = jnp.dot(onehot, emb_ref[...], preferred_element_type=f32)

            # Multi-layer bidirectional GRU over the single decode timestep.
            for l in range(L):
                wi_ref, bi_ref, wh_ref, bh_ref = layer_refs[l]
                h = states[l]
                gi = (jnp.dot(x_in, wi_ref[...], preferred_element_type=f32)
                      + bi_ref[...])
                gh = (jnp.dot(h, wh_ref[...], preferred_element_type=f32)
                      + bh_ref[...])                  # ONE dot for both dirs
                h = _bigru_update(gi, gh, h, H)
                states[l] = h
                x_in = h                              # already [h_f | h_b]

            ht = x_in                                 # (B, 2H)

            # Luong attention (VPU/XLU, no tiny batched MXU dots).
            u = jnp.dot(ht, wat_ref[...], preferred_element_type=f32)  # (B,2H)
            score = jnp.sum(u[:, None, :] * hs, axis=-1)               # (B, S)
            score = score - jnp.max(score, axis=-1, keepdims=True)
            e = jnp.exp(score)
            a = e / jnp.sum(e, axis=-1, keepdims=True)                 # exact
            c = jnp.sum(a[:, :, None] * hs, axis=1)                    # (B,2H)
            attn = jnp.tanh(
                jnp.dot(c, wcc_ref[...], preferred_element_type=f32)
                + jnp.dot(ht, wct_ref[...], preferred_element_type=f32)
                + ba_ref[...])                                         # (B,4H)
            out_d = (jnp.dot(attn, wo_ref[...], preferred_element_type=f32)
                     + bo_ref[...])                                    # (B, O)

            # Scatter this step's logits directly into torch's raw
            # (T,B,O) -> (B, T*O) reshape layout (static offsets).
            for b2 in range(B):
                g = d * B + b2
                row, k = divmod(g, T)
                flat_scr[row:row + 1, k * O:(k + 1) * O] = out_d[b2:b2 + 1, :]

            # Greedy next token (first argmax), fed back as one-hot.
            m = jnp.max(out_d, axis=-1, keepdims=True)
            idx = jnp.min(jnp.where(out_d == m, col, O), axis=-1,
                          keepdims=True)
            onehot = (col == idx).astype(f32)

        # Fused MLP head: relu(l1(flat)) -> l2, all on VMEM-resident data.
        flat = flat_scr[...]                                           # (B,T*O)
        h1 = (jnp.dot(flat, wl1_ref[...], preferred_element_type=f32)
              + bl1_ref[...])
        h1 = jnp.maximum(h1, 0.0)
        out_ref[...] = (jnp.dot(h1, wl2_ref[...], preferred_element_type=f32)
                        + bl2_ref[...])

    return kernel


def run_decoder(params, hs_b, st0, *, hidden_dim, output_dim, max_length):
    B, S, _ = hs_b.shape
    H, O, T = hidden_dim, output_dim, max_length
    L = len(params['gru_dec'])

    inputs = [params['emb_dec'], hs_b, st0, params['wa_t'], params['wc_c'],
              params['wc_t'], params['b_attn'], params['w_out'],
              params['b_out'], params['w_l1'], params['b_l1'],
              params['w_l2'], params['b_l2']]
    for p in params['gru_dec']:
        inputs += [p['wi'], p['bi'], p['wh'], p['bh']]

    return pl.pallas_call(
        _make_decoder_kernel(T, B, S, H, O, L),
        out_shape=jax.ShapeDtypeStruct((B, O), jnp.float32),
        in_specs=[VMEM_SPEC] * len(inputs),
        out_specs=VMEM_SPEC,
        scratch_shapes=[pltpu.VMEM((B, T * O), jnp.float32)],
    )(*inputs)


# ----------------------------------------------------------------------------
# Parameter init (deterministic, synthetic) in the kernel's packed layout.
#   wi, bi, bh : gate columns interleaved  [r_f r_b | z_f z_b | n_f n_b]
#   wh         : block-diagonal (2H, 6H); fwd rows feed only fwd gate columns,
#                bwd rows only bwd gate columns (this is what lets one dot
#                serve both directions).
# A real torch GRU's weight_ih/hh_l0{,_reverse} (shape (3H, in), gates r;z;n)
# would map into this layout by transposing and interleaving the gate blocks.
# ----------------------------------------------------------------------------
def init_params(key, input_dim, hidden_dim, output_dim, num_layers,
                max_length, fcl=256):
    H = hidden_dim
    keys = iter(jax.random.split(key, 512))

    def nrm(shape, scale=0.1):
        return (scale * jax.random.normal(next(keys), shape)).astype(jnp.float32)

    def pack_gate_cols(f, b):
        # f, b: (..., 3H) with gate columns [r|z|n] -> (..., 6H) interleaved.
        pieces = []
        for g in range(3):
            pieces.append(f[..., g * H:(g + 1) * H])
            pieces.append(b[..., g * H:(g + 1) * H])
        return jnp.concatenate(pieces, axis=-1)

    def pack_hidden(whf, whb):
        top = pack_gate_cols(whf, jnp.zeros_like(whb))   # h_f rows
        bot = pack_gate_cols(jnp.zeros_like(whf), whb)   # h_b rows
        return jnp.concatenate([top, bot], axis=0)       # (2H, 6H) block-diag

    def gru_layer(in_dim):
        wif, wib = nrm((in_dim, 3 * H)), nrm((in_dim, 3 * H))
        bif, bib = nrm((1, 3 * H)), nrm((1, 3 * H))
        whf, whb = nrm((H, 3 * H)), nrm((H, 3 * H))
        bhf, bhb = nrm((1, 3 * H)), nrm((1, 3 * H))
        return dict(wi=pack_gate_cols(wif, wib), bi=pack_gate_cols(bif, bib),
                    wh=pack_hidden(whf, whb), bh=pack_gate_cols(bhf, bhb))

    def gru_stack():
        return [gru_layer(H if l == 0 else 2 * H) for l in range(num_layers)]

    return dict(
        emb_enc=nrm((input_dim, H), 1.0),
        gru_enc=gru_stack(),
        emb_dec=nrm((output_dim, H), 1.0),
        gru_dec=gru_stack(),
        wa_t=nrm((2 * H, 2 * H)),                       # W_a^T
        # W_c (4H, 4H) split row-wise: first 2H rows act on c, last 2H on ht.
        wc_c=nrm((2 * H, 4 * H)),
        wc_t=nrm((2 * H, 4 * H)),
        b_attn=jnp.zeros((1, 4 * H), jnp.float32),
        w_out=nrm((4 * H, output_dim)),
        b_out=jnp.zeros((1, output_dim), jnp.float32),
        w_l1=nrm((max_length * output_dim, fcl)),
        b_l1=jnp.zeros((1, fcl), jnp.float32),
        w_l2=nrm((fcl, output_dim)),
        b_l2=jnp.zeros((1, output_dim), jnp.float32),
    )


# ----------------------------------------------------------------------------
# EncoderDecoder forward (teacher forcing disabled, matching the default path)
# ----------------------------------------------------------------------------
def encoder_decoder_forward(params, source, *, hidden_dim, output_dim,
                            num_layers, max_length):
    # source: (S, B) int32 token ids (seq-first, like the PyTorch module)
    S, B = source.shape
    H = hidden_dim

    # ---- Encoder ----
    x = jnp.take(params['emb_enc'], source, axis=0)          # (S, B, H)
    layer_in = x
    finals = []
    for p in params['gru_enc']:
        layer_in, hn = encoder_layer(layer_in, p, H)         # (S,B,2H), (B,2H)
        finals.append(hn)
    hs = layer_in
    st0 = jnp.stack(finals, axis=0)                          # (L, B, 2H)
    hs_b = jnp.transpose(hs, (1, 0, 2))                      # (B, S, 2H)

    # ---- Decoder (full greedy loop + MLP head fused in one kernel) ----
    logits = run_decoder(params, hs_b, st0, hidden_dim=H,
                         output_dim=output_dim, max_length=max_length)
    return logits                                            # (B, output_dim)


if __name__ == "__main__":
    input_dim = 20    # source vocab
    hidden_dim = 16
    output_dim = 12   # target vocab / logit dim
    num_layers = 1
    max_length = 8
    batch = 2
    src_len = 6

    key = jax.random.PRNGKey(0)
    k_param, k_src = jax.random.split(key)
    params = init_params(k_param, input_dim, hidden_dim, output_dim,
                         num_layers, max_length)
    source = jax.random.randint(k_src, (src_len, batch), 0, input_dim,
                                dtype=jnp.int32)

    fwd = jax.jit(functools.partial(encoder_decoder_forward,
                                    hidden_dim=hidden_dim,
                                    output_dim=output_dim,
                                    num_layers=num_layers,
                                    max_length=max_length))
    out = fwd(params, source)
    jax.block_until_ready(out)
    assert out.shape == (batch, output_dim)
    assert bool(jnp.all(jnp.isfinite(out)))
    print("KERNEL_OK")
</pallas_src>

<mosaic_0001>
module attributes {stable_mosaic.version = 11 : i64} {
  func.func @kernel(%arg0: memref<12x16xf32, #tpu.memory_space<vmem>>, %arg1: memref<16x96xf32, #tpu.memory_space<vmem>>, %arg2: memref<1x96xf32, #tpu.memory_space<vmem>>, %arg3: memref<32x96xf32, #tpu.memory_space<vmem>>, %arg4: memref<1x96xf32, #tpu.memory_space<vmem>>, %arg5: memref<6x2x32xf32, #tpu.memory_space<vmem>>, %arg6: memref<2x32xf32, #tpu.memory_space<vmem>>, %arg7: memref<12x96xf32, #tpu.memory_space<vmem>>) attributes {dimension_semantics = [], scalar_prefetch = 0 : i64, scratch_operands = 1 : i64, tpu.core_type = #tpu.core_type<tc>} {
    %c0 = arith.constant 0 : index
    %c0_0 = arith.constant 0 : index
    %0 = vector.load %arg0[%c0, %c0_0] : memref<12x16xf32, #tpu.memory_space<vmem>>, vector<12x16xf32>
    %c0_1 = arith.constant 0 : index
    %c0_2 = arith.constant 0 : index
    %1 = vector.load %arg1[%c0_1, %c0_2] : memref<16x96xf32, #tpu.memory_space<vmem>>, vector<16x96xf32>
    %cst = arith.constant dense<0.000000e+00> : vector<12x96xf32>
    %2 = tpu.matmul %0, %1, %cst {dimension_numbers = #tpu.dot_dimension_numbers<[1], [0], [0], [1], [0, 0, 1, 1], [], []>} : vector<12x16xf32>, vector<16x96xf32>, vector<12x96xf32> -> vector<12x96xf32>
    %c0_3 = arith.constant 0 : index
    %c0_4 = arith.constant 0 : index
    %3 = vector.load %arg2[%c0_3, %c0_4] : memref<1x96xf32, #tpu.memory_space<vmem>>, vector<1x96xf32>
    %4 = vector.broadcast %3 : vector<1x96xf32> to vector<12x96xf32>
    %5 = arith.addf %2, %4 : vector<12x96xf32>
    %c0_5 = arith.constant 0 : index
    %c0_6 = arith.constant 0 : index
    %6 = vector.load %arg7[%c0_5, %c0_6] : memref<12x96xf32, #tpu.memory_space<vmem>>, vector<12x96xf32>
    tpu.vector_store %arg7[%c0_5, %c0_6], %5 {strides = array<i32>} : memref<12x96xf32, #tpu.memory_space<vmem>>, vector<12x96xf32>,
    %7 = tpu.iota {dimensions = array<i32: 1>} : vector<2x96xi32>
    %c32_i32 = arith.constant 32 : i32
    %c0_i32 = arith.constant 0 : i32
    %8 = arith.cmpi eq, %c32_i32, %c0_i32 : i32
    %c1_i32 = arith.constant 1 : i32
    %9 = arith.select %8, %c1_i32, %c32_i32 : i32
    %10 = vector.broadcast %9 : i32 to vector<2x96xi32>
    %11 = arith.remsi %7, %10 : vector<2x96xi32>
    %c0_i32_7 = arith.constant 0 : i32
    %12 = vector.broadcast %c0_i32_7 : i32 to vector<2x96xi32>
    %13 = arith.cmpi ne, %11, %12 : vector<2x96xi32>
    %c0_i32_8 = arith.constant 0 : i32
    %14 = vector.broadcast %c0_i32_8 : i32 to vector<2x96xi32>
    %15 = arith.cmpi slt, %11, %14 : vector<2x96xi32>
    %c0_i32_9 = arith.constant 0 : i32
    %16 = arith.cmpi slt, %9, %c0_i32_9 : i32
    %17 = vector.broadcast %16 : i1 to vector<2x96xi1>
    %18 = vector.broadcast %17 : vector<2x96xi1> to vector<2x96xi1>
    %19 = arith.xori %15, %18 : vector<2x96xi1>
    %20 = arith.andi %19, %13 : vector<2x96xi1>
    %21 = vector.broadcast %9 : i32 to vector<2x96xi32>
    %22 = arith.addi %11, %21 : vector<2x96xi32>
    %23 = arith.select %20, %22, %11 : vector<2x96xi1>, vector<2x96xi32>
    %c16_i32 = arith.constant 16 : i32
    %24 = vector.broadcast %c16_i32 : i32 to vector<2x96xi32>
    %25 = arith.cmpi slt, %23, %24 : vector<2x96xi32>
    %cst_10 = arith.constant 0.000000e+00 : f32
    %26 = vector.broadcast %cst_10 : f32 to vector<2x32xf32>
    %c0_11 = arith.constant 0 : index
    %c0_12 = arith.constant 0 : index
    %27 = vector.load %arg7[%c0_11, %c0_12] : memref<12x96xf32, #tpu.memory_space<vmem>>, vector<2x96xf32>
    %c10 = arith.constant 10 : index
    %c0_13 = arith.constant 0 : index
    %28 = vector.load %arg7[%c10, %c0_13] : memref<12x96xf32, #tpu.memory_space<vmem>>, vector<2x96xf32>
    %29 = arith.select %25, %27, %28 : vector<2x96xi1>, vector<2x96xf32>
    %c0_14 = arith.constant 0 : index
    %c0_15 = arith.constant 0 : index
    %30 = vector.load %arg3[%c0_14, %c0_15] : memref<32x96xf32, #tpu.memory_space<vmem>>, vector<32x96xf32>
    %cst_16 = arith.constant dense<0.000000e+00> : vector<2x96xf32>
    %31 = tpu.matmul %26, %30, %cst_16 {dimension_numbers = #tpu.dot_dimension_numbers<[1], [0], [0], [1], [0, 0, 1, 1], [], []>} : vector<2x32xf32>, vector<32x96xf32>, vector<2x96xf32> -> vector<2x96xf32>
    %c0_17 = arith.constant 0 : index
    %c0_18 = arith.constant 0 : index
    %32 = vector.load %arg4[%c0_17, %c0_18] : memref<1x96xf32, #tpu.memory_space<vmem>>, vector<1x96xf32>
    %33 = vector.broadcast %32 : vector<1x96xf32> to vector<2x96xf32>
    %34 = arith.addf %31, %33 : vector<2x96xf32>
    %35 = vector.extract_strided_slice %29 {offsets = [0, 0], sizes = [2, 32], strides = [1, 1]} : vector<2x96xf32> to vector<2x32xf32>
    %36 = vector.extract_strided_slice %34 {offsets = [0, 0], sizes = [2, 32], strides = [1, 1]} : vector<2x96xf32> to vector<2x32xf32>
    %37 = arith.addf %35, %36 : vector<2x32xf32>
    %38 = arith.negf %37 : vector<2x32xf32>
    %39 = math.exp %38 : vector<2x32xf32>
    %cst_19 = arith.constant 1.000000e+00 : f32
    %40 = vector.broadcast %cst_19 : f32 to vector<2x32xf32>
    %41 = arith.addf %40, %39 : vector<2x32xf32>
    %42 = arith.divf %40, %41 : vector<2x32xf32>
    %43 = vector.extract_strided_slice %29 {offsets = [0, 32], sizes = [2, 32], strides = [1, 1]} : vector<2x96xf32> to vector<2x32xf32>
    %44 = vector.extract_strided_slice %34 {offsets = [0, 32], sizes = [2, 32], strides = [1, 1]} : vector<2x96xf32> to vector<2x32xf32>
    %45 = arith.addf %43, %44 : vector<2x32xf32>
    %46 = arith.negf %45 : vector<2x32xf32>
    %47 = math.exp %46 : vector<2x32xf32>
    %cst_20 = arith.constant 1.000000e+00 : f32
    %48 = vector.broadcast %cst_20 : f32 to vector<2x32xf32>
    %49 = arith.addf %48, %47 : vector<2x32xf32>
    %50 = arith.divf %48, %49 : vector<2x32xf32>
    %51 = vector.extract_strided_slice %29 {offsets = [0, 64], sizes = [2, 32], strides = [1, 1]} : vector<2x96xf32> to vector<2x32xf32>
    %52 = vector.extract_strided_slice %34 {offsets = [0, 64], sizes = [2, 32], strides = [1, 1]} : vector<2x96xf32> to vector<2x32xf32>
    %53 = arith.mulf %42, %52 : vector<2x32xf32>
    %54 = arith.addf %51, %53 : vector<2x32xf32>
    %55 = math.tanh %54 : vector<2x32xf32>
    %cst_21 = arith.constant 1.000000e+00 : f32
    %56 = vector.broadcast %cst_21 : f32 to vector<2x32xf32>
    %57 = arith.subf %56, %50 : vector<2x32xf32>
    %58 = arith.mulf %57, %55 : vector<2x32xf32>
    %59 = arith.mulf %50, %26 : vector<2x32xf32>
    %60 = arith.addf %58, %59 : vector<2x32xf32>
    %61 = vector.extract_strided_slice %60 {offsets = [0, 0], sizes = [2, 16], strides = [1, 1]} : vector<2x32xf32> to vector<2x16xf32>
    %c0_22 = arith.constant 0 : index
    %c0_23 = arith.constant 0 : index
    %c0_24 = arith.constant 0 : index
    %62 = vector.load %arg5[%c0_22, %c0_23, %c0_24] : memref<6x2x32xf32, #tpu.memory_space<vmem>>, vector<1x2x16xf32>
    %63 = vector.shape_cast %62 : vector<1x2x16xf32> to vector<2x16xf32>
    %64 = vector.shape_cast %61 : vector<2x16xf32> to vector<1x2x16xf32>
    tpu.vector_store %arg5[%c0_22, %c0_23, %c0_24], %64 {strides = array<i32>} : memref<6x2x32xf32, #tpu.memory_space<vmem>>, vector<1x2x16xf32>,
    %65 = vector.extract_strided_slice %60 {offsets = [0, 16], sizes = [2, 16], strides = [1, 1]} : vector<2x32xf32> to vector<2x16xf32>
    %c5 = arith.constant 5 : index
    %c0_25 = arith.constant 0 : index
    %c16 = arith.constant 16 : index
    %66 = vector.load %arg5[%c5, %c0_25, %c16] : memref<6x2x32xf32, #tpu.memory_space<vmem>>, vector<1x2x16xf32>
    %67 = vector.shape_cast %66 : vector<1x2x16xf32> to vector<2x16xf32>
    %68 = vector.shape_cast %65 : vector<2x16xf32> to vector<1x2x16xf32>
    tpu.vector_store %arg5[%c5, %c0_25, %c16], %68 {strides = array<i32>} : memref<6x2x32xf32, #tpu.memory_space<vmem>>, vector<1x2x16xf32>,
    %c2 = arith.constant 2 : index
    %c0_26 = arith.constant 0 : index
    %69 = vector.load %arg7[%c2, %c0_26] : memref<12x96xf32, #tpu.memory_space<vmem>>, vector<2x96xf32>
    %c8 = arith.constant 8 : index
    %c0_27 = arith.constant 0 : index
    %70 = vector.load %arg7[%c8, %c0_27] : memref<12x96xf32, #tpu.memory_space<vmem>>, vector<2x96xf32>
    %71 = arith.select %25, %69, %70 : vector<2x96xi1>, vector<2x96xf32>
    %c0_28 = arith.constant 0 : index
    %c0_29 = arith.constant 0 : index
    %72 = vector.load %arg3[%c0_28, %c0_29] : memref<32x96xf32, #tpu.memory_space<vmem>>, vector<32x96xf32>
    %cst_30 = arith.constant dense<0.000000e+00> : vector<2x96xf32>
    %73 = tpu.matmul %60, %72, %cst_30 {dimension_numbers = #tpu.dot_dimension_numbers<[1], [0], [0], [1], [0, 0, 1, 1], [], []>} : vector<2x32xf32>, vector<32x96xf32>, vector<2x96xf32> -> vector<2x96xf32>
    %c0_31 = arith.constant 0 : index
    %c0_32 = arith.constant 0 : index
    %74 = vector.load %arg4[%c0_31, %c0_32] : memref<1x96xf32, #tpu.memory_space<vmem>>, vector<1x96xf32>
    %75 = vector.broadcast %74 : vector<1x96xf32> to vector<2x96xf32>
    %76 = arith.addf %73, %75 : vector<2x96xf32>
    %77 = vector.extract_strided_slice %71 {offsets = [0, 0], sizes = [2, 32], strides = [1, 1]} : vector<2x96xf32> to vector<2x32xf32>
    %78 = vector.extract_strided_slice %76 {offsets = [0, 0], sizes = [2, 32], strides = [1, 1]} : vector<2x96xf32> to vector<2x32xf32>
    %79 = arith.addf %77, %78 : vector<2x32xf32>
    %80 = arith.negf %79 : vector<2x32xf32>
    %81 = math.exp %80 : vector<2x32xf32>
    %cst_33 = arith.constant 1.000000e+00 : f32
    %82 = vector.broadcast %cst_33 : f32 to vector<2x32xf32>
    %83 = arith.addf %82, %81 : vector<2x32xf32>
    %84 = arith.divf %82, %83 : vector<2x32xf32>
    %85 = vector.extract_strided_slice %71 {offsets = [0, 32], sizes = [2, 32], strides = [1, 1]} : vector<2x96xf32> to vector<2x32xf32>
    %86 = vector.extract_strided_slice %76 {offsets = [0, 32], sizes = [2, 32], strides = [1, 1]} : vector<2x96xf32> to vector<2x32xf32>
    %87 = arith.addf %85, %86 : vector<2x32xf32>
    %88 = arith.negf %87 : vector<2x32xf32>
    %89 = math.exp %88 : vector<2x32xf32>
    %cst_34 = arith.constant 1.000000e+00 : f32
    %90 = vector.broadcast %cst_34 : f32 to vector<2x32xf32>
    %91 = arith.addf %90, %89 : vector<2x32xf32>
    %92 = arith.divf %90, %91 : vector<2x32xf32>
    %93 = vector.extract_strided_slice %71 {offsets = [0, 64], sizes = [2, 32], strides = [1, 1]} : vector<2x96xf32> to vector<2x32xf32>
    %94 = vector.extract_strided_slice %76 {offsets = [0, 64], sizes = [2, 32], strides = [1, 1]} : vector<2x96xf32> to vector<2x32xf32>
    %95 = arith.mulf %84, %94 : vector<2x32xf32>
    %96 = arith.addf %93, %95 : vector<2x32xf32>
    %97 = math.tanh %96 : vector<2x32xf32>
    %cst_35 = arith.constant 1.000000e+00 : f32
    %98 = vector.broadcast %cst_35 : f32 to vector<2x32xf32>
    %99 = arith.subf %98, %92 : vector<2x32xf32>
    %100 = arith.mulf %99, %97 : vector<2x32xf32>
    %101 = arith.mulf %92, %60 : vector<2x32xf32>
    %102 = arith.addf %100, %101 : vector<2x32xf32>
    %103 = vector.extract_strided_slice %102 {offsets = [0, 0], sizes = [2, 16], strides = [1, 1]} : vector<2x32xf32> to vector<2x16xf32>
    %c1 = arith.constant 1 : index
    %c0_36 = arith.constant 0 : index
    %c0_37 = arith.constant 0 : index
    %104 = vector.load %arg5[%c1, %c0_36, %c0_37] : memref<6x2x32xf32, #tpu.memory_space<vmem>>, vector<1x2x16xf32>
    %105 = vector.shape_cast %104 : vector<1x2x16xf32> to vector<2x16xf32>
    %106 = vector.shape_cast %103 : vector<2x16xf32> to vector<1x2x16xf32>
    tpu.vector_store %arg5[%c1, %c0_36, %c0_37], %106 {strides = array<i32>} : memref<6x2x32xf32, #tpu.memory_space<vmem>>, vector<1x2x16xf32>,
    %107 = vector.extract_strided_slice %102 {offsets = [0, 16], sizes = [2, 16], strides = [1, 1]} : vector<2x32xf32> to vector<2x16xf32>
    %c4 = arith.constant 4 : index
    %c0_38 = arith.constant 0 : index
    %c16_39 = arith.constant 16 : index
    %108 = vector.load %arg5[%c4, %c0_38, %c16_39] : memref<6x2x32xf32, #tpu.memory_space<vmem>>, vector<1x2x16xf32>
    %109 = vector.shape_cast %108 : vector<1x2x16xf32> to vector<2x16xf32>
    %110 = vector.shape_cast %107 : vector<2x16xf32> to vector<1x2x16xf32>
    tpu.vector_store %arg5[%c4, %c0_38, %c16_39], %110 {strides = array<i32>} : memref<6x2x32xf32, #tpu.memory_space<vmem>>, vector<1x2x16xf32>,
    %c4_40 = arith.constant 4 : index
    %c0_41 = arith.constant 0 : index
    %111 = vector.load %arg7[%c4_40, %c0_41] : memref<12x96xf32, #tpu.memory_space<vmem>>, vector<2x96xf32>
    %c6 = arith.constant 6 : index
    %c0_42 = arith.constant 0 : index
    %112 = vector.load %arg7[%c6, %c0_42] : memref<12x96xf32, #tpu.memory_space<vmem>>, vector<2x96xf32>
    %113 = arith.select %25, %111, %112 : vector<2x96xi1>, vector<2x96xf32>
    %c0_43 = arith.constant 0 : index
    %c0_44 = arith.constant 0 : index
    %114 = vector.load %arg3[%c0_43, %c0_44] : memref<32x96xf32, #tpu.memory_space<vmem>>, vector<32x96xf32>
    %cst_45 = arith.constant dense<0.000000e+00> : vector<2x96xf32>
    %115 = tpu.matmul %102, %114, %cst_45 {dimension_numbers = #tpu.dot_dimension_numbers<[1], [0], [0], [1], [0, 0, 1, 1], [], []>} : vector<2x32xf32>, vector<32x96xf32>, vector<2x96xf32> -> vector<2x96xf32>
    %c0_46 = arith.constant 0 : index
    %c0_47 = arith.constant 0 : index
    %116 = vector.load %arg4[%c0_46, %c0_47] : memref<1x96xf32, #tpu.memory_space<vmem>>, vector<1x96xf32>
    %117 = vector.broadcast %116 : vector<1x96xf32> to vector<2x96xf32>
    %118 = arith.addf %115, %117 : vector<2x96xf32>
    %119 = vector.extract_strided_slice %113 {offsets = [0, 0], sizes = [2, 32], strides = [1, 1]} : vector<2x96xf32> to vector<2x32xf32>
    %120 = vector.extract_strided_slice %118 {offsets = [0, 0], sizes = [2, 32], strides = [1, 1]} : vector<2x96xf32> to vector<2x32xf32>
    %121 = arith.addf %119, %120 : vector<2x32xf32>
    %122 = arith.negf %121 : vector<2x32xf32>
    %123 = math.exp %122 : vector<2x32xf32>
    %cst_48 = arith.constant 1.000000e+00 : f32
    %124 = vector.broadcast %cst_48 : f32 to vector<2x32xf32>
    %125 = arith.addf %124, %123 : vector<2x32xf32>
    %126 = arith.divf %124, %125 : vector<2x32xf32>
    %127 = vector.extract_strided_slice %113 {offsets = [0, 32], sizes = [2, 32], strides = [1, 1]} : vector<2x96xf32> to vector<2x32xf32>
    %128 = vector.extract_strided_slice %118 {offsets = [0, 32], sizes = [2, 32], strides = [1, 1]} : vector<2x96xf32> to vector<2x32xf32>
    %129 = arith.addf %127, %128 : vector<2x32xf32>
    %130 = arith.negf %129 : vector<2x32xf32>
    %131 = math.exp %130 : vector<2x32xf32>
    %cst_49 = arith.constant 1.000000e+00 : f32
    %132 = vector.broadcast %cst_49 : f32 to vector<2x32xf32>
    %133 = arith.addf %132, %131 : vector<2x32xf32>
    %134 = arith.divf %132, %133 : vector<2x32xf32>
    %135 = vector.extract_strided_slice %113 {offsets = [0, 64], sizes = [2, 32], strides = [1, 1]} : vector<2x96xf32> to vector<2x32xf32>
    %136 = vector.extract_strided_slice %118 {offsets = [0, 64], sizes = [2, 32], strides = [1, 1]} : vector<2x96xf32> to vector<2x32xf32>
    %137 = arith.mulf %126, %136 : vector<2x32xf32>
    %138 = arith.addf %135, %137 : vector<2x32xf32>
    %139 = math.tanh %138 : vector<2x32xf32>
    %cst_50 = arith.constant 1.000000e+00 : f32
    %140 = vector.broadcast %cst_50 : f32 to vector<2x32xf32>
    %141 = arith.subf %140, %134 : vector<2x32xf32>
    %142 = arith.mulf %141, %139 : vector<2x32xf32>
    %143 = arith.mulf %134, %102 : vector<2x32xf32>
    %144 = arith.addf %142, %143 : vector<2x32xf32>
    %145 = vector.extract_strided_slice %144 {offsets = [0, 0], sizes = [2, 16], strides = [1, 1]} : vector<2x32xf32> to vector<2x16xf32>
    %c2_51 = arith.constant 2 : index
    %c0_52 = arith.constant 0 : index
    %c0_53 = arith.constant 0 : index
    %146 = vector.load %arg5[%c2_51, %c0_52, %c0_53] : memref<6x2x32xf32, #tpu.memory_space<vmem>>, vector<1x2x16xf32>
    %147 = vector.shape_cast %146 : vector<1x2x16xf32> to vector<2x16xf32>
    %148 = vector.shape_cast %145 : vector<2x16xf32> to vector<1x2x16xf32>
    tpu.vector_store %arg5[%c2_51, %c0_52, %c0_53], %148 {strides = array<i32>} : memref<6x2x32xf32, #tpu.memory_space<vmem>>, vector<1x2x16xf32>,
    %149 = vector.extract_strided_slice %144 {offsets = [0, 16], sizes = [2, 16], strides = [1, 1]} : vector<2x32xf32> to vector<2x16xf32>
    %c3 = arith.constant 3 : index
    %c0_54 = arith.constant 0 : index
    %c16_55 = arith.constant 16 : index
    %150 = vector.load %arg5[%c3, %c0_54, %c16_55] : memref<6x2x32xf32, #tpu.memory_space<vmem>>, vector<1x2x16xf32>
    %151 = vector.shape_cast %150 : vector<1x2x16xf32> to vector<2x16xf32>
    %152 = vector.shape_cast %149 : vector<2x16xf32> to vector<1x2x16xf32>
    tpu.vector_store %arg5[%c3, %c0_54, %c16_55], %152 {strides = array<i32>} : memref<6x2x32xf32, #tpu.memory_space<vmem>>, vector<1x2x16xf32>,
    %c6_56 = arith.constant 6 : index
    %c0_57 = arith.constant 0 : index
    %153 = vector.load %arg7[%c6_56, %c0_57] : memref<12x96xf32, #tpu.memory_space<vmem>>, vector<2x96xf32>
    %c4_58 = arith.constant 4 : index
    %c0_59 = arith.constant 0 : index
    %154 = vector.load %arg7[%c4_58, %c0_59] : memref<12x96xf32, #tpu.memory_space<vmem>>, vector<2x96xf32>
    %155 = arith.select %25, %153, %154 : vector<2x96xi1>, vector<2x96xf32>
    %c0_60 = arith.constant 0 : index
    %c0_61 = arith.constant 0 : index
    %156 = vector.load %arg3[%c0_60, %c0_61] : memref<32x96xf32, #tpu.memory_space<vmem>>, vector<32x96xf32>
    %cst_62 = arith.constant dense<0.000000e+00> : vector<2x96xf32>
    %157 = tpu.matmul %144, %156, %cst_62 {dimension_numbers = #tpu.dot_dimension_numbers<[1], [0], [0], [1], [0, 0, 1, 1], [], []>} : vector<2x32xf32>, vector<32x96xf32>, vector<2x96xf32> -> vector<2x96xf32>
    %c0_63 = arith.constant 0 : index
    %c0_64 = arith.constant 0 : index
    %158 = vector.load %arg4[%c0_63, %c0_64] : memref<1x96xf32, #tpu.memory_space<vmem>>, vector<1x96xf32>
    %159 = vector.broadcast %158 : vector<1x96xf32> to vector<2x96xf32>
    %160 = arith.addf %157, %159 : vector<2x96xf32>
    %161 = vector.extract_strided_slice %155 {offsets = [0, 0], sizes = [2, 32], strides = [1, 1]} : vector<2x96xf32> to vector<2x32xf32>
    %162 = vector.extract_strided_slice %160 {offsets = [0, 0], sizes = [2, 32], strides = [1, 1]} : vector<2x96xf32> to vector<2x32xf32>
    %163 = arith.addf %161, %162 : vector<2x32xf32>
    %164 = arith.negf %163 : vector<2x32xf32>
    %165 = math.exp %164 : vector<2x32xf32>
    %cst_65 = arith.constant 1.000000e+00 : f32
    %166 = vector.broadcast %cst_65 : f32 to vector<2x32xf32>
    %167 = arith.addf %166, %165 : vector<2x32xf32>
    %168 = arith.divf %166, %167 : vector<2x32xf32>
    %169 = vector.extract_strided_slice %155 {offsets = [0, 32], sizes = [2, 32], strides = [1, 1]} : vector<2x96xf32> to vector<2x32xf32>
    %170 = vector.extract_strided_slice %160 {offsets = [0, 32], sizes = [2, 32], strides = [1, 1]} : vector<2x96xf32> to vector<2x32xf32>
    %171 = arith.addf %169, %170 : vector<2x32xf32>
    %172 = arith.negf %171 : vector<2x32xf32>
    %173 = math.exp %172 : vector<2x32xf32>
    %cst_66 = arith.constant 1.000000e+00 : f32
    %174 = vector.broadcast %cst_66 : f32 to vector<2x32xf32>
    %175 = arith.addf %174, %173 : vector<2x32xf32>
    %176 = arith.divf %174, %175 : vector<2x32xf32>
    %177 = vector.extract_strided_slice %155 {offsets = [0, 64], sizes = [2, 32], strides = [1, 1]} : vector<2x96xf32> to vector<2x32xf32>
    %178 = vector.extract_strided_slice %160 {offsets = [0, 64], sizes = [2, 32], strides = [1, 1]} : vector<2x96xf32> to vector<2x32xf32>
    %179 = arith.mulf %168, %178 : vector<2x32xf32>
    %180 = arith.addf %177, %179 : vector<2x32xf32>
    %181 = math.tanh %180 : vector<2x32xf32>
    %cst_67 = arith.constant 1.000000e+00 : f32
    %182 = vector.broadcast %cst_67 : f32 to vector<2x32xf32>
    %183 = arith.subf %182, %176 : vector<2x32xf32>
    %184 = arith.mulf %183, %181 : vector<2x32xf32>
    %185 = arith.mulf %176, %144 : vector<2x32xf32>
    %186 = arith.addf %184, %185 : vector<2x32xf32>
    %187 = vector.extract_strided_slice %186 {offsets = [0, 0], sizes = [2, 16], strides = [1, 1]} : vector<2x32xf32> to vector<2x16xf32>
    %c3_68 = arith.constant 3 : index
    %c0_69 = arith.constant 0 : index
    %c0_70 = arith.constant 0 : index
    %188 = vector.load %arg5[%c3_68, %c0_69, %c0_70] : memref<6x2x32xf32, #tpu.memory_space<vmem>>, vector<1x2x16xf32>
    %189 = vector.shape_cast %188 : vector<1x2x16xf32> to vector<2x16xf32>
    %190 = vector.shape_cast %187 : vector<2x16xf32> to vector<1x2x16xf32>
    tpu.vector_store %arg5[%c3_68, %c0_69, %c0_70], %190 {strides = array<i32>} : memref<6x2x32xf32, #tpu.memory_space<vmem>>, vector<1x2x16xf32>,
    %191 = vector.extract_strided_slice %186 {offsets = [0, 16], sizes = [2, 16], strides = [1, 1]} : vector<2x32xf32> to vector<2x16xf32>
    %c2_71 = arith.constant 2 : index
    %c0_72 = arith.constant 0 : index
    %c16_73 = arith.constant 16 : index
    %192 = vector.load %arg5[%c2_71, %c0_72, %c16_73] : memref<6x2x32xf32, #tpu.memory_space<vmem>>, vector<1x2x16xf32>
    %193 = vector.shape_cast %192 : vector<1x2x16xf32> to vector<2x16xf32>
    %194 = vector.shape_cast %191 : vector<2x16xf32> to vector<1x2x16xf32>
    tpu.vector_store %arg5[%c2_71, %c0_72, %c16_73], %194 {strides = array<i32>} : memref<6x2x32xf32, #tpu.memory_space<vmem>>, vector<1x2x16xf32>,
    %c8_74 = arith.constant 8 : index
    %c0_75 = arith.constant 0 : index
    %195 = vector.load %arg7[%c8_74, %c0_75] : memref<12x96xf32, #tpu.memory_space<vmem>>, vector<2x96xf32>
    %c2_76 = arith.constant 2 : index
    %c0_77 = arith.constant 0 : index
    %196 = vector.load %arg7[%c2_76, %c0_77] : memref<12x96xf32, #tpu.memory_space<vmem>>, vector<2x96xf32>
    %197 = arith.select %25, %195, %196 : vector<2x96xi1>, vector<2x96xf32>
    %c0_78 = arith.constant 0 : index
    %c0_79 = arith.constant 0 : index
    %198 = vector.load %arg3[%c0_78, %c0_79] : memref<32x96xf32, #tpu.memory_space<vmem>>, vector<32x96xf32>
    %cst_80 = arith.constant dense<0.000000e+00> : vector<2x96xf32>
    %199 = tpu.matmul %186, %198, %cst_80 {dimension_numbers = #tpu.dot_dimension_numbers<[1], [0], [0], [1], [0, 0, 1, 1], [], []>} : vector<2x32xf32>, vector<32x96xf32>, vector<2x96xf32> -> vector<2x96xf32>
    %c0_81 = arith.constant 0 : index
    %c0_82 = arith.constant 0 : index
    %200 = vector.load %arg4[%c0_81, %c0_82] : memref<1x96xf32, #tpu.memory_space<vmem>>, vector<1x96xf32>
    %201 = vector.broadcast %200 : vector<1x96xf32> to vector<2x96xf32>
    %202 = arith.addf %199, %201 : vector<2x96xf32>
    %203 = vector.extract_strided_slice %197 {offsets = [0, 0], sizes = [2, 32], strides = [1, 1]} : vector<2x96xf32> to vector<2x32xf32>
    %204 = vector.extract_strided_slice %202 {offsets = [0, 0], sizes = [2, 32], strides = [1, 1]} : vector<2x96xf32> to vector<2x32xf32>
    %205 = arith.addf %203, %204 : vector<2x32xf32>
    %206 = arith.negf %205 : vector<2x32xf32>
    %207 = math.exp %206 : vector<2x32xf32>
    %cst_83 = arith.constant 1.000000e+00 : f32
    %208 = vector.broadcast %cst_83 : f32 to vector<2x32xf32>
    %209 = arith.addf %208, %207 : vector<2x32xf32>
    %210 = arith.divf %208, %209 : vector<2x32xf32>
    %211 = vector.extract_strided_slice %197 {offsets = [0, 32], sizes = [2, 32], strides = [1, 1]} : vector<2x96xf32> to vector<2x32xf32>
    %212 = vector.extract_strided_slice %202 {offsets = [0, 32], sizes = [2, 32], strides = [1, 1]} : vector<2x96xf32> to vector<2x32xf32>
    %213 = arith.addf %211, %212 : vector<2x32xf32>
    %214 = arith.negf %213 : vector<2x32xf32>
    %215 = math.exp %214 : vector<2x32xf32>
    %cst_84 = arith.constant 1.000000e+00 : f32
    %216 = vector.broadcast %cst_84 : f32 to vector<2x32xf32>
    %217 = arith.addf %216, %215 : vector<2x32xf32>
    %218 = arith.divf %216, %217 : vector<2x32xf32>
    %219 = vector.extract_strided_slice %197 {offsets = [0, 64], sizes = [2, 32], strides = [1, 1]} : vector<2x96xf32> to vector<2x32xf32>
    %220 = vector.extract_strided_slice %202 {offsets = [0, 64], sizes = [2, 32], strides = [1, 1]} : vector<2x96xf32> to vector<2x32xf32>
    %221 = arith.mulf %210, %220 : vector<2x32xf32>
    %222 = arith.addf %219, %221 : vector<2x32xf32>
    %223 = math.tanh %222 : vector<2x32xf32>
    %cst_85 = arith.constant 1.000000e+00 : f32
    %224 = vector.broadcast %cst_85 : f32 to vector<2x32xf32>
    %225 = arith.subf %224, %218 : vector<2x32xf32>
    %226 = arith.mulf %225, %223 : vector<2x32xf32>
    %227 = arith.mulf %218, %186 : vector<2x32xf32>
    %228 = arith.addf %226, %227 : vector<2x32xf32>
    %229 = vector.extract_strided_slice %228 {offsets = [0, 0], sizes = [2, 16], strides = [1, 1]} : vector<2x32xf32> to vector<2x16xf32>
    %c4_86 = arith.constant 4 : index
    %c0_87 = arith.constant 0 : index
    %c0_88 = arith.constant 0 : index
    %230 = vector.load %arg5[%c4_86, %c0_87, %c0_88] : memref<6x2x32xf32, #tpu.memory_space<vmem>>, vector<1x2x16xf32>
    %231 = vector.shape_cast %230 : vector<1x2x16xf32> to vector<2x16xf32>
    %232 = vector.shape_cast %229 : vector<2x16xf32> to vector<1x2x16xf32>
    tpu.vector_store %arg5[%c4_86, %c0_87, %c0_88], %232 {strides = array<i32>} : memref<6x2x32xf32, #tpu.memory_space<vmem>>, vector<1x2x16xf32>,
    %233 = vector.extract_strided_slice %228 {offsets = [0, 16], sizes = [2, 16], strides = [1, 1]} : vector<2x32xf32> to vector<2x16xf32>
    %c1_89 = arith.constant 1 : index
    %c0_90 = arith.constant 0 : index
    %c16_91 = arith.constant 16 : index
    %234 = vector.load %arg5[%c1_89, %c0_90, %c16_91] : memref<6x2x32xf32, #tpu.memory_space<vmem>>, vector<1x2x16xf32>
    %235 = vector.shape_cast %234 : vector<1x2x16xf32> to vector<2x16xf32>
    %236 = vector.shape_cast %233 : vector<2x16xf32> to vector<1x2x16xf32>
    tpu.vector_store %arg5[%c1_89, %c0_90, %c16_91], %236 {strides = array<i32>} : memref<6x2x32xf32, #tpu.memory_space<vmem>>, vector<1x2x16xf32>,
    %c10_92 = arith.constant 10 : index
    %c0_93 = arith.constant 0 : index
    %237 = vector.load %arg7[%c10_92, %c0_93] : memref<12x96xf32, #tpu.memory_space<vmem>>, vector<2x96xf32>
    %c0_94 = arith.constant 0 : index
    %c0_95 = arith.constant 0 : index
    %238 = vector.load %arg7[%c0_94, %c0_95] : memref<12x96xf32, #tpu.memory_space<vmem>>, vector<2x96xf32>
    %239 = arith.select %25, %237, %238 : vector<2x96xi1>, vector<2x96xf32>
    %c0_96 = arith.constant 0 : index
    %c0_97 = arith.constant 0 : index
    %240 = vector.load %arg3[%c0_96, %c0_97] : memref<32x96xf32, #tpu.memory_space<vmem>>, vector<32x96xf32>
    %cst_98 = arith.constant dense<0.000000e+00> : vector<2x96xf32>
    %241 = tpu.matmul %228, %240, %cst_98 {dimension_numbers = #tpu.dot_dimension_numbers<[1], [0], [0], [1], [0, 0, 1, 1], [], []>} : vector<2x32xf32>, vector<32x96xf32>, vector<2x96xf32> -> vector<2x96xf32>
    %c0_99 = arith.constant 0 : index
    %c0_100 = arith.constant 0 : index
    %242 = vector.load %arg4[%c0_99, %c0_100] : memref<1x96xf32, #tpu.memory_space<vmem>>, vector<1x96xf32>
    %243 = vector.broadcast %242 : vector<1x96xf32> to vector<2x96xf32>
    %244 = arith.addf %241, %243 : vector<2x96xf32>
    %245 = vector.extract_strided_slice %239 {offsets = [0, 0], sizes = [2, 32], strides = [1, 1]} : vector<2x96xf32> to vector<2x32xf32>
    %246 = vector.extract_strided_slice %244 {offsets = [0, 0], sizes = [2, 32], strides = [1, 1]} : vector<2x96xf32> to vector<2x32xf32>
    %247 = arith.addf %245, %246 : vector<2x32xf32>
    %248 = arith.negf %247 : vector<2x32xf32>
    %249 = math.exp %248 : vector<2x32xf32>
    %cst_101 = arith.constant 1.000000e+00 : f32
    %250 = vector.broadcast %cst_101 : f32 to vector<2x32xf32>
    %251 = arith.addf %250, %249 : vector<2x32xf32>
    %252 = arith.divf %250, %251 : vector<2x32xf32>
    %253 = vector.extract_strided_slice %239 {offsets = [0, 32], sizes = [2, 32], strides = [1, 1]} : vector<2x96xf32> to vector<2x32xf32>
    %254 = vector.extract_strided_slice %244 {offsets = [0, 32], sizes = [2, 32], strides = [1, 1]} : vector<2x96xf32> to vector<2x32xf32>
    %255 = arith.addf %253, %254 : vector<2x32xf32>
    %256 = arith.negf %255 : vector<2x32xf32>
    %257 = math.exp %256 : vector<2x32xf32>
    %cst_102 = arith.constant 1.000000e+00 : f32
    %258 = vector.broadcast %cst_102 : f32 to vector<2x32xf32>
    %259 = arith.addf %258, %257 : vector<2x32xf32>
    %260 = arith.divf %258, %259 : vector<2x32xf32>
    %261 = vector.extract_strided_slice %239 {offsets = [0, 64], sizes = [2, 32], strides = [1, 1]} : vector<2x96xf32> to vector<2x32xf32>
    %262 = vector.extract_strided_slice %244 {offsets = [0, 64], sizes = [2, 32], strides = [1, 1]} : vector<2x96xf32> to vector<2x32xf32>
    %263 = arith.mulf %252, %262 : vector<2x32xf32>
    %264 = arith.addf %261, %263 : vector<2x32xf32>
    %265 = math.tanh %264 : vector<2x32xf32>
    %cst_103 = arith.constant 1.000000e+00 : f32
    %266 = vector.broadcast %cst_103 : f32 to vector<2x32xf32>
    %267 = arith.subf %266, %260 : vector<2x32xf32>
    %268 = arith.mulf %267, %265 : vector<2x32xf32>
    %269 = arith.mulf %260, %228 : vector<2x32xf32>
    %270 = arith.addf %268, %269 : vector<2x32xf32>
    %271 = vector.extract_strided_slice %270 {offsets = [0, 0], sizes = [2, 16], strides = [1, 1]} : vector<2x32xf32> to vector<2x16xf32>
    %c5_104 = arith.constant 5 : index
    %c0_105 = arith.constant 0 : index
    %c0_106 = arith.constant 0 : index
    %272 = vector.load %arg5[%c5_104, %c0_105, %c0_106] : memref<6x2x32xf32, #tpu.memory_space<vmem>>, vector<1x2x16xf32>
    %273 = vector.shape_cast %272 : vector<1x2x16xf32> to vector<2x16xf32>
    %274 = vector.shape_cast %271 : vector<2x16xf32> to vector<1x2x16xf32>
    tpu.vector_store %arg5[%c5_104, %c0_105, %c0_106], %274 {strides = array<i32>} : memref<6x2x32xf32, #tpu.memory_space<vmem>>, vector<1x2x16xf32>,
    %275 = vector.extract_strided_slice %270 {offsets = [0, 16], sizes = [2, 16], strides = [1, 1]} : vector<2x32xf32> to vector<2x16xf32>
    %c0_107 = arith.constant 0 : index
    %c0_108 = arith.constant 0 : index
    %c16_109 = arith.constant 16 : index
    %276 = vector.load %arg5[%c0_107, %c0_108, %c16_109] : memref<6x2x32xf32, #tpu.memory_space<vmem>>, vector<1x2x16xf32>
    %277 = vector.shape_cast %276 : vector<1x2x16xf32> to vector<2x16xf32>
    %278 = vector.shape_cast %275 : vector<2x16xf32> to vector<1x2x16xf32>
    tpu.vector_store %arg5[%c0_107, %c0_108, %c16_109], %278 {strides = array<i32>} : memref<6x2x32xf32, #tpu.memory_space<vmem>>, vector<1x2x16xf32>,
    %c0_110 = arith.constant 0 : index
    %c0_111 = arith.constant 0 : index
    %279 = vector.load %arg6[%c0_110, %c0_111] : memref<2x32xf32, #tpu.memory_space<vmem>>, vector<2x32xf32>
    tpu.vector_store %arg6[%c0_110, %c0_111], %270 {strides = array<i32>} : memref<2x32xf32, #tpu.memory_space<vmem>>, vector<2x32xf32>,
    return
  }
}

module attributes {stable_mosaic.version = 11 : i64} {
  func.func @kernel(%arg0: memref<12x16xf32, #tpu.memory_space<vmem>>, %arg1: memref<2x6x32xf32, #tpu.memory_space<vmem>>, %arg2: memref<1x2x32xf32, #tpu.memory_space<vmem>>, %arg3: memref<32x32xf32, #tpu.memory_space<vmem>>, %arg4: memref<32x64xf32, #tpu.memory_space<vmem>>, %arg5: memref<32x64xf32, #tpu.memory_space<vmem>>, %arg6: memref<1x64xf32, #tpu.memory_space<vmem>>, %arg7: memref<64x12xf32, #tpu.memory_space<vmem>>, %arg8: memref<1x12xf32, #tpu.memory_space<vmem>>, %arg9: memref<96x256xf32, #tpu.memory_space<vmem>>, %arg10: memref<1x256xf32, #tpu.memory_space<vmem>>, %arg11: memref<256x12xf32, #tpu.memory_space<vmem>>, %arg12: memref<1x12xf32, #tpu.memory_space<vmem>>, %arg13: memref<16x96xf32, #tpu.memory_space<vmem>>, %arg14: memref<1x96xf32, #tpu.memory_space<vmem>>, %arg15: memref<32x96xf32, #tpu.memory_space<vmem>>, %arg16: memref<1x96xf32, #tpu.memory_space<vmem>>, %arg17: memref<2x12xf32, #tpu.memory_space<vmem>>, %arg18: memref<2x96xf32, #tpu.memory_space<vmem>>) attributes {dimension_semantics = [], scalar_prefetch = 0 : i64, scratch_operands = 1 : i64, tpu.core_type = #tpu.core_type<tc>} {
    %0 = tpu.iota {dimensions = array<i32: 1>} : vector<2x12xi32>
    %c0 = arith.constant 0 : index
    %c0_0 = arith.constant 0 : index
    %c0_1 = arith.constant 0 : index
    %1 = vector.load %arg1[%c0, %c0_0, %c0_1] : memref<2x6x32xf32, #tpu.memory_space<vmem>>, vector<2x6x32xf32>
    %c0_2 = arith.constant 0 : index
    %c0_3 = arith.constant 0 : index
    %c0_4 = arith.constant 0 : index
    %2 = vector.load %arg2[%c0_2, %c0_3, %c0_4] : memref<1x2x32xf32, #tpu.memory_space<vmem>>, vector<1x2x32xf32>
    %3 = vector.shape_cast %2 : vector<1x2x32xf32> to vector<2x32xf32>
    %c0_i32 = arith.constant 0 : i32
    %4 = vector.broadcast %c0_i32 : i32 to vector<2x12xi32>
    %5 = arith.cmpi eq, %0, %4 : vector<2x12xi32>
    %6 = arith.extui %5 : vector<2x12xi1> to vector<2x12xi32>
    %7 = arith.sitofp %6 : vector<2x12xi32> to vector<2x12xf32>
    %c0_5 = arith.constant 0 : index
    %c0_6 = arith.constant 0 : index
    %8 = vector.load %arg0[%c0_5, %c0_6] : memref<12x16xf32, #tpu.memory_space<vmem>>, vector<12x16xf32>
    %cst = arith.constant dense<0.000000e+00> : vector<2x16xf32>
    %9 = tpu.matmul %7, %8, %cst {dimension_numbers = #tpu.dot_dimension_numbers<[1], [0], [0], [1], [0, 0, 1, 1], [], []>} : vector<2x12xf32>, vector<12x16xf32>, vector<2x16xf32> -> vector<2x16xf32>
    %c0_7 = arith.constant 0 : index
    %c0_8 = arith.constant 0 : index
    %10 = vector.load %arg13[%c0_7, %c0_8] : memref<16x96xf32, #tpu.memory_space<vmem>>, vector<16x96xf32>
    %cst_9 = arith.constant dense<0.000000e+00> : vector<2x96xf32>
    %11 = tpu.matmul %9, %10, %cst_9 {dimension_numbers = #tpu.dot_dimension_numbers<[1], [0], [0], [1], [0, 0, 1, 1], [], []>} : vector<2x16xf32>, vector<16x96xf32>, vector<2x96xf32> -> vector<2x96xf32>
    %c0_10 = arith.constant 0 : index
    %c0_11 = arith.constant 0 : index
    %12 = vector.load %arg14[%c0_10, %c0_11] : memref<1x96xf32, #tpu.memory_space<vmem>>, vector<1x96xf32>
    %13 = vector.broadcast %12 : vector<1x96xf32> to vector<2x96xf32>
    %14 = arith.addf %11, %13 : vector<2x96xf32>
    %c0_12 = arith.constant 0 : index
    %c0_13 = arith.constant 0 : index
    %15 = vector.load %arg15[%c0_12, %c0_13] : memref<32x96xf32, #tpu.memory_space<vmem>>, vector<32x96xf32>
    %cst_14 = arith.constant dense<0.000000e+00> : vector<2x96xf32>
    %16 = tpu.matmul %3, %15, %cst_14 {dimension_numbers = #tpu.dot_dimension_numbers<[1], [0], [0], [1], [0, 0, 1, 1], [], []>} : vector<2x32xf32>, vector<32x96xf32>, vector<2x96xf32> -> vector<2x96xf32>
    %c0_15 = arith.constant 0 : index
    %c0_16 = arith.constant 0 : index
    %17 = vector.load %arg16[%c0_15, %c0_16] : memref<1x96xf32, #tpu.memory_space<vmem>>, vector<1x96xf32>
    %18 = vector.broadcast %17 : vector<1x96xf32> to vector<2x96xf32>
    %19 = arith.addf %16, %18 : vector<2x96xf32>
    %20 = vector.extract_strided_slice %14 {offsets = [0, 0], sizes = [2, 32], strides = [1, 1]} : vector<2x96xf32> to vector<2x32xf32>
    %21 = vector.extract_strided_slice %19 {offsets = [0, 0], sizes = [2, 32], strides = [1, 1]} : vector<2x96xf32> to vector<2x32xf32>
    %22 = arith.addf %20, %21 : vector<2x32xf32>
    %23 = arith.negf %22 : vector<2x32xf32>
    %24 = math.exp %23 : vector<2x32xf32>
    %cst_17 = arith.constant 1.000000e+00 : f32
    %25 = vector.broadcast %cst_17 : f32 to vector<2x32xf32>
    %26 = arith.addf %25, %24 : vector<2x32xf32>
    %27 = arith.divf %25, %26 : vector<2x32xf32>
    %28 = vector.extract_strided_slice %14 {offsets = [0, 32], sizes = [2, 32], strides = [1, 1]} : vector<2x96xf32> to vector<2x32xf32>
    %29 = vector.extract_strided_slice %19 {offsets = [0, 32], sizes = [2, 32], strides = [1, 1]} : vector<2x96xf32> to vector<2x32xf32>
    %30 = arith.addf %28, %29 : vector<2x32xf32>
    %31 = arith.negf %30 : vector<2x32xf32>
    %32 = math.exp %31 : vector<2x32xf32>
    %cst_18 = arith.constant 1.000000e+00 : f32
    %33 = vector.broadcast %cst_18 : f32 to vector<2x32xf32>
    %34 = arith.addf %33, %32 : vector<2x32xf32>
    %35 = arith.divf %33, %34 : vector<2x32xf32>
    %36 = vector.extract_strided_slice %14 {offsets = [0, 64], sizes = [2, 32], strides = [1, 1]} : vector<2x96xf32> to vector<2x32xf32>
    %37 = vector.extract_strided_slice %19 {offsets = [0, 64], sizes = [2, 32], strides = [1, 1]} : vector<2x96xf32> to vector<2x32xf32>
    %38 = arith.mulf %27, %37 : vector<2x32xf32>
    %39 = arith.addf %36, %38 : vector<2x32xf32>
    %40 = math.tanh %39 : vector<2x32xf32>
    %cst_19 = arith.constant 1.000000e+00 : f32
    %41 = vector.broadcast %cst_19 : f32 to vector<2x32xf32>
    %42 = arith.subf %41, %35 : vector<2x32xf32>
    %43 = arith.mulf %42, %40 : vector<2x32xf32>
    %44 = arith.mulf %35, %3 : vector<2x32xf32>
    %45 = arith.addf %43, %44 : vector<2x32xf32>
    %c0_20 = arith.constant 0 : index
    %c0_21 = arith.constant 0 : index
    %46 = vector.load %arg3[%c0_20, %c0_21] : memref<32x32xf32, #tpu.memory_space<vmem>>, vector<32x32xf32>
    %cst_22 = arith.constant dense<0.000000e+00> : vector<2x32xf32>
    %47 = tpu.matmul %45, %46, %cst_22 {dimension_numbers = #tpu.dot_dimension_numbers<[1], [0], [0], [1], [0, 0, 1, 1], [], []>} : vector<2x32xf32>, vector<32x32xf32>, vector<2x32xf32> -> vector<2x32xf32>
    %48 = vector.shape_cast %47 : vector<2x32xf32> to vector<2x1x32xf32>
    %49 = vector.broadcast %48 : vector<2x1x32xf32> to vector<2x6x32xf32>
    %50 = arith.mulf %49, %1 : vector<2x6x32xf32>
    %cst_23 = arith.constant dense<0.000000e+00> : vector<2x6xf32>
    %51 = vector.multi_reduction <add>, %50, %cst_23 [2] : vector<2x6x32xf32> to vector<2x6xf32>
    %cst_24 = arith.constant dense<0xFF800000> : vector<2xf32>
    %52 = vector.multi_reduction <maximumf>, %51, %cst_24 [1] : vector<2x6xf32> to vector<2xf32>
    %53 = vector.shape_cast %52 : vector<2xf32> to vector<2x1xf32>
    %54 = vector.broadcast %53 : vector<2x1xf32> to vector<2x6xf32>
    %55 = arith.subf %51, %54 : vector<2x6xf32>
    %56 = math.exp %55 : vector<2x6xf32>
    %cst_25 = arith.constant dense<0.000000e+00> : vector<2xf32>
    %57 = vector.multi_reduction <add>, %56, %cst_25 [1] : vector<2x6xf32> to vector<2xf32>
    %58 = vector.shape_cast %57 : vector<2xf32> to vector<2x1xf32>
    %59 = vector.broadcast %58 : vector<2x1xf32> to vector<2x6xf32>
    %60 = arith.divf %56, %59 : vector<2x6xf32>
    %61 = vector.shape_cast %60 : vector<2x6xf32> to vector<2x6x1xf32>
    %62 = vector.broadcast %61 : vector<2x6x1xf32> to vector<2x6x32xf32>
    %63 = arith.mulf %62, %1 : vector<2x6x32xf32>
    %cst_26 = arith.constant dense<0.000000e+00> : vector<2x32xf32>
    %64 = vector.multi_reduction <add>, %63, %cst_26 [1] : vector<2x6x32xf32> to vector<2x32xf32>
    %c0_27 = arith.constant 0 : index
    %c0_28 = arith.constant 0 : index
    %65 = vector.load %arg4[%c0_27, %c0_28] : memref<32x64xf32, #tpu.memory_space<vmem>>, vector<32x64xf32>
    %cst_29 = arith.constant dense<0.000000e+00> : vector<2x64xf32>
    %66 = tpu.matmul %64, %65, %cst_29 {dimension_numbers = #tpu.dot_dimension_numbers<[1], [0], [0], [1], [0, 0, 1, 1], [], []>} : vector<2x32xf32>, vector<32x64xf32>, vector<2x64xf32> -> vector<2x64xf32>
    %c0_30 = arith.constant 0 : index
    %c0_31 = arith.constant 0 : index
    %67 = vector.load %arg5[%c0_30, %c0_31] : memref<32x64xf32, #tpu.memory_space<vmem>>, vector<32x64xf32>
    %cst_32 = arith.constant dense<0.000000e+00> : vector<2x64xf32>
    %68 = tpu.matmul %45, %67, %cst_32 {dimension_numbers = #tpu.dot_dimension_numbers<[1], [0], [0], [1], [0, 0, 1, 1], [], []>} : vector<2x32xf32>, vector<32x64xf32>, vector<2x64xf32> -> vector<2x64xf32>
    %69 = arith.addf %66, %68 : vector<2x64xf32>
    %c0_33 = arith.constant 0 : index
    %c0_34 = arith.constant 0 : index
    %70 = vector.load %arg6[%c0_33, %c0_34] : memref<1x64xf32, #tpu.memory_space<vmem>>, vector<1x64xf32>
    %71 = vector.broadcast %70 : vector<1x64xf32> to vector<2x64xf32>
    %72 = arith.addf %69, %71 : vector<2x64xf32>
    %73 = math.tanh %72 : vector<2x64xf32>
    %c0_35 = arith.constant 0 : index
    %c0_36 = arith.constant 0 : index
    %74 = vector.load %arg7[%c0_35, %c0_36] : memref<64x12xf32, #tpu.memory_space<vmem>>, vector<64x12xf32>
    %cst_37 = arith.constant dense<0.000000e+00> : vector<2x12xf32>
    %75 = tpu.matmul %73, %74, %cst_37 {dimension_numbers = #tpu.dot_dimension_numbers<[1], [0], [0], [1], [0, 0, 1, 1], [], []>} : vector<2x64xf32>, vector<64x12xf32>, vector<2x12xf32> -> vector<2x12xf32>
    %c0_38 = arith.constant 0 : index
    %c0_39 = arith.constant 0 : index
    %76 = vector.load %arg8[%c0_38, %c0_39] : memref<1x12xf32, #tpu.memory_space<vmem>>, vector<1x12xf32>
    %77 = vector.broadcast %76 : vector<1x12xf32> to vector<2x12xf32>
    %78 = arith.addf %75, %77 : vector<2x12xf32>
    %79 = vector.extract_strided_slice %78 {offsets = [0, 0], sizes = [1, 12], strides = [1, 1]} : vector<2x12xf32> to vector<1x12xf32>
    %c0_40 = arith.constant 0 : index
    %c0_41 = arith.constant 0 : index
    %80 = vector.load %arg18[%c0_40, %c0_41] : memref<2x96xf32, #tpu.memory_space<vmem>>, vector<1x12xf32>
    tpu.vector_store %arg18[%c0_40, %c0_41], %79 {strides = array<i32>} : memref<2x96xf32, #tpu.memory_space<vmem>>, vector<1x12xf32>,
    %81 = vector.extract_strided_slice %78 {offsets = [1, 0], sizes = [1, 12], strides = [1, 1]} : vector<2x12xf32> to vector<1x12xf32>
    %c0_42 = arith.constant 0 : index
    %c12 = arith.constant 12 : index
    %82 = vector.load %arg18[%c0_42, %c12] : memref<2x96xf32, #tpu.memory_space<vmem>>, vector<1x12xf32>
    tpu.vector_store %arg18[%c0_42, %c12], %81 {strides = array<i32>} : memref<2x96xf32, #tpu.memory_space<vmem>>, vector<1x12xf32>,
    %cst_43 = arith.constant dense<0xFF800000> : vector<2xf32>
    %83 = vector.multi_reduction <maximumf>, %78, %cst_43 [1] : vector<2x12xf32> to vector<2xf32>
    %84 = vector.shape_cast %83 : vector<2xf32> to vector<2x1xf32>
    %85 = vector.broadcast %84 : vector<2x1xf32> to vector<2x12xf32>
    %86 = arith.cmpf oeq, %78, %85 : vector<2x12xf32>
    %c12_i32 = arith.constant 12 : i32
    %87 = vector.broadcast %c12_i32 : i32 to vector<2x12xi32>
    %88 = arith.select %86, %0, %87 : vector<2x12xi1>, vector<2x12xi32>
    %cst_44 = arith.constant dense<2147483647> : vector<2xi32>
    %89 = vector.multi_reduction <minsi>, %88, %cst_44 [1] : vector<2x12xi32> to vector<2xi32>
    %90 = vector.shape_cast %89 : vector<2xi32> to vector<2x1xi32>
    %91 = vector.broadcast %90 : vector<2x1xi32> to vector<2x12xi32>
    %92 = arith.cmpi eq, %0, %91 : vector<2x12xi32>
    %93 = arith.extui %92 : vector<2x12xi1> to vector<2x12xi32>
    %94 = arith.sitofp %93 : vector<2x12xi32> to vector<2x12xf32>
    %c0_45 = arith.constant 0 : index
    %c0_46 = arith.constant 0 : index
    %95 = vector.load %arg0[%c0_45, %c0_46] : memref<12x16xf32, #tpu.memory_space<vmem>>, vector<12x16xf32>
    %cst_47 = arith.constant dense<0.000000e+00> : vector<2x16xf32>
    %96 = tpu.matmul %94, %95, %cst_47 {dimension_numbers = #tpu.dot_dimension_numbers<[1], [0], [0], [1], [0, 0, 1, 1], [], []>} : vector<2x12xf32>, vector<12x16xf32>, vector<2x16xf32> -> vector<2x16xf32>
    %c0_48 = arith.constant 0 : index
    %c0_49 = arith.constant 0 : index
    %97 = vector.load %arg13[%c0_48, %c0_49] : memref<16x96xf32, #tpu.memory_space<vmem>>, vector<16x96xf32>
    %cst_50 = arith.constant dense<0.000000e+00> : vector<2x96xf32>
    %98 = tpu.matmul %96, %97, %cst_50 {dimension_numbers = #tpu.dot_dimension_numbers<[1], [0], [0], [1], [0, 0, 1, 1], [], []>} : vector<2x16xf32>, vector<16x96xf32>, vector<2x96xf32> -> vector<2x96xf32>
    %c0_51 = arith.constant 0 : index
    %c0_52 = arith.constant 0 : index
    %99 = vector.load %arg14[%c0_51, %c0_52] : memref<1x96xf32, #tpu.memory_space<vmem>>, vector<1x96xf32>
    %100 = vector.broadcast %99 : vector<1x96xf32> to vector<2x96xf32>
    %101 = arith.addf %98, %100 : vector<2x96xf32>
    %c0_53 = arith.constant 0 : index
    %c0_54 = arith.constant 0 : index
    %102 = vector.load %arg15[%c0_53, %c0_54] : memref<32x96xf32, #tpu.memory_space<vmem>>, vector<32x96xf32>
    %cst_55 = arith.constant dense<0.000000e+00> : vector<2x96xf32>
    %103 = tpu.matmul %45, %102, %cst_55 {dimension_numbers = #tpu.dot_dimension_numbers<[1], [0], [0], [1], [0, 0, 1, 1], [], []>} : vector<2x32xf32>, vector<32x96xf32>, vector<2x96xf32> -> vector<2x96xf32>
    %c0_56 = arith.constant 0 : index
    %c0_57 = arith.constant 0 : index
    %104 = vector.load %arg16[%c0_56, %c0_57] : memref<1x96xf32, #tpu.memory_space<vmem>>, vector<1x96xf32>
    %105 = vector.broadcast %104 : vector<1x96xf32> to vector<2x96xf32>
    %106 = arith.addf %103, %105 : vector<2x96xf32>
    %107 = vector.extract_strided_slice %101 {offsets = [0, 0], sizes = [2, 32], strides = [1, 1]} : vector<2x96xf32> to vector<2x32xf32>
    %108 = vector.extract_strided_slice %106 {offsets = [0, 0], sizes = [2, 32], strides = [1, 1]} : vector<2x96xf32> to vector<2x32xf32>
    %109 = arith.addf %107, %108 : vector<2x32xf32>
    %110 = arith.negf %109 : vector<2x32xf32>
    %111 = math.exp %110 : vector<2x32xf32>
    %cst_58 = arith.constant 1.000000e+00 : f32
    %112 = vector.broadcast %cst_58 : f32 to vector<2x32xf32>
    %113 = arith.addf %112, %111 : vector<2x32xf32>
    %114 = arith.divf %112, %113 : vector<2x32xf32>
    %115 = vector.extract_strided_slice %101 {offsets = [0, 32], sizes = [2, 32], strides = [1, 1]} : vector<2x96xf32> to vector<2x32xf32>
    %116 = vector.extract_strided_slice %106 {offsets = [0, 32], sizes = [2, 32], strides = [1, 1]} : vector<2x96xf32> to vector<2x32xf32>
    %117 = arith.addf %115, %116 : vector<2x32xf32>
    %118 = arith.negf %117 : vector<2x32xf32>
    %119 = math.exp %118 : vector<2x32xf32>
    %cst_59 = arith.constant 1.000000e+00 : f32
    %120 = vector.broadcast %cst_59 : f32 to vector<2x32xf32>
    %121 = arith.addf %120, %119 : vector<2x32xf32>
    %122 = arith.divf %120, %121 : vector<2x32xf32>
    %123 = vector.extract_strided_slice %101 {offsets = [0, 64], sizes = [2, 32], strides = [1, 1]} : vector<2x96xf32> to vector<2x32xf32>
    %124 = vector.extract_strided_slice %106 {offsets = [0, 64], sizes = [2, 32], strides = [1, 1]} : vector<2x96xf32> to vector<2x32xf32>
    %125 = arith.mulf %114, %124 : vector<2x32xf32>
    %126 = arith.addf %123, %125 : vector<2x32xf32>
    %127 = math.tanh %126 : vector<2x32xf32>
    %cst_60 = arith.constant 1.000000e+00 : f32
    %128 = vector.broadcast %cst_60 : f32 to vector<2x32xf32>
    %129 = arith.subf %128, %122 : vector<2x32xf32>
    %130 = arith.mulf %129, %127 : vector<2x32xf32>
    %131 = arith.mulf %122, %45 : vector<2x32xf32>
    %132 = arith.addf %130, %131 : vector<2x32xf32>
    %c0_61 = arith.constant 0 : index
    %c0_62 = arith.constant 0 : index
    %133 = vector.load %arg3[%c0_61, %c0_62] : memref<32x32xf32, #tpu.memory_space<vmem>>, vector<32x32xf32>
    %cst_63 = arith.constant dense<0.000000e+00> : vector<2x32xf32>
    %134 = tpu.matmul %132, %133, %cst_63 {dimension_numbers = #tpu.dot_dimension_numbers<[1], [0], [0], [1], [0, 0, 1, 1], [], []>} : vector<2x32xf32>, vector<32x32xf32>, vector<2x32xf32> -> vector<2x32xf32>
    %135 = vector.shape_cast %134 : vector<2x32xf32> to vector<2x1x32xf32>
    %136 = vector.broadcast %135 : vector<2x1x32xf32> to vector<2x6x32xf32>
    %137 = arith.mulf %136, %1 : vector<2x6x32xf32>
    %cst_64 = arith.constant dense<0.000000e+00> : vector<2x6xf32>
    %138 = vector.multi_reduction <add>, %137, %cst_64 [2] : vector<2x6x32xf32> to vector<2x6xf32>
    %cst_65 = arith.constant dense<0xFF800000> : vector<2xf32>
    %139 = vector.multi_reduction <maximumf>, %138, %cst_65 [1] : vector<2x6xf32> to vector<2xf32>
    %140 = vector.shape_cast %139 : vector<2xf32> to vector<2x1xf32>
    %141 = vector.broadcast %140 : vector<2x1xf32> to vector<2x6xf32>
    %142 = arith.subf %138, %141 : vector<2x6xf32>
    %143 = math.exp %142 : vector<2x6xf32>
    %cst_66 = arith.constant dense<0.000000e+00> : vector<2xf32>
    %144 = vector.multi_reduction <add>, %143, %cst_66 [1] : vector<2x6xf32> to vector<2xf32>
    %145 = vector.shape_cast %144 : vector<2xf32> to vector<2x1xf32>
    %146 = vector.broadcast %145 : vector<2x1xf32> to vector<2x6xf32>
    %147 = arith.divf %143, %146 : vector<2x6xf32>
    %148 = vector.shape_cast %147 : vector<2x6xf32> to vector<2x6x1xf32>
    %149 = vector.broadcast %148 : vector<2x6x1xf32> to vector<2x6x32xf32>
    %150 = arith.mulf %149, %1 : vector<2x6x32xf32>
    %cst_67 = arith.constant dense<0.000000e+00> : vector<2x32xf32>
    %151 = vector.multi_reduction <add>, %150, %cst_67 [1] : vector<2x6x32xf32> to vector<2x32xf32>
    %c0_68 = arith.constant 0 : index
    %c0_69 = arith.constant 0 : index
    %152 = vector.load %arg4[%c0_68, %c0_69] : memref<32x64xf32, #tpu.memory_space<vmem>>, vector<32x64xf32>
    %cst_70 = arith.constant dense<0.000000e+00> : vector<2x64xf32>
    %153 = tpu.matmul %151, %152, %cst_70 {dimension_numbers = #tpu.dot_dimension_numbers<[1], [0], [0], [1], [0, 0, 1, 1], [], []>} : vector<2x32xf32>, vector<32x64xf32>, vector<2x64xf32> -> vector<2x64xf32>
    %c0_71 = arith.constant 0 : index
    %c0_72 = arith.constant 0 : index
    %154 = vector.load %arg5[%c0_71, %c0_72] : memref<32x64xf32, #tpu.memory_space<vmem>>, vector<32x64xf32>
    %cst_73 = arith.constant dense<0.000000e+00> : vector<2x64xf32>
    %155 = tpu.matmul %132, %154, %cst_73 {dimension_numbers = #tpu.dot_dimension_numbers<[1], [0], [0], [1], [0, 0, 1, 1], [], []>} : vector<2x32xf32>, vector<32x64xf32>, vector<2x64xf32> -> vector<2x64xf32>
    %156 = arith.addf %153, %155 : vector<2x64xf32>
    %c0_74 = arith.constant 0 : index
    %c0_75 = arith.constant 0 : index
    %157 = vector.load %arg6[%c0_74, %c0_75] : memref<1x64xf32, #tpu.memory_space<vmem>>, vector<1x64xf32>
    %158 = vector.broadcast %157 : vector<1x64xf32> to vector<2x64xf32>
    %159 = arith.addf %156, %158 : vector<2x64xf32>
    %160 = math.tanh %159 : vector<2x64xf32>
    %c0_76 = arith.constant 0 : index
    %c0_77 = arith.constant 0 : index
    %161 = vector.load %arg7[%c0_76, %c0_77] : memref<64x12xf32, #tpu.memory_space<vmem>>, vector<64x12xf32>
    %cst_78 = arith.constant dense<0.000000e+00> : vector<2x12xf32>
    %162 = tpu.matmul %160, %161, %cst_78 {dimension_numbers = #tpu.dot_dimension_numbers<[1], [0], [0], [1], [0, 0, 1, 1], [], []>} : vector<2x64xf32>, vector<64x12xf32>, vector<2x12xf32> -> vector<2x12xf32>
    %c0_79 = arith.constant 0 : index
    %c0_80 = arith.constant 0 : index
    %163 = vector.load %arg8[%c0_79, %c0_80] : memref<1x12xf32, #tpu.memory_space<vmem>>, vector<1x12xf32>
    %164 = vector.broadcast %163 : vector<1x12xf32> to vector<2x12xf32>
    %165 = arith.addf %162, %164 : vector<2x12xf32>
    %166 = vector.extract_strided_slice %165 {offsets = [0, 0], sizes = [1, 12], strides = [1, 1]} : vector<2x12xf32> to vector<1x12xf32>
    %c0_81 = arith.constant 0 : index
    %c24 = arith.constant 24 : index
    %167 = vector.load %arg18[%c0_81, %c24] : memref<2x96xf32, #tpu.memory_space<vmem>>, vector<1x12xf32>
    tpu.vector_store %arg18[%c0_81, %c24], %166 {strides = array<i32>} : memref<2x96xf32, #tpu.memory_space<vmem>>, vector<1x12xf32>,
    %168 = vector.extract_strided_slice %165 {offsets = [1, 0], sizes = [1, 12], strides = [1, 1]} : vector<2x12xf32> to vector<1x12xf32>
    %c0_82 = arith.constant 0 : index
    %c36 = arith.constant 36 : index
    %169 = vector.load %arg18[%c0_82, %c36] : memref<2x96xf32, #tpu.memory_space<vmem>>, vector<1x12xf32>
    tpu.vector_store %arg18[%c0_82, %c36], %168 {strides = array<i32>} : memref<2x96xf32, #tpu.memory_space<vmem>>, vector<1x12xf32>,
    %cst_83 = arith.constant dense<0xFF800000> : vector<2xf32>
    %170 = vector.multi_reduction <maximumf>, %165, %cst_83 [1] : vector<2x12xf32> to vector<2xf32>
    %171 = vector.shape_cast %170 : vector<2xf32> to vector<2x1xf32>
    %172 = vector.broadcast %171 : vector<2x1xf32> to vector<2x12xf32>
    %173 = arith.cmpf oeq, %165, %172 : vector<2x12xf32>
    %c12_i32_84 = arith.constant 12 : i32
    %174 = vector.broadcast %c12_i32_84 : i32 to vector<2x12xi32>
    %175 = arith.select %173, %0, %174 : vector<2x12xi1>, vector<2x12xi32>
    %cst_85 = arith.constant dense<2147483647> : vector<2xi32>
    %176 = vector.multi_reduction <minsi>, %175, %cst_85 [1] : vector<2x12xi32> to vector<2xi32>
    %177 = vector.shape_cast %176 : vector<2xi32> to vector<2x1xi32>
    %178 = vector.broadcast %177 : vector<2x1xi32> to vector<2x12xi32>
    %179 = arith.cmpi eq, %0, %178 : vector<2x12xi32>
    %180 = arith.extui %179 : vector<2x12xi1> to vector<2x12xi32>
    %181 = arith.sitofp %180 : vector<2x12xi32> to vector<2x12xf32>
    %c0_86 = arith.constant 0 : index
    %c0_87 = arith.constant 0 : index
    %182 = vector.load %arg0[%c0_86, %c0_87] : memref<12x16xf32, #tpu.memory_space<vmem>>, vector<12x16xf32>
    %cst_88 = arith.constant dense<0.000000e+00> : vector<2x16xf32>
    %183 = tpu.matmul %181, %182, %cst_88 {dimension_numbers = #tpu.dot_dimension_numbers<[1], [0], [0], [1], [0, 0, 1, 1], [], []>} : vector<2x12xf32>, vector<12x16xf32>, vector<2x16xf32> -> vector<2x16xf32>
    %c0_89 = arith.constant 0 : index
    %c0_90 = arith.constant 0 : index
    %184 = vector.load %arg13[%c0_89, %c0_90] : memref<16x96xf32, #tpu.memory_space<vmem>>, vector<16x96xf32>
    %cst_91 = arith.constant dense<0.000000e+00> : vector<2x96xf32>
    %185 = tpu.matmul %183, %184, %cst_91 {dimension_numbers = #tpu.dot_dimension_numbers<[1], [0], [0], [1], [0, 0, 1, 1], [], []>} : vector<2x16xf32>, vector<16x96xf32>, vector<2x96xf32> -> vector<2x96xf32>
    %c0_92 = arith.constant 0 : index
    %c0_93 = arith.constant 0 : index
    %186 = vector.load %arg14[%c0_92, %c0_93] : memref<1x96xf32, #tpu.memory_space<vmem>>, vector<1x96xf32>
    %187 = vector.broadcast %186 : vector<1x96xf32> to vector<2x96xf32>
    %188 = arith.addf %185, %187 : vector<2x96xf32>
    %c0_94 = arith.constant 0 : index
    %c0_95 = arith.constant 0 : index
    %189 = vector.load %arg15[%c0_94, %c0_95] : memref<32x96xf32, #tpu.memory_space<vmem>>, vector<32x96xf32>
    %cst_96 = arith.constant dense<0.000000e+00> : vector<2x96xf32>
    %190 = tpu.matmul %132, %189, %cst_96 {dimension_numbers = #tpu.dot_dimension_numbers<[1], [0], [0], [1], [0, 0, 1, 1], [], []>} : vector<2x32xf32>, vector<32x96xf32>, vector<2x96xf32> -> vector<2x96xf32>
    %c0_97 = arith.constant 0 : index
    %c0_98 = arith.constant 0 : index
    %191 = vector.load %arg16[%c0_97, %c0_98] : memref<1x96xf32, #tpu.memory_space<vmem>>, vector<1x96xf32>
    %192 = vector.broadcast %191 : vector<1x96xf32> to vector<2x96xf32>
    %193 = arith.addf %190, %192 : vector<2x96xf32>
    %194 = vector.extract_strided_slice %188 {offsets = [0, 0], sizes = [2, 32], strides = [1, 1]} : vector<2x96xf32> to vector<2x32xf32>
    %195 = vector.extract_strided_slice %193 {offsets = [0, 0], sizes = [2, 32], strides = [1, 1]} : vector<2x96xf32> to vector<2x32xf32>
    %196 = arith.addf %194, %195 : vector<2x32xf32>
    %197 = arith.negf %196 : vector<2x32xf32>
    %198 = math.exp %197 : vector<2x32xf32>
    %cst_99 = arith.constant 1.000000e+00 : f32
    %199 = vector.broadcast %cst_99 : f32 to vector<2x32xf32>
    %200 = arith.addf %199, %198 : vector<2x32xf32>
    %201 = arith.divf %199, %200 : vector<2x32xf32>
    %202 = vector.extract_strided_slice %188 {offsets = [0, 32], sizes = [2, 32], strides = [1, 1]} : vector<2x96xf32> to vector<2x32xf32>
    %203 = vector.extract_strided_slice %193 {offsets = [0, 32], sizes = [2, 32], strides = [1, 1]} : vector<2x96xf32> to vector<2x32xf32>
    %204 = arith.addf %202, %203 : vector<2x32xf32>
    %205 = arith.negf %204 : vector<2x32xf32>
    %206 = math.exp %205 : vector<2x32xf32>
    %cst_100 = arith.constant 1.000000e+00 : f32
    %207 = vector.broadcast %cst_100 : f32 to vector<2x32xf32>
    %208 = arith.addf %207, %206 : vector<2x32xf32>
    %209 = arith.divf %207, %208 : vector<2x32xf32>
    %210 = vector.extract_strided_slice %188 {offsets = [0, 64], sizes = [2, 32], strides = [1, 1]} : vector<2x96xf32> to vector<2x32xf32>
    %211 = vector.extract_strided_slice %193 {offsets = [0, 64], sizes = [2, 32], strides = [1, 1]} : vector<2x96xf32> to vector<2x32xf32>
    %212 = arith.mulf %201, %211 : vector<2x32xf32>
    %213 = arith.addf %210, %212 : vector<2x32xf32>
    %214 = math.tanh %213 : vector<2x32xf32>
    %cst_101 = arith.constant 1.000000e+00 : f32
    %215 = vector.broadcast %cst_101 : f32 to vector<2x32xf32>
    %216 = arith.subf %215, %209 : vector<2x32xf32>
    %217 = arith.mulf %216, %214 : vector<2x32xf32>
    %218 = arith.mulf %209, %132 : vector<2x32xf32>
    %219 = arith.addf %217, %218 : vector<2x32xf32>
    %c0_102 = arith.constant 0 : index
    %c0_103 = arith.constant 0 : index
    %220 = vector.load %arg3[%c0_102, %c0_103] : memref<32x32xf32, #tpu.memory_space<vmem>>, vector<32x32xf32>
    %cst_104 = arith.constant dense<0.000000e+00> : vector<2x32xf32>
    %221 = tpu.matmul %219, %220, %cst_104 {dimension_numbers = #tpu.dot_dimension_numbers<[1], [0], [0], [1], [0, 0, 1, 1], [], []>} : vector<2x32xf32>, vector<32x32xf32>, vector<2x32xf32> -> vector<2x32xf32>
    %222 = vector.shape_cast %221 : vector<2x32xf32> to vector<2x1x32xf32>
    %223 = vector.broadcast %222 : vector<2x1x32xf32> to vector<2x6x32xf32>
    %224 = arith.mulf %223, %1 : vector<2x6x32xf32>
    %cst_105 = arith.constant dense<0.000000e+00> : vector<2x6xf32>
    %225 = vector.multi_reduction <add>, %224, %cst_105 [2] : vector<2x6x32xf32> to vector<2x6xf32>
    %cst_106 = arith.constant dense<0xFF800000> : vector<2xf32>
    %226 = vector.multi_reduction <maximumf>, %225, %cst_106 [1] : vector<2x6xf32> to vector<2xf32>
    %227 = vector.shape_cast %226 : vector<2xf32> to vector<2x1xf32>
    %228 = vector.broadcast %227 : vector<2x1xf32> to vector<2x6xf32>
    %229 = arith.subf %225, %228 : vector<2x6xf32>
    %230 = math.exp %229 : vector<2x6xf32>
    %cst_107 = arith.constant dense<0.000000e+00> : vector<2xf32>
    %231 = vector.multi_reduction <add>, %230, %cst_107 [1] : vector<2x6xf32> to vector<2xf32>
    %232 = vector.shape_cast %231 : vector<2xf32> to vector<2x1xf32>
    %233 = vector.broadcast %232 : vector<2x1xf32> to vector<2x6xf32>
    %234 = arith.divf %230, %233 : vector<2x6xf32>
    %235 = vector.shape_cast %234 : vector<2x6xf32> to vector<2x6x1xf32>
    %236 = vector.broadcast %235 : vector<2x6x1xf32> to vector<2x6x32xf32>
    %237 = arith.mulf %236, %1 : vector<2x6x32xf32>
    %cst_108 = arith.constant dense<0.000000e+00> : vector<2x32xf32>
    %238 = vector.multi_reduction <add>, %237, %cst_108 [1] : vector<2x6x32xf32> to vector<2x32xf32>
    %c0_109 = arith.constant 0 : index
    %c0_110 = arith.constant 0 : index
    %239 = vector.load %arg4[%c0_109, %c0_110] : memref<32x64xf32, #tpu.memory_space<vmem>>, vector<32x64xf32>
    %cst_111 = arith.constant dense<0.000000e+00> : vector<2x64xf32>
    %240 = tpu.matmul %238, %239, %cst_111 {dimension_numbers = #tpu.dot_dimension_numbers<[1], [0], [0], [1], [0, 0, 1, 1], [], []>} : vector<2x32xf32>, vector<32x64xf32>, vector<2x64xf32> -> vector<2x64xf32>
    %c0_112 = arith.constant 0 : index
    %c0_113 = arith.constant 0 : index
    %241 = vector.load %arg5[%c0_112, %c0_113] : memref<32x64xf32, #tpu.memory_space<vmem>>, vector<32x64xf32>
    %cst_114 = arith.constant dense<0.000000e+00> : vector<2x64xf32>
    %242 = tpu.matmul %219, %241, %cst_114 {dimension_numbers = #tpu.dot_dimension_numbers<[1], [0], [0], [1], [0, 0, 1, 1], [], []>} : vector<2x32xf32>, vector<32x64xf32>, vector<2x64xf32> -> vector<2x64xf32>
    %243 = arith.addf %240, %242 : vector<2x64xf32>
    %c0_115 = arith.constant 0 : index
    %c0_116 = arith.constant 0 : index
    %244 = vector.load %arg6[%c0_115, %c0_116] : memref<1x64xf32, #tpu.memory_space<vmem>>, vector<1x64xf32>
    %245 = vector.broadcast %244 : vector<1x64xf32> to vector<2x64xf32>
    %246 = arith.addf %243, %245 : vector<2x64xf32>
    %247 = math.tanh %246 : vector<2x64xf32>
    %c0_117 = arith.constant 0 : index
    %c0_118 = arith.constant 0 : index
    %248 = vector.load %arg7[%c0_117, %c0_118] : memref<64x12xf32, #tpu.memory_space<vmem>>, vector<64x12xf32>
    %cst_119 = arith.constant dense<0.000000e+00> : vector<2x12xf32>
    %249 = tpu.matmul %247, %248, %cst_119 {dimension_numbers = #tpu.dot_dimension_numbers<[1], [0], [0], [1], [0, 0, 1, 1], [], []>} : vector<2x64xf32>, vector<64x12xf32>, vector<2x12xf32> -> vector<2x12xf32>
    %c0_120 = arith.constant 0 : index
    %c0_121 = arith.constant 0 : index
    %250 = vector.load %arg8[%c0_120, %c0_121] : memref<1x12xf32, #tpu.memory_space<vmem>>, vector<1x12xf32>
    %251 = vector.broadcast %250 : vector<1x12xf32> to vector<2x12xf32>
    %252 = arith.addf %249, %251 : vector<2x12xf32>
    %253 = vector.extract_strided_slice %252 {offsets = [0, 0], sizes = [1, 12], strides = [1, 1]} : vector<2x12xf32> to vector<1x12xf32>
    %c0_122 = arith.constant 0 : index
    %c48 = arith.constant 48 : index
    %254 = vector.load %arg18[%c0_122, %c48] : memref<2x96xf32, #tpu.memory_space<vmem>>, vector<1x12xf32>
    tpu.vector_store %arg18[%c0_122, %c48], %253 {strides = array<i32>} : memref<2x96xf32, #tpu.memory_space<vmem>>, vector<1x12xf32>,
    %255 = vector.extract_strided_slice %252 {offsets = [1, 0], sizes = [1, 12], strides = [1, 1]} : vector<2x12xf32> to vector<1x12xf32>
    %c0_123 = arith.constant 0 : index
    %c60 = arith.constant 60 : index
    %256 = vector.load %arg18[%c0_123, %c60] : memref<2x96xf32, #tpu.memory_space<vmem>>, vector<1x12xf32>
    tpu.vector_store %arg18[%c0_123, %c60], %255 {strides = array<i32>} : memref<2x96xf32, #tpu.memory_space<vmem>>, vector<1x12xf32>,
    %cst_124 = arith.constant dense<0xFF800000> : vector<2xf32>
    %257 = vector.multi_reduction <maximumf>, %252, %cst_124 [1] : vector<2x12xf32> to vector<2xf32>
    %258 = vector.shape_cast %257 : vector<2xf32> to vector<2x1xf32>
    %259 = vector.broadcast %258 : vector<2x1xf32> to vector<2x12xf32>
    %260 = arith.cmpf oeq, %252, %259 : vector<2x12xf32>
    %c12_i32_125 = arith.constant 12 : i32
    %261 = vector.broadcast %c12_i32_125 : i32 to vector<2x12xi32>
    %262 = arith.select %260, %0, %261 : vector<2x12xi1>, vector<2x12xi32>
    %cst_126 = arith.constant dense<2147483647> : vector<2xi32>
    %263 = vector.multi_reduction <minsi>, %262, %cst_126 [1] : vector<2x12xi32> to vector<2xi32>
    %264 = vector.shape_cast %263 : vector<2xi32> to vector<2x1xi32>
    %265 = vector.broadcast %264 : vector<2x1xi32> to vector<2x12xi32>
    %266 = arith.cmpi eq, %0, %265 : vector<2x12xi32>
    %267 = arith.extui %266 : vector<2x12xi1> to vector<2x12xi32>
    %268 = arith.sitofp %267 : vector<2x12xi32> to vector<2x12xf32>
    %c0_127 = arith.constant 0 : index
    %c0_128 = arith.constant 0 : index
    %269 = vector.load %arg0[%c0_127, %c0_128] : memref<12x16xf32, #tpu.memory_space<vmem>>, vector<12x16xf32>
    %cst_129 = arith.constant dense<0.000000e+00> : vector<2x16xf32>
    %270 = tpu.matmul %268, %269, %cst_129 {dimension_numbers = #tpu.dot_dimension_numbers<[1], [0], [0], [1], [0, 0, 1, 1], [], []>} : vector<2x12xf32>, vector<12x16xf32>, vector<2x16xf32> -> vector<2x16xf32>
    %c0_130 = arith.constant 0 : index
    %c0_131 = arith.constant 0 : index
    %271 = vector.load %arg13[%c0_130, %c0_131] : memref<16x96xf32, #tpu.memory_space<vmem>>, vector<16x96xf32>
    %cst_132 = arith.constant dense<0.000000e+00> : vector<2x96xf32>
    %272 = tpu.matmul %270, %271, %cst_132 {dimension_numbers = #tpu.dot_dimension_numbers<[1], [0], [0], [1], [0, 0, 1, 1], [], []>} : vector<2x16xf32>, vector<16x96xf32>, vector<2x96xf32> -> vector<2x96xf32>
    %c0_133 = arith.constant 0 : index
    %c0_134 = arith.constant 0 : index
    %273 = vector.load %arg14[%c0_133, %c0_134] : memref<1x96xf32, #tpu.memory_space<vmem>>, vector<1x96xf32>
    %274 = vector.broadcast %273 : vector<1x96xf32> to vector<2x96xf32>
    %275 = arith.addf %272, %274 : vector<2x96xf32>
    %c0_135 = arith.constant 0 : index
    %c0_136 = arith.constant 0 : index
    %276 = vector.load %arg15[%c0_135, %c0_136] : memref<32x96xf32, #tpu.memory_space<vmem>>, vector<32x96xf32>
    %cst_137 = arith.constant dense<0.000000e+00> : vector<2x96xf32>
    %277 = tpu.matmul %219, %276, %cst_137 {dimension_numbers = #tpu.dot_dimension_numbers<[1], [0], [0], [1], [0, 0, 1, 1], [], []>} : vector<2x32xf32>, vector<32x96xf32>, vector<2x96xf32> -> vector<2x96xf32>
    %c0_138 = arith.constant 0 : index
    %c0_139 = arith.constant 0 : index
    %278 = vector.load %arg16[%c0_138, %c0_139] : memref<1x96xf32, #tpu.memory_space<vmem>>, vector<1x96xf32>
    %279 = vector.broadcast %278 : vector<1x96xf32> to vector<2x96xf32>
    %280 = arith.addf %277, %279 : vector<2x96xf32>
    %281 = vector.extract_strided_slice %275 {offsets = [0, 0], sizes = [2, 32], strides = [1, 1]} : vector<2x96xf32> to vector<2x32xf32>
    %282 = vector.extract_strided_slice %280 {offsets = [0, 0], sizes = [2, 32], strides = [1, 1]} : vector<2x96xf32> to vector<2x32xf32>
    %283 = arith.addf %281, %282 : vector<2x32xf32>
    %284 = arith.negf %283 : vector<2x32xf32>
    %285 = math.exp %284 : vector<2x32xf32>
    %cst_140 = arith.constant 1.000000e+00 : f32
    %286 = vector.broadcast %cst_140 : f32 to vector<2x32xf32>
    %287 = arith.addf %286, %285 : vector<2x32xf32>
    %288 = arith.divf %286, %287 : vector<2x32xf32>
    %289 = vector.extract_strided_slice %275 {offsets = [0, 32], sizes = [2, 32], strides = [1, 1]} : vector<2x96xf32> to vector<2x32xf32>
    %290 = vector.extract_strided_slice %280 {offsets = [0, 32], sizes = [2, 32], strides = [1, 1]} : vector<2x96xf32> to vector<2x32xf32>
    %291 = arith.addf %289, %290 : vector<2x32xf32>
    %292 = arith.negf %291 : vector<2x32xf32>
    %293 = math.exp %292 : vector<2x32xf32>
    %cst_141 = arith.constant 1.000000e+00 : f32
    %294 = vector.broadcast %cst_141 : f32 to vector<2x32xf32>
    %295 = arith.addf %294, %293 : vector<2x32xf32>
    %296 = arith.divf %294, %295 : vector<2x32xf32>
    %297 = vector.extract_strided_slice %275 {offsets = [0, 64], sizes = [2, 32], strides = [1, 1]} : vector<2x96xf32> to vector<2x32xf32>
    %298 = vector.extract_strided_slice %280 {offsets = [0, 64], sizes = [2, 32], strides = [1, 1]} : vector<2x96xf32> to vector<2x32xf32>
    %299 = arith.mulf %288, %298 : vector<2x32xf32>
    %300 = arith.addf %297, %299 : vector<2x32xf32>
    %301 = math.tanh %300 : vector<2x32xf32>
    %cst_142 = arith.constant 1.000000e+00 : f32
    %302 = vector.broadcast %cst_142 : f32 to vector<2x32xf32>
    %303 = arith.subf %302, %296 : vector<2x32xf32>
    %304 = arith.mulf %303, %301 : vector<2x32xf32>
    %305 = arith.mulf %296, %219 : vector<2x32xf32>
    %306 = arith.addf %304, %305 : vector<2x32xf32>
    %c0_143 = arith.constant 0 : index
    %c0_144 = arith.constant 0 : index
    %307 = vector.load %arg3[%c0_143, %c0_144] : memref<32x32xf32, #tpu.memory_space<vmem>>, vector<32x32xf32>
    %cst_145 = arith.constant dense<0.000000e+00> : vector<2x32xf32>
    %308 = tpu.matmul %306, %307, %cst_145 {dimension_numbers = #tpu.dot_dimension_numbers<[1], [0], [0], [1], [0, 0, 1, 1], [], []>} : vector<2x32xf32>, vector<32x32xf32>, vector<2x32xf32> -> vector<2x32xf32>
    %309 = vector.shape_cast %308 : vector<2x32xf32> to vector<2x1x32xf32>
    %310 = vector.broadcast %309 : vector<2x1x32xf32> to vector<2x6x32xf32>
    %311 = arith.mulf %310, %1 : vector<2x6x32xf32>
    %cst_146 = arith.constant dense<0.000000e+00> : vector<2x6xf32>
    %312 = vector.multi_reduction <add>, %311, %cst_146 [2] : vector<2x6x32xf32> to vector<2x6xf32>
    %cst_147 = arith.constant dense<0xFF800000> : vector<2xf32>
    %313 = vector.multi_reduction <maximumf>, %312, %cst_147 [1] : vector<2x6xf32> to vector<2xf32>
    %314 = vector.shape_cast %313 : vector<2xf32> to vector<2x1xf32>
    %315 = vector.broadcast %314 : vector<2x1xf32> to vector<2x6xf32>
    %316 = arith.subf %312, %315 : vector<2x6xf32>
    %317 = math.exp %316 : vector<2x6xf32>
    %cst_148 = arith.constant dense<0.000000e+00> : vector<2xf32>
    %318 = vector.multi_reduction <add>, %317, %cst_148 [1] : vector<2x6xf32> to vector<2xf32>
    %319 = vector.shape_cast %318 : vector<2xf32> to vector<2x1xf32>
    %320 = vector.broadcast %319 : vector<2x1xf32> to vector<2x6xf32>
    %321 = arith.divf %317, %320 : vector<2x6xf32>
    %322 = vector.shape_cast %321 : vector<2x6xf32> to vector<2x6x1xf32>
    %323 = vector.broadcast %322 : vector<2x6x1xf32> to vector<2x6x32xf32>
    %324 = arith.mulf %323, %1 : vector<2x6x32xf32>
    %cst_149 = arith.constant dense<0.000000e+00> : vector<2x32xf32>
    %325 = vector.multi_reduction <add>, %324, %cst_149 [1] : vector<2x6x32xf32> to vector<2x32xf32>
    %c0_150 = arith.constant 0 : index
    %c0_151 = arith.constant 0 : index
    %326 = vector.load %arg4[%c0_150, %c0_151] : memref<32x64xf32, #tpu.memory_space<vmem>>, vector<32x64xf32>
    %cst_152 = arith.constant dense<0.000000e+00> : vector<2x64xf32>
    %327 = tpu.matmul %325, %326, %cst_152 {dimension_numbers = #tpu.dot_dimension_numbers<[1], [0], [0], [1], [0, 0, 1, 1], [], []>} : vector<2x32xf32>, vector<32x64xf32>, vector<2x64xf32> -> vector<2x64xf32>
    %c0_153 = arith.constant 0 : index
    %c0_154 = arith.constant 0 : index
    %328 = vector.load %arg5[%c0_153, %c0_154] : memref<32x64xf32, #tpu.memory_space<vmem>>, vector<32x64xf32>
    %cst_155 = arith.constant dense<0.000000e+00> : vector<2x64xf32>
    %329 = tpu.matmul %306, %328, %cst_155 {dimension_numbers = #tpu.dot_dimension_numbers<[1], [0], [0], [1], [0, 0, 1, 1], [], []>} : vector<2x32xf32>, vector<32x64xf32>, vector<2x64xf32> -> vector<2x64xf32>
    %330 = arith.addf %327, %329 : vector<2x64xf32>
    %c0_156 = arith.constant 0 : index
    %c0_157 = arith.constant 0 : index
    %331 = vector.load %arg6[%c0_156, %c0_157] : memref<1x64xf32, #tpu.memory_space<vmem>>, vector<1x64xf32>
    %332 = vector.broadcast %331 : vector<1x64xf32> to vector<2x64xf32>
    %333 = arith.addf %330, %332 : vector<2x64xf32>
    %334 = math.tanh %333 : vector<2x64xf32>
    %c0_158 = arith.constant 0 : index
    %c0_159 = arith.constant 0 : index
    %335 = vector.load %arg7[%c0_158, %c0_159] : memref<64x12xf32, #tpu.memory_space<vmem>>, vector<64x12xf32>
    %cst_160 = arith.constant dense<0.000000e+00> : vector<2x12xf32>
    %336 = tpu.matmul %334, %335, %cst_160 {dimension_numbers = #tpu.dot_dimension_numbers<[1], [0], [0], [1], [0, 0, 1, 1], [], []>} : vector<2x64xf32>, vector<64x12xf32>, vector<2x12xf32> -> vector<2x12xf32>
    %c0_161 = arith.constant 0 : index
    %c0_162 = arith.constant 0 : index
    %337 = vector.load %arg8[%c0_161, %c0_162] : memref<1x12xf32, #tpu.memory_space<vmem>>, vector<1x12xf32>
    %338 = vector.broadcast %337 : vector<1x12xf32> to vector<2x12xf32>
    %339 = arith.addf %336, %338 : vector<2x12xf32>
    %340 = vector.extract_strided_slice %339 {offsets = [0, 0], sizes = [1, 12], strides = [1, 1]} : vector<2x12xf32> to vector<1x12xf32>
    %c0_163 = arith.constant 0 : index
    %c72 = arith.constant 72 : index
    %341 = vector.load %arg18[%c0_163, %c72] : memref<2x96xf32, #tpu.memory_space<vmem>>, vector<1x12xf32>
    tpu.vector_store %arg18[%c0_163, %c72], %340 {strides = array<i32>} : memref<2x96xf32, #tpu.memory_space<vmem>>, vector<1x12xf32>,
    %342 = vector.extract_strided_slice %339 {offsets = [1, 0], sizes = [1, 12], strides = [1, 1]} : vector<2x12xf32> to vector<1x12xf32>
    %c0_164 = arith.constant 0 : index
    %c84 = arith.constant 84 : index
    %343 = vector.load %arg18[%c0_164, %c84] : memref<2x96xf32, #tpu.memory_space<vmem>>, vector<1x12xf32>
    tpu.vector_store %arg18[%c0_164, %c84], %342 {strides = array<i32>} : memref<2x96xf32, #tpu.memory_space<vmem>>, vector<1x12xf32>,
    %cst_165 = arith.constant dense<0xFF800000> : vector<2xf32>
    %344 = vector.multi_reduction <maximumf>, %339, %cst_165 [1] : vector<2x12xf32> to vector<2xf32>
    %345 = vector.shape_cast %344 : vector<2xf32> to vector<2x1xf32>
    %346 = vector.broadcast %345 : vector<2x1xf32> to vector<2x12xf32>
    %347 = arith.cmpf oeq, %339, %346 : vector<2x12xf32>
    %c12_i32_166 = arith.constant 12 : i32
    %348 = vector.broadcast %c12_i32_166 : i32 to vector<2x12xi32>
    %349 = arith.select %347, %0, %348 : vector<2x12xi1>, vector<2x12xi32>
    %cst_167 = arith.constant dense<2147483647> : vector<2xi32>
    %350 = vector.multi_reduction <minsi>, %349, %cst_167 [1] : vector<2x12xi32> to vector<2xi32>
    %351 = vector.shape_cast %350 : vector<2xi32> to vector<2x1xi32>
    %352 = vector.broadcast %351 : vector<2x1xi32> to vector<2x12xi32>
    %353 = arith.cmpi eq, %0, %352 : vector<2x12xi32>
    %354 = arith.extui %353 : vector<2x12xi1> to vector<2x12xi32>
    %355 = arith.sitofp %354 : vector<2x12xi32> to vector<2x12xf32>
    %c0_168 = arith.constant 0 : index
    %c0_169 = arith.constant 0 : index
    %356 = vector.load %arg0[%c0_168, %c0_169] : memref<12x16xf32, #tpu.memory_space<vmem>>, vector<12x16xf32>
    %cst_170 = arith.constant dense<0.000000e+00> : vector<2x16xf32>
    %357 = tpu.matmul %355, %356, %cst_170 {dimension_numbers = #tpu.dot_dimension_numbers<[1], [0], [0], [1], [0, 0, 1, 1], [], []>} : vector<2x12xf32>, vector<12x16xf32>, vector<2x16xf32> -> vector<2x16xf32>
    %c0_171 = arith.constant 0 : index
    %c0_172 = arith.constant 0 : index
    %358 = vector.load %arg13[%c0_171, %c0_172] : memref<16x96xf32, #tpu.memory_space<vmem>>, vector<16x96xf32>
    %cst_173 = arith.constant dense<0.000000e+00> : vector<2x96xf32>
    %359 = tpu.matmul %357, %358, %cst_173 {dimension_numbers = #tpu.dot_dimension_numbers<[1], [0], [0], [1], [0, 0, 1, 1], [], []>} : vector<2x16xf32>, vector<16x96xf32>, vector<2x96xf32> -> vector<2x96xf32>
    %c0_174 = arith.constant 0 : index
    %c0_175 = arith.constant 0 : index
    %360 = vector.load %arg14[%c0_174, %c0_175] : memref<1x96xf32, #tpu.memory_space<vmem>>, vector<1x96xf32>
    %361 = vector.broadcast %360 : vector<1x96xf32> to vector<2x96xf32>
    %362 = arith.addf %359, %361 : vector<2x96xf32>
    %c0_176 = arith.constant 0 : index
    %c0_177 = arith.constant 0 : index
    %363 = vector.load %arg15[%c0_176, %c0_177] : memref<32x96xf32, #tpu.memory_space<vmem>>, vector<32x96xf32>
    %cst_178 = arith.constant dense<0.000000e+00> : vector<2x96xf32>
    %364 = tpu.matmul %306, %363, %cst_178 {dimension_numbers = #tpu.dot_dimension_numbers<[1], [0], [0], [1], [0, 0, 1, 1], [], []>} : vector<2x32xf32>, vector<32x96xf32>, vector<2x96xf32> -> vector<2x96xf32>
    %c0_179 = arith.constant 0 : index
    %c0_180 = arith.constant 0 : index
    %365 = vector.load %arg16[%c0_179, %c0_180] : memref<1x96xf32, #tpu.memory_space<vmem>>, vector<1x96xf32>
    %366 = vector.broadcast %365 : vector<1x96xf32> to vector<2x96xf32>
    %367 = arith.addf %364, %366 : vector<2x96xf32>
    %368 = vector.extract_strided_slice %362 {offsets = [0, 0], sizes = [2, 32], strides = [1, 1]} : vector<2x96xf32> to vector<2x32xf32>
    %369 = vector.extract_strided_slice %367 {offsets = [0, 0], sizes = [2, 32], strides = [1, 1]} : vector<2x96xf32> to vector<2x32xf32>
    %370 = arith.addf %368, %369 : vector<2x32xf32>
    %371 = arith.negf %370 : vector<2x32xf32>
    %372 = math.exp %371 : vector<2x32xf32>
    %cst_181 = arith.constant 1.000000e+00 : f32
    %373 = vector.broadcast %cst_181 : f32 to vector<2x32xf32>
    %374 = arith.addf %373, %372 : vector<2x32xf32>
    %375 = arith.divf %373, %374 : vector<2x32xf32>
    %376 = vector.extract_strided_slice %362 {offsets = [0, 32], sizes = [2, 32], strides = [1, 1]} : vector<2x96xf32> to vector<2x32xf32>
    %377 = vector.extract_strided_slice %367 {offsets = [0, 32], sizes = [2, 32], strides = [1, 1]} : vector<2x96xf32> to vector<2x32xf32>
    %378 = arith.addf %376, %377 : vector<2x32xf32>
    %379 = arith.negf %378 : vector<2x32xf32>
    %380 = math.exp %379 : vector<2x32xf32>
    %cst_182 = arith.constant 1.000000e+00 : f32
    %381 = vector.broadcast %cst_182 : f32 to vector<2x32xf32>
    %382 = arith.addf %381, %380 : vector<2x32xf32>
    %383 = arith.divf %381, %382 : vector<2x32xf32>
    %384 = vector.extract_strided_slice %362 {offsets = [0, 64], sizes = [2, 32], strides = [1, 1]} : vector<2x96xf32> to vector<2x32xf32>
    %385 = vector.extract_strided_slice %367 {offsets = [0, 64], sizes = [2, 32], strides = [1, 1]} : vector<2x96xf32> to vector<2x32xf32>
    %386 = arith.mulf %375, %385 : vector<2x32xf32>
    %387 = arith.addf %384, %386 : vector<2x32xf32>
    %388 = math.tanh %387 : vector<2x32xf32>
    %cst_183 = arith.constant 1.000000e+00 : f32
    %389 = vector.broadcast %cst_183 : f32 to vector<2x32xf32>
    %390 = arith.subf %389, %383 : vector<2x32xf32>
    %391 = arith.mulf %390, %388 : vector<2x32xf32>
    %392 = arith.mulf %383, %306 : vector<2x32xf32>
    %393 = arith.addf %391, %392 : vector<2x32xf32>
    %c0_184 = arith.constant 0 : index
    %c0_185 = arith.constant 0 : index
    %394 = vector.load %arg3[%c0_184, %c0_185] : memref<32x32xf32, #tpu.memory_space<vmem>>, vector<32x32xf32>
    %cst_186 = arith.constant dense<0.000000e+00> : vector<2x32xf32>
    %395 = tpu.matmul %393, %394, %cst_186 {dimension_numbers = #tpu.dot_dimension_numbers<[1], [0], [0], [1], [0, 0, 1, 1], [], []>} : vector<2x32xf32>, vector<32x32xf32>, vector<2x32xf32> -> vector<2x32xf32>
    %396 = vector.shape_cast %395 : vector<2x32xf32> to vector<2x1x32xf32>
    %397 = vector.broadcast %396 : vector<2x1x32xf32> to vector<2x6x32xf32>
    %398 = arith.mulf %397, %1 : vector<2x6x32xf32>
    %cst_187 = arith.constant dense<0.000000e+00> : vector<2x6xf32>
    %399 = vector.multi_reduction <add>, %398, %cst_187 [2] : vector<2x6x32xf32> to vector<2x6xf32>
    %cst_188 = arith.constant dense<0xFF800000> : vector<2xf32>
    %400 = vector.multi_reduction <maximumf>, %399, %cst_188 [1] : vector<2x6xf32> to vector<2xf32>
    %401 = vector.shape_cast %400 : vector<2xf32> to vector<2x1xf32>
    %402 = vector.broadcast %401 : vector<2x1xf32> to vector<2x6xf32>
    %403 = arith.subf %399, %402 : vector<2x6xf32>
    %404 = math.exp %403 : vector<2x6xf32>
    %cst_189 = arith.constant dense<0.000000e+00> : vector<2xf32>
    %405 = vector.multi_reduction <add>, %404, %cst_189 [1] : vector<2x6xf32> to vector<2xf32>
    %406 = vector.shape_cast %405 : vector<2xf32> to vector<2x1xf32>
    %407 = vector.broadcast %406 : vector<2x1xf32> to vector<2x6xf32>
    %408 = arith.divf %404, %407 : vector<2x6xf32>
    %409 = vector.shape_cast %408 : vector<2x6xf32> to vector<2x6x1xf32>
    %410 = vector.broadcast %409 : vector<2x6x1xf32> to vector<2x6x32xf32>
    %411 = arith.mulf %410, %1 : vector<2x6x32xf32>
    %cst_190 = arith.constant dense<0.000000e+00> : vector<2x32xf32>
    %412 = vector.multi_reduction <add>, %411, %cst_190 [1] : vector<2x6x32xf32> to vector<2x32xf32>
    %c0_191 = arith.constant 0 : index
    %c0_192 = arith.constant 0 : index
    %413 = vector.load %arg4[%c0_191, %c0_192] : memref<32x64xf32, #tpu.memory_space<vmem>>, vector<32x64xf32>
    %cst_193 = arith.constant dense<0.000000e+00> : vector<2x64xf32>
    %414 = tpu.matmul %412, %413, %cst_193 {dimension_numbers = #tpu.dot_dimension_numbers<[1], [0], [0], [1], [0, 0, 1, 1], [], []>} : vector<2x32xf32>, vector<32x64xf32>, vector<2x64xf32> -> vector<2x64xf32>
    %c0_194 = arith.constant 0 : index
    %c0_195 = arith.constant 0 : index
    %415 = vector.load %arg5[%c0_194, %c0_195] : memref<32x64xf32, #tpu.memory_space<vmem>>, vector<32x64xf32>
    %cst_196 = arith.constant dense<0.000000e+00> : vector<2x64xf32>
    %416 = tpu.matmul %393, %415, %cst_196 {dimension_numbers = #tpu.dot_dimension_numbers<[1], [0], [0], [1], [0, 0, 1, 1], [], []>} : vector<2x32xf32>, vector<32x64xf32>, vector<2x64xf32> -> vector<2x64xf32>
    %417 = arith.addf %414, %416 : vector<2x64xf32>
    %c0_197 = arith.constant 0 : index
    %c0_198 = arith.constant 0 : index
    %418 = vector.load %arg6[%c0_197, %c0_198] : memref<1x64xf32, #tpu.memory_space<vmem>>, vector<1x64xf32>
    %419 = vector.broadcast %418 : vector<1x64xf32> to vector<2x64xf32>
    %420 = arith.addf %417, %419 : vector<2x64xf32>
    %421 = math.tanh %420 : vector<2x64xf32>
    %c0_199 = arith.constant 0 : index
    %c0_200 = arith.constant 0 : index
    %422 = vector.load %arg7[%c0_199, %c0_200] : memref<64x12xf32, #tpu.memory_space<vmem>>, vector<64x12xf32>
    %cst_201 = arith.constant dense<0.000000e+00> : vector<2x12xf32>
    %423 = tpu.matmul %421, %422, %cst_201 {dimension_numbers = #tpu.dot_dimension_numbers<[1], [0], [0], [1], [0, 0, 1, 1], [], []>} : vector<2x64xf32>, vector<64x12xf32>, vector<2x12xf32> -> vector<2x12xf32>
    %c0_202 = arith.constant 0 : index
    %c0_203 = arith.constant 0 : index
    %424 = vector.load %arg8[%c0_202, %c0_203] : memref<1x12xf32, #tpu.memory_space<vmem>>, vector<1x12xf32>
    %425 = vector.broadcast %424 : vector<1x12xf32> to vector<2x12xf32>
    %426 = arith.addf %423, %425 : vector<2x12xf32>
    %427 = vector.extract_strided_slice %426 {offsets = [0, 0], sizes = [1, 12], strides = [1, 1]} : vector<2x12xf32> to vector<1x12xf32>
    %c1 = arith.constant 1 : index
    %c0_204 = arith.constant 0 : index
    %428 = vector.load %arg18[%c1, %c0_204] : memref<2x96xf32, #tpu.memory_space<vmem>>, vector<1x12xf32>
    tpu.vector_store %arg18[%c1, %c0_204], %427 {strides = array<i32>} : memref<2x96xf32, #tpu.memory_space<vmem>>, vector<1x12xf32>,
    %429 = vector.extract_strided_slice %426 {offsets = [1, 0], sizes = [1, 12], strides = [1, 1]} : vector<2x12xf32> to vector<1x12xf32>
    %c1_205 = arith.constant 1 : index
    %c12_206 = arith.constant 12 : index
    %430 = vector.load %arg18[%c1_205, %c12_206] : memref<2x96xf32, #tpu.memory_space<vmem>>, vector<1x12xf32>
    tpu.vector_store %arg18[%c1_205, %c12_206], %429 {strides = array<i32>} : memref<2x96xf32, #tpu.memory_space<vmem>>, vector<1x12xf32>,
    %cst_207 = arith.constant dense<0xFF800000> : vector<2xf32>
    %431 = vector.multi_reduction <maximumf>, %426, %cst_207 [1] : vector<2x12xf32> to vector<2xf32>
    %432 = vector.shape_cast %431 : vector<2xf32> to vector<2x1xf32>
    %433 = vector.broadcast %432 : vector<2x1xf32> to vector<2x12xf32>
    %434 = arith.cmpf oeq, %426, %433 : vector<2x12xf32>
    %c12_i32_208 = arith.constant 12 : i32
    %435 = vector.broadcast %c12_i32_208 : i32 to vector<2x12xi32>
    %436 = arith.select %434, %0, %435 : vector<2x12xi1>, vector<2x12xi32>
    %cst_209 = arith.constant dense<2147483647> : vector<2xi32>
    %437 = vector.multi_reduction <minsi>, %436, %cst_209 [1] : vector<2x12xi32> to vector<2xi32>
    %438 = vector.shape_cast %437 : vector<2xi32> to vector<2x1xi32>
    %439 = vector.broadcast %438 : vector<2x1xi32> to vector<2x12xi32>
    %440 = arith.cmpi eq, %0, %439 : vector<2x12xi32>
    %441 = arith.extui %440 : vector<2x12xi1> to vector<2x12xi32>
    %442 = arith.sitofp %441 : vector<2x12xi32> to vector<2x12xf32>
    %c0_210 = arith.constant 0 : index
    %c0_211 = arith.constant 0 : index
    %443 = vector.load %arg0[%c0_210, %c0_211] : memref<12x16xf32, #tpu.memory_space<vmem>>, vector<12x16xf32>
    %cst_212 = arith.constant dense<0.000000e+00> : vector<2x16xf32>
    %444 = tpu.matmul %442, %443, %cst_212 {dimension_numbers = #tpu.dot_dimension_numbers<[1], [0], [0], [1], [0, 0, 1, 1], [], []>} : vector<2x12xf32>, vector<12x16xf32>, vector<2x16xf32> -> vector<2x16xf32>
    %c0_213 = arith.constant 0 : index
    %c0_214 = arith.constant 0 : index
    %445 = vector.load %arg13[%c0_213, %c0_214] : memref<16x96xf32, #tpu.memory_space<vmem>>, vector<16x96xf32>
    %cst_215 = arith.constant dense<0.000000e+00> : vector<2x96xf32>
    %446 = tpu.matmul %444, %445, %cst_215 {dimension_numbers = #tpu.dot_dimension_numbers<[1], [0], [0], [1], [0, 0, 1, 1], [], []>} : vector<2x16xf32>, vector<16x96xf32>, vector<2x96xf32> -> vector<2x96xf32>
    %c0_216 = arith.constant 0 : index
    %c0_217 = arith.constant 0 : index
    %447 = vector.load %arg14[%c0_216, %c0_217] : memref<1x96xf32, #tpu.memory_space<vmem>>, vector<1x96xf32>
    %448 = vector.broadcast %447 : vector<1x96xf32> to vector<2x96xf32>
    %449 = arith.addf %446, %448 : vector<2x96xf32>
    %c0_218 = arith.constant 0 : index
    %c0_219 = arith.constant 0 : index
    %450 = vector.load %arg15[%c0_218, %c0_219] : memref<32x96xf32, #tpu.memory_space<vmem>>, vector<32x96xf32>
    %cst_220 = arith.constant dense<0.000000e+00> : vector<2x96xf32>
    %451 = tpu.matmul %393, %450, %cst_220 {dimension_numbers = #tpu.dot_dimension_numbers<[1], [0], [0], [1], [0, 0, 1, 1], [], []>} : vector<2x32xf32>, vector<32x96xf32>, vector<2x96xf32> -> vector<2x96xf32>
    %c0_221 = arith.constant 0 : index
    %c0_222 = arith.constant 0 : index
    %452 = vector.load %arg16[%c0_221, %c0_222] : memref<1x96xf32, #tpu.memory_space<vmem>>, vector<1x96xf32>
    %453 = vector.broadcast %452 : vector<1x96xf32> to vector<2x96xf32>
    %454 = arith.addf %451, %453 : vector<2x96xf32>
    %455 = vector.extract_strided_slice %449 {offsets = [0, 0], sizes = [2, 32], strides = [1, 1]} : vector<2x96xf32> to vector<2x32xf32>
    %456 = vector.extract_strided_slice %454 {offsets = [0, 0], sizes = [2, 32], strides = [1, 1]} : vector<2x96xf32> to vector<2x32xf32>
    %457 = arith.addf %455, %456 : vector<2x32xf32>
    %458 = arith.negf %457 : vector<2x32xf32>
    %459 = math.exp %458 : vector<2x32xf32>
    %cst_223 = arith.constant 1.000000e+00 : f32
    %460 = vector.broadcast %cst_223 : f32 to vector<2x32xf32>
    %461 = arith.addf %460, %459 : vector<2x32xf32>
    %462 = arith.divf %460, %461 : vector<2x32xf32>
    %463 = vector.extract_strided_slice %449 {offsets = [0, 32], sizes = [2, 32], strides = [1, 1]} : vector<2x96xf32> to vector<2x32xf32>
    %464 = vector.extract_strided_slice %454 {offsets = [0, 32], sizes = [2, 32], strides = [1, 1]} : vector<2x96xf32> to vector<2x32xf32>
    %465 = arith.addf %463, %464 : vector<2x32xf32>
    %466 = arith.negf %465 : vector<2x32xf32>
    %467 = math.exp %466 : vector<2x32xf32>
    %cst_224 = arith.constant 1.000000e+00 : f32
    %468 = vector.broadcast %cst_224 : f32 to vector<2x32xf32>
    %469 = arith.addf %468, %467 : vector<2x32xf32>
    %470 = arith.divf %468, %469 : vector<2x32xf32>
    %471 = vector.extract_strided_slice %449 {offsets = [0, 64], sizes = [2, 32], strides = [1, 1]} : vector<2x96xf32> to vector<2x32xf32>
    %472 = vector.extract_strided_slice %454 {offsets = [0, 64], sizes = [2, 32], strides = [1, 1]} : vector<2x96xf32> to vector<2x32xf32>
    %473 = arith.mulf %462, %472 : vector<2x32xf32>
    %474 = arith.addf %471, %473 : vector<2x32xf32>
    %475 = math.tanh %474 : vector<2x32xf32>
    %cst_225 = arith.constant 1.000000e+00 : f32
    %476 = vector.broadcast %cst_225 : f32 to vector<2x32xf32>
    %477 = arith.subf %476, %470 : vector<2x32xf32>
    %478 = arith.mulf %477, %475 : vector<2x32xf32>
    %479 = arith.mulf %470, %393 : vector<2x32xf32>
    %480 = arith.addf %478, %479 : vector<2x32xf32>
    %c0_226 = arith.constant 0 : index
    %c0_227 = arith.constant 0 : index
    %481 = vector.load %arg3[%c0_226, %c0_227] : memref<32x32xf32, #tpu.memory_space<vmem>>, vector<32x32xf32>
    %cst_228 = arith.constant dense<0.000000e+00> : vector<2x32xf32>
    %482 = tpu.matmul %480, %481, %cst_228 {dimension_numbers = #tpu.dot_dimension_numbers<[1], [0], [0], [1], [0, 0, 1, 1], [], []>} : vector<2x32xf32>, vector<32x32xf32>, vector<2x32xf32> -> vector<2x32xf32>
    %483 = vector.shape_cast %482 : vector<2x32xf32> to vector<2x1x32xf32>
    %484 = vector.broadcast %483 : vector<2x1x32xf32> to vector<2x6x32xf32>
    %485 = arith.mulf %484, %1 : vector<2x6x32xf32>
    %cst_229 = arith.constant dense<0.000000e+00> : vector<2x6xf32>
    %486 = vector.multi_reduction <add>, %485, %cst_229 [2] : vector<2x6x32xf32> to vector<2x6xf32>
    %cst_230 = arith.constant dense<0xFF800000> : vector<2xf32>
    %487 = vector.multi_reduction <maximumf>, %486, %cst_230 [1] : vector<2x6xf32> to vector<2xf32>
    %488 = vector.shape_cast %487 : vector<2xf32> to vector<2x1xf32>
    %489 = vector.broadcast %488 : vector<2x1xf32> to vector<2x6xf32>
    %490 = arith.subf %486, %489 : vector<2x6xf32>
    %491 = math.exp %490 : vector<2x6xf32>
    %cst_231 = arith.constant dense<0.000000e+00> : vector<2xf32>
    %492 = vector.multi_reduction <add>, %491, %cst_231 [1] : vector<2x6xf32> to vector<2xf32>
    %493 = vector.shape_cast %492 : vector<2xf32> to vector<2x1xf32>
    %494 = vector.broadcast %493 : vector<2x1xf32> to vector<2x6xf32>
    %495 = arith.divf %491, %494 : vector<2x6xf32>
    %496 = vector.shape_cast %495 : vector<2x6xf32> to vector<2x6x1xf32>
    %497 = vector.broadcast %496 : vector<2x6x1xf32> to vector<2x6x32xf32>
    %498 = arith.mulf %497, %1 : vector<2x6x32xf32>
    %cst_232 = arith.constant dense<0.000000e+00> : vector<2x32xf32>
    %499 = vector.multi_reduction <add>, %498, %cst_232 [1] : vector<2x6x32xf32> to vector<2x32xf32>
    %c0_233 = arith.constant 0 : index
    %c0_234 = arith.constant 0 : index
    %500 = vector.load %arg4[%c0_233, %c0_234] : memref<32x64xf32, #tpu.memory_space<vmem>>, vector<32x64xf32>
    %cst_235 = arith.constant dense<0.000000e+00> : vector<2x64xf32>
    %501 = tpu.matmul %499, %500, %cst_235 {dimension_numbers = #tpu.dot_dimension_numbers<[1], [0], [0], [1], [0, 0, 1, 1], [], []>} : vector<2x32xf32>, vector<32x64xf32>, vector<2x64xf32> -> vector<2x64xf32>
    %c0_236 = arith.constant 0 : index
    %c0_237 = arith.constant 0 : index
    %502 = vector.load %arg5[%c0_236, %c0_237] : memref<32x64xf32, #tpu.memory_space<vmem>>, vector<32x64xf32>
    %cst_238 = arith.constant dense<0.000000e+00> : vector<2x64xf32>
    %503 = tpu.matmul %480, %502, %cst_238 {dimension_numbers = #tpu.dot_dimension_numbers<[1], [0], [0], [1], [0, 0, 1, 1], [], []>} : vector<2x32xf32>, vector<32x64xf32>, vector<2x64xf32> -> vector<2x64xf32>
    %504 = arith.addf %501, %503 : vector<2x64xf32>
    %c0_239 = arith.constant 0 : index
    %c0_240 = arith.constant 0 : index
    %505 = vector.load %arg6[%c0_239, %c0_240] : memref<1x64xf32, #tpu.memory_space<vmem>>, vector<1x64xf32>
    %506 = vector.broadcast %505 : vector<1x64xf32> to vector<2x64xf32>
    %507 = arith.addf %504, %506 : vector<2x64xf32>
    %508 = math.tanh %507 : vector<2x64xf32>
    %c0_241 = arith.constant 0 : index
    %c0_242 = arith.constant 0 : index
    %509 = vector.load %arg7[%c0_241, %c0_242] : memref<64x12xf32, #tpu.memory_space<vmem>>, vector<64x12xf32>
    %cst_243 = arith.constant dense<0.000000e+00> : vector<2x12xf32>
    %510 = tpu.matmul %508, %509, %cst_243 {dimension_numbers = #tpu.dot_dimension_numbers<[1], [0], [0], [1], [0, 0, 1, 1], [], []>} : vector<2x64xf32>, vector<64x12xf32>, vector<2x12xf32> -> vector<2x12xf32>
    %c0_244 = arith.constant 0 : index
    %c0_245 = arith.constant 0 : index
    %511 = vector.load %arg8[%c0_244, %c0_245] : memref<1x12xf32, #tpu.memory_space<vmem>>, vector<1x12xf32>
    %512 = vector.broadcast %511 : vector<1x12xf32> to vector<2x12xf32>
    %513 = arith.addf %510, %512 : vector<2x12xf32>
    %514 = vector.extract_strided_slice %513 {offsets = [0, 0], sizes = [1, 12], strides = [1, 1]} : vector<2x12xf32> to vector<1x12xf32>
    %c1_246 = arith.constant 1 : index
    %c24_247 = arith.constant 24 : index
    %515 = vector.load %arg18[%c1_246, %c24_247] : memref<2x96xf32, #tpu.memory_space<vmem>>, vector<1x12xf32>
    tpu.vector_store %arg18[%c1_246, %c24_247], %514 {strides = array<i32>} : memref<2x96xf32, #tpu.memory_space<vmem>>, vector<1x12xf32>,
    %516 = vector.extract_strided_slice %513 {offsets = [1, 0], sizes = [1, 12], strides = [1, 1]} : vector<2x12xf32> to vector<1x12xf32>
    %c1_248 = arith.constant 1 : index
    %c36_249 = arith.constant 36 : index
    %517 = vector.load %arg18[%c1_248, %c36_249] : memref<2x96xf32, #tpu.memory_space<vmem>>, vector<1x12xf32>
    tpu.vector_store %arg18[%c1_248, %c36_249], %516 {strides = array<i32>} : memref<2x96xf32, #tpu.memory_space<vmem>>, vector<1x12xf32>,
    %cst_250 = arith.constant dense<0xFF800000> : vector<2xf32>
    %518 = vector.multi_reduction <maximumf>, %513, %cst_250 [1] : vector<2x12xf32> to vector<2xf32>
    %519 = vector.shape_cast %518 : vector<2xf32> to vector<2x1xf32>
    %520 = vector.broadcast %519 : vector<2x1xf32> to vector<2x12xf32>
    %521 = arith.cmpf oeq, %513, %520 : vector<2x12xf32>
    %c12_i32_251 = arith.constant 12 : i32
    %522 = vector.broadcast %c12_i32_251 : i32 to vector<2x12xi32>
    %523 = arith.select %521, %0, %522 : vector<2x12xi1>, vector<2x12xi32>
    %cst_252 = arith.constant dense<2147483647> : vector<2xi32>
    %524 = vector.multi_reduction <minsi>, %523, %cst_252 [1] : vector<2x12xi32> to vector<2xi32>
    %525 = vector.shape_cast %524 : vector<2xi32> to vector<2x1xi32>
    %526 = vector.broadcast %525 : vector<2x1xi32> to vector<2x12xi32>
    %527 = arith.cmpi eq, %0, %526 : vector<2x12xi32>
    %528 = arith.extui %527 : vector<2x12xi1> to vector<2x12xi32>
    %529 = arith.sitofp %528 : vector<2x12xi32> to vector<2x12xf32>
    %c0_253 = arith.constant 0 : index
    %c0_254 = arith.constant 0 : index
    %530 = vector.load %arg0[%c0_253, %c0_254] : memref<12x16xf32, #tpu.memory_space<vmem>>, vector<12x16xf32>
    %cst_255 = arith.constant dense<0.000000e+00> : vector<2x16xf32>
    %531 = tpu.matmul %529, %530, %cst_255 {dimension_numbers = #tpu.dot_dimension_numbers<[1], [0], [0], [1], [0, 0, 1, 1], [], []>} : vector<2x12xf32>, vector<12x16xf32>, vector<2x16xf32> -> vector<2x16xf32>
    %c0_256 = arith.constant 0 : index
    %c0_257 = arith.constant 0 : index
    %532 = vector.load %arg13[%c0_256, %c0_257] : memref<16x96xf32, #tpu.memory_space<vmem>>, vector<16x96xf32>
    %cst_258 = arith.constant dense<0.000000e+00> : vector<2x96xf32>
    %533 = tpu.matmul %531, %532, %cst_258 {dimension_numbers = #tpu.dot_dimension_numbers<[1], [0], [0], [1], [0, 0, 1, 1], [], []>} : vector<2x16xf32>, vector<16x96xf32>, vector<2x96xf32> -> vector<2x96xf32>
    %c0_259 = arith.constant 0 : index
    %c0_260 = arith.constant 0 : index
    %534 = vector.load %arg14[%c0_259, %c0_260] : memref<1x96xf32, #tpu.memory_space<vmem>>, vector<1x96xf32>
    %535 = vector.broadcast %534 : vector<1x96xf32> to vector<2x96xf32>
    %536 = arith.addf %533, %535 : vector<2x96xf32>
    %c0_261 = arith.constant 0 : index
    %c0_262 = arith.constant 0 : index
    %537 = vector.load %arg15[%c0_261, %c0_262] : memref<32x96xf32, #tpu.memory_space<vmem>>, vector<32x96xf32>
    %cst_263 = arith.constant dense<0.000000e+00> : vector<2x96xf32>
    %538 = tpu.matmul %480, %537, %cst_263 {dimension_numbers = #tpu.dot_dimension_numbers<[1], [0], [0], [1], [0, 0, 1, 1], [], []>} : vector<2x32xf32>, vector<32x96xf32>, vector<2x96xf32> -> vector<2x96xf32>
    %c0_264 = arith.constant 0 : index
    %c0_265 = arith.constant 0 : index
    %539 = vector.load %arg16[%c0_264, %c0_265] : memref<1x96xf32, #tpu.memory_space<vmem>>, vector<1x96xf32>
    %540 = vector.broadcast %539 : vector<1x96xf32> to vector<2x96xf32>
    %541 = arith.addf %538, %540 : vector<2x96xf32>
    %542 = vector.extract_strided_slice %536 {offsets = [0, 0], sizes = [2, 32], strides = [1, 1]} : vector<2x96xf32> to vector<2x32xf32>
    %543 = vector.extract_strided_slice %541 {offsets = [0, 0], sizes = [2, 32], strides = [1, 1]} : vector<2x96xf32> to vector<2x32xf32>
    %544 = arith.addf %542, %543 : vector<2x32xf32>
    %545 = arith.negf %544 : vector<2x32xf32>
    %546 = math.exp %545 : vector<2x32xf32>
    %cst_266 = arith.constant 1.000000e+00 : f32
    %547 = vector.broadcast %cst_266 : f32 to vector<2x32xf32>
    %548 = arith.addf %547, %546 : vector<2x32xf32>
    %549 = arith.divf %547, %548 : vector<2x32xf32>
    %550 = vector.extract_strided_slice %536 {offsets = [0, 32], sizes = [2, 32], strides = [1, 1]} : vector<2x96xf32> to vector<2x32xf32>
    %551 = vector.extract_strided_slice %541 {offsets = [0, 32], sizes = [2, 32], strides = [1, 1]} : vector<2x96xf32> to vector<2x32xf32>
    %552 = arith.addf %550, %551 : vector<2x32xf32>
    %553 = arith.negf %552 : vector<2x32xf32>
    %554 = math.exp %553 : vector<2x32xf32>
    %cst_267 = arith.constant 1.000000e+00 : f32
    %555 = vector.broadcast %cst_267 : f32 to vector<2x32xf32>
    %556 = arith.addf %555, %554 : vector<2x32xf32>
    %557 = arith.divf %555, %556 : vector<2x32xf32>
    %558 = vector.extract_strided_slice %536 {offsets = [0, 64], sizes = [2, 32], strides = [1, 1]} : vector<2x96xf32> to vector<2x32xf32>
    %559 = vector.extract_strided_slice %541 {offsets = [0, 64], sizes = [2, 32], strides = [1, 1]} : vector<2x96xf32> to vector<2x32xf32>
    %560 = arith.mulf %549, %559 : vector<2x32xf32>
    %561 = arith.addf %558, %560 : vector<2x32xf32>
    %562 = math.tanh %561 : vector<2x32xf32>
    %cst_268 = arith.constant 1.000000e+00 : f32
    %563 = vector.broadcast %cst_268 : f32 to vector<2x32xf32>
    %564 = arith.subf %563, %557 : vector<2x32xf32>
    %565 = arith.mulf %564, %562 : vector<2x32xf32>
    %566 = arith.mulf %557, %480 : vector<2x32xf32>
    %567 = arith.addf %565, %566 : vector<2x32xf32>
    %c0_269 = arith.constant 0 : index
    %c0_270 = arith.constant 0 : index
    %568 = vector.load %arg3[%c0_269, %c0_270] : memref<32x32xf32, #tpu.memory_space<vmem>>, vector<32x32xf32>
    %cst_271 = arith.constant dense<0.000000e+00> : vector<2x32xf32>
    %569 = tpu.matmul %567, %568, %cst_271 {dimension_numbers = #tpu.dot_dimension_numbers<[1], [0], [0], [1], [0, 0, 1, 1], [], []>} : vector<2x32xf32>, vector<32x32xf32>, vector<2x32xf32> -> vector<2x32xf32>
    %570 = vector.shape_cast %569 : vector<2x32xf32> to vector<2x1x32xf32>
    %571 = vector.broadcast %570 : vector<2x1x32xf32> to vector<2x6x32xf32>
    %572 = arith.mulf %571, %1 : vector<2x6x32xf32>
    %cst_272 = arith.constant dense<0.000000e+00> : vector<2x6xf32>
    %573 = vector.multi_reduction <add>, %572, %cst_272 [2] : vector<2x6x32xf32> to vector<2x6xf32>
    %cst_273 = arith.constant dense<0xFF800000> : vector<2xf32>
    %574 = vector.multi_reduction <maximumf>, %573, %cst_273 [1] : vector<2x6xf32> to vector<2xf32>
    %575 = vector.shape_cast %574 : vector<2xf32> to vector<2x1xf32>
    %576 = vector.broadcast %575 : vector<2x1xf32> to vector<2x6xf32>
    %577 = arith.subf %573, %576 : vector<2x6xf32>
    %578 = math.exp %577 : vector<2x6xf32>
    %cst_274 = arith.constant dense<0.000000e+00> : vector<2xf32>
    %579 = vector.multi_reduction <add>, %578, %cst_274 [1] : vector<2x6xf32> to vector<2xf32>
    %580 = vector.shape_cast %579 : vector<2xf32> to vector<2x1xf32>
    %581 = vector.broadcast %580 : vector<2x1xf32> to vector<2x6xf32>
    %582 = arith.divf %578, %581 : vector<2x6xf32>
    %583 = vector.shape_cast %582 : vector<2x6xf32> to vector<2x6x1xf32>
    %584 = vector.broadcast %583 : vector<2x6x1xf32> to vector<2x6x32xf32>
    %585 = arith.mulf %584, %1 : vector<2x6x32xf32>
    %cst_275 = arith.constant dense<0.000000e+00> : vector<2x32xf32>
    %586 = vector.multi_reduction <add>, %585, %cst_275 [1] : vector<2x6x32xf32> to vector<2x32xf32>
    %c0_276 = arith.constant 0 : index
    %c0_277 = arith.constant 0 : index
    %587 = vector.load %arg4[%c0_276, %c0_277] : memref<32x64xf32, #tpu.memory_space<vmem>>, vector<32x64xf32>
    %cst_278 = arith.constant dense<0.000000e+00> : vector<2x64xf32>
    %588 = tpu.matmul %586, %587, %cst_278 {dimension_numbers = #tpu.dot_dimension_numbers<[1], [0], [0], [1], [0, 0, 1, 1], [], []>} : vector<2x32xf32>, vector<32x64xf32>, vector<2x64xf32> -> vector<2x64xf32>
    %c0_279 = arith.constant 0 : index
    %c0_280 = arith.constant 0 : index
    %589 = vector.load %arg5[%c0_279, %c0_280] : memref<32x64xf32, #tpu.memory_space<vmem>>, vector<32x64xf32>
    %cst_281 = arith.constant dense<0.000000e+00> : vector<2x64xf32>
    %590 = tpu.matmul %567, %589, %cst_281 {dimension_numbers = #tpu.dot_dimension_numbers<[1], [0], [0], [1], [0, 0, 1, 1], [], []>} : vector<2x32xf32>, vector<32x64xf32>, vector<2x64xf32> -> vector<2x64xf32>
    %591 = arith.addf %588, %590 : vector<2x64xf32>
    %c0_282 = arith.constant 0 : index
    %c0_283 = arith.constant 0 : index
    %592 = vector.load %arg6[%c0_282, %c0_283] : memref<1x64xf32, #tpu.memory_space<vmem>>, vector<1x64xf32>
    %593 = vector.broadcast %592 : vector<1x64xf32> to vector<2x64xf32>
    %594 = arith.addf %591, %593 : vector<2x64xf32>
    %595 = math.tanh %594 : vector<2x64xf32>
    %c0_284 = arith.constant 0 : index
    %c0_285 = arith.constant 0 : index
    %596 = vector.load %arg7[%c0_284, %c0_285] : memref<64x12xf32, #tpu.memory_space<vmem>>, vector<64x12xf32>
    %cst_286 = arith.constant dense<0.000000e+00> : vector<2x12xf32>
    %597 = tpu.matmul %595, %596, %cst_286 {dimension_numbers = #tpu.dot_dimension_numbers<[1], [0], [0], [1], [0, 0, 1, 1], [], []>} : vector<2x64xf32>, vector<64x12xf32>, vector<2x12xf32> -> vector<2x12xf32>
    %c0_287 = arith.constant 0 : index
    %c0_288 = arith.constant 0 : index
    %598 = vector.load %arg8[%c0_287, %c0_288] : memref<1x12xf32, #tpu.memory_space<vmem>>, vector<1x12xf32>
    %599 = vector.broadcast %598 : vector<1x12xf32> to vector<2x12xf32>
    %600 = arith.addf %597, %599 : vector<2x12xf32>
    %601 = vector.extract_strided_slice %600 {offsets = [0, 0], sizes = [1, 12], strides = [1, 1]} : vector<2x12xf32> to vector<1x12xf32>
    %c1_289 = arith.constant 1 : index
    %c48_290 = arith.constant 48 : index
    %602 = vector.load %arg18[%c1_289, %c48_290] : memref<2x96xf32, #tpu.memory_space<vmem>>, vector<1x12xf32>
    tpu.vector_store %arg18[%c1_289, %c48_290], %601 {strides = array<i32>} : memref<2x96xf32, #tpu.memory_space<vmem>>, vector<1x12xf32>,
    %603 = vector.extract_strided_slice %600 {offsets = [1, 0], sizes = [1, 12], strides = [1, 1]} : vector<2x12xf32> to vector<1x12xf32>
    %c1_291 = arith.constant 1 : index
    %c60_292 = arith.constant 60 : index
    %604 = vector.load %arg18[%c1_291, %c60_292] : memref<2x96xf32, #tpu.memory_space<vmem>>, vector<1x12xf32>
    tpu.vector_store %arg18[%c1_291, %c60_292], %603 {strides = array<i32>} : memref<2x96xf32, #tpu.memory_space<vmem>>, vector<1x12xf32>,
    %cst_293 = arith.constant dense<0xFF800000> : vector<2xf32>
    %605 = vector.multi_reduction <maximumf>, %600, %cst_293 [1] : vector<2x12xf32> to vector<2xf32>
    %606 = vector.shape_cast %605 : vector<2xf32> to vector<2x1xf32>
    %607 = vector.broadcast %606 : vector<2x1xf32> to vector<2x12xf32>
    %608 = arith.cmpf oeq, %600, %607 : vector<2x12xf32>
    %c12_i32_294 = arith.constant 12 : i32
    %609 = vector.broadcast %c12_i32_294 : i32 to vector<2x12xi32>
    %610 = arith.select %608, %0, %609 : vector<2x12xi1>, vector<2x12xi32>
    %cst_295 = arith.constant dense<2147483647> : vector<2xi32>
    %611 = vector.multi_reduction <minsi>, %610, %cst_295 [1] : vector<2x12xi32> to vector<2xi32>
    %612 = vector.shape_cast %611 : vector<2xi32> to vector<2x1xi32>
    %613 = vector.broadcast %612 : vector<2x1xi32> to vector<2x12xi32>
    %614 = arith.cmpi eq, %0, %613 : vector<2x12xi32>
    %615 = arith.extui %614 : vector<2x12xi1> to vector<2x12xi32>
    %616 = arith.sitofp %615 : vector<2x12xi32> to vector<2x12xf32>
    %c0_296 = arith.constant 0 : index
    %c0_297 = arith.constant 0 : index
    %617 = vector.load %arg0[%c0_296, %c0_297] : memref<12x16xf32, #tpu.memory_space<vmem>>, vector<12x16xf32>
    %cst_298 = arith.constant dense<0.000000e+00> : vector<2x16xf32>
    %618 = tpu.matmul %616, %617, %cst_298 {dimension_numbers = #tpu.dot_dimension_numbers<[1], [0], [0], [1], [0, 0, 1, 1], [], []>} : vector<2x12xf32>, vector<12x16xf32>, vector<2x16xf32> -> vector<2x16xf32>
    %c0_299 = arith.constant 0 : index
    %c0_300 = arith.constant 0 : index
    %619 = vector.load %arg13[%c0_299, %c0_300] : memref<16x96xf32, #tpu.memory_space<vmem>>, vector<16x96xf32>
    %cst_301 = arith.constant dense<0.000000e+00> : vector<2x96xf32>
    %620 = tpu.matmul %618, %619, %cst_301 {dimension_numbers = #tpu.dot_dimension_numbers<[1], [0], [0], [1], [0, 0, 1, 1], [], []>} : vector<2x16xf32>, vector<16x96xf32>, vector<2x96xf32> -> vector<2x96xf32>
    %c0_302 = arith.constant 0 : index
    %c0_303 = arith.constant 0 : index
    %621 = vector.load %arg14[%c0_302, %c0_303] : memref<1x96xf32, #tpu.memory_space<vmem>>, vector<1x96xf32>
    %622 = vector.broadcast %621 : vector<1x96xf32> to vector<2x96xf32>
    %623 = arith.addf %620, %622 : vector<2x96xf32>
    %c0_304 = arith.constant 0 : index
    %c0_305 = arith.constant 0 : index
    %624 = vector.load %arg15[%c0_304, %c0_305] : memref<32x96xf32, #tpu.memory_space<vmem>>, vector<32x96xf32>
    %cst_306 = arith.constant dense<0.000000e+00> : vector<2x96xf32>
    %625 = tpu.matmul %567, %624, %cst_306 {dimension_numbers = #tpu.dot_dimension_numbers<[1], [0], [0], [1], [0, 0, 1, 1], [], []>} : vector<2x32xf32>, vector<32x96xf32>, vector<2x96xf32> -> vector<2x96xf32>
    %c0_307 = arith.constant 0 : index
    %c0_308 = arith.constant 0 : index
    %626 = vector.load %arg16[%c0_307, %c0_308] : memref<1x96xf32, #tpu.memory_space<vmem>>, vector<1x96xf32>
    %627 = vector.broadcast %626 : vector<1x96xf32> to vector<2x96xf32>
    %628 = arith.addf %625, %627 : vector<2x96xf32>
    %629 = vector.extract_strided_slice %623 {offsets = [0, 0], sizes = [2, 32], strides = [1, 1]} : vector<2x96xf32> to vector<2x32xf32>
    %630 = vector.extract_strided_slice %628 {offsets = [0, 0], sizes = [2, 32], strides = [1, 1]} : vector<2x96xf32> to vector<2x32xf32>
    %631 = arith.addf %629, %630 : vector<2x32xf32>
    %632 = arith.negf %631 : vector<2x32xf32>
    %633 = math.exp %632 : vector<2x32xf32>
    %cst_309 = arith.constant 1.000000e+00 : f32
    %634 = vector.broadcast %cst_309 : f32 to vector<2x32xf32>
    %635 = arith.addf %634, %633 : vector<2x32xf32>
    %636 = arith.divf %634, %635 : vector<2x32xf32>
    %637 = vector.extract_strided_slice %623 {offsets = [0, 32], sizes = [2, 32], strides = [1, 1]} : vector<2x96xf32> to vector<2x32xf32>
    %638 = vector.extract_strided_slice %628 {offsets = [0, 32], sizes = [2, 32], strides = [1, 1]} : vector<2x96xf32> to vector<2x32xf32>
    %639 = arith.addf %637, %638 : vector<2x32xf32>
    %640 = arith.negf %639 : vector<2x32xf32>
    %641 = math.exp %640 : vector<2x32xf32>
    %cst_310 = arith.constant 1.000000e+00 : f32
    %642 = vector.broadcast %cst_310 : f32 to vector<2x32xf32>
    %643 = arith.addf %642, %641 : vector<2x32xf32>
    %644 = arith.divf %642, %643 : vector<2x32xf32>
    %645 = vector.extract_strided_slice %623 {offsets = [0, 64], sizes = [2, 32], strides = [1, 1]} : vector<2x96xf32> to vector<2x32xf32>
    %646 = vector.extract_strided_slice %628 {offsets = [0, 64], sizes = [2, 32], strides = [1, 1]} : vector<2x96xf32> to vector<2x32xf32>
    %647 = arith.mulf %636, %646 : vector<2x32xf32>
    %648 = arith.addf %645, %647 : vector<2x32xf32>
    %649 = math.tanh %648 : vector<2x32xf32>
    %cst_311 = arith.constant 1.000000e+00 : f32
    %650 = vector.broadcast %cst_311 : f32 to vector<2x32xf32>
    %651 = arith.subf %650, %644 : vector<2x32xf32>
    %652 = arith.mulf %651, %649 : vector<2x32xf32>
    %653 = arith.mulf %644, %567 : vector<2x32xf32>
    %654 = arith.addf %652, %653 : vector<2x32xf32>
    %c0_312 = arith.constant 0 : index
    %c0_313 = arith.constant 0 : index
    %655 = vector.load %arg3[%c0_312, %c0_313] : memref<32x32xf32, #tpu.memory_space<vmem>>, vector<32x32xf32>
    %cst_314 = arith.constant dense<0.000000e+00> : vector<2x32xf32>
    %656 = tpu.matmul %654, %655, %cst_314 {dimension_numbers = #tpu.dot_dimension_numbers<[1], [0], [0], [1], [0, 0, 1, 1], [], []>} : vector<2x32xf32>, vector<32x32xf32>, vector<2x32xf32> -> vector<2x32xf32>
    %657 = vector.shape_cast %656 : vector<2x32xf32> to vector<2x1x32xf32>
    %658 = vector.broadcast %657 : vector<2x1x32xf32> to vector<2x6x32xf32>
    %659 = arith.mulf %658, %1 : vector<2x6x32xf32>
    %cst_315 = arith.constant dense<0.000000e+00> : vector<2x6xf32>
    %660 = vector.multi_reduction <add>, %659, %cst_315 [2] : vector<2x6x32xf32> to vector<2x6xf32>
    %cst_316 = arith.constant dense<0xFF800000> : vector<2xf32>
    %661 = vector.multi_reduction <maximumf>, %660, %cst_316 [1] : vector<2x6xf32> to vector<2xf32>
    %662 = vector.shape_cast %661 : vector<2xf32> to vector<2x1xf32>
    %663 = vector.broadcast %662 : vector<2x1xf32> to vector<2x6xf32>
    %664 = arith.subf %660, %663 : vector<2x6xf32>
    %665 = math.exp %664 : vector<2x6xf32>
    %cst_317 = arith.constant dense<0.000000e+00> : vector<2xf32>
    %666 = vector.multi_reduction <add>, %665, %cst_317 [1] : vector<2x6xf32> to vector<2xf32>
    %667 = vector.shape_cast %666 : vector<2xf32> to vector<2x1xf32>
    %668 = vector.broadcast %667 : vector<2x1xf32> to vector<2x6xf32>
    %669 = arith.divf %665, %668 : vector<2x6xf32>
    %670 = vector.shape_cast %669 : vector<2x6xf32> to vector<2x6x1xf32>
    %671 = vector.broadcast %670 : vector<2x6x1xf32> to vector<2x6x32xf32>
    %672 = arith.mulf %671, %1 : vector<2x6x32xf32>
    %cst_318 = arith.constant dense<0.000000e+00> : vector<2x32xf32>
    %673 = vector.multi_reduction <add>, %672, %cst_318 [1] : vector<2x6x32xf32> to vector<2x32xf32>
    %c0_319 = arith.constant 0 : index
    %c0_320 = arith.constant 0 : index
    %674 = vector.load %arg4[%c0_319, %c0_320] : memref<32x64xf32, #tpu.memory_space<vmem>>, vector<32x64xf32>
    %cst_321 = arith.constant dense<0.000000e+00> : vector<2x64xf32>
    %675 = tpu.matmul %673, %674, %cst_321 {dimension_numbers = #tpu.dot_dimension_numbers<[1], [0], [0], [1], [0, 0, 1, 1], [], []>} : vector<2x32xf32>, vector<32x64xf32>, vector<2x64xf32> -> vector<2x64xf32>
    %c0_322 = arith.constant 0 : index
    %c0_323 = arith.constant 0 : index
    %676 = vector.load %arg5[%c0_322, %c0_323] : memref<32x64xf32, #tpu.memory_space<vmem>>, vector<32x64xf32>
    %cst_324 = arith.constant dense<0.000000e+00> : vector<2x64xf32>
    %677 = tpu.matmul %654, %676, %cst_324 {dimension_numbers = #tpu.dot_dimension_numbers<[1], [0], [0], [1], [0, 0, 1, 1], [], []>} : vector<2x32xf32>, vector<32x64xf32>, vector<2x64xf32> -> vector<2x64xf32>
    %678 = arith.addf %675, %677 : vector<2x64xf32>
    %c0_325 = arith.constant 0 : index
    %c0_326 = arith.constant 0 : index
    %679 = vector.load %arg6[%c0_325, %c0_326] : memref<1x64xf32, #tpu.memory_space<vmem>>, vector<1x64xf32>
    %680 = vector.broadcast %679 : vector<1x64xf32> to vector<2x64xf32>
    %681 = arith.addf %678, %680 : vector<2x64xf32>
    %682 = math.tanh %681 : vector<2x64xf32>
    %c0_327 = arith.constant 0 : index
    %c0_328 = arith.constant 0 : index
    %683 = vector.load %arg7[%c0_327, %c0_328] : memref<64x12xf32, #tpu.memory_space<vmem>>, vector<64x12xf32>
    %cst_329 = arith.constant dense<0.000000e+00> : vector<2x12xf32>
    %684 = tpu.matmul %682, %683, %cst_329 {dimension_numbers = #tpu.dot_dimension_numbers<[1], [0], [0], [1], [0, 0, 1, 1], [], []>} : vector<2x64xf32>, vector<64x12xf32>, vector<2x12xf32> -> vector<2x12xf32>
    %c0_330 = arith.constant 0 : index
    %c0_331 = arith.constant 0 : index
    %685 = vector.load %arg8[%c0_330, %c0_331] : memref<1x12xf32, #tpu.memory_space<vmem>>, vector<1x12xf32>
    %686 = vector.broadcast %685 : vector<1x12xf32> to vector<2x12xf32>
    %687 = arith.addf %684, %686 : vector<2x12xf32>
    %688 = vector.extract_strided_slice %687 {offsets = [0, 0], sizes = [1, 12], strides = [1, 1]} : vector<2x12xf32> to vector<1x12xf32>
    %c1_332 = arith.constant 1 : index
    %c72_333 = arith.constant 72 : index
    %689 = vector.load %arg18[%c1_332, %c72_333] : memref<2x96xf32, #tpu.memory_space<vmem>>, vector<1x12xf32>
    tpu.vector_store %arg18[%c1_332, %c72_333], %688 {strides = array<i32>} : memref<2x96xf32, #tpu.memory_space<vmem>>, vector<1x12xf32>,
    %690 = vector.extract_strided_slice %687 {offsets = [1, 0], sizes = [1, 12], strides = [1, 1]} : vector<2x12xf32> to vector<1x12xf32>
    %c1_334 = arith.constant 1 : index
    %c84_335 = arith.constant 84 : index
    %691 = vector.load %arg18[%c1_334, %c84_335] : memref<2x96xf32, #tpu.memory_space<vmem>>, vector<1x12xf32>
    tpu.vector_store %arg18[%c1_334, %c84_335], %690 {strides = array<i32>} : memref<2x96xf32, #tpu.memory_space<vmem>>, vector<1x12xf32>,
    %c0_336 = arith.constant 0 : index
    %c0_337 = arith.constant 0 : index
    %692 = vector.load %arg18[%c0_336, %c0_337] : memref<2x96xf32, #tpu.memory_space<vmem>>, vector<2x96xf32>
    %c0_338 = arith.constant 0 : index
    %c0_339 = arith.constant 0 : index
    %693 = vector.load %arg9[%c0_338, %c0_339] : memref<96x256xf32, #tpu.memory_space<vmem>>, vector<96x256xf32>
    %cst_340 = arith.constant dense<0.000000e+00> : vector<2x256xf32>
    %694 = tpu.matmul %692, %693, %cst_340 {dimension_numbers = #tpu.dot_dimension_numbers<[1], [0], [0], [1], [0, 0, 1, 1], [], []>} : vector<2x96xf32>, vector<96x256xf32>, vector<2x256xf32> -> vector<2x256xf32>
    %c0_341 = arith.constant 0 : index
    %c0_342 = arith.constant 0 : index
    %695 = vector.load %arg10[%c0_341, %c0_342] : memref<1x256xf32, #tpu.memory_space<vmem>>, vector<1x256xf32>
    %696 = vector.broadcast %695 : vector<1x256xf32> to vector<2x256xf32>
    %697 = arith.addf %694, %696 : vector<2x256xf32>
    %cst_343 = arith.constant 0.000000e+00 : f32
    %698 = vector.broadcast %cst_343 : f32 to vector<2x256xf32>
    %699 = arith.maximumf %697, %698 : vector<2x256xf32>
    %c0_344 = arith.constant 0 : index
    %c0_345 = arith.constant 0 : index
    %700 = vector.load %arg11[%c0_344, %c0_345] : memref<256x12xf32, #tpu.memory_space<vmem>>, vector<256x12xf32>
    %cst_346 = arith.constant dense<0.000000e+00> : vector<2x12xf32>
    %701 = tpu.matmul %699, %700, %cst_346 {dimension_numbers = #tpu.dot_dimension_numbers<[1], [0], [0], [1], [0, 0, 1, 1], [], []>} : vector<2x256xf32>, vector<256x12xf32>, vector<2x12xf32> -> vector<2x12xf32>
    %c0_347 = arith.constant 0 : index
    %c0_348 = arith.constant 0 : index
    %702 = vector.load %arg12[%c0_347, %c0_348] : memref<1x12xf32, #tpu.memory_space<vmem>>, vector<1x12xf32>
    %703 = vector.broadcast %702 : vector<1x12xf32> to vector<2x12xf32>
    %704 = arith.addf %701, %703 : vector<2x12xf32>
    %c0_349 = arith.constant 0 : index
    %c0_350 = arith.constant 0 : index
    %705 = vector.load %arg17[%c0_349, %c0_350] : memref<2x12xf32, #tpu.memory_space<vmem>>, vector<2x12xf32>
    tpu.vector_store %arg17[%c0_349, %c0_350], %704 {strides = array<i32>} : memref<2x12xf32, #tpu.memory_space<vmem>>, vector<2x12xf32>,
    return
  }
}

</mosaic_0001>

<llo_original>
// kernel: encoder_decoder_forward.2
$region0: #{encoder_decoder_forward.2}
  #allocation0 [shape = 'u32[]', space=smem, size = 0x4, offset = 0x4, fixed_abs, tag = 'smem constant byte address 0x4 - core index']
  #allocation1 [shape = 'u32[144,128]{1,0:T(1,128)}', space=vmem, size = 0x12000, scoped, tag = 'internal scratch']
  #allocation2 [shape = 'f32[12,96]{1,0:T(8,128)}', space=vmem, size = 0x2000, scoped, tag = 'scratch operand']
  %s0 = inlined_call_operand.vmem [shape: f32[12,16], index: 0, kind: input, shape index: {}]
  %s1 = inlined_call_operand.vmem [shape: f32[16,96], index: 1, kind: input, shape index: {}]
  %s2 = inlined_call_operand.vmem [shape: f32[1,96], index: 2, kind: input, shape index: {}]
  %s3 = inlined_call_operand.vmem [shape: f32[32,96], index: 3, kind: input, shape index: {}]
  %s4 = inlined_call_operand.vmem [shape: f32[1,96], index: 4, kind: input, shape index: {}]
  %s5 = inlined_call_operand.vmem [shape: f32[6,2,32], index: 5, kind: output, shape index: {0}]
  %s6 = inlined_call_operand.vmem [shape: f32[2,32], index: 6, kind: output, shape index: {1}]
  %7 = xla_tuple %s5, %s6
  %s8 = sld [smem:[#allocation0]]
  $region38: #{encoder_decoder_forward.2} parent=0
    _
  %s10 = ssub.s32 1, %s8
  %s11 = scalar_select 0, %s10, %s8
  // Predicated region
  $region2: #{encoder_decoder_forward.2} parent=0 // pred_check
    _
  $region3: #{encoder_decoder_forward.2} parent=0 // pred_check_branch
    %13 = sbr.rel (0) target = $region5
  $region4: #{encoder_decoder_forward.2} parent=0 // pred_region
    _
  $region5: #{encoder_decoder_forward.2} parent=0 // pred_fallthru
    _
  // Predicated region
  $region6: #{encoder_decoder_forward.2} parent=0 // pred_check
    _
  $region7: #{encoder_decoder_forward.2} parent=0 // pred_check_branch
    %15 = sbr.rel (0) target = $region9
  $region8: #{encoder_decoder_forward.2} parent=0 // pred_region
    _
  $region9: #{encoder_decoder_forward.2} parent=0 // pred_fallthru
    _
  // Predicated region
  $region10: #{encoder_decoder_forward.2} parent=0 // pred_check
    _
  $region11: #{encoder_decoder_forward.2} parent=0 // pred_check_branch
    %17 = sbr.rel (0) target = $region13
  $region12: #{encoder_decoder_forward.2} parent=0 // pred_region
    _
  $region13: #{encoder_decoder_forward.2} parent=0 // pred_fallthru
    _
  // Predicated region
  $region14: #{encoder_decoder_forward.2} parent=0 // pred_check
    _
  $region15: #{encoder_decoder_forward.2} parent=0 // pred_check_branch
    %19 = sbr.rel (0) target = $region17
  $region16: #{encoder_decoder_forward.2} parent=0 // pred_region
    _
  $region17: #{encoder_decoder_forward.2} parent=0 // pred_fallthru
    _
  // Predicated region
  $region18: #{encoder_decoder_forward.2} parent=0 // pred_check
    _
  $region19: #{encoder_decoder_forward.2} parent=0 // pred_check_branch
    %21 = sbr.rel (0) target = $region21
  $region20: #{encoder_decoder_forward.2} parent=0 // pred_region
    _
  $region21: #{encoder_decoder_forward.2} parent=0 // pred_fallthru
    _
  %v22 = vld [vmem:[%s0] sm:$0xff]
  %v23 = vld [vmem:[%s0 + $0x8] sm:$0xf]
  %v24 = vld [vmem:[%s1] sm:$0xff]
  %v25 = vld [vmem:[%s1 + $0x8] sm:$0xff]
  %v26 = vld [vmem:[%s2] sm:$0x1]
  %v28 = vlaneseq
  %v29 = vshrl.u32 %v28, 7
  %v30 = vsub.s32 0, %v29
  %v31 = vrot.slane %v26, %v30
  %vm33 = vcmask 130048
  %v35 = vsel %vm33, %v22, 0
  %v38 = vsel %vm33, %v23, 0
  %40 = vmatprep.subr.mxu0 0.0
  %41 = vmatpush1.msra.mxu0 0.0
  %42 = vmatprep.subr.mxu0 0.0
  %43 = vmatpush1.msra.mxu0 0.0
  %44 = vmatprep.subr.mxu0 0.0
  %45 = vmatpush1.msra.mxu0 0.0
  %46 = vmatprep.subr.mxu0 0.0
  %47 = vmatpush1.msra.mxu0 0.0
  %48 = vmatprep.subr.mxu0 0.0
  %49 = vmatpush1.msra.mxu0 0.0
  %50 = vmatprep.subr.mxu0 0.0
  %51 = vmatpush1.msra.mxu0 0.0
  %52 = vmatprep.subr.mxu0 0.0
  %53 = vmatpush1.msra.mxu0 0.0
  %54 = vmatprep.subr.mxu0 0.0
  %55 = vmatpush1.msra.mxu0 0.0
  %56 = vmatprep.subr.mxu0 0.0
  %57 = vmatpush1.msra.mxu0 0.0
  %58 = vmatprep.subr.mxu0 0.0
  %59 = vmatpush1.msra.mxu0 0.0
  %60 = vmatprep.subr.mxu0 0.0
  %61 = vmatpush1.msra.mxu0 0.0
  %62 = vmatprep.subr.mxu0 0.0
  %63 = vmatpush1.msra.mxu0 0.0
  %64 = vmatprep.subr.mxu0 0.0
  %65 = vmatpush1.msra.mxu0 0.0
  %66 = vmatprep.subr.mxu0 0.0
  %67 = vmatpush1.msra.mxu0 0.0
  %68 = vmatprep.subr.mxu0 0.0
  %69 = vmatpush1.msra.mxu0 %v25
  %70 = vmatprep.subr.mxu0 0.0
  %71 = vmatpush1.msra.mxu0 %v24
  %72 = vmatprep.subr.mxu0 0.0
  %73 = vmatpush2.msra.mxu0 0.0
  %74 = vmatprep.subr.mxu0 0.0
  %75 = vmatpush2.msra.mxu0 0.0
  %76 = vmatprep.subr.mxu0 0.0
  %77 = vmatpush2.msra.mxu0 0.0
  %78 = vmatprep.subr.mxu0 0.0
  %79 = vmatpush2.msra.mxu0 0.0
  %80 = vmatprep.subr.mxu0 0.0
  %81 = vmatpush2.msra.mxu0 0.0
  %82 = vmatprep.subr.mxu0 0.0
  %83 = vmatpush2.msra.mxu0 0.0
  %84 = vmatprep.subr.mxu0 0.0
  %85 = vmatpush2.msra.mxu0 0.0
  %86 = vmatprep.subr.mxu0 0.0
  %87 = vmatpush2.msra.mxu0 0.0
  %88 = vmatprep.subr.mxu0 0.0
  %89 = vmatpush2.msra.mxu0 0.0
  %90 = vmatprep.subr.mxu0 0.0
  %91 = vmatpush2.msra.mxu0 0.0
  %92 = vmatprep.subr.mxu0 0.0
  %93 = vmatpush2.msra.mxu0 0.0
  %94 = vmatprep.subr.mxu0 0.0
  %95 = vmatpush2.msra.mxu0 0.0
  %96 = vmatprep.subr.mxu0 0.0
  %97 = vmatpush2.msra.mxu0 0.0
  %98 = vmatprep.subr.mxu0 0.0
  %99 = vmatpush2.msra.mxu0 0.0
  %100 = vmatprep.subr.mxu0 0.0
  %101 = vmatpush2.msra.mxu0 0.0
  %102 = vmatprep.subr.mxu0 0.0
  %103 = vmatpush2.msra.mxu0 0.0
  %104 = vmatprep.mubr.f32.mxu0 0.0
  %105 = vmatmul.mubr.f32.gmra.mxu0 %v35
  %v106 = vpop.f32.mrf.mxu0
  %v107 = vadd.f32 %v31, %v106
  %v108 = vpop.f32.mrf.mxu0
  %109 = vmatprep.mubr.f32.mxu0 0.0
  %110 = vmatmul.mubr.f32.gmra.mxu0 %v38
  %v111 = vpop.f32.mrf.mxu0
  %v112 = vadd.f32 %v31, %v111
  %v113 = vpop.f32.mrf.mxu0
  %114 = vdwg.mxu0
  %vm115 = vcmask 785408
  %116 = vst.msk [vmem:[#allocation2] sm:$0xff] %vm115, %v107
  %vm117 = vcmask 781312
  %118 = vst.msk [vmem:[#allocation2 + $0x8] sm:$0xf] %vm117, %v112
  %v119 = vlaneseq
  %v120 = vand.u32 %v119, 127
  %vm121 = vcmp.lt.s32.totalorder %v120, 0
  %v122 = vsub.s32 0, %v120
  %v123 = vsel %vm121, %v122, %v120
  %v124 = vshrl.u32 %v123, 5
  %v125 = vand.u32 %v123, 31
  %v126 = vsub.s32 0, %v125
  %v127 = vsel %vm121, %v126, %v125
  %vm128 = vcmp.ne.s32.totalorder %v127, 0
  %vm129 = vcmp.lt.s32.totalorder %v127, 0
  %vm130 = vmand %vm129, %vm128
  %v131 = vadd.s32 %v127, 32
  %v132 = vsel %vm130, %v131, %v127
  %vm133 = vcmp.lt.s32.totalorder %v132, 16
  %v134 = vld [vmem:[#allocation2] sm:$0x3]
  %v135 = vld [vmem:[#allocation2 + $0xa] sm:$0x3]
  %v136 = vsel %vm133, %v134, %v135
  %v137 = vld [vmem:[%s3] sm:$0xff]
  %v138 = vld [vmem:[%s3 + $0x8] sm:$0xff]
  %v139 = vld [vmem:[%s3 + $0x10] sm:$0xff]
  %v140 = vld [vmem:[%s3 + $0x18] sm:$0xff]
  %v141 = vld [vmem:[%s4] sm:$0x1]
  %v143 = vlaneseq
  %v144 = vshrl.u32 %v143, 7
  %v145 = vsub.s32 0, %v144
  %v146 = vrot.slane %v141, %v145
  %vm148 = vcmask 261120
  %v150 = vsel %vm148, 0.0, 0
  %152 = vmatprep.subr.mxu0 0.0
  %153 = vmatpush1.msra.mxu0 0.0
  %154 = vmatprep.subr.mxu0 0.0
  %155 = vmatpush1.msra.mxu0 0.0
  %156 = vmatprep.subr.mxu0 0.0
  %157 = vmatpush1.msra.mxu0 0.0
  %158 = vmatprep.subr.mxu0 0.0
  %159 = vmatpush1.msra.mxu0 0.0
  %160 = vmatprep.subr.mxu0 0.0
  %161 = vmatpush1.msra.mxu0 0.0
  %162 = vmatprep.subr.mxu0 0.0
  %163 = vmatpush1.msra.mxu0 0.0
  %164 = vmatprep.subr.mxu0 0.0
  %165 = vmatpush1.msra.mxu0 0.0
  %166 = vmatprep.subr.mxu0 0.0
  %167 = vmatpush1.msra.mxu0 0.0
  %168 = vmatprep.subr.mxu0 0.0
  %169 = vmatpush1.msra.mxu0 0.0
  %170 = vmatprep.subr.mxu0 0.0
  %171 = vmatpush1.msra.mxu0 0.0
  %172 = vmatprep.subr.mxu0 0.0
  %173 = vmatpush1.msra.mxu0 0.0
  %174 = vmatprep.subr.mxu0 0.0
  %175 = vmatpush1.msra.mxu0 0.0
  %176 = vmatprep.subr.mxu0 0.0
  %177 = vmatpush1.msra.mxu0 %v140
  %178 = vmatprep.subr.mxu0 0.0
  %179 = vmatpush1.msra.mxu0 %v139
  %180 = vmatprep.subr.mxu0 0.0
  %181 = vmatpush1.msra.mxu0 %v138
  %182 = vmatprep.subr.mxu0 0.0
  %183 = vmatpush1.msra.mxu0 %v137
  %184 = vmatprep.subr.mxu0 0.0
  %185 = vmatpush2.msra.mxu0 0.0
  %186 = vmatprep.subr.mxu0 0.0
  %187 = vmatpush2.msra.mxu0 0.0
  %188 = vmatprep.subr.mxu0 0.0
  %189 = vmatpush2.msra.mxu0 0.0
  %190 = vmatprep.subr.mxu0 0.0
  %191 = vmatpush2.msra.mxu0 0.0
  %192 = vmatprep.subr.mxu0 0.0
  %193 = vmatpush2.msra.mxu0 0.0
  %194 = vmatprep.subr.mxu0 0.0
  %195 = vmatpush2.msra.mxu0 0.0
  %196 = vmatprep.subr.mxu0 0.0
  %197 = vmatpush2.msra.mxu0 0.0
  %198 = vmatprep.subr.mxu0 0.0
  %199 = vmatpush2.msra.mxu0 0.0
  %200 = vmatprep.subr.mxu0 0.0
  %201 = vmatpush2.msra.mxu0 0.0
  %202 = vmatprep.subr.mxu0 0.0
  %203 = vmatpush2.msra.mxu0 0.0
  %204 = vmatprep.subr.mxu0 0.0
  %205 = vmatpush2.msra.mxu0 0.0
  %206 = vmatprep.subr.mxu0 0.0
  %207 = vmatpush2.msra.mxu0 0.0
  %208 = vmatprep.subr.mxu0 0.0
  %209 = vmatpush2.msra.mxu0 0.0
  %210 = vmatprep.subr.mxu0 0.0
  %211 = vmatpush2.msra.mxu0 0.0
  %212 = vmatprep.subr.mxu0 0.0
  %213 = vmatpush2.msra.mxu0 0.0
  %214 = vmatprep.subr.mxu0 0.0
  %215 = vmatpush2.msra.mxu0 0.0
  %216 = vmatprep.mubr.f32.mxu0 0.0
  %217 = vmatmul.mubr.f32.gmra.mxu0 %v150
  %v218 = vpop.f32.mrf.mxu0
  %v219 = vadd.f32 %v146, %v218
  %v220 = vpop.f32.mrf.mxu0
  %221 = vdwg.mxu0
  %v222 = vadd.f32 %v136, %v219
  %v223 = vxor.u32 %v222, 2147483648
  %v224 = vmul.f32 %v223, 1.442695
  %v225 = vpow.pop %v224
  %v226 = vadd.f32 %v225, 1.0
  %v227 = vrcp.pop %v226
  %v228 = vmul.f32 1.0, %v227
  %230 = vrot.lane.b32.xlu0 %v219, 64
  %v231 = vpop.permute.xlu0 %230
  %v233 = vmul.f32 %v228, %v231
  %235 = vrot.lane.b32.xlu0 %v233, 64
  %v236 = vpop.permute.xlu0 %235
  %v238 = vadd.f32 %v136, %v236
  %v239 = vtanh.pop %v238
  %v240 = vsub.f32 1.0, %v228
  %242 = vrot.lane.b32.xlu0 %v239, 96
  %v243 = vpop.permute.xlu0 %242
  %v245 = vmul.f32 %v240, %v243
  %v246 = vmul.f32 %v228, 0.0
  %v247 = vadd.f32 %v245, %v246
  %249 = vrot.lane.b32.xlu0 %v247, 96
  %v250 = vpop.permute.xlu0 %249
  %vm252 = vcmask 123904
  %253 = vst.msk [vmem:[%s5] sm:$0x3] %vm252, %v250
  %s254 = scalar_lea.vmem %s5, 10
  %vm255 = vcmask 255104
  %256 = vst.msk [vmem:[%s254] sm:$0x3] %vm255, %v250
  %v257 = vld [vmem:[#allocation2 + $0x2] sm:$0x3]
  %v258 = vld [vmem:[#allocation2 + $0x8] sm:$0x3]
  %v259 = vsel %vm133, %v257, %v258
  %v260 = vld [vmem:[%s3] sm:$0xff]
  %v261 = vld [vmem:[%s3 + $0x8] sm:$0xff]
  %v262 = vld [vmem:[%s3 + $0x10] sm:$0xff]
  %v263 = vld [vmem:[%s3 + $0x18] sm:$0xff]
  %v264 = vld [vmem:[%s4] sm:$0x1]
  %v266 = vlaneseq
  %v267 = vshrl.u32 %v266, 7
  %v268 = vsub.s32 0, %v267
  %v269 = vrot.slane %v264, %v268
  %v271 = vsel %vm148, %v250, 0
  %273 = vmatprep.subr.mxu0 0.0
  %274 = vmatpush1.msra.mxu0 0.0
  %275 = vmatprep.subr.mxu0 0.0
  %276 = vmatpush1.msra.mxu0 0.0
  %277 = vmatprep.subr.mxu0 0.0
  %278 = vmatpush1.msra.mxu0 0.0
  %279 = vmatprep.subr.mxu0 0.0
  %280 = vmatpush1.msra.mxu0 0.0
  %281 = vmatprep.subr.mxu0 0.0
  %282 = vmatpush1.msra.mxu0 0.0
  %283 = vmatprep.subr.mxu0 0.0
  %284 = vmatpush1.msra.mxu0 0.0
  %285 = vmatprep.subr.mxu0 0.0
  %286 = vmatpush1.msra.mxu0 0.0
  %287 = vmatprep.subr.mxu0 0.0
  %288 = vmatpush1.msra.mxu0 0.0
  %289 = vmatprep.subr.mxu0 0.0
  %290 = vmatpush1.msra.mxu0 0.0
  %291 = vmatprep.subr.mxu0 0.0
  %292 = vmatpush1.msra.mxu0 0.0
  %293 = vmatprep.subr.mxu0 0.0
  %294 = vmatpush1.msra.mxu0 0.0
  %295 = vmatprep.subr.mxu0 0.0
  %296 = vmatpush1.msra.mxu0 0.0
  %297 = vmatprep.subr.mxu0 0.0
  %298 = vmatpush1.msra.mxu0 %v263
  %299 = vmatprep.subr.mxu0 0.0
  %300 = vmatpush1.msra.mxu0 %v262
  %301 = vmatprep.subr.mxu0 0.0
  %302 = vmatpush1.msra.mxu0 %v261
  %303 = vmatprep.subr.mxu0 0.0
  %304 = vmatpush1.msra.mxu0 %v260
  %305 = vmatprep.subr.mxu0 0.0
  %306 = vmatpush2.msra.mxu0 0.0
  %307 = vmatprep.subr.mxu0 0.0
  %308 = vmatpush2.msra.mxu0 0.0
  %309 = vmatprep.subr.mxu0 0.0
  %310 = vmatpush2.msra.mxu0 0.0
  %311 = vmatprep.subr.mxu0 0.0
  %312 = vmatpush2.msra.mxu0 0.0
  %313 = vmatprep.subr.mxu0 0.0
  %314 = vmatpush2.msra.mxu0 0.0
  %315 = vmatprep.subr.mxu0 0.0
  %316 = vmatpush2.msra.mxu0 0.0
  %317 = vmatprep.subr.mxu0 0.0
  %318 = vmatpush2.msra.mxu0 0.0
  %319 = vmatprep.subr.mxu0 0.0
  %320 = vmatpush2.msra.mxu0 0.0
  %321 = vmatprep.subr.mxu0 0.0
  %322 = vmatpush2.msra.mxu0 0.0
  %323 = vmatprep.subr.mxu0 0.0
  %324 = vmatpush2.msra.mxu0 0.0
  %325 = vmatprep.subr.mxu0 0.0
  %326 = vmatpush2.msra.mxu0 0.0
  %327 = vmatprep.subr.mxu0 0.0
  %328 = vmatpush2.msra.mxu0 0.0
  %329 = vmatprep.subr.mxu0 0.0
  %330 = vmatpush2.msra.mxu0 0.0
  %331 = vmatprep.subr.mxu0 0.0
  %332 = vmatpush2.msra.mxu0 0.0
  %333 = vmatprep.subr.mxu0 0.0
  %334 = vmatpush2.msra.mxu0 0.0
  %335 = vmatprep.subr.mxu0 0.0
  %336 = vmatpush2.msra.mxu0 0.0
  %337 = vmatprep.mubr.f32.mxu0 0.0
  %338 = vmatmul.mubr.f32.gmra.mxu0 %v271
  %v339 = vpop.f32.mrf.mxu0
  %v340 = vadd.f32 %v269, %v339
  %v341 = vpop.f32.mrf.mxu0
  %342 = vdwg.mxu0
  %v343 = vadd.f32 %v259, %v340
  %v344 = vxor.u32 %v343, 2147483648
  %v345 = vmul.f32 %v344, 1.442695
  %v346 = vpow.pop %v345
  %v347 = vadd.f32 %v346, 1.0
  %v348 = vrcp.pop %v347
  %v349 = vmul.f32 1.0, %v348
  %351 = vrot.lane.b32.xlu0 %v340, 64
  %v352 = vpop.permute.xlu0 %351
  %v354 = vmul.f32 %v349, %v352
  %356 = vrot.lane.b32.xlu0 %v354, 64
  %v357 = vpop.permute.xlu0 %356
  %v359 = vadd.f32 %v259, %v357
  %v360 = vtanh.pop %v359
  %v361 = vsub.f32 1.0, %v349
  %363 = vrot.lane.b32.xlu0 %v360, 96
  %v364 = vpop.permute.xlu0 %363
  %v366 = vmul.f32 %v361, %v364
  %v367 = vmul.f32 %v349, %v247
  %v368 = vadd.f32 %v366, %v367
  %370 = vrot.lane.b32.xlu0 %v368, 96
  %v371 = vpop.permute.xlu0 %370
  %s373 = scalar_lea.vmem %s5, 2
  %374 = vst.msk [vmem:[%s373] sm:$0x3] %vm252, %v371
  %s375 = scalar_lea.vmem %s5, 8
  %376 = vst.msk [vmem:[%s375] sm:$0x3] %vm255, %v371
  %v377 = vld [vmem:[#allocation2 + $0x4] sm:$0x3]
  %v378 = vld [vmem:[#allocation2 + $0x6] sm:$0x3]
  %v379 = vsel %vm133, %v377, %v378
  %v380 = vld [vmem:[%s3] sm:$0xff]
  %v381 = vld [vmem:[%s3 + $0x8] sm:$0xff]
  %v382 = vld [vmem:[%s3 + $0x10] sm:$0xff]
  %v383 = vld [vmem:[%s3 + $0x18] sm:$0xff]
  %v384 = vld [vmem:[%s4] sm:$0x1]
  %v386 = vlaneseq
  %v387 = vshrl.u32 %v386, 7
  %v388 = vsub.s32 0, %v387
  %v389 = vrot.slane %v384, %v388
  %v391 = vsel %vm148, %v371, 0
  %393 = vmatprep.subr.mxu0 0.0
  %394 = vmatpush1.msra.mxu0 0.0
  %395 = vmatprep.subr.mxu0 0.0
  %396 = vmatpush1.msra.mxu0 0.0
  %397 = vmatprep.subr.mxu0 0.0
  %398 = vmatpush1.msra.mxu0 0.0
  %399 = vmatprep.subr.mxu0 0.0
  %400 = vmatpush1.msra.mxu0 0.0
  %401 = vmatprep.subr.mxu0 0.0
  %402 = vmatpush1.msra.mxu0 0.0
  %403 = vmatprep.subr.mxu0 0.0
  %404 = vmatpush1.msra.mxu0 0.0
  %405 = vmatprep.subr.mxu0 0.0
  %406 = vmatpush1.msra.mxu0 0.0
  %407 = vmatprep.subr.mxu0 0.0
  %408 = vmatpush1.msra.mxu0 0.0
  %409 = vmatprep.subr.mxu0 0.0
  %410 = vmatpush1.msra.mxu0 0.0
  %411 = vmatprep.subr.mxu0 0.0
  %412 = vmatpush1.msra.mxu0 0.0
  %413 = vmatprep.subr.mxu0 0.0
  %414 = vmatpush1.msra.mxu0 0.0
  %415 = vmatprep.subr.mxu0 0.0
  %416 = vmatpush1.msra.mxu0 0.0
  %417 = vmatprep.subr.mxu0 0.0
  %418 = vmatpush1.msra.mxu0 %v383
  %419 = vmatprep.subr.mxu0 0.0
  %420 = vmatpush1.msra.mxu0 %v382
  %421 = vmatprep.subr.mxu0 0.0
  %422 = vmatpush1.msra.mxu0 %v381
  %423 = vmatprep.subr.mxu0 0.0
  %424 = vmatpush1.msra.mxu0 %v380
  %425 = vmatprep.subr.mxu0 0.0
  %426 = vmatpush2.msra.mxu0 0.0
  %427 = vmatprep.subr.mxu0 0.0
  %428 = vmatpush2.msra.mxu0 0.0
  %429 = vmatprep.subr.mxu0 0.0
  %430 = vmatpush2.msra.mxu0 0.0
  %431 = vmatprep.subr.mxu0 0.0
  %432 = vmatpush2.msra.mxu0 0.0
  %433 = vmatprep.subr.mxu0 0.0
  %434 = vmatpush2.msra.mxu0 0.0
  %435 = vmatprep.subr.mxu0 0.0
  %436 = vmatpush2.msra.mxu0 0.0
  %437 = vmatprep.subr.mxu0 0.0
  %438 = vmatpush2.msra.mxu0 0.0
  %439 = vmatprep.subr.mxu0 0.0
  %440 = vmatpush2.msra.mxu0 0.0
  %441 = vmatprep.subr.mxu0 0.0
  %442 = vmatpush2.msra.mxu0 0.0
  %443 = vmatprep.subr.mxu0 0.0
  %444 = vmatpush2.msra.mxu0 0.0
  %445 = vmatprep.subr.mxu0 0.0
  %446 = vmatpush2.msra.mxu0 0.0
  %447 = vmatprep.subr.mxu0 0.0
  %448 = vmatpush2.msra.mxu0 0.0
  %449 = vmatprep.subr.mxu0 0.0
  %450 = vmatpush2.msra.mxu0 0.0
  %451 = vmatprep.subr.mxu0 0.0
  %452 = vmatpush2.msra.mxu0 0.0
  %453 = vmatprep.subr.mxu0 0.0
  %454 = vmatpush2.msra.mxu0 0.0
  %455 = vmatprep.subr.mxu0 0.0
  %456 = vmatpush2.msra.mxu0 0.0
  %457 = vmatprep.mubr.f32.mxu0 0.0
  %458 = vmatmul.mubr.f32.gmra.mxu0 %v391
  %v459 = vpop.f32.mrf.mxu0
  %v460 = vadd.f32 %v389, %v459
  %v461 = vpop.f32.mrf.mxu0
  %462 = vdwg.mxu0
  %v463 = vadd.f32 %v379, %v460
  %v464 = vxor.u32 %v463, 2147483648
  %v465 = vmul.f32 %v464, 1.442695
  %v466 = vpow.pop %v465
  %v467 = vadd.f32 %v466, 1.0
  %v468 = vrcp.pop %v467
  %v469 = vmul.f32 1.0, %v468
  %471 = vrot.lane.b32.xlu0 %v460, 64
  %v472 = vpop.permute.xlu0 %471
  %v474 = vmul.f32 %v469, %v472
  %476 = vrot.lane.b32.xlu0 %v474, 64
  %v477 = vpop.permute.xlu0 %476
  %v479 = vadd.f32 %v379, %v477
  %v480 = vtanh.pop %v479
  %v481 = vsub.f32 1.0, %v469
  %483 = vrot.lane.b32.xlu0 %v480, 96
  %v484 = vpop.permute.xlu0 %483
  %v486 = vmul.f32 %v481, %v484
  %v487 = vmul.f32 %v469, %v368
  %v488 = vadd.f32 %v486, %v487
  %490 = vrot.lane.b32.xlu0 %v488, 96
  %v491 = vpop.permute.xlu0 %490
  %s493 = scalar_lea.vmem %s5, 4
  %494 = vst.msk [vmem:[%s493] sm:$0x3] %vm252, %v491
  %s495 = scalar_lea.vmem %s5, 6
  %496 = vst.msk [vmem:[%s495] sm:$0x3] %vm255, %v491
  %v497 = vld [vmem:[#allocation2 + $0x6] sm:$0x3]
  %v498 = vld [vmem:[#allocation2 + $0x4] sm:$0x3]
  %v499 = vsel %vm133, %v497, %v498
  %v500 = vld [vmem:[%s3] sm:$0xff]
  %v501 = vld [vmem:[%s3 + $0x8] sm:$0xff]
  %v502 = vld [vmem:[%s3 + $0x10] sm:$0xff]
  %v503 = vld [vmem:[%s3 + $0x18] sm:$0xff]
  %v504 = vld [vmem:[%s4] sm:$0x1]
  %v506 = vlaneseq
  %v507 = vshrl.u32 %v506, 7
  %v508 = vsub.s32 0, %v507
  %v509 = vrot.slane %v504, %v508
  %v511 = vsel %vm148, %v491, 0
  %513 = vmatprep.subr.mxu0 0.0
  %514 = vmatpush1.msra.mxu0 0.0
  %515 = vmatprep.subr.mxu0 0.0
  %516 = vmatpush1.msra.mxu0 0.0
  %517 = vmatprep.subr.mxu0 0.0
  %518 = vmatpush1.msra.mxu0 0.0
  %519 = vmatprep.subr.mxu0 0.0
  %520 = vmatpush1.msra.mxu0 0.0
  %521 = vmatprep.subr.mxu0 0.0
  %522 = vmatpush1.msra.mxu0 0.0
  %523 = vmatprep.subr.mxu0 0.0
  %524 = vmatpush1.msra.mxu0 0.0
  %525 = vmatprep.subr.mxu0 0.0
  %526 = vmatpush1.msra.mxu0 0.0
  %527 = vmatprep.subr.mxu0 0.0
  %528 = vmatpush1.msra.mxu0 0.0
  %529 = vmatprep.subr.mxu0 0.0
  %530 = vmatpush1.msra.mxu0 0.0
  %531 = vmatprep.subr.mxu0 0.0
  %532 = vmatpush1.msra.mxu0 0.0
  %533 = vmatprep.subr.mxu0 0.0
  %534 = vmatpush1.msra.mxu0 0.0
  %535 = vmatprep.subr.mxu0 0.0
  %536 = vmatpush1.msra.mxu0 0.0
  %537 = vmatprep.subr.mxu0 0.0
  %538 = vmatpush1.msra.mxu0 %v503
  %539 = vmatprep.subr.mxu0 0.0
  %540 = vmatpush1.msra.mxu0 %v502
  %541 = vmatprep.subr.mxu0 0.0
  %542 = vmatpush1.msra.mxu0 %v501
  %543 = vmatprep.subr.mxu0 0.0
  %544 = vmatpush1.msra.mxu0 %v500
  %545 = vmatprep.subr.mxu0 0.0
  %546 = vmatpush2.msra.mxu0 0.0
  %547 = vmatprep.subr.mxu0 0.0
  %548 = vmatpush2.msra.mxu0 0.0
  %549 = vmatprep.subr.mxu0 0.0
  %550 = vmatpush2.msra.mxu0 0.0
  %551 = vmatprep.subr.mxu0 0.0
  %552 = vmatpush2.msra.mxu0 0.0
  %553 = vmatprep.subr.mxu0 0.0
  %554 = vmatpush2.msra.mxu0 0.0
  %555 = vmatprep.subr.mxu0 0.0
  %556 = vmatpush2.msra.mxu0 0.0
  %557 = vmatprep.subr.mxu0 0.0
  %558 = vmatpush2.msra.mxu0 0.0
  %559 = vmatprep.subr.mxu0 0.0
  %560 = vmatpush2.msra.mxu0 0.0
  %561 = vmatprep.subr.mxu0 0.0
  %562 = vmatpush2.msra.mxu0 0.0
  %563 = vmatprep.subr.mxu0 0.0
  %564 = vmatpush2.msra.mxu0 0.0
  %565 = vmatprep.subr.mxu0 0.0
  %566 = vmatpush2.msra.mxu0 0.0
  %567 = vmatprep.subr.mxu0 0.0
  %568 = vmatpush2.msra.mxu0 0.0
  %569 = vmatprep.subr.mxu0 0.0
  %570 = vmatpush2.msra.mxu0 0.0
  %571 = vmatprep.subr.mxu0 0.0
  %572 = vmatpush2.msra.mxu0 0.0
  %573 = vmatprep.subr.mxu0 0.0
  %574 = vmatpush2.msra.mxu0 0.0
  %575 = vmatprep.subr.mxu0 0.0
  %576 = vmatpush2.msra.mxu0 0.0
  %577 = vmatprep.mubr.f32.mxu0 0.0
  %578 = vmatmul.mubr.f32.gmra.mxu0 %v511
  %v579 = vpop.f32.mrf.mxu0
  %v580 = vadd.f32 %v509, %v579
  %v581 = vpop.f32.mrf.mxu0
  %582 = vdwg.mxu0
  %v583 = vadd.f32 %v499, %v580
  %v584 = vxor.u32 %v583, 2147483648
  %v585 = vmul.f32 %v584, 1.442695
  %v586 = vpow.pop %v585
  %v587 = vadd.f32 %v586, 1.0
  %v588 = vrcp.pop %v587
  %v589 = vmul.f32 1.0, %v588
  %591 = vrot.lane.b32.xlu0 %v580, 64
  %v592 = vpop.permute.xlu0 %591
  %v594 = vmul.f32 %v589, %v592
  %596 = vrot.lane.b32.xlu0 %v594, 64
  %v597 = vpop.permute.xlu0 %596
  %v599 = vadd.f32 %v499, %v597
  %v600 = vtanh.pop %v599
  %v601 = vsub.f32 1.0, %v589
  %603 = vrot.lane.b32.xlu0 %v600, 96
  %v604 = vpop.permute.xlu0 %603
  %v606 = vmul.f32 %v601, %v604
  %v607 = vmul.f32 %v589, %v488
  %v608 = vadd.f32 %v606, %v607
  %610 = vrot.lane.b32.xlu0 %v608, 96
  %v611 = vpop.permute.xlu0 %610
  %613 = vst.msk [vmem:[%s495] sm:$0x3] %vm252, %v611
  %614 = vst.msk [vmem:[%s493] sm:$0x3] %vm255, %v611
  %v615 = vld [vmem:[#allocation2 + $0x8] sm:$0x3]
  %v616 = vld [vmem:[#allocation2 + $0x2] sm:$0x3]
  %v617 = vsel %vm133, %v615, %v616
  %v618 = vld [vmem:[%s3] sm:$0xff]
  %v619 = vld [vmem:[%s3 + $0x8] sm:$0xff]
  %v620 = vld [vmem:[%s3 + $0x10] sm:$0xff]
  %v621 = vld [vmem:[%s3 + $0x18] sm:$0xff]
  %v622 = vld [vmem:[%s4] sm:$0x1]
  %v624 = vlaneseq
  %v625 = vshrl.u32 %v624, 7
  %v626 = vsub.s32 0, %v625
  %v627 = vrot.slane %v622, %v626
  %v629 = vsel %vm148, %v611, 0
  %631 = vmatprep.subr.mxu0 0.0
  %632 = vmatpush1.msra.mxu0 0.0
  %633 = vmatprep.subr.mxu0 0.0
  %634 = vmatpush1.msra.mxu0 0.0
  %635 = vmatprep.subr.mxu0 0.0
  %636 = vmatpush1.msra.mxu0 0.0
  %637 = vmatprep.subr.mxu0 0.0
  %638 = vmatpush1.msra.mxu0 0.0
  %639 = vmatprep.subr.mxu0 0.0
  %640 = vmatpush1.msra.mxu0 0.0
  %641 = vmatprep.subr.mxu0 0.0
  %642 = vmatpush1.msra.mxu0 0.0
  %643 = vmatprep.subr.mxu0 0.0
  %644 = vmatpush1.msra.mxu0 0.0
  %645 = vmatprep.subr.mxu0 0.0
  %646 = vmatpush1.msra.mxu0 0.0
  %647 = vmatprep.subr.mxu0 0.0
  %648 = vmatpush1.msra.mxu0 0.0
  %649 = vmatprep.subr.mxu0 0.0
  %650 = vmatpush1.msra.mxu0 0.0
  %651 = vmatprep.subr.mxu0 0.0
  %652 = vmatpush1.msra.mxu0 0.0
  %653 = vmatprep.subr.mxu0 0.0
  %654 = vmatpush1.msra.mxu0 0.0
  %655 = vmatprep.subr.mxu0 0.0
  %656 = vmatpush1.msra.mxu0 %v621
  %657 = vmatprep.subr.mxu0 0.0
  %658 = vmatpush1.msra.mxu0 %v620
  %659 = vmatprep.subr.mxu0 0.0
  %660 = vmatpush1.msra.mxu0 %v619
  %661 = vmatprep.subr.mxu0 0.0
  %662 = vmatpush1.msra.mxu0 %v618
  %663 = vmatprep.subr.mxu0 0.0
  %664 = vmatpush2.msra.mxu0 0.0
  %665 = vmatprep.subr.mxu0 0.0
  %666 = vmatpush2.msra.mxu0 0.0
  %667 = vmatprep.subr.mxu0 0.0
  %668 = vmatpush2.msra.mxu0 0.0
  %669 = vmatprep.subr.mxu0 0.0
  %670 = vmatpush2.msra.mxu0 0.0
  %671 = vmatprep.subr.mxu0 0.0
  %672 = vmatpush2.msra.mxu0 0.0
  %673 = vmatprep.subr.mxu0 0.0
  %674 = vmatpush2.msra.mxu0 0.0
  %675 = vmatprep.subr.mxu0 0.0
  %676 = vmatpush2.msra.mxu0 0.0
  %677 = vmatprep.subr.mxu0 0.0
  %678 = vmatpush2.msra.mxu0 0.0
  %679 = vmatprep.subr.mxu0 0.0
  %680 = vmatpush2.msra.mxu0 0.0
  %681 = vmatprep.subr.mxu0 0.0
  %682 = vmatpush2.msra.mxu0 0.0
  %683 = vmatprep.subr.mxu0 0.0
  %684 = vmatpush2.msra.mxu0 0.0
  %685 = vmatprep.subr.mxu0 0.0
  %686 = vmatpush2.msra.mxu0 0.0
  %687 = vmatprep.subr.mxu0 0.0
  %688 = vmatpush2.msra.mxu0 0.0
  %689 = vmatprep.subr.mxu0 0.0
  %690 = vmatpush2.msra.mxu0 0.0
  %691 = vmatprep.subr.mxu0 0.0
  %692 = vmatpush2.msra.mxu0 0.0
  %693 = vmatprep.subr.mxu0 0.0
  %694 = vmatpush2.msra.mxu0 0.0
  %695 = vmatprep.mubr.f32.mxu0 0.0
  %696 = vmatmul.mubr.f32.gmra.mxu0 %v629
  %v697 = vpop.f32.mrf.mxu0
  %v698 = vadd.f32 %v627, %v697
  %v699 = vpop.f32.mrf.mxu0
  %700 = vdwg.mxu0
  %v701 = vadd.f32 %v617, %v698
  %v702 = vxor.u32 %v701, 2147483648
  %v703 = vmul.f32 %v702, 1.442695
  %v704 = vpow.pop %v703
  %v705 = vadd.f32 %v704, 1.0
  %v706 = vrcp.pop %v705
  %v707 = vmul.f32 1.0, %v706
  %709 = vrot.lane.b32.xlu0 %v698, 64
  %v710 = vpop.permute.xlu0 %709
  %v712 = vmul.f32 %v707, %v710
  %714 = vrot.lane.b32.xlu0 %v712, 64
  %v715 = vpop.permute.xlu0 %714
  %v717 = vadd.f32 %v617, %v715
  %v718 = vtanh.pop %v717
  %v719 = vsub.f32 1.0, %v707
  %721 = vrot.lane.b32.xlu0 %v718, 96
  %v722 = vpop.permute.xlu0 %721
  %v724 = vmul.f32 %v719, %v722
  %v725 = vmul.f32 %v707, %v608
  %v726 = vadd.f32 %v724, %v725
  %728 = vrot.lane.b32.xlu0 %v726, 96
  %v729 = vpop.permute.xlu0 %728
  %731 = vst.msk [vmem:[%s375] sm:$0x3] %vm252, %v729
  %732 = vst.msk [vmem:[%s373] sm:$0x3] %vm255, %v729
  %v733 = vld [vmem:[#allocation2 + $0xa] sm:$0x3]
  %v734 = vld [vmem:[#allocation2] sm:$0x3]
  %v735 = vsel %vm133, %v733, %v734
  %v736 = vld [vmem:[%s3] sm:$0xff]
  %v737 = vld [vmem:[%s3 + $0x8] sm:$0xff]
  %v738 = vld [vmem:[%s3 + $0x10] sm:$0xff]
  %v739 = vld [vmem:[%s3 + $0x18] sm:$0xff]
  %v740 = vld [vmem:[%s4] sm:$0x1]
  %v742 = vlaneseq
  %v743 = vshrl.u32 %v742, 7
  %v744 = vsub.s32 0, %v743
  %v745 = vrot.slane %v740, %v744
  %v747 = vsel %vm148, %v729, 0
  %749 = vmatprep.subr.mxu0 0.0
  %750 = vmatpush1.msra.mxu0 0.0
  %751 = vmatprep.subr.mxu0 0.0
  %752 = vmatpush1.msra.mxu0 0.0
  %753 = vmatprep.subr.mxu0 0.0
  %754 = vmatpush1.msra.mxu0 0.0
  %755 = vmatprep.subr.mxu0 0.0
  %756 = vmatpush1.msra.mxu0 0.0
  %757 = vmatprep.subr.mxu0 0.0
  %758 = vmatpush1.msra.mxu0 0.0
  %759 = vmatprep.subr.mxu0 0.0
  %760 = vmatpush1.msra.mxu0 0.0
  %761 = vmatprep.subr.mxu0 0.0
  %762 = vmatpush1.msra.mxu0 0.0
  %763 = vmatprep.subr.mxu0 0.0
  %764 = vmatpush1.msra.mxu0 0.0
  %765 = vmatprep.subr.mxu0 0.0
  %766 = vmatpush1.msra.mxu0 0.0
  %767 = vmatprep.subr.mxu0 0.0
  %768 = vmatpush1.msra.mxu0 0.0
  %769 = vmatprep.subr.mxu0 0.0
  %770 = vmatpush1.msra.mxu0 0.0
  %771 = vmatprep.subr.mxu0 0.0
  %772 = vmatpush1.msra.mxu0 0.0
  %773 = vmatprep.subr.mxu0 0.0
  %774 = vmatpush1.msra.mxu0 %v739
  %775 = vmatprep.subr.mxu0 0.0
  %776 = vmatpush1.msra.mxu0 %v738
  %777 = vmatprep.subr.mxu0 0.0
  %778 = vmatpush1.msra.mxu0 %v737
  %779 = vmatprep.subr.mxu0 0.0
  %780 = vmatpush1.msra.mxu0 %v736
  %781 = vmatprep.subr.mxu0 0.0
  %782 = vmatpush2.msra.mxu0 0.0
  %783 = vmatprep.subr.mxu0 0.0
  %784 = vmatpush2.msra.mxu0 0.0
  %785 = vmatprep.subr.mxu0 0.0
  %786 = vmatpush2.msra.mxu0 0.0
  %787 = vmatprep.subr.mxu0 0.0
  %788 = vmatpush2.msra.mxu0 0.0
  %789 = vmatprep.subr.mxu0 0.0
  %790 = vmatpush2.msra.mxu0 0.0
  %791 = vmatprep.subr.mxu0 0.0
  %792 = vmatpush2.msra.mxu0 0.0
  %793 = vmatprep.subr.mxu0 0.0
  %794 = vmatpush2.msra.mxu0 0.0
  %795 = vmatprep.subr.mxu0 0.0
  %796 = vmatpush2.msra.mxu0 0.0
  %797 = vmatprep.subr.mxu0 0.0
  %798 = vmatpush2.msra.mxu0 0.0
  %799 = vmatprep.subr.mxu0 0.0
  %800 = vmatpush2.msra.mxu0 0.0
  %801 = vmatprep.subr.mxu0 0.0
  %802 = vmatpush2.msra.mxu0 0.0
  %803 = vmatprep.subr.mxu0 0.0
  %804 = vmatpush2.msra.mxu0 0.0
  %805 = vmatprep.subr.mxu0 0.0
  %806 = vmatpush2.msra.mxu0 0.0
  %807 = vmatprep.subr.mxu0 0.0
  %808 = vmatpush2.msra.mxu0 0.0
  %809 = vmatprep.subr.mxu0 0.0
  %810 = vmatpush2.msra.mxu0 0.0
  %811 = vmatprep.subr.mxu0 0.0
  %812 = vmatpush2.msra.mxu0 0.0
  %813 = vmatprep.mubr.f32.mxu0 0.0
  %814 = vmatmul.mubr.f32.gmra.mxu0 %v747
  %v815 = vpop.f32.mrf.mxu0
  %v816 = vadd.f32 %v745, %v815
  %v817 = vpop.f32.mrf.mxu0
  %818 = vdwg.mxu0
  %v819 = vadd.f32 %v735, %v816
  %v820 = vxor.u32 %v819, 2147483648
  %v821 = vmul.f32 %v820, 1.442695
  %v822 = vpow.pop %v821
  %v823 = vadd.f32 %v822, 1.0
  %v824 = vrcp.pop %v823
  %v825 = vmul.f32 1.0, %v824
  %827 = vrot.lane.b32.xlu0 %v816, 64
  %v828 = vpop.permute.xlu0 %827
  %v830 = vmul.f32 %v825, %v828
  %832 = vrot.lane.b32.xlu0 %v830, 64
  %v833 = vpop.permute.xlu0 %832
  %v835 = vadd.f32 %v735, %v833
  %v836 = vtanh.pop %v835
  %v837 = vsub.f32 1.0, %v825
  %839 = vrot.lane.b32.xlu0 %v836, 96
  %v840 = vpop.permute.xlu0 %839
  %v842 = vmul.f32 %v837, %v840
  %v843 = vmul.f32 %v825, %v726
  %v844 = vadd.f32 %v842, %v843
  %846 = vrot.lane.b32.xlu0 %v844, 96
  %v847 = vpop.permute.xlu0 %846
  %849 = vst.msk [vmem:[%s254] sm:$0x3] %vm252, %v847
  %850 = vst.msk [vmem:[%s5] sm:$0x3] %vm255, %v847
  %vm851 = vcmask 254976
  %852 = vst.msk [vmem:[%s6] sm:$0x3] %vm851, %v847
  // Predicated region
  $region22: #{encoder_decoder_forward.2} parent=0 // pred_check
    _
  $region23: #{encoder_decoder_forward.2} parent=0 // pred_check_branch
    %854 = sbr.rel (0) target = $region25
  $region24: #{encoder_decoder_forward.2} parent=0 // pred_region
    _
  $region25: #{encoder_decoder_forward.2} parent=0 // pred_fallthru
    _
  // Predicated region
  $region26: #{encoder_decoder_forward.2} parent=0 // pred_check
    _
  $region27: #{encoder_decoder_forward.2} parent=0 // pred_check_branch
    %856 = sbr.rel (0) target = $region29
  $region28: #{encoder_decoder_forward.2} parent=0 // pred_region
    _
  $region29: #{encoder_decoder_forward.2} parent=0 // pred_fallthru
    _
  // Predicated region
  $region30: #{encoder_decoder_forward.2} parent=0 // pred_check
    _
  $region31: #{encoder_decoder_forward.2} parent=0 // pred_check_branch
    %858 = sbr.rel (0) target = $region33
  $region32: #{encoder_decoder_forward.2} parent=0 // pred_region
    _
  $region33: #{encoder_decoder_forward.2} parent=0 // pred_fallthru
    _
  // Predicated region
  $region34: #{encoder_decoder_forward.2} parent=0 // pred_check
    _
  $region35: #{encoder_decoder_forward.2} parent=0 // pred_check_branch
    %860 = sbr.rel (0) target = $region37
  $region36: #{encoder_decoder_forward.2} parent=0 // pred_region
    _
  $region37: #{encoder_decoder_forward.2} parent=0 // pred_fallthru
    _

// kernel: encoder_decoder_forward.3
$region0: #{encoder_decoder_forward.3}
  #allocation0 [shape = 'u32[]', space=smem, size = 0x4, offset = 0x4, fixed_abs, tag = 'smem constant byte address 0x4 - core index']
  #allocation1 [shape = 'u32[144,128]{1,0:T(1,128)}', space=vmem, size = 0x12000, scoped, tag = 'internal scratch']
  #allocation2 [shape = 'f32[2,96]{1,0:T(2,128)}', space=vmem, size = 0x400, scoped, tag = 'scratch operand']
  %s0 = inlined_call_operand.vmem [shape: f32[12,16], index: 0, kind: input, shape index: {}]
  %s1 = inlined_call_operand.vmem [shape: f32[2,6,32], index: 1, kind: input, shape index: {}]
  %s2 = inlined_call_operand.vmem [shape: f32[1,2,32], index: 2, kind: input, shape index: {}]
  %s3 = inlined_call_operand.vmem [shape: f32[32,32], index: 3, kind: input, shape index: {}]
  %s4 = inlined_call_operand.vmem [shape: f32[32,64], index: 4, kind: input, shape index: {}]
  %s5 = inlined_call_operand.vmem [shape: f32[32,64], index: 5, kind: input, shape index: {}]
  %s6 = inlined_call_operand.vmem [shape: f32[1,64], index: 6, kind: input, shape index: {}]
  %s7 = inlined_call_operand.vmem [shape: f32[64,12], index: 7, kind: input, shape index: {}]
  %s8 = inlined_call_operand.vmem [shape: f32[1,12], index: 8, kind: input, shape index: {}]
  %s9 = inlined_call_operand.vmem [shape: f32[96,256], index: 9, kind: input, shape index: {}]
  %s10 = inlined_call_operand.vmem [shape: f32[1,256], index: 10, kind: input, shape index: {}]
  %s11 = inlined_call_operand.vmem [shape: f32[256,12], index: 11, kind: input, shape index: {}]
  %s12 = inlined_call_operand.vmem [shape: f32[1,12], index: 12, kind: input, shape index: {}]
  %s13 = inlined_call_operand.vmem [shape: f32[16,96], index: 13, kind: input, shape index: {}]
  %s14 = inlined_call_operand.vmem [shape: f32[1,96], index: 14, kind: input, shape index: {}]
  %s15 = inlined_call_operand.vmem [shape: f32[32,96], index: 15, kind: input, shape index: {}]
  %s16 = inlined_call_operand.vmem [shape: f32[1,96], index: 16, kind: input, shape index: {}]
  %s17 = inlined_call_operand.hbm [shape: f32[2,12], index: 17, kind: output, shape index: {}]
  %s18 = sld [smem:[#allocation0]]
  $region78: #{encoder_decoder_forward.3} parent=0
    _
  %s20 = ssub.s32 1, %s18
  %s21 = scalar_select 0, %s20, %s18
  $region1: #{encoder_decoder_forward.3} parent=0
    #allocation3 [shape = 'u8[1024]{0}', space=vmem, size = 0x400, scoped, tag = 'output window, operand 0, single buffered']
    #allocation4 [shape = 's32[1]{0}', space=sflag, size = 0x4, scoped, tag = 'scoped memory for encoder_decoder_forward.3']
    %22 = vsyncpa [#allocation4], 0
    // Predicated region
    $region2: #{encoder_decoder_forward.3} parent=1 // pred_check
      _
    $region3: #{encoder_decoder_forward.3} parent=1 // pred_check_branch
      %24 = sbr.rel (0) target = $region5
    $region4: #{encoder_decoder_forward.3} parent=1 // pred_region
      _
    $region5: #{encoder_decoder_forward.3} parent=1 // pred_fallthru
      _
    // Predicated region
    $region6: #{encoder_decoder_forward.3} parent=1 // pred_check
      _
    $region7: #{encoder_decoder_forward.3} parent=1 // pred_check_branch
      %26 = sbr.rel (0) target = $region9
    $region8: #{encoder_decoder_forward.3} parent=1 // pred_region
      _
    $region9: #{encoder_decoder_forward.3} parent=1 // pred_fallthru
      _
    // Predicated region
    $region10: #{encoder_decoder_forward.3} parent=1 // pred_check
      _
    $region11: #{encoder_decoder_forward.3} parent=1 // pred_check_branch
      %28 = sbr.rel (0) target = $region13
    $region12: #{encoder_decoder_forward.3} parent=1 // pred_region
      _
    $region13: #{encoder_decoder_forward.3} parent=1 // pred_fallthru
      _
    // Predicated region
    $region14: #{encoder_decoder_forward.3} parent=1 // pred_check
      _
    $region15: #{encoder_decoder_forward.3} parent=1 // pred_check_branch
      %30 = sbr.rel (0) target = $region17
    $region16: #{encoder_decoder_forward.3} parent=1 // pred_region
      _
    $region17: #{encoder_decoder_forward.3} parent=1 // pred_fallthru
      _
    // Predicated region
    $region18: #{encoder_decoder_forward.3} parent=1 // pred_check
      _
    $region19: #{encoder_decoder_forward.3} parent=1 // pred_check_branch
      %32 = sbr.rel (0) target = $region21
    $region20: #{encoder_decoder_forward.3} parent=1 // pred_region
      _
    $region21: #{encoder_decoder_forward.3} parent=1 // pred_fallthru
      _
    // Predicated region
    $region22: #{encoder_decoder_forward.3} parent=1 // pred_check
      _
    $region23: #{encoder_decoder_forward.3} parent=1 // pred_check_branch
      %34 = sbr.rel (0) target = $region25
    $region24: #{encoder_decoder_forward.3} parent=1 // pred_region
      _
    $region25: #{encoder_decoder_forward.3} parent=1 // pred_fallthru
      _
    // Predicated region
    $region26: #{encoder_decoder_forward.3} parent=1 // pred_check
      _
    $region27: #{encoder_decoder_forward.3} parent=1 // pred_check_branch
      %36 = sbr.rel (0) target = $region29
    $region28: #{encoder_decoder_forward.3} parent=1 // pred_region
      _
    $region29: #{encoder_decoder_forward.3} parent=1 // pred_fallthru
      _
    // Predicated region
    $region30: #{encoder_decoder_forward.3} parent=1 // pred_check
      _
    $region31: #{encoder_decoder_forward.3} parent=1 // pred_check_branch
      %38 = sbr.rel (0) target = $region33
    $region32: #{encoder_decoder_forward.3} parent=1 // pred_region
      _
    $region33: #{encoder_decoder_forward.3} parent=1 // pred_fallthru
      _
    // Predicated region
    $region34: #{encoder_decoder_forward.3} parent=1 // pred_check
      _
    $region35: #{encoder_decoder_forward.3} parent=1 // pred_check_branch
      %40 = sbr.rel (0) target = $region37
    $region36: #{encoder_decoder_forward.3} parent=1 // pred_region
      _
    $region37: #{encoder_decoder_forward.3} parent=1 // pred_fallthru
      _
    // Predicated region
    $region38: #{encoder_decoder_forward.3} parent=1 // pred_check
      _
    $region39: #{encoder_decoder_forward.3} parent=1 // pred_check_branch
      %42 = sbr.rel (0) target = $region41
    $region40: #{encoder_decoder_forward.3} parent=1 // pred_region
      _
    $region41: #{encoder_decoder_forward.3} parent=1 // pred_fallthru
      _
    // Predicated region
    $region42: #{encoder_decoder_forward.3} parent=1 // pred_check
      _
    $region43: #{encoder_decoder_forward.3} parent=1 // pred_check_branch
      %44 = sbr.rel (0) target = $region45
    $region44: #{encoder_decoder_forward.3} parent=1 // pred_region
      _
    $region45: #{encoder_decoder_forward.3} parent=1 // pred_fallthru
      _
    // Predicated region
    $region46: #{encoder_decoder_forward.3} parent=1 // pred_check
      _
    $region47: #{encoder_decoder_forward.3} parent=1 // pred_check_branch
      %46 = sbr.rel (0) target = $region49
    $region48: #{encoder_decoder_forward.3} parent=1 // pred_region
      _
    $region49: #{encoder_decoder_forward.3} parent=1 // pred_fallthru
      _
    // Predicated region
    $region50: #{encoder_decoder_forward.3} parent=1 // pred_check
      _
    $region51: #{encoder_decoder_forward.3} parent=1 // pred_check_branch
      %48 = sbr.rel (0) target = $region53
    $region52: #{encoder_decoder_forward.3} parent=1 // pred_region
      _
    $region53: #{encoder_decoder_forward.3} parent=1 // pred_fallthru
      _
    // Predicated region
    $region54: #{encoder_decoder_forward.3} parent=1 // pred_check
      _
    $region55: #{encoder_decoder_forward.3} parent=1 // pred_check_branch
      %50 = sbr.rel (0) target = $region57
    $region56: #{encoder_decoder_forward.3} parent=1 // pred_region
      _
    $region57: #{encoder_decoder_forward.3} parent=1 // pred_fallthru
      _
    // Predicated region
    $region58: #{encoder_decoder_forward.3} parent=1 // pred_check
      _
    $region59: #{encoder_decoder_forward.3} parent=1 // pred_check_branch
      %52 = sbr.rel (0) target = $region61
    $region60: #{encoder_decoder_forward.3} parent=1 // pred_region
      _
    $region61: #{encoder_decoder_forward.3} parent=1 // pred_fallthru
      _
    // Predicated region
    $region62: #{encoder_decoder_forward.3} parent=1 // pred_check
      _
    $region63: #{encoder_decoder_forward.3} parent=1 // pred_check_branch
      %54 = sbr.rel (0) target = $region65
    $region64: #{encoder_decoder_forward.3} parent=1 // pred_region
      _
    $region65: #{encoder_decoder_forward.3} parent=1 // pred_fallthru
      _
    // Predicated region
    $region66: #{encoder_decoder_forward.3} parent=1 // pred_check
      _
    $region67: #{encoder_decoder_forward.3} parent=1 // pred_check_branch
      %56 = sbr.rel (0) target = $region69
    $region68: #{encoder_decoder_forward.3} parent=1 // pred_region
      _
    $region69: #{encoder_decoder_forward.3} parent=1 // pred_fallthru
      _
    %v57 = vlaneseq
    %v58 = vand.u32 %v57, 127
    %v59 = vld [vmem:[%s1] sm:$0x3f]
    %v60 = vld [vmem:[%s1 + $0x8] sm:$0x3f]
    %v61 = vld [vmem:[%s2] sm:$0x3]
    %vm62 = vcmp.eq.s32.totalorder %v58, 0
    %v63 = vsel %vm62, 1, 0
    %v64 = vcvt.s32.f32 %v63
    %v65 = vld [vmem:[%s0] sm:$0xff]
    %v66 = vld [vmem:[%s0 + $0x8] sm:$0xf]
    %vm67 = vcmask 97280
    %v69 = vsel %vm67, %v64, 0
    %vm71 = vcmask 1043456
    %v73 = vsel %vm71, %v66, 0
    %75 = vmatprep.subr.mxu0 0.0
    %76 = vmatpush1.msra.mxu0 0.0
    %77 = vmatprep.subr.mxu0 0.0
    %78 = vmatpush1.msra.mxu0 0.0
    %79 = vmatprep.subr.mxu0 0.0
    %80 = vmatpush1.msra.mxu0 0.0
    %81 = vmatprep.subr.mxu0 0.0
    %82 = vmatpush1.msra.mxu0 0.0
    %83 = vmatprep.subr.mxu0 0.0
    %84 = vmatpush1.msra.mxu0 0.0
    %85 = vmatprep.subr.mxu0 0.0
    %86 = vmatpush1.msra.mxu0 0.0
    %87 = vmatprep.subr.mxu0 0.0
    %88 = vmatpush1.msra.mxu0 0.0
    %89 = vmatprep.subr.mxu0 0.0
    %90 = vmatpush1.msra.mxu0 0.0
    %91 = vmatprep.subr.mxu0 0.0
    %92 = vmatpush1.msra.mxu0 0.0
    %93 = vmatprep.subr.mxu0 0.0
    %94 = vmatpush1.msra.mxu0 0.0
    %95 = vmatprep.subr.mxu0 0.0
    %96 = vmatpush1.msra.mxu0 0.0
    %97 = vmatprep.subr.mxu0 0.0
    %98 = vmatpush1.msra.mxu0 0.0
    %99 = vmatprep.subr.mxu0 0.0
    %100 = vmatpush1.msra.mxu0 0.0
    %101 = vmatprep.subr.mxu0 0.0
    %102 = vmatpush1.msra.mxu0 0.0
    %103 = vmatprep.subr.mxu0 0.0
    %104 = vmatpush1.msra.mxu0 %v73
    %105 = vmatprep.subr.mxu0 0.0
    %106 = vmatpush1.msra.mxu0 %v65
    %107 = vmatprep.subr.mxu0 0.0
    %108 = vmatpush2.msra.mxu0 0.0
    %109 = vmatprep.subr.mxu0 0.0
    %110 = vmatpush2.msra.mxu0 0.0
    %111 = vmatprep.subr.mxu0 0.0
    %112 = vmatpush2.msra.mxu0 0.0
    %113 = vmatprep.subr.mxu0 0.0
    %114 = vmatpush2.msra.mxu0 0.0
    %115 = vmatprep.subr.mxu0 0.0
    %116 = vmatpush2.msra.mxu0 0.0
    %117 = vmatprep.subr.mxu0 0.0
    %118 = vmatpush2.msra.mxu0 0.0
    %119 = vmatprep.subr.mxu0 0.0
    %120 = vmatpush2.msra.mxu0 0.0
    %121 = vmatprep.subr.mxu0 0.0
    %122 = vmatpush2.msra.mxu0 0.0
    %123 = vmatprep.subr.mxu0 0.0
    %124 = vmatpush2.msra.mxu0 0.0
    %125 = vmatprep.subr.mxu0 0.0
    %126 = vmatpush2.msra.mxu0 0.0
    %127 = vmatprep.subr.mxu0 0.0
    %128 = vmatpush2.msra.mxu0 0.0
    %129 = vmatprep.subr.mxu0 0.0
    %130 = vmatpush2.msra.mxu0 0.0
    %131 = vmatprep.subr.mxu0 0.0
    %132 = vmatpush2.msra.mxu0 0.0
    %133 = vmatprep.subr.mxu0 0.0
    %134 = vmatpush2.msra.mxu0 0.0
    %135 = vmatprep.subr.mxu0 0.0
    %136 = vmatpush2.msra.mxu0 0.0
    %137 = vmatprep.subr.mxu0 0.0
    %138 = vmatpush2.msra.mxu0 0.0
    %139 = vmatprep.mubr.f32.mxu0 0.0
    %140 = vmatmul.mubr.f32.gmra.mxu0 %v69
    %v141 = vpop.f32.mrf.mxu0
    %v142 = vadd.f32 0.0, %v141
    %v143 = vpop.f32.mrf.mxu0
    %144 = vdwg.mxu0
    %v145 = vld [vmem:[%s13] sm:$0xff]
    %v146 = vld [vmem:[%s13 + $0x8] sm:$0xff]
    %v147 = vld [vmem:[%s14] sm:$0x1]
    %v149 = vlaneseq
    %v150 = vshrl.u32 %v149, 7
    %v151 = vsub.s32 0, %v150
    %v152 = vrot.slane %v147, %v151
    %vm154 = vcmask 130048
    %v156 = vsel %vm154, %v142, 0
    %158 = vmatprep.subr.mxu0 0.0
    %159 = vmatpush1.msra.mxu0 0.0
    %160 = vmatprep.subr.mxu0 0.0
    %161 = vmatpush1.msra.mxu0 0.0
    %162 = vmatprep.subr.mxu0 0.0
    %163 = vmatpush1.msra.mxu0 0.0
    %164 = vmatprep.subr.mxu0 0.0
    %165 = vmatpush1.msra.mxu0 0.0
    %166 = vmatprep.subr.mxu0 0.0
    %167 = vmatpush1.msra.mxu0 0.0
    %168 = vmatprep.subr.mxu0 0.0
    %169 = vmatpush1.msra.mxu0 0.0
    %170 = vmatprep.subr.mxu0 0.0
    %171 = vmatpush1.msra.mxu0 0.0
    %172 = vmatprep.subr.mxu0 0.0
    %173 = vmatpush1.msra.mxu0 0.0
    %174 = vmatprep.subr.mxu0 0.0
    %175 = vmatpush1.msra.mxu0 0.0
    %176 = vmatprep.subr.mxu0 0.0
    %177 = vmatpush1.msra.mxu0 0.0
    %178 = vmatprep.subr.mxu0 0.0
    %179 = vmatpush1.msra.mxu0 0.0
    %180 = vmatprep.subr.mxu0 0.0
    %181 = vmatpush1.msra.mxu0 0.0
    %182 = vmatprep.subr.mxu0 0.0
    %183 = vmatpush1.msra.mxu0 0.0
    %184 = vmatprep.subr.mxu0 0.0
    %185 = vmatpush1.msra.mxu0 0.0
    %186 = vmatprep.subr.mxu0 0.0
    %187 = vmatpush1.msra.mxu0 %v146
    %188 = vmatprep.subr.mxu0 0.0
    %189 = vmatpush1.msra.mxu0 %v145
    %190 = vmatprep.subr.mxu0 0.0
    %191 = vmatpush2.msra.mxu0 0.0
    %192 = vmatprep.subr.mxu0 0.0
    %193 = vmatpush2.msra.mxu0 0.0
    %194 = vmatprep.subr.mxu0 0.0
    %195 = vmatpush2.msra.mxu0 0.0
    %196 = vmatprep.subr.mxu0 0.0
    %197 = vmatpush2.msra.mxu0 0.0
    %198 = vmatprep.subr.mxu0 0.0
    %199 = vmatpush2.msra.mxu0 0.0
    %200 = vmatprep.subr.mxu0 0.0
    %201 = vmatpush2.msra.mxu0 0.0
    %202 = vmatprep.subr.mxu0 0.0
    %203 = vmatpush2.msra.mxu0 0.0
    %204 = vmatprep.subr.mxu0 0.0
    %205 = vmatpush2.msra.mxu0 0.0
    %206 = vmatprep.subr.mxu0 0.0
    %207 = vmatpush2.msra.mxu0 0.0
    %208 = vmatprep.subr.mxu0 0.0
    %209 = vmatpush2.msra.mxu0 0.0
    %210 = vmatprep.subr.mxu0 0.0
    %211 = vmatpush2.msra.mxu0 0.0
    %212 = vmatprep.subr.mxu0 0.0
    %213 = vmatpush2.msra.mxu0 0.0
    %214 = vmatprep.subr.mxu0 0.0
    %215 = vmatpush2.msra.mxu0 0.0
    %216 = vmatprep.subr.mxu0 0.0
    %217 = vmatpush2.msra.mxu0 0.0
    %218 = vmatprep.subr.mxu0 0.0
    %219 = vmatpush2.msra.mxu0 0.0
    %220 = vmatprep.subr.mxu0 0.0
    %221 = vmatpush2.msra.mxu0 0.0
    %222 = vmatprep.mubr.f32.mxu0 0.0
    %223 = vmatmul.mubr.f32.gmra.mxu0 %v156
    %v224 = vpop.f32.mrf.mxu0
    %v225 = vadd.f32 %v152, %v224
    %v226 = vpop.f32.mrf.mxu0
    %227 = vdwg.mxu0
    %v228 = vld [vmem:[%s15] sm:$0xff]
    %v229 = vld [vmem:[%s15 + $0x8] sm:$0xff]
    %v230 = vld [vmem:[%s15 + $0x10] sm:$0xff]
    %v231 = vld [vmem:[%s15 + $0x18] sm:$0xff]
    %v232 = vld [vmem:[%s16] sm:$0x1]
    %v234 = vlaneseq
    %v235 = vshrl.u32 %v234, 7
    %v236 = vsub.s32 0, %v235
    %v237 = vrot.slane %v232, %v236
    %vm239 = vcmask 261120
    %v241 = vsel %vm239, %v61, 0
    %243 = vmatprep.subr.mxu0 0.0
    %244 = vmatpush1.msra.mxu0 0.0
    %245 = vmatprep.subr.mxu0 0.0
    %246 = vmatpush1.msra.mxu0 0.0
    %247 = vmatprep.subr.mxu0 0.0
    %248 = vmatpush1.msra.mxu0 0.0
    %249 = vmatprep.subr.mxu0 0.0
    %250 = vmatpush1.msra.mxu0 0.0
    %251 = vmatprep.subr.mxu0 0.0
    %252 = vmatpush1.msra.mxu0 0.0
    %253 = vmatprep.subr.mxu0 0.0
    %254 = vmatpush1.msra.mxu0 0.0
    %255 = vmatprep.subr.mxu0 0.0
    %256 = vmatpush1.msra.mxu0 0.0
    %257 = vmatprep.subr.mxu0 0.0
    %258 = vmatpush1.msra.mxu0 0.0
    %259 = vmatprep.subr.mxu0 0.0
    %260 = vmatpush1.msra.mxu0 0.0
    %261 = vmatprep.subr.mxu0 0.0
    %262 = vmatpush1.msra.mxu0 0.0
    %263 = vmatprep.subr.mxu0 0.0
    %264 = vmatpush1.msra.mxu0 0.0
    %265 = vmatprep.subr.mxu0 0.0
    %266 = vmatpush1.msra.mxu0 0.0
    %267 = vmatprep.subr.mxu0 0.0
    %268 = vmatpush1.msra.mxu0 %v231
    %269 = vmatprep.subr.mxu0 0.0
    %270 = vmatpush1.msra.mxu0 %v230
    %271 = vmatprep.subr.mxu0 0.0
    %272 = vmatpush1.msra.mxu0 %v229
    %273 = vmatprep.subr.mxu0 0.0
    %274 = vmatpush1.msra.mxu0 %v228
    %275 = vmatprep.subr.mxu0 0.0
    %276 = vmatpush2.msra.mxu0 0.0
    %277 = vmatprep.subr.mxu0 0.0
    %278 = vmatpush2.msra.mxu0 0.0
    %279 = vmatprep.subr.mxu0 0.0
    %280 = vmatpush2.msra.mxu0 0.0
    %281 = vmatprep.subr.mxu0 0.0
    %282 = vmatpush2.msra.mxu0 0.0
    %283 = vmatprep.subr.mxu0 0.0
    %284 = vmatpush2.msra.mxu0 0.0
    %285 = vmatprep.subr.mxu0 0.0
    %286 = vmatpush2.msra.mxu0 0.0
    %287 = vmatprep.subr.mxu0 0.0
    %288 = vmatpush2.msra.mxu0 0.0
    %289 = vmatprep.subr.mxu0 0.0
    %290 = vmatpush2.msra.mxu0 0.0
    %291 = vmatprep.subr.mxu0 0.0
    %292 = vmatpush2.msra.mxu0 0.0
    %293 = vmatprep.subr.mxu0 0.0
    %294 = vmatpush2.msra.mxu0 0.0
    %295 = vmatprep.subr.mxu0 0.0
    %296 = vmatpush2.msra.mxu0 0.0
    %297 = vmatprep.subr.mxu0 0.0
    %298 = vmatpush2.msra.mxu0 0.0
    %299 = vmatprep.subr.mxu0 0.0
    %300 = vmatpush2.msra.mxu0 0.0
    %301 = vmatprep.subr.mxu0 0.0
    %302 = vmatpush2.msra.mxu0 0.0
    %303 = vmatprep.subr.mxu0 0.0
    %304 = vmatpush2.msra.mxu0 0.0
    %305 = vmatprep.subr.mxu0 0.0
    %306 = vmatpush2.msra.mxu0 0.0
    %307 = vmatprep.mubr.f32.mxu0 0.0
    %308 = vmatmul.mubr.f32.gmra.mxu0 %v241
    %v309 = vpop.f32.mrf.mxu0
    %v310 = vadd.f32 %v237, %v309
    %v311 = vpop.f32.mrf.mxu0
    %312 = vdwg.mxu0
    %v313 = vadd.f32 %v225, %v310
    %v314 = vxor.u32 %v313, 2147483648
    %v315 = vmul.f32 %v314, 1.442695
    %v316 = vpow.pop %v315
    %v317 = vadd.f32 %v316, 1.0
    %v318 = vrcp.pop %v317
    %v319 = vmul.f32 1.0, %v318
    %321 = vrot.lane.b32.xlu0 %v310, 64
    %v322 = vpop.permute.xlu0 %321
    %v324 = vmul.f32 %v319, %v322
    %326 = vrot.lane.b32.xlu0 %v324, 64
    %v327 = vpop.permute.xlu0 %326
    %v329 = vadd.f32 %v225, %v327
    %v330 = vtanh.pop %v329
    %v331 = vsub.f32 1.0, %v319
    %333 = vrot.lane.b32.xlu0 %v330, 96
    %v334 = vpop.permute.xlu0 %333
    %v336 = vmul.f32 %v331, %v334
    %337 = vrot.lane.b32.xlu0 %v61, 32
    %v338 = vpop.permute.xlu0 %337
    %v340 = vmul.f32 %v319, %v338
    %v341 = vadd.f32 %v336, %v340
    %v342 = vld [vmem:[%s3] sm:$0xff]
    %v343 = vld [vmem:[%s3 + $0x8] sm:$0xff]
    %v344 = vld [vmem:[%s3 + $0x10] sm:$0xff]
    %v345 = vld [vmem:[%s3 + $0x18] sm:$0xff]
    %347 = vrot.lane.b32.xlu0 %v341, 96
    %v348 = vpop.permute.xlu0 %347
    %v349 = vsel %vm239, %v348, 0
    %351 = vmatprep.subr.mxu0 0.0
    %352 = vmatpush1.msra.mxu0 0.0
    %353 = vmatprep.subr.mxu0 0.0
    %354 = vmatpush1.msra.mxu0 0.0
    %355 = vmatprep.subr.mxu0 0.0
    %356 = vmatpush1.msra.mxu0 0.0
    %357 = vmatprep.subr.mxu0 0.0
    %358 = vmatpush1.msra.mxu0 0.0
    %359 = vmatprep.subr.mxu0 0.0
    %360 = vmatpush1.msra.mxu0 0.0
    %361 = vmatprep.subr.mxu0 0.0
    %362 = vmatpush1.msra.mxu0 0.0
    %363 = vmatprep.subr.mxu0 0.0
    %364 = vmatpush1.msra.mxu0 0.0
    %365 = vmatprep.subr.mxu0 0.0
    %366 = vmatpush1.msra.mxu0 0.0
    %367 = vmatprep.subr.mxu0 0.0
    %368 = vmatpush1.msra.mxu0 0.0
    %369 = vmatprep.subr.mxu0 0.0
    %370 = vmatpush1.msra.mxu0 0.0
    %371 = vmatprep.subr.mxu0 0.0
    %372 = vmatpush1.msra.mxu0 0.0
    %373 = vmatprep.subr.mxu0 0.0
    %374 = vmatpush1.msra.mxu0 0.0
    %375 = vmatprep.subr.mxu0 0.0
    %376 = vmatpush1.msra.mxu0 %v345
    %377 = vmatprep.subr.mxu0 0.0
    %378 = vmatpush1.msra.mxu0 %v344
    %379 = vmatprep.subr.mxu0 0.0
    %380 = vmatpush1.msra.mxu0 %v343
    %381 = vmatprep.subr.mxu0 0.0
    %382 = vmatpush1.msra.mxu0 %v342
    %383 = vmatprep.subr.mxu0 0.0
    %384 = vmatpush2.msra.mxu0 0.0
    %385 = vmatprep.subr.mxu0 0.0
    %386 = vmatpush2.msra.mxu0 0.0
    %387 = vmatprep.subr.mxu0 0.0
    %388 = vmatpush2.msra.mxu0 0.0
    %389 = vmatprep.subr.mxu0 0.0
    %390 = vmatpush2.msra.mxu0 0.0
    %391 = vmatprep.subr.mxu0 0.0
    %392 = vmatpush2.msra.mxu0 0.0
    %393 = vmatprep.subr.mxu0 0.0
    %394 = vmatpush2.msra.mxu0 0.0
    %395 = vmatprep.subr.mxu0 0.0
    %396 = vmatpush2.msra.mxu0 0.0
    %397 = vmatprep.subr.mxu0 0.0
    %398 = vmatpush2.msra.mxu0 0.0
    %399 = vmatprep.subr.mxu0 0.0
    %400 = vmatpush2.msra.mxu0 0.0
    %401 = vmatprep.subr.mxu0 0.0
    %402 = vmatpush2.msra.mxu0 0.0
    %403 = vmatprep.subr.mxu0 0.0
    %404 = vmatpush2.msra.mxu0 0.0
    %405 = vmatprep.subr.mxu0 0.0
    %406 = vmatpush2.msra.mxu0 0.0
    %407 = vmatprep.subr.mxu0 0.0
    %408 = vmatpush2.msra.mxu0 0.0
    %409 = vmatprep.subr.mxu0 0.0
    %410 = vmatpush2.msra.mxu0 0.0
    %411 = vmatprep.subr.mxu0 0.0
    %412 = vmatpush2.msra.mxu0 0.0
    %413 = vmatprep.subr.mxu0 0.0
    %414 = vmatpush2.msra.mxu0 0.0
    %415 = vmatprep.mubr.f32.mxu0 0.0
    %416 = vmatmul.mubr.f32.gmra.mxu0 %v349
    %v417 = vpop.f32.mrf.mxu0
    %v418 = vadd.f32 0.0, %v417
    %v419 = vpop.f32.mrf.mxu0
    %420 = vdwg.mxu0
    %v423 = vunpack.c.l.s4 1966171168
    %v424 = vunpack.c.0.s8 %v423
    %v425 = vlaneseq
    %v426 = vshrl.u32 %v425, 7
    %v427 = vsub.s32 %v424, %v426
    %v428 = vrot.slane %v418, %v427
    %v429 = vcombine.high %v428, %v428
    %v431 = vunpack.c.l.s4 1966171168
    %v432 = vunpack.c.0.s8 %v431
    %v433 = vlaneseq
    %v434 = vshrl.u32 %v433, 7
    %v435 = vsub.s32 %v432, %v434
    %v436 = vrot.slane %v428, %v435
    %v438 = vunpack.c.l.s4 1966171168
    %v439 = vunpack.c.0.s8 %v438
    %v440 = vlaneseq
    %v441 = vshrl.u32 %v440, 7
    %v442 = vsub.s32 %v439, %v441
    %v443 = vrot.slane %v429, %v442
    %v444 = vlaneseq
    %v445 = vshrl.u32 %v444, 7
    %v446 = vsub.s32 0, %v445
    %v447 = vrot.slane %v436, %v446
    %v448 = vlaneseq
    %v449 = vshrl.u32 %v448, 7
    %v450 = vsub.s32 0, %v449
    %v451 = vrot.slane %v443, %v450
    %v454 = vmul.f32 %v447, %v59
    %v455 = vmul.f32 %v451, %v60
    %vm456 = vcmask 259072
    %v457 = vsel %vm456, %v454, 0.0
    %458 = vadd.xlane.f32.xlu0 %v457
    %v459 = vpop.xlane.xlu0 %458
    %v460 = vsel %vm456, %v455, 0.0
    %461 = vadd.xlane.f32.xlu0 %v460
    %v462 = vpop.xlane.xlu0 %461
    %v465 = vlaneseq
    %v466 = vshrl.u32 %v465, 7
    %v467 = vsub.s32 %v58, %v466
    %v468 = vrot.slane %v459, %v467
    %v469 = vlaneseq
    %v470 = vshrl.u32 %v469, 7
    %v471 = vsub.s32 %v58, %v470
    %v472 = vrot.slane %v462, %v471
    %vm473 = vcmask 1041409
    %v474 = vsel %vm473, %v472, %v468
    %vm476 = vcmask 41984
    %v477 = vsel %vm476, %v474, -inf
    %478 = vmax.xlane.f32.xlu0 %v477
    %v479 = vpop.xlane.xlu0 %478
    %v481 = vlaneseq
    %v482 = vshrl.u32 %v481, 7
    %v483 = vsub.s32 0, %v482
    %v484 = vrot.slane %v479, %v483
    %v485 = vlaneseq
    %v486 = vshrl.u32 %v485, 7
    %v487 = vsub.s32 1, %v486
    %v488 = vrot.slane %v479, %v487
    %v491 = vsub.f32 %v459, %v484
    %v492 = vsub.f32 %v462, %v488
    %v493 = vmul.f32 %v491, 1.442695
    %v494 = vpow.pop %v493
    %v495 = vmul.f32 %v492, 1.442695
    %v496 = vpow.pop %v495
    %499 = vset.pattern.permute.xlu0 0
    %500 = vperm.xlu0 %499, %v494
    %v501 = vpop.permute.xlu0 %500
    %502 = vset.pattern.permute.xlu0 0
    %503 = vperm.xlu0 %502, %v496
    %v504 = vpop.permute.xlu0 %503
    %v505 = vlaneseq
    %v506 = vshrl.u32 %v505, 7
    %v507 = vsub.s32 %v58, %v506
    %v508 = vrot.slane %v501, %v507
    %v509 = vlaneseq
    %v510 = vshrl.u32 %v509, 7
    %v511 = vsub.s32 %v58, %v510
    %v512 = vrot.slane %v504, %v511
    %v513 = vsel %vm473, %v512, %v508
    %v515 = vsel %vm476, %v513, 0.0
    %516 = vadd.xlane.f32.xlu0 %v515
    %v517 = vpop.xlane.xlu0 %516
    %v519 = vlaneseq
    %v520 = vshrl.u32 %v519, 7
    %v521 = vsub.s32 0, %v520
    %v522 = vrot.slane %v517, %v521
    %v523 = vlaneseq
    %v524 = vshrl.u32 %v523, 7
    %v525 = vsub.s32 1, %v524
    %v526 = vrot.slane %v517, %v525
    %v529 = vrcp.pop %v522
    %v530 = vmul.f32 %v494, %v529
    %v531 = vrcp.pop %v526
    %v532 = vmul.f32 %v496, %v531
    %534 = vset.pattern.permute.xlu0 0
    %535 = vperm.xlu0 %534, %v530
    %v536 = vpop.permute.xlu0 %535
    %539 = vset.pattern.permute.xlu0 0
    %540 = vperm.xlu0 %539, %v532
    %v541 = vpop.permute.xlu0 %540
    %v543 = vmul.f32 %v536, %v59
    %v544 = vmul.f32 %v541, %v60
    %v545 = vsel %vm456, %v543, 0.0
    %v546 = vrot.slane %v545, 4
    %v547 = vadd.f32 %v545, %v546
    %v548 = vrot.slane %v547, 2
    %v549 = vadd.f32 %v547, %v548
    %v550 = vrot.slane %v549, 1
    %v551 = vadd.f32 %v549, %v550
    %v552 = vsel %vm456, %v544, 0.0
    %v553 = vrot.slane %v552, 4
    %v554 = vadd.f32 %v552, %v553
    %v555 = vrot.slane %v554, 2
    %v556 = vadd.f32 %v554, %v555
    %v557 = vrot.slane %v556, 1
    %v558 = vadd.f32 %v556, %v557
    %v559 = vld [vmem:[%s4] sm:$0xff]
    %v560 = vld [vmem:[%s4 + $0x8] sm:$0xff]
    %v561 = vld [vmem:[%s4 + $0x10] sm:$0xff]
    %v562 = vld [vmem:[%s4 + $0x18] sm:$0xff]
    %v563 = vld [vmem:[%s5] sm:$0xff]
    %v564 = vld [vmem:[%s5 + $0x8] sm:$0xff]
    %v565 = vld [vmem:[%s5 + $0x10] sm:$0xff]
    %v566 = vld [vmem:[%s5 + $0x18] sm:$0xff]
    %567 = vmatprep.subr.mxu0 0.0
    %568 = vmatpush1.msra.mxu0 0.0
    %569 = vmatprep.subr.mxu0 0.0
    %570 = vmatpush1.msra.mxu0 0.0
    %571 = vmatprep.subr.mxu0 0.0
    %572 = vmatpush1.msra.mxu0 0.0
    %573 = vmatprep.subr.mxu0 0.0
    %574 = vmatpush1.msra.mxu0 0.0
    %575 = vmatprep.subr.mxu0 0.0
    %576 = vmatpush1.msra.mxu0 0.0
    %577 = vmatprep.subr.mxu0 0.0
    %578 = vmatpush1.msra.mxu0 0.0
    %579 = vmatprep.subr.mxu0 0.0
    %580 = vmatpush1.msra.mxu0 0.0
    %581 = vmatprep.subr.mxu0 0.0
    %582 = vmatpush1.msra.mxu0 0.0
    %583 = vmatprep.subr.mxu0 0.0
    %584 = vmatpush1.msra.mxu0 0.0
    %585 = vmatprep.subr.mxu0 0.0
    %586 = vmatpush1.msra.mxu0 0.0
    %587 = vmatprep.subr.mxu0 0.0
    %588 = vmatpush1.msra.mxu0 0.0
    %589 = vmatprep.subr.mxu0 0.0
    %590 = vmatpush1.msra.mxu0 0.0
    %591 = vmatprep.subr.mxu0 0.0
    %592 = vmatpush1.msra.mxu0 %v566
    %593 = vmatprep.subr.mxu0 0.0
    %594 = vmatpush1.msra.mxu0 %v565
    %595 = vmatprep.subr.mxu0 0.0
    %596 = vmatpush1.msra.mxu0 %v564
    %597 = vmatprep.subr.mxu0 0.0
    %598 = vmatpush1.msra.mxu0 %v563
    %599 = vmatprep.subr.mxu0 0.0
    %600 = vmatpush2.msra.mxu0 0.0
    %601 = vmatprep.subr.mxu0 0.0
    %602 = vmatpush2.msra.mxu0 0.0
    %603 = vmatprep.subr.mxu0 0.0
    %604 = vmatpush2.msra.mxu0 0.0
    %605 = vmatprep.subr.mxu0 0.0
    %606 = vmatpush2.msra.mxu0 0.0
    %607 = vmatprep.subr.mxu0 0.0
    %608 = vmatpush2.msra.mxu0 0.0
    %609 = vmatprep.subr.mxu0 0.0
    %610 = vmatpush2.msra.mxu0 0.0
    %611 = vmatprep.subr.mxu0 0.0
    %612 = vmatpush2.msra.mxu0 0.0
    %613 = vmatprep.subr.mxu0 0.0
    %614 = vmatpush2.msra.mxu0 0.0
    %615 = vmatprep.subr.mxu0 0.0
    %616 = vmatpush2.msra.mxu0 0.0
    %617 = vmatprep.subr.mxu0 0.0
    %618 = vmatpush2.msra.mxu0 0.0
    %619 = vmatprep.subr.mxu0 0.0
    %620 = vmatpush2.msra.mxu0 0.0
    %621 = vmatprep.subr.mxu0 0.0
    %622 = vmatpush2.msra.mxu0 0.0
    %623 = vmatprep.subr.mxu0 0.0
    %624 = vmatpush2.msra.mxu0 0.0
    %625 = vmatprep.subr.mxu0 0.0
    %626 = vmatpush2.msra.mxu0 0.0
    %627 = vmatprep.subr.mxu0 0.0
    %628 = vmatpush2.msra.mxu0 0.0
    %629 = vmatprep.subr.mxu0 0.0
    %630 = vmatpush2.msra.mxu0 0.0
    %631 = vmatprep.mubr.f32.mxu0 0.0
    %632 = vmatmul.mubr.f32.gmra.mxu0 %v349
    %v633 = vpop.f32.mrf.mxu0
    %v634 = vadd.f32 0.0, %v633
    %v635 = vpop.f32.mrf.mxu0
    %636 = vdwg.mxu0
    %v639 = vsel %vm473, %v558, %v551
    %v640 = vsel %vm239, %v639, 0
    %642 = vmatprep.subr.mxu0 0.0
    %643 = vmatpush1.msra.mxu0 0.0
    %644 = vmatprep.subr.mxu0 0.0
    %645 = vmatpush1.msra.mxu0 0.0
    %646 = vmatprep.subr.mxu0 0.0
    %647 = vmatpush1.msra.mxu0 0.0
    %648 = vmatprep.subr.mxu0 0.0
    %649 = vmatpush1.msra.mxu0 0.0
    %650 = vmatprep.subr.mxu0 0.0
    %651 = vmatpush1.msra.mxu0 0.0
    %652 = vmatprep.subr.mxu0 0.0
    %653 = vmatpush1.msra.mxu0 0.0
    %654 = vmatprep.subr.mxu0 0.0
    %655 = vmatpush1.msra.mxu0 0.0
    %656 = vmatprep.subr.mxu0 0.0
    %657 = vmatpush1.msra.mxu0 0.0
    %658 = vmatprep.subr.mxu0 0.0
    %659 = vmatpush1.msra.mxu0 0.0
    %660 = vmatprep.subr.mxu0 0.0
    %661 = vmatpush1.msra.mxu0 0.0
    %662 = vmatprep.subr.mxu0 0.0
    %663 = vmatpush1.msra.mxu0 0.0
    %664 = vmatprep.subr.mxu0 0.0
    %665 = vmatpush1.msra.mxu0 0.0
    %666 = vmatprep.subr.mxu0 0.0
    %667 = vmatpush1.msra.mxu0 %v562
    %668 = vmatprep.subr.mxu0 0.0
    %669 = vmatpush1.msra.mxu0 %v561
    %670 = vmatprep.subr.mxu0 0.0
    %671 = vmatpush1.msra.mxu0 %v560
    %672 = vmatprep.subr.mxu0 0.0
    %673 = vmatpush1.msra.mxu0 %v559
    %674 = vmatprep.subr.mxu0 0.0
    %675 = vmatpush2.msra.mxu0 0.0
    %676 = vmatprep.subr.mxu0 0.0
    %677 = vmatpush2.msra.mxu0 0.0
    %678 = vmatprep.subr.mxu0 0.0
    %679 = vmatpush2.msra.mxu0 0.0
    %680 = vmatprep.subr.mxu0 0.0
    %681 = vmatpush2.msra.mxu0 0.0
    %682 = vmatprep.subr.mxu0 0.0
    %683 = vmatpush2.msra.mxu0 0.0
    %684 = vmatprep.subr.mxu0 0.0
    %685 = vmatpush2.msra.mxu0 0.0
    %686 = vmatprep.subr.mxu0 0.0
    %687 = vmatpush2.msra.mxu0 0.0
    %688 = vmatprep.subr.mxu0 0.0
    %689 = vmatpush2.msra.mxu0 0.0
    %690 = vmatprep.subr.mxu0 0.0
    %691 = vmatpush2.msra.mxu0 0.0
    %692 = vmatprep.subr.mxu0 0.0
    %693 = vmatpush2.msra.mxu0 0.0
    %694 = vmatprep.subr.mxu0 0.0
    %695 = vmatpush2.msra.mxu0 0.0
    %696 = vmatprep.subr.mxu0 0.0
    %697 = vmatpush2.msra.mxu0 0.0
    %698 = vmatprep.subr.mxu0 0.0
    %699 = vmatpush2.msra.mxu0 0.0
    %700 = vmatprep.subr.mxu0 0.0
    %701 = vmatpush2.msra.mxu0 0.0
    %702 = vmatprep.subr.mxu0 0.0
    %703 = vmatpush2.msra.mxu0 0.0
    %704 = vmatprep.subr.mxu0 0.0
    %705 = vmatpush2.msra.mxu0 0.0
    %706 = vmatprep.mubr.f32.mxu0 0.0
    %707 = vmatmul.mubr.f32.gmra.mxu0 %v640
    %v708 = vpop.f32.mrf.mxu0
    %v709 = vadd.f32 %v634, %v708
    %v710 = vpop.f32.mrf.mxu0
    %711 = vdwg.mxu0
    %v712 = vld [vmem:[%s6] sm:$0x1]
    %v714 = vlaneseq
    %v715 = vshrl.u32 %v714, 7
    %v716 = vsub.s32 0, %v715
    %v717 = vrot.slane %v712, %v716
    %v719 = vadd.f32 %v709, %v717
    %v720 = vtanh.pop %v719
    %v721 = vld [vmem:[%s7] sm:$0xff]
    %v722 = vld [vmem:[%s7 + $0x8] sm:$0xff]
    %v723 = vld [vmem:[%s7 + $0x10] sm:$0xff]
    %v724 = vld [vmem:[%s7 + $0x18] sm:$0xff]
    %v725 = vld [vmem:[%s7 + $0x20] sm:$0xff]
    %v726 = vld [vmem:[%s7 + $0x28] sm:$0xff]
    %v727 = vld [vmem:[%s7 + $0x30] sm:$0xff]
    %v728 = vld [vmem:[%s7 + $0x38] sm:$0xff]
    %v729 = vld [vmem:[%s8] sm:$0x1]
    %v731 = vlaneseq
    %v732 = vshrl.u32 %v731, 7
    %v733 = vsub.s32 0, %v732
    %v734 = vrot.slane %v729, %v733
    %vm736 = vcmask 523264
    %v738 = vsel %vm736, %v720, 0
    %740 = vmatprep.subr.mxu0 0.0
    %741 = vmatpush1.msra.mxu0 0.0
    %742 = vmatprep.subr.mxu0 0.0
    %743 = vmatpush1.msra.mxu0 0.0
    %744 = vmatprep.subr.mxu0 0.0
    %745 = vmatpush1.msra.mxu0 0.0
    %746 = vmatprep.subr.mxu0 0.0
    %747 = vmatpush1.msra.mxu0 0.0
    %748 = vmatprep.subr.mxu0 0.0
    %749 = vmatpush1.msra.mxu0 0.0
    %750 = vmatprep.subr.mxu0 0.0
    %751 = vmatpush1.msra.mxu0 0.0
    %752 = vmatprep.subr.mxu0 0.0
    %753 = vmatpush1.msra.mxu0 0.0
    %754 = vmatprep.subr.mxu0 0.0
    %755 = vmatpush1.msra.mxu0 0.0
    %756 = vmatprep.subr.mxu0 0.0
    %757 = vmatpush1.msra.mxu0 %v728
    %758 = vmatprep.subr.mxu0 0.0
    %759 = vmatpush1.msra.mxu0 %v727
    %760 = vmatprep.subr.mxu0 0.0
    %761 = vmatpush1.msra.mxu0 %v726
    %762 = vmatprep.subr.mxu0 0.0
    %763 = vmatpush1.msra.mxu0 %v725
    %764 = vmatprep.subr.mxu0 0.0
    %765 = vmatpush1.msra.mxu0 %v724
    %766 = vmatprep.subr.mxu0 0.0
    %767 = vmatpush1.msra.mxu0 %v723
    %768 = vmatprep.subr.mxu0 0.0
    %769 = vmatpush1.msra.mxu0 %v722
    %770 = vmatprep.subr.mxu0 0.0
    %771 = vmatpush1.msra.mxu0 %v721
    %772 = vmatprep.subr.mxu0 0.0
    %773 = vmatpush2.msra.mxu0 0.0
    %774 = vmatprep.subr.mxu0 0.0
    %775 = vmatpush2.msra.mxu0 0.0
    %776 = vmatprep.subr.mxu0 0.0
    %777 = vmatpush2.msra.mxu0 0.0
    %778 = vmatprep.subr.mxu0 0.0
    %779 = vmatpush2.msra.mxu0 0.0
    %780 = vmatprep.subr.mxu0 0.0
    %781 = vmatpush2.msra.mxu0 0.0
    %782 = vmatprep.subr.mxu0 0.0
    %783 = vmatpush2.msra.mxu0 0.0
    %784 = vmatprep.subr.mxu0 0.0
    %785 = vmatpush2.msra.mxu0 0.0
    %786 = vmatprep.subr.mxu0 0.0
    %787 = vmatpush2.msra.mxu0 0.0
    %788 = vmatprep.subr.mxu0 0.0
    %789 = vmatpush2.msra.mxu0 0.0
    %790 = vmatprep.subr.mxu0 0.0
    %791 = vmatpush2.msra.mxu0 0.0
    %792 = vmatprep.subr.mxu0 0.0
    %793 = vmatpush2.msra.mxu0 0.0
    %794 = vmatprep.subr.mxu0 0.0
    %795 = vmatpush2.msra.mxu0 0.0
    %796 = vmatprep.subr.mxu0 0.0
    %797 = vmatpush2.msra.mxu0 0.0
    %798 = vmatprep.subr.mxu0 0.0
    %799 = vmatpush2.msra.mxu0 0.0
    %800 = vmatprep.subr.mxu0 0.0
    %801 = vmatpush2.msra.mxu0 0.0
    %802 = vmatprep.subr.mxu0 0.0
    %803 = vmatpush2.msra.mxu0 0.0
    %804 = vmatprep.mubr.f32.mxu0 0.0
    %805 = vmatmul.mubr.f32.gmra.mxu0 %v738
    %v806 = vpop.f32.mrf.mxu0
    %v807 = vadd.f32 %v734, %v806
    %v808 = vpop.f32.mrf.mxu0
    %809 = vdwg.mxu0
    %vm810 = vcmask 90112
    %811 = vst.msk [vmem:[#allocation2] sm:$0x1] %vm810, %v807
    %813 = vrot.lane.b32.xlu0 %v807, 12
    %v814 = vpop.permute.xlu0 %813
    %vm816 = vcmask 189537
    %817 = vst.msk [vmem:[#allocation2 - $0x1] sm:$0x2] %vm816, %v814
    %vm818 = vcmask 91136
    %v819 = vsel %vm818, %v807, -inf
    %820 = vmax.xlane.f32.xlu0 %v819
    %v821 = vpop.xlane.xlu0 %820
    %vm822 = vcmp.eq.f32.partialorder %v807, %v821
    %v823 = vsel %vm822, %v58, 12
    %v824 = vsel %vm818, %v823, 2147483647
    %v825 = vand.u32 %v824, 65535
    %v826 = vshra.s32 %v824, 16
    %v827 = vcvt.s32.f32 %v825
    %v828 = vcvt.s32.f32 %v826
    %829 = vmin.xlane.f32.xlu0 %v828
    %v830 = vpop.xlane.xlu0 %829
    %vm831 = vcmp.eq.f32.partialorder %v828, %v830
    %v832 = vsel %vm831, %v827, inf
    %833 = vmin.xlane.f32.xlu0 %v832
    %v834 = vpop.xlane.xlu0 %833
    %v835 = vcvt.f32.s32 %v834
    %v836 = vcvt.f32.s32 %v830
    %v837 = vshll.u32 %v836, 16
    %v838 = vadd.s32 %v837, %v835
    %vm839 = vcmp.eq.s32.totalorder %v58, %v838
    %v840 = vsel %vm839, 1, 0
    %v841 = vcvt.s32.f32 %v840
    %v842 = vld [vmem:[%s0] sm:$0xff]
    %v843 = vld [vmem:[%s0 + $0x8] sm:$0xf]
    %v845 = vsel %vm67, %v841, 0
    %v848 = vsel %vm71, %v843, 0
    %850 = vmatprep.subr.mxu0 0.0
    %851 = vmatpush1.msra.mxu0 0.0
    %852 = vmatprep.subr.mxu0 0.0
    %853 = vmatpush1.msra.mxu0 0.0
    %854 = vmatprep.subr.mxu0 0.0
    %855 = vmatpush1.msra.mxu0 0.0
    %856 = vmatprep.subr.mxu0 0.0
    %857 = vmatpush1.msra.mxu0 0.0
    %858 = vmatprep.subr.mxu0 0.0
    %859 = vmatpush1.msra.mxu0 0.0
    %860 = vmatprep.subr.mxu0 0.0
    %861 = vmatpush1.msra.mxu0 0.0
    %862 = vmatprep.subr.mxu0 0.0
    %863 = vmatpush1.msra.mxu0 0.0
    %864 = vmatprep.subr.mxu0 0.0
    %865 = vmatpush1.msra.mxu0 0.0
    %866 = vmatprep.subr.mxu0 0.0
    %867 = vmatpush1.msra.mxu0 0.0
    %868 = vmatprep.subr.mxu0 0.0
    %869 = vmatpush1.msra.mxu0 0.0
    %870 = vmatprep.subr.mxu0 0.0
    %871 = vmatpush1.msra.mxu0 0.0
    %872 = vmatprep.subr.mxu0 0.0
    %873 = vmatpush1.msra.mxu0 0.0
    %874 = vmatprep.subr.mxu0 0.0
    %875 = vmatpush1.msra.mxu0 0.0
    %876 = vmatprep.subr.mxu0 0.0
    %877 = vmatpush1.msra.mxu0 0.0
    %878 = vmatprep.subr.mxu0 0.0
    %879 = vmatpush1.msra.mxu0 %v848
    %880 = vmatprep.subr.mxu0 0.0
    %881 = vmatpush1.msra.mxu0 %v842
    %882 = vmatprep.subr.mxu0 0.0
    %883 = vmatpush2.msra.mxu0 0.0
    %884 = vmatprep.subr.mxu0 0.0
    %885 = vmatpush2.msra.mxu0 0.0
    %886 = vmatprep.subr.mxu0 0.0
    %887 = vmatpush2.msra.mxu0 0.0
    %888 = vmatprep.subr.mxu0 0.0
    %889 = vmatpush2.msra.mxu0 0.0
    %890 = vmatprep.subr.mxu0 0.0
    %891 = vmatpush2.msra.mxu0 0.0
    %892 = vmatprep.subr.mxu0 0.0
    %893 = vmatpush2.msra.mxu0 0.0
    %894 = vmatprep.subr.mxu0 0.0
    %895 = vmatpush2.msra.mxu0 0.0
    %896 = vmatprep.subr.mxu0 0.0
    %897 = vmatpush2.msra.mxu0 0.0
    %898 = vmatprep.subr.mxu0 0.0
    %899 = vmatpush2.msra.mxu0 0.0
    %900 = vmatprep.subr.mxu0 0.0
    %901 = vmatpush2.msra.mxu0 0.0
    %902 = vmatprep.subr.mxu0 0.0
    %903 = vmatpush2.msra.mxu0 0.0
    %904 = vmatprep.subr.mxu0 0.0
    %905 = vmatpush2.msra.mxu0 0.0
    %906 = vmatprep.subr.mxu0 0.0
    %907 = vmatpush2.msra.mxu0 0.0
    %908 = vmatprep.subr.mxu0 0.0
    %909 = vmatpush2.msra.mxu0 0.0
    %910 = vmatprep.subr.mxu0 0.0
    %911 = vmatpush2.msra.mxu0 0.0
    %912 = vmatprep.subr.mxu0 0.0
    %913 = vmatpush2.msra.mxu0 0.0
    %914 = vmatprep.mubr.f32.mxu0 0.0
    %915 = vmatmul.mubr.f32.gmra.mxu0 %v845
    %v916 = vpop.f32.mrf.mxu0
    %v917 = vadd.f32 0.0, %v916
    %v918 = vpop.f32.mrf.mxu0
    %919 = vdwg.mxu0
    %v920 = vld [vmem:[%s13] sm:$0xff]
    %v921 = vld [vmem:[%s13 + $0x8] sm:$0xff]
    %v922 = vld [vmem:[%s14] sm:$0x1]
    %v924 = vlaneseq
    %v925 = vshrl.u32 %v924, 7
    %v926 = vsub.s32 0, %v925
    %v927 = vrot.slane %v922, %v926
    %v930 = vsel %vm154, %v917, 0
    %932 = vmatprep.subr.mxu0 0.0
    %933 = vmatpush1.msra.mxu0 0.0
    %934 = vmatprep.subr.mxu0 0.0
    %935 = vmatpush1.msra.mxu0 0.0
    %936 = vmatprep.subr.mxu0 0.0
    %937 = vmatpush1.msra.mxu0 0.0
    %938 = vmatprep.subr.mxu0 0.0
    %939 = vmatpush1.msra.mxu0 0.0
    %940 = vmatprep.subr.mxu0 0.0
    %941 = vmatpush1.msra.mxu0 0.0
    %942 = vmatprep.subr.mxu0 0.0
    %943 = vmatpush1.msra.mxu0 0.0
    %944 = vmatprep.subr.mxu0 0.0
    %945 = vmatpush1.msra.mxu0 0.0
    %946 = vmatprep.subr.mxu0 0.0
    %947 = vmatpush1.msra.mxu0 0.0
    %948 = vmatprep.subr.mxu0 0.0
    %949 = vmatpush1.msra.mxu0 0.0
    %950 = vmatprep.subr.mxu0 0.0
    %951 = vmatpush1.msra.mxu0 0.0
    %952 = vmatprep.subr.mxu0 0.0
    %953 = vmatpush1.msra.mxu0 0.0
    %954 = vmatprep.subr.mxu0 0.0
    %955 = vmatpush1.msra.mxu0 0.0
    %956 = vmatprep.subr.mxu0 0.0
    %957 = vmatpush1.msra.mxu0 0.0
    %958 = vmatprep.subr.mxu0 0.0
    %959 = vmatpush1.msra.mxu0 0.0
    %960 = vmatprep.subr.mxu0 0.0
    %961 = vmatpush1.msra.mxu0 %v921
    %962 = vmatprep.subr.mxu0 0.0
    %963 = vmatpush1.msra.mxu0 %v920
    %964 = vmatprep.subr.mxu0 0.0
    %965 = vmatpush2.msra.mxu0 0.0
    %966 = vmatprep.subr.mxu0 0.0
    %967 = vmatpush2.msra.mxu0 0.0
    %968 = vmatprep.subr.mxu0 0.0
    %969 = vmatpush2.msra.mxu0 0.0
    %970 = vmatprep.subr.mxu0 0.0
    %971 = vmatpush2.msra.mxu0 0.0
    %972 = vmatprep.subr.mxu0 0.0
    %973 = vmatpush2.msra.mxu0 0.0
    %974 = vmatprep.subr.mxu0 0.0
    %975 = vmatpush2.msra.mxu0 0.0
    %976 = vmatprep.subr.mxu0 0.0
    %977 = vmatpush2.msra.mxu0 0.0
    %978 = vmatprep.subr.mxu0 0.0
    %979 = vmatpush2.msra.mxu0 0.0
    %980 = vmatprep.subr.mxu0 0.0
    %981 = vmatpush2.msra.mxu0 0.0
    %982 = vmatprep.subr.mxu0 0.0
    %983 = vmatpush2.msra.mxu0 0.0
    %984 = vmatprep.subr.mxu0 0.0
    %985 = vmatpush2.msra.mxu0 0.0
    %986 = vmatprep.subr.mxu0 0.0
    %987 = vmatpush2.msra.mxu0 0.0
    %988 = vmatprep.subr.mxu0 0.0
    %989 = vmatpush2.msra.mxu0 0.0
    %990 = vmatprep.subr.mxu0 0.0
    %991 = vmatpush2.msra.mxu0 0.0
    %992 = vmatprep.subr.mxu0 0.0
    %993 = vmatpush2.msra.mxu0 0.0
    %994 = vmatprep.subr.mxu0 0.0
    %995 = vmatpush2.msra.mxu0 0.0
    %996 = vmatprep.mubr.f32.mxu0 0.0
    %997 = vmatmul.mubr.f32.gmra.mxu0 %v930
    %v998 = vpop.f32.mrf.mxu0
    %v999 = vadd.f32 %v927, %v998
    %v1000 = vpop.f32.mrf.mxu0
    %1001 = vdwg.mxu0
    %v1002 = vld [vmem:[%s15] sm:$0xff]
    %v1003 = vld [vmem:[%s15 + $0x8] sm:$0xff]
    %v1004 = vld [vmem:[%s15 + $0x10] sm:$0xff]
    %v1005 = vld [vmem:[%s15 + $0x18] sm:$0xff]
    %v1006 = vld [vmem:[%s16] sm:$0x1]
    %v1008 = vlaneseq
    %v1009 = vshrl.u32 %v1008, 7
    %v1010 = vsub.s32 0, %v1009
    %v1011 = vrot.slane %v1006, %v1010
    %1013 = vmatprep.subr.mxu0 0.0
    %1014 = vmatpush1.msra.mxu0 0.0
    %1015 = vmatprep.subr.mxu0 0.0
    %1016 = vmatpush1.msra.mxu0 0.0
    %1017 = vmatprep.subr.mxu0 0.0
    %1018 = vmatpush1.msra.mxu0 0.0
    %1019 = vmatprep.subr.mxu0 0.0
    %1020 = vmatpush1.msra.mxu0 0.0
    %1021 = vmatprep.subr.mxu0 0.0
    %1022 = vmatpush1.msra.mxu0 0.0
    %1023 = vmatprep.subr.mxu0 0.0
    %1024 = vmatpush1.msra.mxu0 0.0
    %1025 = vmatprep.subr.mxu0 0.0
    %1026 = vmatpush1.msra.mxu0 0.0
    %1027 = vmatprep.subr.mxu0 0.0
    %1028 = vmatpush1.msra.mxu0 0.0
    %1029 = vmatprep.subr.mxu0 0.0
    %1030 = vmatpush1.msra.mxu0 0.0
    %1031 = vmatprep.subr.mxu0 0.0
    %1032 = vmatpush1.msra.mxu0 0.0
    %1033 = vmatprep.subr.mxu0 0.0
    %1034 = vmatpush1.msra.mxu0 0.0
    %1035 = vmatprep.subr.mxu0 0.0
    %1036 = vmatpush1.msra.mxu0 0.0
    %1037 = vmatprep.subr.mxu0 0.0
    %1038 = vmatpush1.msra.mxu0 %v1005
    %1039 = vmatprep.subr.mxu0 0.0
    %1040 = vmatpush1.msra.mxu0 %v1004
    %1041 = vmatprep.subr.mxu0 0.0
    %1042 = vmatpush1.msra.mxu0 %v1003
    %1043 = vmatprep.subr.mxu0 0.0
    %1044 = vmatpush1.msra.mxu0 %v1002
    %1045 = vmatprep.subr.mxu0 0.0
    %1046 = vmatpush2.msra.mxu0 0.0
    %1047 = vmatprep.subr.mxu0 0.0
    %1048 = vmatpush2.msra.mxu0 0.0
    %1049 = vmatprep.subr.mxu0 0.0
    %1050 = vmatpush2.msra.mxu0 0.0
    %1051 = vmatprep.subr.mxu0 0.0
    %1052 = vmatpush2.msra.mxu0 0.0
    %1053 = vmatprep.subr.mxu0 0.0
    %1054 = vmatpush2.msra.mxu0 0.0
    %1055 = vmatprep.subr.mxu0 0.0
    %1056 = vmatpush2.msra.mxu0 0.0
    %1057 = vmatprep.subr.mxu0 0.0
    %1058 = vmatpush2.msra.mxu0 0.0
    %1059 = vmatprep.subr.mxu0 0.0
    %1060 = vmatpush2.msra.mxu0 0.0
    %1061 = vmatprep.subr.mxu0 0.0
    %1062 = vmatpush2.msra.mxu0 0.0
    %1063 = vmatprep.subr.mxu0 0.0
    %1064 = vmatpush2.msra.mxu0 0.0
    %1065 = vmatprep.subr.mxu0 0.0
    %1066 = vmatpush2.msra.mxu0 0.0
    %1067 = vmatprep.subr.mxu0 0.0
    %1068 = vmatpush2.msra.mxu0 0.0
    %1069 = vmatprep.subr.mxu0 0.0
    %1070 = vmatpush2.msra.mxu0 0.0
    %1071 = vmatprep.subr.mxu0 0.0
    %1072 = vmatpush2.msra.mxu0 0.0
    %1073 = vmatprep.subr.mxu0 0.0
    %1074 = vmatpush2.msra.mxu0 0.0
    %1075 = vmatprep.subr.mxu0 0.0
    %1076 = vmatpush2.msra.mxu0 0.0
    %1077 = vmatprep.mubr.f32.mxu0 0.0
    %1078 = vmatmul.mubr.f32.gmra.mxu0 %v349
    %v1079 = vpop.f32.mrf.mxu0
    %v1080 = vadd.f32 %v1011, %v1079
    %v1081 = vpop.f32.mrf.mxu0
    %1082 = vdwg.mxu0
    %v1083 = vadd.f32 %v999, %v1080
    %v1084 = vxor.u32 %v1083, 2147483648
    %v1085 = vmul.f32 %v1084, 1.442695
    %v1086 = vpow.pop %v1085
    %v1087 = vadd.f32 %v1086, 1.0
    %v1088 = vrcp.pop %v1087
    %v1089 = vmul.f32 1.0, %v1088
    %1091 = vrot.lane.b32.xlu0 %v1080, 64
    %v1092 = vpop.permute.xlu0 %1091
    %v1094 = vmul.f32 %v1089, %v1092
    %1096 = vrot.lane.b32.xlu0 %v1094, 64
    %v1097 = vpop.permute.xlu0 %1096
    %v1099 = vadd.f32 %v999, %v1097
    %v1100 = vtanh.pop %v1099
    %v1101 = vsub.f32 1.0, %v1089
    %1103 = vrot.lane.b32.xlu0 %v1100, 96
    %v1104 = vpop.permute.xlu0 %1103
    %v1106 = vmul.f32 %v1101, %v1104
    %v1107 = vmul.f32 %v1089, %v341
    %v1108 = vadd.f32 %v1106, %v1107
    %v1109 = vld [vmem:[%s3] sm:$0xff]
    %v1110 = vld [vmem:[%s3 + $0x8] sm:$0xff]
    %v1111 = vld [vmem:[%s3 + $0x10] sm:$0xff]
    %v1112 = vld [vmem:[%s3 + $0x18] sm:$0xff]
    %1114 = vrot.lane.b32.xlu0 %v1108, 96
    %v1115 = vpop.permute.xlu0 %1114
    %v1116 = vsel %vm239, %v1115, 0
    %1118 = vmatprep.subr.mxu0 0.0
    %1119 = vmatpush1.msra.mxu0 0.0
    %1120 = vmatprep.subr.mxu0 0.0
    %1121 = vmatpush1.msra.mxu0 0.0
    %1122 = vmatprep.subr.mxu0 0.0
    %1123 = vmatpush1.msra.mxu0 0.0
    %1124 = vmatprep.subr.mxu0 0.0
    %1125 = vmatpush1.msra.mxu0 0.0
    %1126 = vmatprep.subr.mxu0 0.0
    %1127 = vmatpush1.msra.mxu0 0.0
    %1128 = vmatprep.subr.mxu0 0.0
    %1129 = vmatpush1.msra.mxu0 0.0
    %1130 = vmatprep.subr.mxu0 0.0
    %1131 = vmatpush1.msra.mxu0 0.0
    %1132 = vmatprep.subr.mxu0 0.0
    %1133 = vmatpush1.msra.mxu0 0.0
    %1134 = vmatprep.subr.mxu0 0.0
    %1135 = vmatpush1.msra.mxu0 0.0
    %1136 = vmatprep.subr.mxu0 0.0
    %1137 = vmatpush1.msra.mxu0 0.0
    %1138 = vmatprep.subr.mxu0 0.0
    %1139 = vmatpush1.msra.mxu0 0.0
    %1140 = vmatprep.subr.mxu0 0.0
    %1141 = vmatpush1.msra.mxu0 0.0
    %1142 = vmatprep.subr.mxu0 0.0
    %1143 = vmatpush1.msra.mxu0 %v1112
    %1144 = vmatprep.subr.mxu0 0.0
    %1145 = vmatpush1.msra.mxu0 %v1111
    %1146 = vmatprep.subr.mxu0 0.0
    %1147 = vmatpush1.msra.mxu0 %v1110
    %1148 = vmatprep.subr.mxu0 0.0
    %1149 = vmatpush1.msra.mxu0 %v1109
    %1150 = vmatprep.subr.mxu0 0.0
    %1151 = vmatpush2.msra.mxu0 0.0
    %1152 = vmatprep.subr.mxu0 0.0
    %1153 = vmatpush2.msra.mxu0 0.0
    %1154 = vmatprep.subr.mxu0 0.0
    %1155 = vmatpush2.msra.mxu0 0.0
    %1156 = vmatprep.subr.mxu0 0.0
    %1157 = vmatpush2.msra.mxu0 0.0
    %1158 = vmatprep.subr.mxu0 0.0
    %1159 = vmatpush2.msra.mxu0 0.0
    %1160 = vmatprep.subr.mxu0 0.0
    %1161 = vmatpush2.msra.mxu0 0.0
    %1162 = vmatprep.subr.mxu0 0.0
    %1163 = vmatpush2.msra.mxu0 0.0
    %1164 = vmatprep.subr.mxu0 0.0
    %1165 = vmatpush2.msra.mxu0 0.0
    %1166 = vmatprep.subr.mxu0 0.0
    %1167 = vmatpush2.msra.mxu0 0.0
    %1168 = vmatprep.subr.mxu0 0.0
    %1169 = vmatpush2.msra.mxu0 0.0
    %1170 = vmatprep.subr.mxu0 0.0
    %1171 = vmatpush2.msra.mxu0 0.0
    %1172 = vmatprep.subr.mxu0 0.0
    %1173 = vmatpush2.msra.mxu0 0.0
    %1174 = vmatprep.subr.mxu0 0.0
    %1175 = vmatpush2.msra.mxu0 0.0
    %1176 = vmatprep.subr.mxu0 0.0
    %1177 = vmatpush2.msra.mxu0 0.0
    %1178 = vmatprep.subr.mxu0 0.0
    %1179 = vmatpush2.msra.mxu0 0.0
    %1180 = vmatprep.subr.mxu0 0.0
    %1181 = vmatpush2.msra.mxu0 0.0
    %1182 = vmatprep.mubr.f32.mxu0 0.0
    %1183 = vmatmul.mubr.f32.gmra.mxu0 %v1116
    %v1184 = vpop.f32.mrf.mxu0
    %v1185 = vadd.f32 0.0, %v1184
    %v1186 = vpop.f32.mrf.mxu0
    %1187 = vdwg.mxu0
    %v1190 = vunpack.c.l.s4 1966171168
    %v1191 = vunpack.c.0.s8 %v1190
    %v1192 = vlaneseq
    %v1193 = vshrl.u32 %v1192, 7
    %v1194 = vsub.s32 %v1191, %v1193
    %v1195 = vrot.slane %v1185, %v1194
    %v1196 = vcombine.high %v1195, %v1195
    %v1198 = vunpack.c.l.s4 1966171168
    %v1199 = vunpack.c.0.s8 %v1198
    %v1200 = vlaneseq
    %v1201 = vshrl.u32 %v1200, 7
    %v1202 = vsub.s32 %v1199, %v1201
    %v1203 = vrot.slane %v1195, %v1202
    %v1205 = vunpack.c.l.s4 1966171168
    %v1206 = vunpack.c.0.s8 %v1205
    %v1207 = vlaneseq
    %v1208 = vshrl.u32 %v1207, 7
    %v1209 = vsub.s32 %v1206, %v1208
    %v1210 = vrot.slane %v1196, %v1209
    %v1211 = vlaneseq
    %v1212 = vshrl.u32 %v1211, 7
    %v1213 = vsub.s32 0, %v1212
    %v1214 = vrot.slane %v1203, %v1213
    %v1215 = vlaneseq
    %v1216 = vshrl.u32 %v1215, 7
    %v1217 = vsub.s32 0, %v1216
    %v1218 = vrot.slane %v1210, %v1217
    %v1221 = vmul.f32 %v1214, %v59
    %v1222 = vmul.f32 %v1218, %v60
    %v1223 = vsel %vm456, %v1221, 0.0
    %1224 = vadd.xlane.f32.xlu0 %v1223
    %v1225 = vpop.xlane.xlu0 %1224
    %v1226 = vsel %vm456, %v1222, 0.0
    %1227 = vadd.xlane.f32.xlu0 %v1226
    %v1228 = vpop.xlane.xlu0 %1227
    %v1231 = vlaneseq
    %v1232 = vshrl.u32 %v1231, 7
    %v1233 = vsub.s32 %v58, %v1232
    %v1234 = vrot.slane %v1225, %v1233
    %v1235 = vlaneseq
    %v1236 = vshrl.u32 %v1235, 7
    %v1237 = vsub.s32 %v58, %v1236
    %v1238 = vrot.slane %v1228, %v1237
    %v1239 = vsel %vm473, %v1238, %v1234
    %v1241 = vsel %vm476, %v1239, -inf
    %1242 = vmax.xlane.f32.xlu0 %v1241
    %v1243 = vpop.xlane.xlu0 %1242
    %v1245 = vlaneseq
    %v1246 = vshrl.u32 %v1245, 7
    %v1247 = vsub.s32 0, %v1246
    %v1248 = vrot.slane %v1243, %v1247
    %v1249 = vlaneseq
    %v1250 = vshrl.u32 %v1249, 7
    %v1251 = vsub.s32 1, %v1250
    %v1252 = vrot.slane %v1243, %v1251
    %v1255 = vsub.f32 %v1225, %v1248
    %v1256 = vsub.f32 %v1228, %v1252
    %v1257 = vmul.f32 %v1255, 1.442695
    %v1258 = vpow.pop %v1257
    %v1259 = vmul.f32 %v1256, 1.442695
    %v1260 = vpow.pop %v1259
    %1263 = vset.pattern.permute.xlu0 0
    %1264 = vperm.xlu0 %1263, %v1258
    %v1265 = vpop.permute.xlu0 %1264
    %1266 = vset.pattern.permute.xlu0 0
    %1267 = vperm.xlu0 %1266, %v1260
    %v1268 = vpop.permute.xlu0 %1267
    %v1269 = vlaneseq
    %v1270 = vshrl.u32 %v1269, 7
    %v1271 = vsub.s32 %v58, %v1270
    %v1272 = vrot.slane %v1265, %v1271
    %v1273 = vlaneseq
    %v1274 = vshrl.u32 %v1273, 7
    %v1275 = vsub.s32 %v58, %v1274
    %v1276 = vrot.slane %v1268, %v1275
    %v1277 = vsel %vm473, %v1276, %v1272
    %v1279 = vsel %vm476, %v1277, 0.0
    %1280 = vadd.xlane.f32.xlu0 %v1279
    %v1281 = vpop.xlane.xlu0 %1280
    %v1283 = vlaneseq
    %v1284 = vshrl.u32 %v1283, 7
    %v1285 = vsub.s32 0, %v1284
    %v1286 = vrot.slane %v1281, %v1285
    %v1287 = vlaneseq
    %v1288 = vshrl.u32 %v1287, 7
    %v1289 = vsub.s32 1, %v1288
    %v1290 = vrot.slane %v1281, %v1289
    %v1293 = vrcp.pop %v1286
    %v1294 = vmul.f32 %v1258, %v1293
    %v1295 = vrcp.pop %v1290
    %v1296 = vmul.f32 %v1260, %v1295
    %1298 = vset.pattern.permute.xlu0 0
    %1299 = vperm.xlu0 %1298, %v1294
    %v1300 = vpop.permute.xlu0 %1299
    %1303 = vset.pattern.permute.xlu0 0
    %1304 = vperm.xlu0 %1303, %v1296
    %v1305 = vpop.permute.xlu0 %1304
    %v1307 = vmul.f32 %v1300, %v59
    %v1308 = vmul.f32 %v1305, %v60
    %v1309 = vsel %vm456, %v1307, 0.0
    %v1310 = vrot.slane %v1309, 4
    %v1311 = vadd.f32 %v1309, %v1310
    %v1312 = vrot.slane %v1311, 2
    %v1313 = vadd.f32 %v1311, %v1312
    %v1314 = vrot.slane %v1313, 1
    %v1315 = vadd.f32 %v1313, %v1314
    %v1316 = vsel %vm456, %v1308, 0.0
    %v1317 = vrot.slane %v1316, 4
    %v1318 = vadd.f32 %v1316, %v1317
    %v1319 = vrot.slane %v1318, 2
    %v1320 = vadd.f32 %v1318, %v1319
    %v1321 = vrot.slane %v1320, 1
    %v1322 = vadd.f32 %v1320, %v1321
    %v1323 = vld [vmem:[%s4] sm:$0xff]
    %v1324 = vld [vmem:[%s4 + $0x8] sm:$0xff]
    %v1325 = vld [vmem:[%s4 + $0x10] sm:$0xff]
    %v1326 = vld [vmem:[%s4 + $0x18] sm:$0xff]
    %v1327 = vld [vmem:[%s5] sm:$0xff]
    %v1328 = vld [vmem:[%s5 + $0x8] sm:$0xff]
    %v1329 = vld [vmem:[%s5 + $0x10] sm:$0xff]
    %v1330 = vld [vmem:[%s5 + $0x18] sm:$0xff]
    %1331 = vmatprep.subr.mxu0 0.0
    %1332 = vmatpush1.msra.mxu0 0.0
    %1333 = vmatprep.subr.mxu0 0.0
    %1334 = vmatpush1.msra.mxu0 0.0
    %1335 = vmatprep.subr.mxu0 0.0
    %1336 = vmatpush1.msra.mxu0 0.0
    %1337 = vmatprep.subr.mxu0 0.0
    %1338 = vmatpush1.msra.mxu0 0.0
    %1339 = vmatprep.subr.mxu0 0.0
    %1340 = vmatpush1.msra.mxu0 0.0
    %1341 = vmatprep.subr.mxu0 0.0
    %1342 = vmatpush1.msra.mxu0 0.0
    %1343 = vmatprep.subr.mxu0 0.0
    %1344 = vmatpush1.msra.mxu0 0.0
    %1345 = vmatprep.subr.mxu0 0.0
    %1346 = vmatpush1.msra.mxu0 0.0
    %1347 = vmatprep.subr.mxu0 0.0
    %1348 = vmatpush1.msra.mxu0 0.0
    %1349 = vmatprep.subr.mxu0 0.0
    %1350 = vmatpush1.msra.mxu0 0.0
    %1351 = vmatprep.subr.mxu0 0.0
    %1352 = vmatpush1.msra.mxu0 0.0
    %1353 = vmatprep.subr.mxu0 0.0
    %1354 = vmatpush1.msra.mxu0 0.0
    %1355 = vmatprep.subr.mxu0 0.0
    %1356 = vmatpush1.msra.mxu0 %v1330
    %1357 = vmatprep.subr.mxu0 0.0
    %1358 = vmatpush1.msra.mxu0 %v1329
    %1359 = vmatprep.subr.mxu0 0.0
    %1360 = vmatpush1.msra.mxu0 %v1328
    %1361 = vmatprep.subr.mxu0 0.0
    %1362 = vmatpush1.msra.mxu0 %v1327
    %1363 = vmatprep.subr.mxu0 0.0
    %1364 = vmatpush2.msra.mxu0 0.0
    %1365 = vmatprep.subr.mxu0 0.0
    %1366 = vmatpush2.msra.mxu0 0.0
    %1367 = vmatprep.subr.mxu0 0.0
    %1368 = vmatpush2.msra.mxu0 0.0
    %1369 = vmatprep.subr.mxu0 0.0
    %1370 = vmatpush2.msra.mxu0 0.0
    %1371 = vmatprep.subr.mxu0 0.0
    %1372 = vmatpush2.msra.mxu0 0.0
    %1373 = vmatprep.subr.mxu0 0.0
    %1374 = vmatpush2.msra.mxu0 0.0
    %1375 = vmatprep.subr.mxu0 0.0
    %1376 = vmatpush2.msra.mxu0 0.0
    %1377 = vmatprep.subr.mxu0 0.0
    %1378 = vmatpush2.msra.mxu0 0.0
    %1379 = vmatprep.subr.mxu0 0.0
    %1380 = vmatpush2.msra.mxu0 0.0
    %1381 = vmatprep.subr.mxu0 0.0
    %1382 = vmatpush2.msra.mxu0 0.0
    %1383 = vmatprep.subr.mxu0 0.0
    %1384 = vmatpush2.msra.mxu0 0.0
    %1385 = vmatprep.subr.mxu0 0.0
    %1386 = vmatpush2.msra.mxu0 0.0
    %1387 = vmatprep.subr.mxu0 0.0
    %1388 = vmatpush2.msra.mxu0 0.0
    %1389 = vmatprep.subr.mxu0 0.0
    %1390 = vmatpush2.msra.mxu0 0.0
    %1391 = vmatprep.subr.mxu0 0.0
    %1392 = vmatpush2.msra.mxu0 0.0
    %1393 = vmatprep.subr.mxu0 0.0
    %1394 = vmatpush2.msra.mxu0 0.0
    %1395 = vmatprep.mubr.f32.mxu0 0.0
    %1396 = vmatmul.mubr.f32.gmra.mxu0 %v1116
    %v1397 = vpop.f32.mrf.mxu0
    %v1398 = vadd.f32 0.0, %v1397
    %v1399 = vpop.f32.mrf.mxu0
    %1400 = vdwg.mxu0
    %v1403 = vsel %vm473, %v1322, %v1315
    %v1404 = vsel %vm239, %v1403, 0
    %1406 = vmatprep.subr.mxu0 0.0
    %1407 = vmatpush1.msra.mxu0 0.0
    %1408 = vmatprep.subr.mxu0 0.0
    %1409 = vmatpush1.msra.mxu0 0.0
    %1410 = vmatprep.subr.mxu0 0.0
    %1411 = vmatpush1.msra.mxu0 0.0
    %1412 = vmatprep.subr.mxu0 0.0
    %1413 = vmatpush1.msra.mxu0 0.0
    %1414 = vmatprep.subr.mxu0 0.0
    %1415 = vmatpush1.msra.mxu0 0.0
    %1416 = vmatprep.subr.mxu0 0.0
    %1417 = vmatpush1.msra.mxu0 0.0
    %1418 = vmatprep.subr.mxu0 0.0
    %1419 = vmatpush1.msra.mxu0 0.0
    %1420 = vmatprep.subr.mxu0 0.0
    %1421 = vmatpush1.msra.mxu0 0.0
    %1422 = vmatprep.subr.mxu0 0.0
    %1423 = vmatpush1.msra.mxu0 0.0
    %1424 = vmatprep.subr.mxu0 0.0
    %1425 = vmatpush1.msra.mxu0 0.0
    %1426 = vmatprep.subr.mxu0 0.0
    %1427 = vmatpush1.msra.mxu0 0.0
    %1428 = vmatprep.subr.mxu0 0.0
    %1429 = vmatpush1.msra.mxu0 0.0
    %1430 = vmatprep.subr.mxu0 0.0
    %1431 = vmatpush1.msra.mxu0 %v1326
    %1432 = vmatprep.subr.mxu0 0.0
    %1433 = vmatpush1.msra.mxu0 %v1325
    %1434 = vmatprep.subr.mxu0 0.0
    %1435 = vmatpush1.msra.mxu0 %v1324
    %1436 = vmatprep.subr.mxu0 0.0
    %1437 = vmatpush1.msra.mxu0 %v1323
    %1438 = vmatprep.subr.mxu0 0.0
    %1439 = vmatpush2.msra.mxu0 0.0
    %1440 = vmatprep.subr.mxu0 0.0
    %1441 = vmatpush2.msra.mxu0 0.0
    %1442 = vmatprep.subr.mxu0 0.0
    %1443 = vmatpush2.msra.mxu0 0.0
    %1444 = vmatprep.subr.mxu0 0.0
    %1445 = vmatpush2.msra.mxu0 0.0
    %1446 = vmatprep.subr.mxu0 0.0
    %1447 = vmatpush2.msra.mxu0 0.0
    %1448 = vmatprep.subr.mxu0 0.0
    %1449 = vmatpush2.msra.mxu0 0.0
    %1450 = vmatprep.subr.mxu0 0.0
    %1451 = vmatpush2.msra.mxu0 0.0
    %1452 = vmatprep.subr.mxu0 0.0
    %1453 = vmatpush2.msra.mxu0 0.0
    %1454 = vmatprep.subr.mxu0 0.0
    %1455 = vmatpush2.msra.mxu0 0.0
    %1456 = vmatprep.subr.mxu0 0.0
    %1457 = vmatpush2.msra.mxu0 0.0
    %1458 = vmatprep.subr.mxu0 0.0
    %1459 = vmatpush2.msra.mxu0 0.0
    %1460 = vmatprep.subr.mxu0 0.0
    %1461 = vmatpush2.msra.mxu0 0.0
    %1462 = vmatprep.subr.mxu0 0.0
    %1463 = vmatpush2.msra.mxu0 0.0
    %1464 = vmatprep.subr.mxu0 0.0
    %1465 = vmatpush2.msra.mxu0 0.0
    %1466 = vmatprep.subr.mxu0 0.0
    %1467 = vmatpush2.msra.mxu0 0.0
    %1468 = vmatprep.subr.mxu0 0.0
    %1469 = vmatpush2.msra.mxu0 0.0
    %1470 = vmatprep.mubr.f32.mxu0 0.0
    %1471 = vmatmul.mubr.f32.gmra.mxu0 %v1404
    %v1472 = vpop.f32.mrf.mxu0
    %v1473 = vadd.f32 %v1398, %v1472
    %v1474 = vpop.f32.mrf.mxu0
    %1475 = vdwg.mxu0
    %v1476 = vld [vmem:[%s6] sm:$0x1]
    %v1478 = vlaneseq
    %v1479 = vshrl.u32 %v1478, 7
    %v1480 = vsub.s32 0, %v1479
    %v1481 = vrot.slane %v1476, %v1480
    %v1483 = vadd.f32 %v1473, %v1481
    %v1484 = vtanh.pop %v1483
    %v1485 = vld [vmem:[%s7] sm:$0xff]
    %v1486 = vld [vmem:[%s7 + $0x8] sm:$0xff]
    %v1487 = vld [vmem:[%s7 + $0x10] sm:$0xff]
    %v1488 = vld [vmem:[%s7 + $0x18] sm:$0xff]
    %v1489 = vld [vmem:[%s7 + $0x20] sm:$0xff]
    %v1490 = vld [vmem:[%s7 + $0x28] sm:$0xff]
    %v1491 = vld [vmem:[%s7 + $0x30] sm:$0xff]
    %v1492 = vld [vmem:[%s7 + $0x38] sm:$0xff]
    %v1493 = vld [vmem:[%s8] sm:$0x1]
    %v1495 = vlaneseq
    %v1496 = vshrl.u32 %v1495, 7
    %v1497 = vsub.s32 0, %v1496
    %v1498 = vrot.slane %v1493, %v1497
    %v1501 = vsel %vm736, %v1484, 0
    %1503 = vmatprep.subr.mxu0 0.0
    %1504 = vmatpush1.msra.mxu0 0.0
    %1505 = vmatprep.subr.mxu0 0.0
    %1506 = vmatpush1.msra.mxu0 0.0
    %1507 = vmatprep.subr.mxu0 0.0
    %1508 = vmatpush1.msra.mxu0 0.0
    %1509 = vmatprep.subr.mxu0 0.0
    %1510 = vmatpush1.msra.mxu0 0.0
    %1511 = vmatprep.subr.mxu0 0.0
    %1512 = vmatpush1.msra.mxu0 0.0
    %1513 = vmatprep.subr.mxu0 0.0
    %1514 = vmatpush1.msra.mxu0 0.0
    %1515 = vmatprep.subr.mxu0 0.0
    %1516 = vmatpush1.msra.mxu0 0.0
    %1517 = vmatprep.subr.mxu0 0.0
    %1518 = vmatpush1.msra.mxu0 0.0
    %1519 = vmatprep.subr.mxu0 0.0
    %1520 = vmatpush1.msra.mxu0 %v1492
    %1521 = vmatprep.subr.mxu0 0.0
    %1522 = vmatpush1.msra.mxu0 %v1491
    %1523 = vmatprep.subr.mxu0 0.0
    %1524 = vmatpush1.msra.mxu0 %v1490
    %1525 = vmatprep.subr.mxu0 0.0
    %1526 = vmatpush1.msra.mxu0 %v1489
    %1527 = vmatprep.subr.mxu0 0.0
    %1528 = vmatpush1.msra.mxu0 %v1488
    %1529 = vmatprep.subr.mxu0 0.0
    %1530 = vmatpush1.msra.mxu0 %v1487
    %1531 = vmatprep.subr.mxu0 0.0
    %1532 = vmatpush1.msra.mxu0 %v1486
    %1533 = vmatprep.subr.mxu0 0.0
    %1534 = vmatpush1.msra.mxu0 %v1485
    %1535 = vmatprep.subr.mxu0 0.0
    %1536 = vmatpush2.msra.mxu0 0.0
    %1537 = vmatprep.subr.mxu0 0.0
    %1538 = vmatpush2.msra.mxu0 0.0
    %1539 = vmatprep.subr.mxu0 0.0
    %1540 = vmatpush2.msra.mxu0 0.0
    %1541 = vmatprep.subr.mxu0 0.0
    %1542 = vmatpush2.msra.mxu0 0.0
    %1543 = vmatprep.subr.mxu0 0.0
    %1544 = vmatpush2.msra.mxu0 0.0
    %1545 = vmatprep.subr.mxu0 0.0
    %1546 = vmatpush2.msra.mxu0 0.0
    %1547 = vmatprep.subr.mxu0 0.0
    %1548 = vmatpush2.msra.mxu0 0.0
    %1549 = vmatprep.subr.mxu0 0.0
    %1550 = vmatpush2.msra.mxu0 0.0
    %1551 = vmatprep.subr.mxu0 0.0
    %1552 = vmatpush2.msra.mxu0 0.0
    %1553 = vmatprep.subr.mxu0 0.0
    %1554 = vmatpush2.msra.mxu0 0.0
    %1555 = vmatprep.subr.mxu0 0.0
    %1556 = vmatpush2.msra.mxu0 0.0
    %1557 = vmatprep.subr.mxu0 0.0
    %1558 = vmatpush2.msra.mxu0 0.0
    %1559 = vmatprep.subr.mxu0 0.0
    %1560 = vmatpush2.msra.mxu0 0.0
    %1561 = vmatprep.subr.mxu0 0.0
    %1562 = vmatpush2.msra.mxu0 0.0
    %1563 = vmatprep.subr.mxu0 0.0
    %1564 = vmatpush2.msra.mxu0 0.0
    %1565 = vmatprep.subr.mxu0 0.0
    %1566 = vmatpush2.msra.mxu0 0.0
    %1567 = vmatprep.mubr.f32.mxu0 0.0
    %1568 = vmatmul.mubr.f32.gmra.mxu0 %v1501
    %v1569 = vpop.f32.mrf.mxu0
    %v1570 = vadd.f32 %v1498, %v1569
    %v1571 = vpop.f32.mrf.mxu0
    %1572 = vdwg.mxu0
    %1574 = vrot.lane.b32.xlu0 %v1570, 24
    %v1575 = vpop.permute.xlu0 %1574
    %vm1577 = vcmask 286912
    %1578 = vst.msk [vmem:[#allocation2] sm:$0x1] %vm1577, %v1575
    %1579 = vrot.lane.b32.xlu0 %v1570, 36
    %v1580 = vpop.permute.xlu0 %1579
    %vm1582 = vcmask 386337
    %1583 = vst.msk [vmem:[#allocation2 - $0x1] sm:$0x2] %vm1582, %v1580
    %v1584 = vsel %vm818, %v1570, -inf
    %1585 = vmax.xlane.f32.xlu0 %v1584
    %v1586 = vpop.xlane.xlu0 %1585
    %vm1587 = vcmp.eq.f32.partialorder %v1570, %v1586
    %v1588 = vsel %vm1587, %v58, 12
    %v1589 = vsel %vm818, %v1588, 2147483647
    %v1590 = vand.u32 %v1589, 65535
    %v1591 = vshra.s32 %v1589, 16
    %v1592 = vcvt.s32.f32 %v1590
    %v1593 = vcvt.s32.f32 %v1591
    %1594 = vmin.xlane.f32.xlu0 %v1593
    %v1595 = vpop.xlane.xlu0 %1594
    %vm1596 = vcmp.eq.f32.partialorder %v1593, %v1595
    %v1597 = vsel %vm1596, %v1592, inf
    %1598 = vmin.xlane.f32.xlu0 %v1597
    %v1599 = vpop.xlane.xlu0 %1598
    %v1600 = vcvt.f32.s32 %v1599
    %v1601 = vcvt.f32.s32 %v1595
    %v1602 = vshll.u32 %v1601, 16
    %v1603 = vadd.s32 %v1602, %v1600
    %vm1604 = vcmp.eq.s32.totalorder %v58, %v1603
    %v1605 = vsel %vm1604, 1, 0
    %v1606 = vcvt.s32.f32 %v1605
    %v1607 = vld [vmem:[%s0] sm:$0xff]
    %v1608 = vld [vmem:[%s0 + $0x8] sm:$0xf]
    %v1610 = vsel %vm67, %v1606, 0
    %v1613 = vsel %vm71, %v1608, 0
    %1615 = vmatprep.subr.mxu0 0.0
    %1616 = vmatpush1.msra.mxu0 0.0
    %1617 = vmatprep.subr.mxu0 0.0
    %1618 = vmatpush1.msra.mxu0 0.0
    %1619 = vmatprep.subr.mxu0 0.0
    %1620 = vmatpush1.msra.mxu0 0.0
    %1621 = vmatprep.subr.mxu0 0.0
    %1622 = vmatpush1.msra.mxu0 0.0
    %1623 = vmatprep.subr.mxu0 0.0
    %1624 = vmatpush1.msra.mxu0 0.0
    %1625 = vmatprep.subr.mxu0 0.0
    %1626 = vmatpush1.msra.mxu0 0.0
    %1627 = vmatprep.subr.mxu0 0.0
    %1628 = vmatpush1.msra.mxu0 0.0
    %1629 = vmatprep.subr.mxu0 0.0
    %1630 = vmatpush1.msra.mxu0 0.0
    %1631 = vmatprep.subr.mxu0 0.0
    %1632 = vmatpush1.msra.mxu0 0.0
    %1633 = vmatprep.subr.mxu0 0.0
    %1634 = vmatpush1.msra.mxu0 0.0
    %1635 = vmatprep.subr.mxu0 0.0
    %1636 = vmatpush1.msra.mxu0 0.0
    %1637 = vmatprep.subr.mxu0 0.0
    %1638 = vmatpush1.msra.mxu0 0.0
    %1639 = vmatprep.subr.mxu0 0.0
    %1640 = vmatpush1.msra.mxu0 0.0
    %1641 = vmatprep.subr.mxu0 0.0
    %1642 = vmatpush1.msra.mxu0 0.0
    %1643 = vmatprep.subr.mxu0 0.0
    %1644 = vmatpush1.msra.mxu0 %v1613
    %1645 = vmatprep.subr.mxu0 0.0
    %1646 = vmatpush1.msra.mxu0 %v1607
    %1647 = vmatprep.subr.mxu0 0.0
    %1648 = vmatpush2.msra.mxu0 0.0
    %1649 = vmatprep.subr.mxu0 0.0
    %1650 = vmatpush2.msra.mxu0 0.0
    %1651 = vmatprep.subr.mxu0 0.0
    %1652 = vmatpush2.msra.mxu0 0.0
    %1653 = vmatprep.subr.mxu0 0.0
    %1654 = vmatpush2.msra.mxu0 0.0
    %1655 = vmatprep.subr.mxu0 0.0
    %1656 = vmatpush2.msra.mxu0 0.0
    %1657 = vmatprep.subr.mxu0 0.0
    %1658 = vmatpush2.msra.mxu0 0.0
    %1659 = vmatprep.subr.mxu0 0.0
    %1660 = vmatpush2.msra.mxu0 0.0
    %1661 = vmatprep.subr.mxu0 0.0
    %1662 = vmatpush2.msra.mxu0 0.0
    %1663 = vmatprep.subr.mxu0 0.0
    %1664 = vmatpush2.msra.mxu0 0.0
    %1665 = vmatprep.subr.mxu0 0.0
    %1666 = vmatpush2.msra.mxu0 0.0
    %1667 = vmatprep.subr.mxu0 0.0
    %1668 = vmatpush2.msra.mxu0 0.0
    %1669 = vmatprep.subr.mxu0 0.0
    %1670 = vmatpush2.msra.mxu0 0.0
    %1671 = vmatprep.subr.mxu0 0.0
    %1672 = vmatpush2.msra.mxu0 0.0
    %1673 = vmatprep.subr.mxu0 0.0
    %1674 = vmatpush2.msra.mxu0 0.0
    %1675 = vmatprep.subr.mxu0 0.0
    %1676 = vmatpush2.msra.mxu0 0.0
    %1677 = vmatprep.subr.mxu0 0.0
    %1678 = vmatpush2.msra.mxu0 0.0
    %1679 = vmatprep.mubr.f32.mxu0 0.0
    %1680 = vmatmul.mubr.f32.gmra.mxu0 %v1610
    %v1681 = vpop.f32.mrf.mxu0
    %v1682 = vadd.f32 0.0, %v1681
    %v1683 = vpop.f32.mrf.mxu0
    %1684 = vdwg.mxu0
    %v1685 = vld [vmem:[%s13] sm:$0xff]
    %v1686 = vld [vmem:[%s13 + $0x8] sm:$0xff]
    %v1687 = vld [vmem:[%s14] sm:$0x1]
    %v1689 = vlaneseq
    %v1690 = vshrl.u32 %v1689, 7
    %v1691 = vsub.s32 0, %v1690
    %v1692 = vrot.slane %v1687, %v1691
    %v1695 = vsel %vm154, %v1682, 0
    %1697 = vmatprep.subr.mxu0 0.0
    %1698 = vmatpush1.msra.mxu0 0.0
    %1699 = vmatprep.subr.mxu0 0.0
    %1700 = vmatpush1.msra.mxu0 0.0
    %1701 = vmatprep.subr.mxu0 0.0
    %1702 = vmatpush1.msra.mxu0 0.0
    %1703 = vmatprep.subr.mxu0 0.0
    %1704 = vmatpush1.msra.mxu0 0.0
    %1705 = vmatprep.subr.mxu0 0.0
    %1706 = vmatpush1.msra.mxu0 0.0
    %1707 = vmatprep.subr.mxu0 0.0
    %1708 = vmatpush1.msra.mxu0 0.0
    %1709 = vmatprep.subr.mxu0 0.0
    %1710 = vmatpush1.msra.mxu0 0.0
    %1711 = vmatprep.subr.mxu0 0.0
    %1712 = vmatpush1.msra.mxu0 0.0
    %1713 = vmatprep.subr.mxu0 0.0
    %1714 = vmatpush1.msra.mxu0 0.0
    %1715 = vmatprep.subr.mxu0 0.0
    %1716 = vmatpush1.msra.mxu0 0.0
    %1717 = vmatprep.subr.mxu0 0.0
    %1718 = vmatpush1.msra.mxu0 0.0
    %1719 = vmatprep.subr.mxu0 0.0
    %1720 = vmatpush1.msra.mxu0 0.0
    %1721 = vmatprep.subr.mxu0 0.0
    %1722 = vmatpush1.msra.mxu0 0.0
    %1723 = vmatprep.subr.mxu0 0.0
    %1724 = vmatpush1.msra.mxu0 0.0
    %1725 = vmatprep.subr.mxu0 0.0
    %1726 = vmatpush1.msra.mxu0 %v1686
    %1727 = vmatprep.subr.mxu0 0.0
    %1728 = vmatpush1.msra.mxu0 %v1685
    %1729 = vmatprep.subr.mxu0 0.0
    %1730 = vmatpush2.msra.mxu0 0.0
    %1731 = vmatprep.subr.mxu0 0.0
    %1732 = vmatpush2.msra.mxu0 0.0
    %1733 = vmatprep.subr.mxu0 0.0
    %1734 = vmatpush2.msra.mxu0 0.0
    %1735 = vmatprep.subr.mxu0 0.0
    %1736 = vmatpush2.msra.mxu0 0.0
    %1737 = vmatprep.subr.mxu0 0.0
    %1738 = vmatpush2.msra.mxu0 0.0
    %1739 = vmatprep.subr.mxu0 0.0
    %1740 = vmatpush2.msra.mxu0 0.0
    %1741 = vmatprep.subr.mxu0 0.0
    %1742 = vmatpush2.msra.mxu0 0.0
    %1743 = vmatprep.subr.mxu0 0.0
    %1744 = vmatpush2.msra.mxu0 0.0
    %1745 = vmatprep.subr.mxu0 0.0
    %1746 = vmatpush2.msra.mxu0 0.0
    %1747 = vmatprep.subr.mxu0 0.0
    %1748 = vmatpush2.msra.mxu0 0.0
    %1749 = vmatprep.subr.mxu0 0.0
    %1750 = vmatpush2.msra.mxu0 0.0
    %1751 = vmatprep.subr.mxu0 0.0
    %1752 = vmatpush2.msra.mxu0 0.0
    %1753 = vmatprep.subr.mxu0 0.0
    %1754 = vmatpush2.msra.mxu0 0.0
    %1755 = vmatprep.subr.mxu0 0.0
    %1756 = vmatpush2.msra.mxu0 0.0
    %1757 = vmatprep.subr.mxu0 0.0
    %1758 = vmatpush2.msra.mxu0 0.0
    %1759 = vmatprep.subr.mxu0 0.0
    %1760 = vmatpush2.msra.mxu0 0.0
    %1761 = vmatprep.mubr.f32.mxu0 0.0
    %1762 = vmatmul.mubr.f32.gmra.mxu0 %v1695
    %v1763 = vpop.f32.mrf.mxu0
    %v1764 = vadd.f32 %v1692, %v1763
    %v1765 = vpop.f32.mrf.mxu0
    %1766 = vdwg.mxu0
    %v1767 = vld [vmem:[%s15] sm:$0xff]
    %v1768 = vld [vmem:[%s15 + $0x8] sm:$0xff]
    %v1769 = vld [vmem:[%s15 + $0x10] sm:$0xff]
    %v1770 = vld [vmem:[%s15 + $0x18] sm:$0xff]
    %v1771 = vld [vmem:[%s16] sm:$0x1]
    %v1773 = vlaneseq
    %v1774 = vshrl.u32 %v1773, 7
    %v1775 = vsub.s32 0, %v1774
    %v1776 = vrot.slane %v1771, %v1775
    %1778 = vmatprep.subr.mxu0 0.0
    %1779 = vmatpush1.msra.mxu0 0.0
    %1780 = vmatprep.subr.mxu0 0.0
    %1781 = vmatpush1.msra.mxu0 0.0
    %1782 = vmatprep.subr.mxu0 0.0
    %1783 = vmatpush1.msra.mxu0 0.0
    %1784 = vmatprep.subr.mxu0 0.0
    %1785 = vmatpush1.msra.mxu0 0.0
    %1786 = vmatprep.subr.mxu0 0.0
    %1787 = vmatpush1.msra.mxu0 0.0
    %1788 = vmatprep.subr.mxu0 0.0
    %1789 = vmatpush1.msra.mxu0 0.0
    %1790 = vmatprep.subr.mxu0 0.0
    %1791 = vmatpush1.msra.mxu0 0.0
    %1792 = vmatprep.subr.mxu0 0.0
    %1793 = vmatpush1.msra.mxu0 0.0
    %1794 = vmatprep.subr.mxu0 0.0
    %1795 = vmatpush1.msra.mxu0 0.0
    %1796 = vmatprep.subr.mxu0 0.0
    %1797 = vmatpush1.msra.mxu0 0.0
    %1798 = vmatprep.subr.mxu0 0.0
    %1799 = vmatpush1.msra.mxu0 0.0
    %1800 = vmatprep.subr.mxu0 0.0
    %1801 = vmatpush1.msra.mxu0 0.0
    %1802 = vmatprep.subr.mxu0 0.0
    %1803 = vmatpush1.msra.mxu0 %v1770
    %1804 = vmatprep.subr.mxu0 0.0
    %1805 = vmatpush1.msra.mxu0 %v1769
    %1806 = vmatprep.subr.mxu0 0.0
    %1807 = vmatpush1.msra.mxu0 %v1768
    %1808 = vmatprep.subr.mxu0 0.0
    %1809 = vmatpush1.msra.mxu0 %v1767
    %1810 = vmatprep.subr.mxu0 0.0
    %1811 = vmatpush2.msra.mxu0 0.0
    %1812 = vmatprep.subr.mxu0 0.0
    %1813 = vmatpush2.msra.mxu0 0.0
    %1814 = vmatprep.subr.mxu0 0.0
    %1815 = vmatpush2.msra.mxu0 0.0
    %1816 = vmatprep.subr.mxu0 0.0
    %1817 = vmatpush2.msra.mxu0 0.0
    %1818 = vmatprep.subr.mxu0 0.0
    %1819 = vmatpush2.msra.mxu0 0.0
    %1820 = vmatprep.subr.mxu0 0.0
    %1821 = vmatpush2.msra.mxu0 0.0
    %1822 = vmatprep.subr.mxu0 0.0
    %1823 = vmatpush2.msra.mxu0 0.0
    %1824 = vmatprep.subr.mxu0 0.0
    %1825 = vmatpush2.msra.mxu0 0.0
    %1826 = vmatprep.subr.mxu0 0.0
    %1827 = vmatpush2.msra.mxu0 0.0
    %1828 = vmatprep.subr.mxu0 0.0
    %1829 = vmatpush2.msra.mxu0 0.0
    %1830 = vmatprep.subr.mxu0 0.0
    %1831 = vmatpush2.msra.mxu0 0.0
    %1832 = vmatprep.subr.mxu0 0.0
    %1833 = vmatpush2.msra.mxu0 0.0
    %1834 = vmatprep.subr.mxu0 0.0
    %1835 = vmatpush2.msra.mxu0 0.0
    %1836 = vmatprep.subr.mxu0 0.0
    %1837 = vmatpush2.msra.mxu0 0.0
    %1838 = vmatprep.subr.mxu0 0.0
    %1839 = vmatpush2.msra.mxu0 0.0
    %1840 = vmatprep.subr.mxu0 0.0
    %1841 = vmatpush2.msra.mxu0 0.0
    %1842 = vmatprep.mubr.f32.mxu0 0.0
    %1843 = vmatmul.mubr.f32.gmra.mxu0 %v1116
    %v1844 = vpop.f32.mrf.mxu0
    %v1845 = vadd.f32 %v1776, %v1844
    %v1846 = vpop.f32.mrf.mxu0
    %1847 = vdwg.mxu0
    %v1848 = vadd.f32 %v1764, %v1845
    %v1849 = vxor.u32 %v1848, 2147483648
    %v1850 = vmul.f32 %v1849, 1.442695
    %v1851 = vpow.pop %v1850
    %v1852 = vadd.f32 %v1851, 1.0
    %v1853 = vrcp.pop %v1852
    %v1854 = vmul.f32 1.0, %v1853
    %1856 = vrot.lane.b32.xlu0 %v1845, 64
    %v1857 = vpop.permute.xlu0 %1856
    %v1859 = vmul.f32 %v1854, %v1857
    %1861 = vrot.lane.b32.xlu0 %v1859, 64
    %v1862 = vpop.permute.xlu0 %1861
    %v1864 = vadd.f32 %v1764, %v1862
    %v1865 = vtanh.pop %v1864
    %v1866 = vsub.f32 1.0, %v1854
    %1868 = vrot.lane.b32.xlu0 %v1865, 96
    %v1869 = vpop.permute.xlu0 %1868
    %v1871 = vmul.f32 %v1866, %v1869
    %v1872 = vmul.f32 %v1854, %v1108
    %v1873 = vadd.f32 %v1871, %v1872
    %v1874 = vld [vmem:[%s3] sm:$0xff]
    %v1875 = vld [vmem:[%s3 + $0x8] sm:$0xff]
    %v1876 = vld [vmem:[%s3 + $0x10] sm:$0xff]
    %v1877 = vld [vmem:[%s3 + $0x18] sm:$0xff]
    %1879 = vrot.lane.b32.xlu0 %v1873, 96
    %v1880 = vpop.permute.xlu0 %1879
    %v1881 = vsel %vm239, %v1880, 0
    %1883 = vmatprep.subr.mxu0 0.0
    %1884 = vmatpush1.msra.mxu0 0.0
    %1885 = vmatprep.subr.mxu0 0.0
    %1886 = vmatpush1.msra.mxu0 0.0
    %1887 = vmatprep.subr.mxu0 0.0
    %1888 = vmatpush1.msra.mxu0 0.0
    %1889 = vmatprep.subr.mxu0 0.0
    %1890 = vmatpush1.msra.mxu0 0.0
    %1891 = vmatprep.subr.mxu0 0.0
    %1892 = vmatpush1.msra.mxu0 0.0
    %1893 = vmatprep.subr.mxu0 0.0
    %1894 = vmatpush1.msra.mxu0 0.0
    %1895 = vmatprep.subr.mxu0 0.0
    %1896 = vmatpush1.msra.mxu0 0.0
    %1897 = vmatprep.subr.mxu0 0.0
    %1898 = vmatpush1.msra.mxu0 0.0
    %1899 = vmatprep.subr.mxu0 0.0
    %1900 = vmatpush1.msra.mxu0 0.0
    %1901 = vmatprep.subr.mxu0 0.0
    %1902 = vmatpush1.msra.mxu0 0.0
    %1903 = vmatprep.subr.mxu0 0.0
    %1904 = vmatpush1.msra.mxu0 0.0
    %1905 = vmatprep.subr.mxu0 0.0
    %1906 = vmatpush1.msra.mxu0 0.0
    %1907 = vmatprep.subr.mxu0 0.0
    %1908 = vmatpush1.msra.mxu0 %v1877
    %1909 = vmatprep.subr.mxu0 0.0
    %1910 = vmatpush1.msra.mxu0 %v1876
    %1911 = vmatprep.subr.mxu0 0.0
    %1912 = vmatpush1.msra.mxu0 %v1875
    %1913 = vmatprep.subr.mxu0 0.0
    %1914 = vmatpush1.msra.mxu0 %v1874
    %1915 = vmatprep.subr.mxu0 0.0
    %1916 = vmatpush2.msra.mxu0 0.0
    %1917 = vmatprep.subr.mxu0 0.0
    %1918 = vmatpush2.msra.mxu0 0.0
    %1919 = vmatprep.subr.mxu0 0.0
    %1920 = vmatpush2.msra.mxu0 0.0
    %1921 = vmatprep.subr.mxu0 0.0
    %1922 = vmatpush2.msra.mxu0 0.0
    %1923 = vmatprep.subr.mxu0 0.0
    %1924 = vmatpush2.msra.mxu0 0.0
    %1925 = vmatprep.subr.mxu0 0.0
    %1926 = vmatpush2.msra.mxu0 0.0
    %1927 = vmatprep.subr.mxu0 0.0
    %1928 = vmatpush2.msra.mxu0 0.0
    %1929 = vmatprep.subr.mxu0 0.0
    %1930 = vmatpush2.msra.mxu0 0.0
    %1931 = vmatprep.subr.mxu0 0.0
    %1932 = vmatpush2.msra.mxu0 0.0
    %1933 = vmatprep.subr.mxu0 0.0
    %1934 = vmatpush2.msra.mxu0 0.0
    %1935 = vmatprep.subr.mxu0 0.0
    %1936 = vmatpush2.msra.mxu0 0.0
    %1937 = vmatprep.subr.mxu0 0.0
    %1938 = vmatpush2.msra.mxu0 0.0
    %1939 = vmatprep.subr.mxu0 0.0
    %1940 = vmatpush2.msra.mxu0 0.0
    %1941 = vmatprep.subr.mxu0 0.0
    %1942 = vmatpush2.msra.mxu0 0.0
    %1943 = vmatprep.subr.mxu0 0.0
    %1944 = vmatpush2.msra.mxu0 0.0
    %1945 = vmatprep.subr.mxu0 0.0
    %1946 = vmatpush2.msra.mxu0 0.0
    %1947 = vmatprep.mubr.f32.mxu0 0.0
    %1948 = vmatmul.mubr.f32.gmra.mxu0 %v1881
    %v1949 = vpop.f32.mrf.mxu0
    %v1950 = vadd.f32 0.0, %v1949
    %v1951 = vpop.f32.mrf.mxu0
    %1952 = vdwg.mxu0
    %v1955 = vunpack.c.l.s4 1966171168
    %v1956 = vunpack.c.0.s8 %v1955
    %v1957 = vlaneseq
    %v1958 = vshrl.u32 %v1957, 7
    %v1959 = vsub.s32 %v1956, %v1958
    %v1960 = vrot.slane %v1950, %v1959
    %v1961 = vcombine.high %v1960, %v1960
    %v1963 = vunpack.c.l.s4 1966171168
    %v1964 = vunpack.c.0.s8 %v1963
    %v1965 = vlaneseq
    %v1966 = vshrl.u32 %v1965, 7
    %v1967 = vsub.s32 %v1964, %v1966
    %v1968 = vrot.slane %v1960, %v1967
    %v1970 = vunpack.c.l.s4 1966171168
    %v1971 = vunpack.c.0.s8 %v1970
    %v1972 = vlaneseq
    %v1973 = vshrl.u32 %v1972, 7
    %v1974 = vsub.s32 %v1971, %v1973
    %v1975 = vrot.slane %v1961, %v1974
    %v1976 = vlaneseq
    %v1977 = vshrl.u32 %v1976, 7
    %v1978 = vsub.s32 0, %v1977
    %v1979 = vrot.slane %v1968, %v1978
    %v1980 = vlaneseq
    %v1981 = vshrl.u32 %v1980, 7
    %v1982 = vsub.s32 0, %v1981
    %v1983 = vrot.slane %v1975, %v1982
    %v1986 = vmul.f32 %v1979, %v59
    %v1987 = vmul.f32 %v1983, %v60
    %v1988 = vsel %vm456, %v1986, 0.0
    %1989 = vadd.xlane.f32.xlu0 %v1988
    %v1990 = vpop.xlane.xlu0 %1989
    %v1991 = vsel %vm456, %v1987, 0.0
    %1992 = vadd.xlane.f32.xlu0 %v1991
    %v1993 = vpop.xlane.xlu0 %1992
    %v1996 = vlaneseq
    %v1997 = vshrl.u32 %v1996, 7
    %v1998 = vsub.s32 %v58, %v1997
    %v1999 = vrot.slane %v1990, %v1998
    %v2000 = vlaneseq
    %v2001 = vshrl.u32 %v2000, 7
    %v2002 = vsub.s32 %v58, %v2001
    %v2003 = vrot.slane %v1993, %v2002
    %v2004 = vsel %vm473, %v2003, %v1999
    %v2006 = vsel %vm476, %v2004, -inf
    %2007 = vmax.xlane.f32.xlu0 %v2006
    %v2008 = vpop.xlane.xlu0 %2007
    %v2010 = vlaneseq
    %v2011 = vshrl.u32 %v2010, 7
    %v2012 = vsub.s32 0, %v2011
    %v2013 = vrot.slane %v2008, %v2012
    %v2014 = vlaneseq
    %v2015 = vshrl.u32 %v2014, 7
    %v2016 = vsub.s32 1, %v2015
    %v2017 = vrot.slane %v2008, %v2016
    %v2020 = vsub.f32 %v1990, %v2013
    %v2021 = vsub.f32 %v1993, %v2017
    %v2022 = vmul.f32 %v2020, 1.442695
    %v2023 = vpow.pop %v2022
    %v2024 = vmul.f32 %v2021, 1.442695
    %v2025 = vpow.pop %v2024
    %2028 = vset.pattern.permute.xlu0 0
    %2029 = vperm.xlu0 %2028, %v2023
    %v2030 = vpop.permute.xlu0 %2029
    %2031 = vset.pattern.permute.xlu0 0
    %2032 = vperm.xlu0 %2031, %v2025
    %v2033 = vpop.permute.xlu0 %2032
    %v2034 = vlaneseq
    %v2035 = vshrl.u32 %v2034, 7
    %v2036 = vsub.s32 %v58, %v2035
    %v2037 = vrot.slane %v2030, %v2036
    %v2038 = vlaneseq
    %v2039 = vshrl.u32 %v2038, 7
    %v2040 = vsub.s32 %v58, %v2039
    %v2041 = vrot.slane %v2033, %v2040
    %v2042 = vsel %vm473, %v2041, %v2037
    %v2044 = vsel %vm476, %v2042, 0.0
    %2045 = vadd.xlane.f32.xlu0 %v2044
    %v2046 = vpop.xlane.xlu0 %2045
    %v2048 = vlaneseq
    %v2049 = vshrl.u32 %v2048, 7
    %v2050 = vsub.s32 0, %v2049
    %v2051 = vrot.slane %v2046, %v2050
    %v2052 = vlaneseq
    %v2053 = vshrl.u32 %v2052, 7
    %v2054 = vsub.s32 1, %v2053
    %v2055 = vrot.slane %v2046, %v2054
    %v2058 = vrcp.pop %v2051
    %v2059 = vmul.f32 %v2023, %v2058
    %v2060 = vrcp.pop %v2055
    %v2061 = vmul.f32 %v2025, %v2060
    %2063 = vset.pattern.permute.xlu0 0
    %2064 = vperm.xlu0 %2063, %v2059
    %v2065 = vpop.permute.xlu0 %2064
    %2068 = vset.pattern.permute.xlu0 0
    %2069 = vperm.xlu0 %2068, %v2061
    %v2070 = vpop.permute.xlu0 %2069
    %v2072 = vmul.f32 %v2065, %v59
    %v2073 = vmul.f32 %v2070, %v60
    %v2074 = vsel %vm456, %v2072, 0.0
    %v2075 = vrot.slane %v2074, 4
    %v2076 = vadd.f32 %v2074, %v2075
    %v2077 = vrot.slane %v2076, 2
    %v2078 = vadd.f32 %v2076, %v2077
    %v2079 = vrot.slane %v2078, 1
    %v2080 = vadd.f32 %v2078, %v2079
    %v2081 = vsel %vm456, %v2073, 0.0
    %v2082 = vrot.slane %v2081, 4
    %v2083 = vadd.f32 %v2081, %v2082
    %v2084 = vrot.slane %v2083, 2
    %v2085 = vadd.f32 %v2083, %v2084
    %v2086 = vrot.slane %v2085, 1
    %v2087 = vadd.f32 %v2085, %v2086
    %v2088 = vld [vmem:[%s4] sm:$0xff]
    %v2089 = vld [vmem:[%s4 + $0x8] sm:$0xff]
    %v2090 = vld [vmem:[%s4 + $0x10] sm:$0xff]
    %v2091 = vld [vmem:[%s4 + $0x18] sm:$0xff]
    %v2092 = vld [vmem:[%s5] sm:$0xff]
    %v2093 = vld [vmem:[%s5 + $0x8] sm:$0xff]
    %v2094 = vld [vmem:[%s5 + $0x10] sm:$0xff]
    %v2095 = vld [vmem:[%s5 + $0x18] sm:$0xff]
    %2096 = vmatprep.subr.mxu0 0.0
    %2097 = vmatpush1.msra.mxu0 0.0
    %2098 = vmatprep.subr.mxu0 0.0
    %2099 = vmatpush1.msra.mxu0 0.0
    %2100 = vmatprep.subr.mxu0 0.0
    %2101 = vmatpush1.msra.mxu0 0.0
    %2102 = vmatprep.subr.mxu0 0.0
    %2103 = vmatpush1.msra.mxu0 0.0
    %2104 = vmatprep.subr.mxu0 0.0
    %2105 = vmatpush1.msra.mxu0 0.0
    %2106 = vmatprep.subr.mxu0 0.0
    %2107 = vmatpush1.msra.mxu0 0.0
    %2108 = vmatprep.subr.mxu0 0.0
    %2109 = vmatpush1.msra.mxu0 0.0
    %2110 = vmatprep.subr.mxu0 0.0
    %2111 = vmatpush1.msra.mxu0 0.0
    %2112 = vmatprep.subr.mxu0 0.0
    %2113 = vmatpush1.msra.mxu0 0.0
    %2114 = vmatprep.subr.mxu0 0.0
    %2115 = vmatpush1.msra.mxu0 0.0
    %2116 = vmatprep.subr.mxu0 0.0
    %2117 = vmatpush1.msra.mxu0 0.0
    %2118 = vmatprep.subr.mxu0 0.0
    %2119 = vmatpush1.msra.mxu0 0.0
    %2120 = vmatprep.subr.mxu0 0.0
    %2121 = vmatpush1.msra.mxu0 %v2095
    %2122 = vmatprep.subr.mxu0 0.0
    %2123 = vmatpush1.msra.mxu0 %v2094
    %2124 = vmatprep.subr.mxu0 0.0
    %2125 = vmatpush1.msra.mxu0 %v2093
    %2126 = vmatprep.subr.mxu0 0.0
    %2127 = vmatpush1.msra.mxu0 %v2092
    %2128 = vmatprep.subr.mxu0 0.0
    %2129 = vmatpush2.msra.mxu0 0.0
    %2130 = vmatprep.subr.mxu0 0.0
    %2131 = vmatpush2.msra.mxu0 0.0
    %2132 = vmatprep.subr.mxu0 0.0
    %2133 = vmatpush2.msra.mxu0 0.0
    %2134 = vmatprep.subr.mxu0 0.0
    %2135 = vmatpush2.msra.mxu0 0.0
    %2136 = vmatprep.subr.mxu0 0.0
    %2137 = vmatpush2.msra.mxu0 0.0
    %2138 = vmatprep.subr.mxu0 0.0
    %2139 = vmatpush2.msra.mxu0 0.0
    %2140 = vmatprep.subr.mxu0 0.0
    %2141 = vmatpush2.msra.mxu0 0.0
    %2142 = vmatprep.subr.mxu0 0.0
    %2143 = vmatpush2.msra.mxu0 0.0
    %2144 = vmatprep.subr.mxu0 0.0
    %2145 = vmatpush2.msra.mxu0 0.0
    %2146 = vmatprep.subr.mxu0 0.0
    %2147 = vmatpush2.msra.mxu0 0.0
    %2148 = vmatprep.subr.mxu0 0.0
    %2149 = vmatpush2.msra.mxu0 0.0
    %2150 = vmatprep.subr.mxu0 0.0
    %2151 = vmatpush2.msra.mxu0 0.0
    %2152 = vmatprep.subr.mxu0 0.0
    %2153 = vmatpush2.msra.mxu0 0.0
    %2154 = vmatprep.subr.mxu0 0.0
    %2155 = vmatpush2.msra.mxu0 0.0
    %2156 = vmatprep.subr.mxu0 0.0
    %2157 = vmatpush2.msra.mxu0 0.0
    %2158 = vmatprep.subr.mxu0 0.0
    %2159 = vmatpush2.msra.mxu0 0.0
    %2160 = vmatprep.mubr.f32.mxu0 0.0
    %2161 = vmatmul.mubr.f32.gmra.mxu0 %v1881
    %v2162 = vpop.f32.mrf.mxu0
    %v2163 = vadd.f32 0.0, %v2162
    %v2164 = vpop.f32.mrf.mxu0
    %2165 = vdwg.mxu0
    %v2168 = vsel %vm473, %v2087, %v2080
    %v2169 = vsel %vm239, %v2168, 0
    %2171 = vmatprep.subr.mxu0 0.0
    %2172 = vmatpush1.msra.mxu0 0.0
    %2173 = vmatprep.subr.mxu0 0.0
    %2174 = vmatpush1.msra.mxu0 0.0
    %2175 = vmatprep.subr.mxu0 0.0
    %2176 = vmatpush1.msra.mxu0 0.0
    %2177 = vmatprep.subr.mxu0 0.0
    %2178 = vmatpush1.msra.mxu0 0.0
    %2179 = vmatprep.subr.mxu0 0.0
    %2180 = vmatpush1.msra.mxu0 0.0
    %2181 = vmatprep.subr.mxu0 0.0
    %2182 = vmatpush1.msra.mxu0 0.0
    %2183 = vmatprep.subr.mxu0 0.0
    %2184 = vmatpush1.msra.mxu0 0.0
    %2185 = vmatprep.subr.mxu0 0.0
    %2186 = vmatpush1.msra.mxu0 0.0
    %2187 = vmatprep.subr.mxu0 0.0
    %2188 = vmatpush1.msra.mxu0 0.0
    %2189 = vmatprep.subr.mxu0 0.0
    %2190 = vmatpush1.msra.mxu0 0.0
    %2191 = vmatprep.subr.mxu0 0.0
    %2192 = vmatpush1.msra.mxu0 0.0
    %2193 = vmatprep.subr.mxu0 0.0
    %2194 = vmatpush1.msra.mxu0 0.0
    %2195 = vmatprep.subr.mxu0 0.0
    %2196 = vmatpush1.msra.mxu0 %v2091
    %2197 = vmatprep.subr.mxu0 0.0
    %2198 = vmatpush1.msra.mxu0 %v2090
    %2199 = vmatprep.subr.mxu0 0.0
    %2200 = vmatpush1.msra.mxu0 %v2089
    %2201 = vmatprep.subr.mxu0 0.0
    %2202 = vmatpush1.msra.mxu0 %v2088
    %2203 = vmatprep.subr.mxu0 0.0
    %2204 = vmatpush2.msra.mxu0 0.0
    %2205 = vmatprep.subr.mxu0 0.0
    %2206 = vmatpush2.msra.mxu0 0.0
    %2207 = vmatprep.subr.mxu0 0.0
    %2208 = vmatpush2.msra.mxu0 0.0
    %2209 = vmatprep.subr.mxu0 0.0
    %2210 = vmatpush2.msra.mxu0 0.0
    %2211 = vmatprep.subr.mxu0 0.0
    %2212 = vmatpush2.msra.mxu0 0.0
    %2213 = vmatprep.subr.mxu0 0.0
    %2214 = vmatpush2.msra.mxu0 0.0
    %2215 = vmatprep.subr.mxu0 0.0
    %2216 = vmatpush2.msra.mxu0 0.0
    %2217 = vmatprep.subr.mxu0 0.0
    %2218 = vmatpush2.msra.mxu0 0.0
    %2219 = vmatprep.subr.mxu0 0.0
    %2220 = vmatpush2.msra.mxu0 0.0
    %2221 = vmatprep.subr.mxu0 0.0
    %2222 = vmatpush2.msra.mxu0 0.0
    %2223 = vmatprep.subr.mxu0 0.0
    %2224 = vmatpush2.msra.mxu0 0.0
    %2225 = vmatprep.subr.mxu0 0.0
    %2226 = vmatpush2.msra.mxu0 0.0
    %2227 = vmatprep.subr.mxu0 0.0
    %2228 = vmatpush2.msra.mxu0 0.0
    %2229 = vmatprep.subr.mxu0 0.0
    %2230 = vmatpush2.msra.mxu0 0.0
    %2231 = vmatprep.subr.mxu0 0.0
    %2232 = vmatpush2.msra.mxu0 0.0
    %2233 = vmatprep.subr.mxu0 0.0
    %2234 = vmatpush2.msra.mxu0 0.0
    %2235 = vmatprep.mubr.f32.mxu0 0.0
    %2236 = vmatmul.mubr.f32.gmra.mxu0 %v2169
    %v2237 = vpop.f32.mrf.mxu0
    %v2238 = vadd.f32 %v2163, %v2237
    %v2239 = vpop.f32.mrf.mxu0
    %2240 = vdwg.mxu0
    %v2241 = vld [vmem:[%s6] sm:$0x1]
    %v2243 = vlaneseq
    %v2244 = vshrl.u32 %v2243, 7
    %v2245 = vsub.s32 0, %v2244
    %v2246 = vrot.slane %v2241, %v2245
    %v2248 = vadd.f32 %v2238, %v2246
    %v2249 = vtanh.pop %v2248
    %v2250 = vld [vmem:[%s7] sm:$0xff]
    %v2251 = vld [vmem:[%s7 + $0x8] sm:$0xff]
    %v2252 = vld [vmem:[%s7 + $0x10] sm:$0xff]
    %v2253 = vld [vmem:[%s7 + $0x18] sm:$0xff]
    %v2254 = vld [vmem:[%s7 + $0x20] sm:$0xff]
    %v2255 = vld [vmem:[%s7 + $0x28] sm:$0xff]
    %v2256 = vld [vmem:[%s7 + $0x30] sm:$0xff]
    %v2257 = vld [vmem:[%s7 + $0x38] sm:$0xff]
    %v2258 = vld [vmem:[%s8] sm:$0x1]
    %v2260 = vlaneseq
    %v2261 = vshrl.u32 %v2260, 7
    %v2262 = vsub.s32 0, %v2261
    %v2263 = vrot.slane %v2258, %v2262
    %v2266 = vsel %vm736, %v2249, 0
    %2268 = vmatprep.subr.mxu0 0.0
    %2269 = vmatpush1.msra.mxu0 0.0
    %2270 = vmatprep.subr.mxu0 0.0
    %2271 = vmatpush1.msra.mxu0 0.0
    %2272 = vmatprep.subr.mxu0 0.0
    %2273 = vmatpush1.msra.mxu0 0.0
    %2274 = vmatprep.subr.mxu0 0.0
    %2275 = vmatpush1.msra.mxu0 0.0
    %2276 = vmatprep.subr.mxu0 0.0
    %2277 = vmatpush1.msra.mxu0 0.0
    %2278 = vmatprep.subr.mxu0 0.0
    %2279 = vmatpush1.msra.mxu0 0.0
    %2280 = vmatprep.subr.mxu0 0.0
    %2281 = vmatpush1.msra.mxu0 0.0
    %2282 = vmatprep.subr.mxu0 0.0
    %2283 = vmatpush1.msra.mxu0 0.0
    %2284 = vmatprep.subr.mxu0 0.0
    %2285 = vmatpush1.msra.mxu0 %v2257
    %2286 = vmatprep.subr.mxu0 0.0
    %2287 = vmatpush1.msra.mxu0 %v2256
    %2288 = vmatprep.subr.mxu0 0.0
    %2289 = vmatpush1.msra.mxu0 %v2255
    %2290 = vmatprep.subr.mxu0 0.0
    %2291 = vmatpush1.msra.mxu0 %v2254
    %2292 = vmatprep.subr.mxu0 0.0
    %2293 = vmatpush1.msra.mxu0 %v2253
    %2294 = vmatprep.subr.mxu0 0.0
    %2295 = vmatpush1.msra.mxu0 %v2252
    %2296 = vmatprep.subr.mxu0 0.0
    %2297 = vmatpush1.msra.mxu0 %v2251
    %2298 = vmatprep.subr.mxu0 0.0
    %2299 = vmatpush1.msra.mxu0 %v2250
    %2300 = vmatprep.subr.mxu0 0.0
    %2301 = vmatpush2.msra.mxu0 0.0
    %2302 = vmatprep.subr.mxu0 0.0
    %2303 = vmatpush2.msra.mxu0 0.0
    %2304 = vmatprep.subr.mxu0 0.0
    %2305 = vmatpush2.msra.mxu0 0.0
    %2306 = vmatprep.subr.mxu0 0.0
    %2307 = vmatpush2.msra.mxu0 0.0
    %2308 = vmatprep.subr.mxu0 0.0
    %2309 = vmatpush2.msra.mxu0 0.0
    %2310 = vmatprep.subr.mxu0 0.0
    %2311 = vmatpush2.msra.mxu0 0.0
    %2312 = vmatprep.subr.mxu0 0.0
    %2313 = vmatpush2.msra.mxu0 0.0
    %2314 = vmatprep.subr.mxu0 0.0
    %2315 = vmatpush2.msra.mxu0 0.0
    %2316 = vmatprep.subr.mxu0 0.0
    %2317 = vmatpush2.msra.mxu0 0.0
    %2318 = vmatprep.subr.mxu0 0.0
    %2319 = vmatpush2.msra.mxu0 0.0
    %2320 = vmatprep.subr.mxu0 0.0
    %2321 = vmatpush2.msra.mxu0 0.0
    %2322 = vmatprep.subr.mxu0 0.0
    %2323 = vmatpush2.msra.mxu0 0.0
    %2324 = vmatprep.subr.mxu0 0.0
    %2325 = vmatpush2.msra.mxu0 0.0
    %2326 = vmatprep.subr.mxu0 0.0
    %2327 = vmatpush2.msra.mxu0 0.0
    %2328 = vmatprep.subr.mxu0 0.0
    %2329 = vmatpush2.msra.mxu0 0.0
    %2330 = vmatprep.subr.mxu0 0.0
    %2331 = vmatpush2.msra.mxu0 0.0
    %2332 = vmatprep.mubr.f32.mxu0 0.0
    %2333 = vmatmul.mubr.f32.gmra.mxu0 %v2266
    %v2334 = vpop.f32.mrf.mxu0
    %v2335 = vadd.f32 %v2263, %v2334
    %v2336 = vpop.f32.mrf.mxu0
    %2337 = vdwg.mxu0
    %2339 = vrot.lane.b32.xlu0 %v2335, 48
    %v2340 = vpop.permute.xlu0 %2339
    %vm2342 = vcmask 483712
    %2343 = vst.msk [vmem:[#allocation2] sm:$0x1] %vm2342, %v2340
    %2344 = vrot.lane.b32.xlu0 %v2335, 60
    %v2345 = vpop.permute.xlu0 %2344
    %vm2347 = vcmask 583137
    %2348 = vst.msk [vmem:[#allocation2 - $0x1] sm:$0x2] %vm2347, %v2345
    %v2349 = vsel %vm818, %v2335, -inf
    %2350 = vmax.xlane.f32.xlu0 %v2349
    %v2351 = vpop.xlane.xlu0 %2350
    %vm2352 = vcmp.eq.f32.partialorder %v2335, %v2351
    %v2353 = vsel %vm2352, %v58, 12
    %v2354 = vsel %vm818, %v2353, 2147483647
    %v2355 = vand.u32 %v2354, 65535
    %v2356 = vshra.s32 %v2354, 16
    %v2357 = vcvt.s32.f32 %v2355
    %v2358 = vcvt.s32.f32 %v2356
    %2359 = vmin.xlane.f32.xlu0 %v2358
    %v2360 = vpop.xlane.xlu0 %2359
    %vm2361 = vcmp.eq.f32.partialorder %v2358, %v2360
    %v2362 = vsel %vm2361, %v2357, inf
    %2363 = vmin.xlane.f32.xlu0 %v2362
    %v2364 = vpop.xlane.xlu0 %2363
    %v2365 = vcvt.f32.s32 %v2364
    %v2366 = vcvt.f32.s32 %v2360
    %v2367 = vshll.u32 %v2366, 16
    %v2368 = vadd.s32 %v2367, %v2365
    %vm2369 = vcmp.eq.s32.totalorder %v58, %v2368
    %v2370 = vsel %vm2369, 1, 0
    %v2371 = vcvt.s32.f32 %v2370
    %v2372 = vld [vmem:[%s0] sm:$0xff]
    %v2373 = vld [vmem:[%s0 + $0x8] sm:$0xf]
    %v2375 = vsel %vm67, %v2371, 0
    %v2378 = vsel %vm71, %v2373, 0
    %2380 = vmatprep.subr.mxu0 0.0
    %2381 = vmatpush1.msra.mxu0 0.0
    %2382 = vmatprep.subr.mxu0 0.0
    %2383 = vmatpush1.msra.mxu0 0.0
    %2384 = vmatprep.subr.mxu0 0.0
    %2385 = vmatpush1.msra.mxu0 0.0
    %2386 = vmatprep.subr.mxu0 0.0
    %2387 = vmatpush1.msra.mxu0 0.0
    %2388 = vmatprep.subr.mxu0 0.0
    %2389 = vmatpush1.msra.mxu0 0.0
    %2390 = vmatprep.subr.mxu0 0.0
    %2391 = vmatpush1.msra.mxu0 0.0
    %2392 = vmatprep.subr.mxu0 0.0
    %2393 = vmatpush1.msra.mxu0 0.0
    %2394 = vmatprep.subr.mxu0 0.0
    %2395 = vmatpush1.msra.mxu0 0.0
    %2396 = vmatprep.subr.mxu0 0.0
    %2397 = vmatpush1.msra.mxu0 0.0
    %2398 = vmatprep.subr.mxu0 0.0
    %2399 = vmatpush1.msra.mxu0 0.0
    %2400 = vmatprep.subr.mxu0 0.0
    %2401 = vmatpush1.msra.mxu0 0.0
    %2402 = vmatprep.subr.mxu0 0.0
    %2403 = vmatpush1.msra.mxu0 0.0
    %2404 = vmatprep.subr.mxu0 0.0
    %2405 = vmatpush1.msra.mxu0 0.0
    %2406 = vmatprep.subr.mxu0 0.0
    %2407 = vmatpush1.msra.mxu0 0.0
    %2408 = vmatprep.subr.mxu0 0.0
    %2409 = vmatpush1.msra.mxu0 %v2378
    %2410 = vmatprep.subr.mxu0 0.0
    %2411 = vmatpush1.msra.mxu0 %v2372
    %2412 = vmatprep.subr.mxu0 0.0
    %2413 = vmatpush2.msra.mxu0 0.0
    %2414 = vmatprep.subr.mxu0 0.0
    %2415 = vmatpush2.msra.mxu0 0.0
    %2416 = vmatprep.subr.mxu0 0.0
    %2417 = vmatpush2.msra.mxu0 0.0
    %2418 = vmatprep.subr.mxu0 0.0
    %2419 = vmatpush2.msra.mxu0 0.0
    %2420 = vmatprep.subr.mxu0 0.0
    %2421 = vmatpush2.msra.mxu0 0.0
    %2422 = vmatprep.subr.mxu0 0.0
    %2423 = vmatpush2.msra.mxu0 0.0
    %2424 = vmatprep.subr.mxu0 0.0
    %2425 = vmatpush2.msra.mxu0 0.0
    %2426 = vmatprep.subr.mxu0 0.0
    %2427 = vmatpush2.msra.mxu0 0.0
    %2428 = vmatprep.subr.mxu0 0.0
    %2429 = vmatpush2.msra.mxu0 0.0
    %2430 = vmatprep.subr.mxu0 0.0
    %2431 = vmatpush2.msra.mxu0 0.0
    %2432 = vmatprep.subr.mxu0 0.0
    %2433 = vmatpush2.msra.mxu0 0.0
    %2434 = vmatprep.subr.mxu0 0.0
    %2435 = vmatpush2.msra.mxu0 0.0
    %2436 = vmatprep.subr.mxu0 0.0
    %2437 = vmatpush2.msra.mxu0 0.0
    %2438 = vmatprep.subr.mxu0 0.0
    %2439 = vmatpush2.msra.mxu0 0.0
    %2440 = vmatprep.subr.mxu0 0.0
    %2441 = vmatpush2.msra.mxu0 0.0
    %2442 = vmatprep.subr.mxu0 0.0
    %2443 = vmatpush2.msra.mxu0 0.0
    %2444 = vmatprep.mubr.f32.mxu0 0.0
    %2445 = vmatmul.mubr.f32.gmra.mxu0 %v2375
    %v2446 = vpop.f32.mrf.mxu0
    %v2447 = vadd.f32 0.0, %v2446
    %v2448 = vpop.f32.mrf.mxu0
    %2449 = vdwg.mxu0
    %v2450 = vld [vmem:[%s13] sm:$0xff]
    %v2451 = vld [vmem:[%s13 + $0x8] sm:$0xff]
    %v2452 = vld [vmem:[%s14] sm:$0x1]
    %v2454 = vlaneseq
    %v2455 = vshrl.u32 %v2454, 7
    %v2456 = vsub.s32 0, %v2455
    %v2457 = vrot.slane %v2452, %v2456
    %v2460 = vsel %vm154, %v2447, 0
    %2462 = vmatprep.subr.mxu0 0.0
    %2463 = vmatpush1.msra.mxu0 0.0
    %2464 = vmatprep.subr.mxu0 0.0
    %2465 = vmatpush1.msra.mxu0 0.0
    %2466 = vmatprep.subr.mxu0 0.0
    %2467 = vmatpush1.msra.mxu0 0.0
    %2468 = vmatprep.subr.mxu0 0.0
    %2469 = vmatpush1.msra.mxu0 0.0
    %2470 = vmatprep.subr.mxu0 0.0
    %2471 = vmatpush1.msra.mxu0 0.0
    %2472 = vmatprep.subr.mxu0 0.0
    %2473 = vmatpush1.msra.mxu0 0.0
    %2474 = vmatprep.subr.mxu0 0.0
    %2475 = vmatpush1.msra.mxu0 0.0
    %2476 = vmatprep.subr.mxu0 0.0
    %2477 = vmatpush1.msra.mxu0 0.0
    %2478 = vmatprep.subr.mxu0 0.0
    %2479 = vmatpush1.msra.mxu0 0.0
    %2480 = vmatprep.subr.mxu0 0.0
    %2481 = vmatpush1.msra.mxu0 0.0
    %2482 = vmatprep.subr.mxu0 0.0
    %2483 = vmatpush1.msra.mxu0 0.0
    %2484 = vmatprep.subr.mxu0 0.0
    %2485 = vmatpush1.msra.mxu0 0.0
    %2486 = vmatprep.subr.mxu0 0.0
    %2487 = vmatpush1.msra.mxu0 0.0
    %2488 = vmatprep.subr.mxu0 0.0
    %2489 = vmatpush1.msra.mxu0 0.0
    %2490 = vmatprep.subr.mxu0 0.0
    %2491 = vmatpush1.msra.mxu0 %v2451
    %2492 = vmatprep.subr.mxu0 0.0
    %2493 = vmatpush1.msra.mxu0 %v2450
    %2494 = vmatprep.subr.mxu0 0.0
    %2495 = vmatpush2.msra.mxu0 0.0
    %2496 = vmatprep.subr.mxu0 0.0
    %2497 = vmatpush2.msra.mxu0 0.0
    %2498 = vmatprep.subr.mxu0 0.0
    %2499 = vmatpush2.msra.mxu0 0.0
    %2500 = vmatprep.subr.mxu0 0.0
    %2501 = vmatpush2.msra.mxu0 0.0
    %2502 = vmatprep.subr.mxu0 0.0
    %2503 = vmatpush2.msra.mxu0 0.0
    %2504 = vmatprep.subr.mxu0 0.0
    %2505 = vmatpush2.msra.mxu0 0.0
    %2506 = vmatprep.subr.mxu0 0.0
    %2507 = vmatpush2.msra.mxu0 0.0
    %2508 = vmatprep.subr.mxu0 0.0
    %2509 = vmatpush2.msra.mxu0 0.0
    %2510 = vmatprep.subr.mxu0 0.0
    %2511 = vmatpush2.msra.mxu0 0.0
    %2512 = vmatprep.subr.mxu0 0.0
    %2513 = vmatpush2.msra.mxu0 0.0
    %2514 = vmatprep.subr.mxu0 0.0
    %2515 = vmatpush2.msra.mxu0 0.0
    %2516 = vmatprep.subr.mxu0 0.0
    %2517 = vmatpush2.msra.mxu0 0.0
    %2518 = vmatprep.subr.mxu0 0.0
    %2519 = vmatpush2.msra.mxu0 0.0
    %2520 = vmatprep.subr.mxu0 0.0
    %2521 = vmatpush2.msra.mxu0 0.0
    %2522 = vmatprep.subr.mxu0 0.0
    %2523 = vmatpush2.msra.mxu0 0.0
    %2524 = vmatprep.subr.mxu0 0.0
    %2525 = vmatpush2.msra.mxu0 0.0
    %2526 = vmatprep.mubr.f32.mxu0 0.0
    %2527 = vmatmul.mubr.f32.gmra.mxu0 %v2460
    %v2528 = vpop.f32.mrf.mxu0
    %v2529 = vadd.f32 %v2457, %v2528
    %v2530 = vpop.f32.mrf.mxu0
    %2531 = vdwg.mxu0
    %v2532 = vld [vmem:[%s15] sm:$0xff]
    %v2533 = vld [vmem:[%s15 + $0x8] sm:$0xff]
    %v2534 = vld [vmem:[%s15 + $0x10] sm:$0xff]
    %v2535 = vld [vmem:[%s15 + $0x18] sm:$0xff]
    %v2536 = vld [vmem:[%s16] sm:$0x1]
    %v2538 = vlaneseq
    %v2539 = vshrl.u32 %v2538, 7
    %v2540 = vsub.s32 0, %v2539
    %v2541 = vrot.slane %v2536, %v2540
    %2543 = vmatprep.subr.mxu0 0.0
    %2544 = vmatpush1.msra.mxu0 0.0
    %2545 = vmatprep.subr.mxu0 0.0
    %2546 = vmatpush1.msra.mxu0 0.0
    %2547 = vmatprep.subr.mxu0 0.0
    %2548 = vmatpush1.msra.mxu0 0.0
    %2549 = vmatprep.subr.mxu0 0.0
    %2550 = vmatpush1.msra.mxu0 0.0
    %2551 = vmatprep.subr.mxu0 0.0
    %2552 = vmatpush1.msra.mxu0 0.0
    %2553 = vmatprep.subr.mxu0 0.0
    %2554 = vmatpush1.msra.mxu0 0.0
    %2555 = vmatprep.subr.mxu0 0.0
    %2556 = vmatpush1.msra.mxu0 0.0
    %2557 = vmatprep.subr.mxu0 0.0
    %2558 = vmatpush1.msra.mxu0 0.0
    %2559 = vmatprep.subr.mxu0 0.0
    %2560 = vmatpush1.msra.mxu0 0.0
    %2561 = vmatprep.subr.mxu0 0.0
    %2562 = vmatpush1.msra.mxu0 0.0
    %2563 = vmatprep.subr.mxu0 0.0
    %2564 = vmatpush1.msra.mxu0 0.0
    %2565 = vmatprep.subr.mxu0 0.0
    %2566 = vmatpush1.msra.mxu0 0.0
    %2567 = vmatprep.subr.mxu0 0.0
    %2568 = vmatpush1.msra.mxu0 %v2535
    %2569 = vmatprep.subr.mxu0 0.0
    %2570 = vmatpush1.msra.mxu0 %v2534
    %2571 = vmatprep.subr.mxu0 0.0
    %2572 = vmatpush1.msra.mxu0 %v2533
    %2573 = vmatprep.subr.mxu0 0.0
    %2574 = vmatpush1.msra.mxu0 %v2532
    %2575 = vmatprep.subr.mxu0 0.0
    %2576 = vmatpush2.msra.mxu0 0.0
    %2577 = vmatprep.subr.mxu0 0.0
    %2578 = vmatpush2.msra.mxu0 0.0
    %2579 = vmatprep.subr.mxu0 0.0
    %2580 = vmatpush2.msra.mxu0 0.0
    %2581 = vmatprep.subr.mxu0 0.0
    %2582 = vmatpush2.msra.mxu0 0.0
    %2583 = vmatprep.subr.mxu0 0.0
    %2584 = vmatpush2.msra.mxu0 0.0
    %2585 = vmatprep.subr.mxu0 0.0
    %2586 = vmatpush2.msra.mxu0 0.0
    %2587 = vmatprep.subr.mxu0 0.0
    %2588 = vmatpush2.msra.mxu0 0.0
    %2589 = vmatprep.subr.mxu0 0.0
    %2590 = vmatpush2.msra.mxu0 0.0
    %2591 = vmatprep.subr.mxu0 0.0
    %2592 = vmatpush2.msra.mxu0 0.0
    %2593 = vmatprep.subr.mxu0 0.0
    %2594 = vmatpush2.msra.mxu0 0.0
    %2595 = vmatprep.subr.mxu0 0.0
    %2596 = vmatpush2.msra.mxu0 0.0
    %2597 = vmatprep.subr.mxu0 0.0
    %2598 = vmatpush2.msra.mxu0 0.0
    %2599 = vmatprep.subr.mxu0 0.0
    %2600 = vmatpush2.msra.mxu0 0.0
    %2601 = vmatprep.subr.mxu0 0.0
    %2602 = vmatpush2.msra.mxu0 0.0
    %2603 = vmatprep.subr.mxu0 0.0
    %2604 = vmatpush2.msra.mxu0 0.0
    %2605 = vmatprep.subr.mxu0 0.0
    %2606 = vmatpush2.msra.mxu0 0.0
    %2607 = vmatprep.mubr.f32.mxu0 0.0
    %2608 = vmatmul.mubr.f32.gmra.mxu0 %v1881
    %v2609 = vpop.f32.mrf.mxu0
    %v2610 = vadd.f32 %v2541, %v2609
    %v2611 = vpop.f32.mrf.mxu0
    %2612 = vdwg.mxu0
    %v2613 = vadd.f32 %v2529, %v2610
    %v2614 = vxor.u32 %v2613, 2147483648
    %v2615 = vmul.f32 %v2614, 1.442695
    %v2616 = vpow.pop %v2615
    %v2617 = vadd.f32 %v2616, 1.0
    %v2618 = vrcp.pop %v2617
    %v2619 = vmul.f32 1.0, %v2618
    %2621 = vrot.lane.b32.xlu0 %v2610, 64
    %v2622 = vpop.permute.xlu0 %2621
    %v2624 = vmul.f32 %v2619, %v2622
    %2626 = vrot.lane.b32.xlu0 %v2624, 64
    %v2627 = vpop.permute.xlu0 %2626
    %v2629 = vadd.f32 %v2529, %v2627
    %v2630 = vtanh.pop %v2629
    %v2631 = vsub.f32 1.0, %v2619
    %2633 = vrot.lane.b32.xlu0 %v2630, 96
    %v2634 = vpop.permute.xlu0 %2633
    %v2636 = vmul.f32 %v2631, %v2634
    %v2637 = vmul.f32 %v2619, %v1873
    %v2638 = vadd.f32 %v2636, %v2637
    %v2639 = vld [vmem:[%s3] sm:$0xff]
    %v2640 = vld [vmem:[%s3 + $0x8] sm:$0xff]
    %v2641 = vld [vmem:[%s3 + $0x10] sm:$0xff]
    %v2642 = vld [vmem:[%s3 + $0x18] sm:$0xff]
    %2644 = vrot.lane.b32.xlu0 %v2638, 96
    %v2645 = vpop.permute.xlu0 %2644
    %v2646 = vsel %vm239, %v2645, 0
    %2648 = vmatprep.subr.mxu0 0.0
    %2649 = vmatpush1.msra.mxu0 0.0
    %2650 = vmatprep.subr.mxu0 0.0
    %2651 = vmatpush1.msra.mxu0 0.0
    %2652 = vmatprep.subr.mxu0 0.0
    %2653 = vmatpush1.msra.mxu0 0.0
    %2654 = vmatprep.subr.mxu0 0.0
    %2655 = vmatpush1.msra.mxu0 0.0
    %2656 = vmatprep.subr.mxu0 0.0
    %2657 = vmatpush1.msra.mxu0 0.0
    %2658 = vmatprep.subr.mxu0 0.0
    %2659 = vmatpush1.msra.mxu0 0.0
    %2660 = vmatprep.subr.mxu0 0.0
    %2661 = vmatpush1.msra.mxu0 0.0
    %2662 = vmatprep.subr.mxu0 0.0
    %2663 = vmatpush1.msra.mxu0 0.0
    %2664 = vmatprep.subr.mxu0 0.0
    %2665 = vmatpush1.msra.mxu0 0.0
    %2666 = vmatprep.subr.mxu0 0.0
    %2667 = vmatpush1.msra.mxu0 0.0
    %2668 = vmatprep.subr.mxu0 0.0
    %2669 = vmatpush1.msra.mxu0 0.0
    %2670 = vmatprep.subr.mxu0 0.0
    %2671 = vmatpush1.msra.mxu0 0.0
    %2672 = vmatprep.subr.mxu0 0.0
    %2673 = vmatpush1.msra.mxu0 %v2642
    %2674 = vmatprep.subr.mxu0 0.0
    %2675 = vmatpush1.msra.mxu0 %v2641
    %2676 = vmatprep.subr.mxu0 0.0
    %2677 = vmatpush1.msra.mxu0 %v2640
    %2678 = vmatprep.subr.mxu0 0.0
    %2679 = vmatpush1.msra.mxu0 %v2639
    %2680 = vmatprep.subr.mxu0 0.0
    %2681 = vmatpush2.msra.mxu0 0.0
    %2682 = vmatprep.subr.mxu0 0.0
    %2683 = vmatpush2.msra.mxu0 0.0
    %2684 = vmatprep.subr.mxu0 0.0
    %2685 = vmatpush2.msra.mxu0 0.0
    %2686 = vmatprep.subr.mxu0 0.0
    %2687 = vmatpush2.msra.mxu0 0.0
    %2688 = vmatprep.subr.mxu0 0.0
    %2689 = vmatpush2.msra.mxu0 0.0
    %2690 = vmatprep.subr.mxu0 0.0
    %2691 = vmatpush2.msra.mxu0 0.0
    %2692 = vmatprep.subr.mxu0 0.0
    %2693 = vmatpush2.msra.mxu0 0.0
    %2694 = vmatprep.subr.mxu0 0.0
    %2695 = vmatpush2.msra.mxu0 0.0
    %2696 = vmatprep.subr.mxu0 0.0
    %2697 = vmatpush2.msra.mxu0 0.0
    %2698 = vmatprep.subr.mxu0 0.0
    %2699 = vmatpush2.msra.mxu0 0.0
    %2700 = vmatprep.subr.mxu0 0.0
    %2701 = vmatpush2.msra.mxu0 0.0
    %2702 = vmatprep.subr.mxu0 0.0
    %2703 = vmatpush2.msra.mxu0 0.0
    %2704 = vmatprep.subr.mxu0 0.0
    %2705 = vmatpush2.msra.mxu0 0.0
    %2706 = vmatprep.subr.mxu0 0.0
    %2707 = vmatpush2.msra.mxu0 0.0
    %2708 = vmatprep.subr.mxu0 0.0
    %2709 = vmatpush2.msra.mxu0 0.0
    %2710 = vmatprep.subr.mxu0 0.0
    %2711 = vmatpush2.msra.mxu0 0.0
    %2712 = vmatprep.mubr.f32.mxu0 0.0
    %2713 = vmatmul.mubr.f32.gmra.mxu0 %v2646
    %v2714 = vpop.f32.mrf.mxu0
    %v2715 = vadd.f32 0.0, %v2714
    %v2716 = vpop.f32.mrf.mxu0
    %2717 = vdwg.mxu0
    %v2720 = vunpack.c.l.s4 1966171168
    %v2721 = vunpack.c.0.s8 %v2720
    %v2722 = vlaneseq
    %v2723 = vshrl.u32 %v2722, 7
    %v2724 = vsub.s32 %v2721, %v2723
    %v2725 = vrot.slane %v2715, %v2724
    %v2726 = vcombine.high %v2725, %v2725
    %v2728 = vunpack.c.l.s4 1966171168
    %v2729 = vunpack.c.0.s8 %v2728
    %v2730 = vlaneseq
    %v2731 = vshrl.u32 %v2730, 7
    %v2732 = vsub.s32 %v2729, %v2731
    %v2733 = vrot.slane %v2725, %v2732
    %v2735 = vunpack.c.l.s4 1966171168
    %v2736 = vunpack.c.0.s8 %v2735
    %v2737 = vlaneseq
    %v2738 = vshrl.u32 %v2737, 7
    %v2739 = vsub.s32 %v2736, %v2738
    %v2740 = vrot.slane %v2726, %v2739
    %v2741 = vlaneseq
    %v2742 = vshrl.u32 %v2741, 7
    %v2743 = vsub.s32 0, %v2742
    %v2744 = vrot.slane %v2733, %v2743
    %v2745 = vlaneseq
    %v2746 = vshrl.u32 %v2745, 7
    %v2747 = vsub.s32 0, %v2746
    %v2748 = vrot.slane %v2740, %v2747
    %v2751 = vmul.f32 %v2744, %v59
    %v2752 = vmul.f32 %v2748, %v60
    %v2753 = vsel %vm456, %v2751, 0.0
    %2754 = vadd.xlane.f32.xlu0 %v2753
    %v2755 = vpop.xlane.xlu0 %2754
    %v2756 = vsel %vm456, %v2752, 0.0
    %2757 = vadd.xlane.f32.xlu0 %v2756
    %v2758 = vpop.xlane.xlu0 %2757
    %v2761 = vlaneseq
    %v2762 = vshrl.u32 %v2761, 7
    %v2763 = vsub.s32 %v58, %v2762
    %v2764 = vrot.slane %v2755, %v2763
    %v2765 = vlaneseq
    %v2766 = vshrl.u32 %v2765, 7
    %v2767 = vsub.s32 %v58, %v2766
    %v2768 = vrot.slane %v2758, %v2767
    %v2769 = vsel %vm473, %v2768, %v2764
    %v2771 = vsel %vm476, %v2769, -inf
    %2772 = vmax.xlane.f32.xlu0 %v2771
    %v2773 = vpop.xlane.xlu0 %2772
    %v2775 = vlaneseq
    %v2776 = vshrl.u32 %v2775, 7
    %v2777 = vsub.s32 0, %v2776
    %v2778 = vrot.slane %v2773, %v2777
    %v2779 = vlaneseq
    %v2780 = vshrl.u32 %v2779, 7
    %v2781 = vsub.s32 1, %v2780
    %v2782 = vrot.slane %v2773, %v2781
    %v2785 = vsub.f32 %v2755, %v2778
    %v2786 = vsub.f32 %v2758, %v2782
    %v2787 = vmul.f32 %v2785, 1.442695
    %v2788 = vpow.pop %v2787
    %v2789 = vmul.f32 %v2786, 1.442695
    %v2790 = vpow.pop %v2789
    %2793 = vset.pattern.permute.xlu0 0
    %2794 = vperm.xlu0 %2793, %v2788
    %v2795 = vpop.permute.xlu0 %2794
    %2796 = vset.pattern.permute.xlu0 0
    %2797 = vperm.xlu0 %2796, %v2790
    %v2798 = vpop.permute.xlu0 %2797
    %v2799 = vlaneseq
    %v2800 = vshrl.u32 %v2799, 7
    %v2801 = vsub.s32 %v58, %v2800
    %v2802 = vrot.slane %v2795, %v2801
    %v2803 = vlaneseq
    %v2804 = vshrl.u32 %v2803, 7
    %v2805 = vsub.s32 %v58, %v2804
    %v2806 = vrot.slane %v2798, %v2805
    %v2807 = vsel %vm473, %v2806, %v2802
    %v2809 = vsel %vm476, %v2807, 0.0
    %2810 = vadd.xlane.f32.xlu0 %v2809
    %v2811 = vpop.xlane.xlu0 %2810
    %v2813 = vlaneseq
    %v2814 = vshrl.u32 %v2813, 7
    %v2815 = vsub.s32 0, %v2814
    %v2816 = vrot.slane %v2811, %v2815
    %v2817 = vlaneseq
    %v2818 = vshrl.u32 %v2817, 7
    %v2819 = vsub.s32 1, %v2818
    %v2820 = vrot.slane %v2811, %v2819
    %v2823 = vrcp.pop %v2816
    %v2824 = vmul.f32 %v2788, %v2823
    %v2825 = vrcp.pop %v2820
    %v2826 = vmul.f32 %v2790, %v2825
    %2828 = vset.pattern.permute.xlu0 0
    %2829 = vperm.xlu0 %2828, %v2824
    %v2830 = vpop.permute.xlu0 %2829
    %2833 = vset.pattern.permute.xlu0 0
    %2834 = vperm.xlu0 %2833, %v2826
    %v2835 = vpop.permute.xlu0 %2834
    %v2837 = vmul.f32 %v2830, %v59
    %v2838 = vmul.f32 %v2835, %v60
    %v2839 = vsel %vm456, %v2837, 0.0
    %v2840 = vrot.slane %v2839, 4
    %v2841 = vadd.f32 %v2839, %v2840
    %v2842 = vrot.slane %v2841, 2
    %v2843 = vadd.f32 %v2841, %v2842
    %v2844 = vrot.slane %v2843, 1
    %v2845 = vadd.f32 %v2843, %v2844
    %v2846 = vsel %vm456, %v2838, 0.0
    %v2847 = vrot.slane %v2846, 4
    %v2848 = vadd.f32 %v2846, %v2847
    %v2849 = vrot.slane %v2848, 2
    %v2850 = vadd.f32 %v2848, %v2849
    %v2851 = vrot.slane %v2850, 1
    %v2852 = vadd.f32 %v2850, %v2851
    %v2853 = vld [vmem:[%s4] sm:$0xff]
    %v2854 = vld [vmem:[%s4 + $0x8] sm:$0xff]
    %v2855 = vld [vmem:[%s4 + $0x10] sm:$0xff]
    %v2856 = vld [vmem:[%s4 + $0x18] sm:$0xff]
    %v2857 = vld [vmem:[%s5] sm:$0xff]
    %v2858 = vld [vmem:[%s5 + $0x8] sm:$0xff]
    %v2859 = vld [vmem:[%s5 + $0x10] sm:$0xff]
    %v2860 = vld [vmem:[%s5 + $0x18] sm:$0xff]
    %2861 = vmatprep.subr.mxu0 0.0
    %2862 = vmatpush1.msra.mxu0 0.0
    %2863 = vmatprep.subr.mxu0 0.0
    %2864 = vmatpush1.msra.mxu0 0.0
    %2865 = vmatprep.subr.mxu0 0.0
    %2866 = vmatpush1.msra.mxu0 0.0
    %2867 = vmatprep.subr.mxu0 0.0
    %2868 = vmatpush1.msra.mxu0 0.0
    %2869 = vmatprep.subr.mxu0 0.0
    %2870 = vmatpush1.msra.mxu0 0.0
    %2871 = vmatprep.subr.mxu0 0.0
    %2872 = vmatpush1.msra.mxu0 0.0
    %2873 = vmatprep.subr.mxu0 0.0
    %2874 = vmatpush1.msra.mxu0 0.0
    %2875 = vmatprep.subr.mxu0 0.0
    %2876 = vmatpush1.msra.mxu0 0.0
    %2877 = vmatprep.subr.mxu0 0.0
    %2878 = vmatpush1.msra.mxu0 0.0
    %2879 = vmatprep.subr.mxu0 0.0
    %2880 = vmatpush1.msra.mxu0 0.0
    %2881 = vmatprep.subr.mxu0 0.0
    %2882 = vmatpush1.msra.mxu0 0.0
    %2883 = vmatprep.subr.mxu0 0.0
    %2884 = vmatpush1.msra.mxu0 0.0
    %2885 = vmatprep.subr.mxu0 0.0
    %2886 = vmatpush1.msra.mxu0 %v2860
    %2887 = vmatprep.subr.mxu0 0.0
    %2888 = vmatpush1.msra.mxu0 %v2859
    %2889 = vmatprep.subr.mxu0 0.0
    %2890 = vmatpush1.msra.mxu0 %v2858
    %2891 = vmatprep.subr.mxu0 0.0
    %2892 = vmatpush1.msra.mxu0 %v2857
    %2893 = vmatprep.subr.mxu0 0.0
    %2894 = vmatpush2.msra.mxu0 0.0
    %2895 = vmatprep.subr.mxu0 0.0
    %2896 = vmatpush2.msra.mxu0 0.0
    %2897 = vmatprep.subr.mxu0 0.0
    %2898 = vmatpush2.msra.mxu0 0.0
    %2899 = vmatprep.subr.mxu0 0.0
    %2900 = vmatpush2.msra.mxu0 0.0
    %2901 = vmatprep.subr.mxu0 0.0
    %2902 = vmatpush2.msra.mxu0 0.0
    %2903 = vmatprep.subr.mxu0 0.0
    %2904 = vmatpush2.msra.mxu0 0.0
    %2905 = vmatprep.subr.mxu0 0.0
    %2906 = vmatpush2.msra.mxu0 0.0
    %2907 = vmatprep.subr.mxu0 0.0
    %2908 = vmatpush2.msra.mxu0 0.0
    %2909 = vmatprep.subr.mxu0 0.0
    %2910 = vmatpush2.msra.mxu0 0.0
    %2911 = vmatprep.subr.mxu0 0.0
    %2912 = vmatpush2.msra.mxu0 0.0
    %2913 = vmatprep.subr.mxu0 0.0
    %2914 = vmatpush2.msra.mxu0 0.0
    %2915 = vmatprep.subr.mxu0 0.0
    %2916 = vmatpush2.msra.mxu0 0.0
    %2917 = vmatprep.subr.mxu0 0.0
    %2918 = vmatpush2.msra.mxu0 0.0
    %2919 = vmatprep.subr.mxu0 0.0
    %2920 = vmatpush2.msra.mxu0 0.0
    %2921 = vmatprep.subr.mxu0 0.0
    %2922 = vmatpush2.msra.mxu0 0.0
    %2923 = vmatprep.subr.mxu0 0.0
    %2924 = vmatpush2.msra.mxu0 0.0
    %2925 = vmatprep.mubr.f32.mxu0 0.0
    %2926 = vmatmul.mubr.f32.gmra.mxu0 %v2646
    %v2927 = vpop.f32.mrf.mxu0
    %v2928 = vadd.f32 0.0, %v2927
    %v2929 = vpop.f32.mrf.mxu0
    %2930 = vdwg.mxu0
    %v2933 = vsel %vm473, %v2852, %v2845
    %v2934 = vsel %vm239, %v2933, 0
    %2936 = vmatprep.subr.mxu0 0.0
    %2937 = vmatpush1.msra.mxu0 0.0
    %2938 = vmatprep.subr.mxu0 0.0
    %2939 = vmatpush1.msra.mxu0 0.0
    %2940 = vmatprep.subr.mxu0 0.0
    %2941 = vmatpush1.msra.mxu0 0.0
    %2942 = vmatprep.subr.mxu0 0.0
    %2943 = vmatpush1.msra.mxu0 0.0
    %2944 = vmatprep.subr.mxu0 0.0
    %2945 = vmatpush1.msra.mxu0 0.0
    %2946 = vmatprep.subr.mxu0 0.0
    %2947 = vmatpush1.msra.mxu0 0.0
    %2948 = vmatprep.subr.mxu0 0.0
    %2949 = vmatpush1.msra.mxu0 0.0
    %2950 = vmatprep.subr.mxu0 0.0
    %2951 = vmatpush1.msra.mxu0 0.0
    %2952 = vmatprep.subr.mxu0 0.0
    %2953 = vmatpush1.msra.mxu0 0.0
    %2954 = vmatprep.subr.mxu0 0.0
    %2955 = vmatpush1.msra.mxu0 0.0
    %2956 = vmatprep.subr.mxu0 0.0
    %2957 = vmatpush1.msra.mxu0 0.0
    %2958 = vmatprep.subr.mxu0 0.0
    %2959 = vmatpush1.msra.mxu0 0.0
    %2960 = vmatprep.subr.mxu0 0.0
    %2961 = vmatpush1.msra.mxu0 %v2856
    %2962 = vmatprep.subr.mxu0 0.0
    %2963 = vmatpush1.msra.mxu0 %v2855
    %2964 = vmatprep.subr.mxu0 0.0
    %2965 = vmatpush1.msra.mxu0 %v2854
    %2966 = vmatprep.subr.mxu0 0.0
    %2967 = vmatpush1.msra.mxu0 %v2853
    %2968 = vmatprep.subr.mxu0 0.0
    %2969 = vmatpush2.msra.mxu0 0.0
    %2970 = vmatprep.subr.mxu0 0.0
    %2971 = vmatpush2.msra.mxu0 0.0
    %2972 = vmatprep.subr.mxu0 0.0
    %2973 = vmatpush2.msra.mxu0 0.0
    %2974 = vmatprep.subr.mxu0 0.0
    %2975 = vmatpush2.msra.mxu0 0.0
    %2976 = vmatprep.subr.mxu0 0.0
    %2977 = vmatpush2.msra.mxu0 0.0
    %2978 = vmatprep.subr.mxu0 0.0
    %2979 = vmatpush2.msra.mxu0 0.0
    %2980 = vmatprep.subr.mxu0 0.0
    %2981 = vmatpush2.msra.mxu0 0.0
    %2982 = vmatprep.subr.mxu0 0.0
    %2983 = vmatpush2.msra.mxu0 0.0
    %2984 = vmatprep.subr.mxu0 0.0
    %2985 = vmatpush2.msra.mxu0 0.0
    %2986 = vmatprep.subr.mxu0 0.0
    %2987 = vmatpush2.msra.mxu0 0.0
    %2988 = vmatprep.subr.mxu0 0.0
    %2989 = vmatpush2.msra.mxu0 0.0
    %2990 = vmatprep.subr.mxu0 0.0
    %2991 = vmatpush2.msra.mxu0 0.0
    %2992 = vmatprep.subr.mxu0 0.0
    %2993 = vmatpush2.msra.mxu0 0.0
    %2994 = vmatprep.subr.mxu0 0.0
    %2995 = vmatpush2.msra.mxu0 0.0
    %2996 = vmatprep.subr.mxu0 0.0
    %2997 = vmatpush2.msra.mxu0 0.0
    %2998 = vmatprep.subr.mxu0 0.0
    %2999 = vmatpush2.msra.mxu0 0.0
    %3000 = vmatprep.mubr.f32.mxu0 0.0
    %3001 = vmatmul.mubr.f32.gmra.mxu0 %v2934
    %v3002 = vpop.f32.mrf.mxu0
    %v3003 = vadd.f32 %v2928, %v3002
    %v3004 = vpop.f32.mrf.mxu0
    %3005 = vdwg.mxu0
    %v3006 = vld [vmem:[%s6] sm:$0x1]
    %v3008 = vlaneseq
    %v3009 = vshrl.u32 %v3008, 7
    %v3010 = vsub.s32 0, %v3009
    %v3011 = vrot.slane %v3006, %v3010
    %v3013 = vadd.f32 %v3003, %v3011
    %v3014 = vtanh.pop %v3013
    %v3015 = vld [vmem:[%s7] sm:$0xff]
    %v3016 = vld [vmem:[%s7 + $0x8] sm:$0xff]
    %v3017 = vld [vmem:[%s7 + $0x10] sm:$0xff]
    %v3018 = vld [vmem:[%s7 + $0x18] sm:$0xff]
    %v3019 = vld [vmem:[%s7 + $0x20] sm:$0xff]
    %v3020 = vld [vmem:[%s7 + $0x28] sm:$0xff]
    %v3021 = vld [vmem:[%s7 + $0x30] sm:$0xff]
    %v3022 = vld [vmem:[%s7 + $0x38] sm:$0xff]
    %v3023 = vld [vmem:[%s8] sm:$0x1]
    %v3025 = vlaneseq
    %v3026 = vshrl.u32 %v3025, 7
    %v3027 = vsub.s32 0, %v3026
    %v3028 = vrot.slane %v3023, %v3027
    %v3031 = vsel %vm736, %v3014, 0
    %3033 = vmatprep.subr.mxu0 0.0
    %3034 = vmatpush1.msra.mxu0 0.0
    %3035 = vmatprep.subr.mxu0 0.0
    %3036 = vmatpush1.msra.mxu0 0.0
    %3037 = vmatprep.subr.mxu0 0.0
    %3038 = vmatpush1.msra.mxu0 0.0
    %3039 = vmatprep.subr.mxu0 0.0
    %3040 = vmatpush1.msra.mxu0 0.0
    %3041 = vmatprep.subr.mxu0 0.0
    %3042 = vmatpush1.msra.mxu0 0.0
    %3043 = vmatprep.subr.mxu0 0.0
    %3044 = vmatpush1.msra.mxu0 0.0
    %3045 = vmatprep.subr.mxu0 0.0
    %3046 = vmatpush1.msra.mxu0 0.0
    %3047 = vmatprep.subr.mxu0 0.0
    %3048 = vmatpush1.msra.mxu0 0.0
    %3049 = vmatprep.subr.mxu0 0.0
    %3050 = vmatpush1.msra.mxu0 %v3022
    %3051 = vmatprep.subr.mxu0 0.0
    %3052 = vmatpush1.msra.mxu0 %v3021
    %3053 = vmatprep.subr.mxu0 0.0
    %3054 = vmatpush1.msra.mxu0 %v3020
    %3055 = vmatprep.subr.mxu0 0.0
    %3056 = vmatpush1.msra.mxu0 %v3019
    %3057 = vmatprep.subr.mxu0 0.0
    %3058 = vmatpush1.msra.mxu0 %v3018
    %3059 = vmatprep.subr.mxu0 0.0
    %3060 = vmatpush1.msra.mxu0 %v3017
    %3061 = vmatprep.subr.mxu0 0.0
    %3062 = vmatpush1.msra.mxu0 %v3016
    %3063 = vmatprep.subr.mxu0 0.0
    %3064 = vmatpush1.msra.mxu0 %v3015
    %3065 = vmatprep.subr.mxu0 0.0
    %3066 = vmatpush2.msra.mxu0 0.0
    %3067 = vmatprep.subr.mxu0 0.0
    %3068 = vmatpush2.msra.mxu0 0.0
    %3069 = vmatprep.subr.mxu0 0.0
    %3070 = vmatpush2.msra.mxu0 0.0
    %3071 = vmatprep.subr.mxu0 0.0
    %3072 = vmatpush2.msra.mxu0 0.0
    %3073 = vmatprep.subr.mxu0 0.0
    %3074 = vmatpush2.msra.mxu0 0.0
    %3075 = vmatprep.subr.mxu0 0.0
    %3076 = vmatpush2.msra.mxu0 0.0
    %3077 = vmatprep.subr.mxu0 0.0
    %3078 = vmatpush2.msra.mxu0 0.0
    %3079 = vmatprep.subr.mxu0 0.0
    %3080 = vmatpush2.msra.mxu0 0.0
    %3081 = vmatprep.subr.mxu0 0.0
    %3082 = vmatpush2.msra.mxu0 0.0
    %3083 = vmatprep.subr.mxu0 0.0
    %3084 = vmatpush2.msra.mxu0 0.0
    %3085 = vmatprep.subr.mxu0 0.0
    %3086 = vmatpush2.msra.mxu0 0.0
    %3087 = vmatprep.subr.mxu0 0.0
    %3088 = vmatpush2.msra.mxu0 0.0
    %3089 = vmatprep.subr.mxu0 0.0
    %3090 = vmatpush2.msra.mxu0 0.0
    %3091 = vmatprep.subr.mxu0 0.0
    %3092 = vmatpush2.msra.mxu0 0.0
    %3093 = vmatprep.subr.mxu0 0.0
    %3094 = vmatpush2.msra.mxu0 0.0
    %3095 = vmatprep.subr.mxu0 0.0
    %3096 = vmatpush2.msra.mxu0 0.0
    %3097 = vmatprep.mubr.f32.mxu0 0.0
    %3098 = vmatmul.mubr.f32.gmra.mxu0 %v3031
    %v3099 = vpop.f32.mrf.mxu0
    %v3100 = vadd.f32 %v3028, %v3099
    %v3101 = vpop.f32.mrf.mxu0
    %3102 = vdwg.mxu0
    %3104 = vrot.lane.b32.xlu0 %v3100, 72
    %v3105 = vpop.permute.xlu0 %3104
    %vm3107 = vcmask 680512
    %3108 = vst.msk [vmem:[#allocation2] sm:$0x1] %vm3107, %v3105
    %3109 = vrot.lane.b32.xlu0 %v3100, 84
    %v3110 = vpop.permute.xlu0 %3109
    %vm3112 = vcmask 779937
    %3113 = vst.msk [vmem:[#allocation2 - $0x1] sm:$0x2] %vm3112, %v3110
    %v3114 = vsel %vm818, %v3100, -inf
    %3115 = vmax.xlane.f32.xlu0 %v3114
    %v3116 = vpop.xlane.xlu0 %3115
    %vm3117 = vcmp.eq.f32.partialorder %v3100, %v3116
    %v3118 = vsel %vm3117, %v58, 12
    %v3119 = vsel %vm818, %v3118, 2147483647
    %v3120 = vand.u32 %v3119, 65535
    %v3121 = vshra.s32 %v3119, 16
    %v3122 = vcvt.s32.f32 %v3120
    %v3123 = vcvt.s32.f32 %v3121
    %3124 = vmin.xlane.f32.xlu0 %v3123
    %v3125 = vpop.xlane.xlu0 %3124
    %vm3126 = vcmp.eq.f32.partialorder %v3123, %v3125
    %v3127 = vsel %vm3126, %v3122, inf
    %3128 = vmin.xlane.f32.xlu0 %v3127
    %v3129 = vpop.xlane.xlu0 %3128
    %v3130 = vcvt.f32.s32 %v3129
    %v3131 = vcvt.f32.s32 %v3125
    %v3132 = vshll.u32 %v3131, 16
    %v3133 = vadd.s32 %v3132, %v3130
    %vm3134 = vcmp.eq.s32.totalorder %v58, %v3133
    %v3135 = vsel %vm3134, 1, 0
    %v3136 = vcvt.s32.f32 %v3135
    %v3137 = vld [vmem:[%s0] sm:$0xff]
    %v3138 = vld [vmem:[%s0 + $0x8] sm:$0xf]
    %v3140 = vsel %vm67, %v3136, 0
    %v3143 = vsel %vm71, %v3138, 0
    %3145 = vmatprep.subr.mxu0 0.0
    %3146 = vmatpush1.msra.mxu0 0.0
    %3147 = vmatprep.subr.mxu0 0.0
    %3148 = vmatpush1.msra.mxu0 0.0
    %3149 = vmatprep.subr.mxu0 0.0
    %3150 = vmatpush1.msra.mxu0 0.0
    %3151 = vmatprep.subr.mxu0 0.0
    %3152 = vmatpush1.msra.mxu0 0.0
    %3153 = vmatprep.subr.mxu0 0.0
    %3154 = vmatpush1.msra.mxu0 0.0
    %3155 = vmatprep.subr.mxu0 0.0
    %3156 = vmatpush1.msra.mxu0 0.0
    %3157 = vmatprep.subr.mxu0 0.0
    %3158 = vmatpush1.msra.mxu0 0.0
    %3159 = vmatprep.subr.mxu0 0.0
    %3160 = vmatpush1.msra.mxu0 0.0
    %3161 = vmatprep.subr.mxu0 0.0
    %3162 = vmatpush1.msra.mxu0 0.0
    %3163 = vmatprep.subr.mxu0 0.0
    %3164 = vmatpush1.msra.mxu0 0.0
    %3165 = vmatprep.subr.mxu0 0.0
    %3166 = vmatpush1.msra.mxu0 0.0
    %3167 = vmatprep.subr.mxu0 0.0
    %3168 = vmatpush1.msra.mxu0 0.0
    %3169 = vmatprep.subr.mxu0 0.0
    %3170 = vmatpush1.msra.mxu0 0.0
    %3171 = vmatprep.subr.mxu0 0.0
    %3172 = vmatpush1.msra.mxu0 0.0
    %3173 = vmatprep.subr.mxu0 0.0
    %3174 = vmatpush1.msra.mxu0 %v3143
    %3175 = vmatprep.subr.mxu0 0.0
    %3176 = vmatpush1.msra.mxu0 %v3137
    %3177 = vmatprep.subr.mxu0 0.0
    %3178 = vmatpush2.msra.mxu0 0.0
    %3179 = vmatprep.subr.mxu0 0.0
    %3180 = vmatpush2.msra.mxu0 0.0
    %3181 = vmatprep.subr.mxu0 0.0
    %3182 = vmatpush2.msra.mxu0 0.0
    %3183 = vmatprep.subr.mxu0 0.0
    %3184 = vmatpush2.msra.mxu0 0.0
    %3185 = vmatprep.subr.mxu0 0.0
    %3186 = vmatpush2.msra.mxu0 0.0
    %3187 = vmatprep.subr.mxu0 0.0
    %3188 = vmatpush2.msra.mxu0 0.0
    %3189 = vmatprep.subr.mxu0 0.0
    %3190 = vmatpush2.msra.mxu0 0.0
    %3191 = vmatprep.subr.mxu0 0.0
    %3192 = vmatpush2.msra.mxu0 0.0
    %3193 = vmatprep.subr.mxu0 0.0
    %3194 = vmatpush2.msra.mxu0 0.0
    %3195 = vmatprep.subr.mxu0 0.0
    %3196 = vmatpush2.msra.mxu0 0.0
    %3197 = vmatprep.subr.mxu0 0.0
    %3198 = vmatpush2.msra.mxu0 0.0
    %3199 = vmatprep.subr.mxu0 0.0
    %3200 = vmatpush2.msra.mxu0 0.0
    %3201 = vmatprep.subr.mxu0 0.0
    %3202 = vmatpush2.msra.mxu0 0.0
    %3203 = vmatprep.subr.mxu0 0.0
    %3204 = vmatpush2.msra.mxu0 0.0
    %3205 = vmatprep.subr.mxu0 0.0
    %3206 = vmatpush2.msra.mxu0 0.0
    %3207 = vmatprep.subr.mxu0 0.0
    %3208 = vmatpush2.msra.mxu0 0.0
    %3209 = vmatprep.mubr.f32.mxu0 0.0
    %3210 = vmatmul.mubr.f32.gmra.mxu0 %v3140
    %v3211 = vpop.f32.mrf.mxu0
    %v3212 = vadd.f32 0.0, %v3211
    %v3213 = vpop.f32.mrf.mxu0
    %3214 = vdwg.mxu0
    %v3215 = vld [vmem:[%s13] sm:$0xff]
    %v3216 = vld [vmem:[%s13 + $0x8] sm:$0xff]
    %v3217 = vld [vmem:[%s14] sm:$0x1]
    %v3219 = vlaneseq
    %v3220 = vshrl.u32 %v3219, 7
    %v3221 = vsub.s32 0, %v3220
    %v3222 = vrot.slane %v3217, %v3221
    %v3225 = vsel %vm154, %v3212, 0
    %3227 = vmatprep.subr.mxu0 0.0
    %3228 = vmatpush1.msra.mxu0 0.0
    %3229 = vmatprep.subr.mxu0 0.0
    %3230 = vmatpush1.msra.mxu0 0.0
    %3231 = vmatprep.subr.mxu0 0.0
    %3232 = vmatpush1.msra.mxu0 0.0
    %3233 = vmatprep.subr.mxu0 0.0
    %3234 = vmatpush1.msra.mxu0 0.0
    %3235 = vmatprep.subr.mxu0 0.0
    %3236 = vmatpush1.msra.mxu0 0.0
    %3237 = vmatprep.subr.mxu0 0.0
    %3238 = vmatpush1.msra.mxu0 0.0
    %3239 = vmatprep.subr.mxu0 0.0
    %3240 = vmatpush1.msra.mxu0 0.0
    %3241 = vmatprep.subr.mxu0 0.0
    %3242 = vmatpush1.msra.mxu0 0.0
    %3243 = vmatprep.subr.mxu0 0.0
    %3244 = vmatpush1.msra.mxu0 0.0
    %3245 = vmatprep.subr.mxu0 0.0
    %3246 = vmatpush1.msra.mxu0 0.0
    %3247 = vmatprep.subr.mxu0 0.0
    %3248 = vmatpush1.msra.mxu0 0.0
    %3249 = vmatprep.subr.mxu0 0.0
    %3250 = vmatpush1.msra.mxu0 0.0
    %3251 = vmatprep.subr.mxu0 0.0
    %3252 = vmatpush1.msra.mxu0 0.0
    %3253 = vmatprep.subr.mxu0 0.0
    %3254 = vmatpush1.msra.mxu0 0.0
    %3255 = vmatprep.subr.mxu0 0.0
    %3256 = vmatpush1.msra.mxu0 %v3216
    %3257 = vmatprep.subr.mxu0 0.0
    %3258 = vmatpush1.msra.mxu0 %v3215
    %3259 = vmatprep.subr.mxu0 0.0
    %3260 = vmatpush2.msra.mxu0 0.0
    %3261 = vmatprep.subr.mxu0 0.0
    %3262 = vmatpush2.msra.mxu0 0.0
    %3263 = vmatprep.subr.mxu0 0.0
    %3264 = vmatpush2.msra.mxu0 0.0
    %3265 = vmatprep.subr.mxu0 0.0
    %3266 = vmatpush2.msra.mxu0 0.0
    %3267 = vmatprep.subr.mxu0 0.0
    %3268 = vmatpush2.msra.mxu0 0.0
    %3269 = vmatprep.subr.mxu0 0.0
    %3270 = vmatpush2.msra.mxu0 0.0
    %3271 = vmatprep.subr.mxu0 0.0
    %3272 = vmatpush2.msra.mxu0 0.0
    %3273 = vmatprep.subr.mxu0 0.0
    %3274 = vmatpush2.msra.mxu0 0.0
    %3275 = vmatprep.subr.mxu0 0.0
    %3276 = vmatpush2.msra.mxu0 0.0
    %3277 = vmatprep.subr.mxu0 0.0
    %3278 = vmatpush2.msra.mxu0 0.0
    %3279 = vmatprep.subr.mxu0 0.0
    %3280 = vmatpush2.msra.mxu0 0.0
    %3281 = vmatprep.subr.mxu0 0.0
    %3282 = vmatpush2.msra.mxu0 0.0
    %3283 = vmatprep.subr.mxu0 0.0
    %3284 = vmatpush2.msra.mxu0 0.0
    %3285 = vmatprep.subr.mxu0 0.0
    %3286 = vmatpush2.msra.mxu0 0.0
    %3287 = vmatprep.subr.mxu0 0.0
    %3288 = vmatpush2.msra.mxu0 0.0
    %3289 = vmatprep.subr.mxu0 0.0
    %3290 = vmatpush2.msra.mxu0 0.0
    %3291 = vmatprep.mubr.f32.mxu0 0.0
    %3292 = vmatmul.mubr.f32.gmra.mxu0 %v3225
    %v3293 = vpop.f32.mrf.mxu0
    %v3294 = vadd.f32 %v3222, %v3293
    %v3295 = vpop.f32.mrf.mxu0
    %3296 = vdwg.mxu0
    %v3297 = vld [vmem:[%s15] sm:$0xff]
    %v3298 = vld [vmem:[%s15 + $0x8] sm:$0xff]
    %v3299 = vld [vmem:[%s15 + $0x10] sm:$0xff]
    %v3300 = vld [vmem:[%s15 + $0x18] sm:$0xff]
    %v3301 = vld [vmem:[%s16] sm:$0x1]
    %v3303 = vlaneseq
    %v3304 = vshrl.u32 %v3303, 7
    %v3305 = vsub.s32 0, %v3304
    %v3306 = vrot.slane %v3301, %v3305
    %3308 = vmatprep.subr.mxu0 0.0
    %3309 = vmatpush1.msra.mxu0 0.0
    %3310 = vmatprep.subr.mxu0 0.0
    %3311 = vmatpush1.msra.mxu0 0.0
    %3312 = vmatprep.subr.mxu0 0.0
    %3313 = vmatpush1.msra.mxu0 0.0
    %3314 = vmatprep.subr.mxu0 0.0
    %3315 = vmatpush1.msra.mxu0 0.0
    %3316 = vmatprep.subr.mxu0 0.0
    %3317 = vmatpush1.msra.mxu0 0.0
    %3318 = vmatprep.subr.mxu0 0.0
    %3319 = vmatpush1.msra.mxu0 0.0
    %3320 = vmatprep.subr.mxu0 0.0
    %3321 = vmatpush1.msra.mxu0 0.0
    %3322 = vmatprep.subr.mxu0 0.0
    %3323 = vmatpush1.msra.mxu0 0.0
    %3324 = vmatprep.subr.mxu0 0.0
    %3325 = vmatpush1.msra.mxu0 0.0
    %3326 = vmatprep.subr.mxu0 0.0
    %3327 = vmatpush1.msra.mxu0 0.0
    %3328 = vmatprep.subr.mxu0 0.0
    %3329 = vmatpush1.msra.mxu0 0.0
    %3330 = vmatprep.subr.mxu0 0.0
    %3331 = vmatpush1.msra.mxu0 0.0
    %3332 = vmatprep.subr.mxu0 0.0
    %3333 = vmatpush1.msra.mxu0 %v3300
    %3334 = vmatprep.subr.mxu0 0.0
    %3335 = vmatpush1.msra.mxu0 %v3299
    %3336 = vmatprep.subr.mxu0 0.0
    %3337 = vmatpush1.msra.mxu0 %v3298
    %3338 = vmatprep.subr.mxu0 0.0
    %3339 = vmatpush1.msra.mxu0 %v3297
    %3340 = vmatprep.subr.mxu0 0.0
    %3341 = vmatpush2.msra.mxu0 0.0
    %3342 = vmatprep.subr.mxu0 0.0
    %3343 = vmatpush2.msra.mxu0 0.0
    %3344 = vmatprep.subr.mxu0 0.0
    %3345 = vmatpush2.msra.mxu0 0.0
    %3346 = vmatprep.subr.mxu0 0.0
    %3347 = vmatpush2.msra.mxu0 0.0
    %3348 = vmatprep.subr.mxu0 0.0
    %3349 = vmatpush2.msra.mxu0 0.0
    %3350 = vmatprep.subr.mxu0 0.0
    %3351 = vmatpush2.msra.mxu0 0.0
    %3352 = vmatprep.subr.mxu0 0.0
    %3353 = vmatpush2.msra.mxu0 0.0
    %3354 = vmatprep.subr.mxu0 0.0
    %3355 = vmatpush2.msra.mxu0 0.0
    %3356 = vmatprep.subr.mxu0 0.0
    %3357 = vmatpush2.msra.mxu0 0.0
    %3358 = vmatprep.subr.mxu0 0.0
    %3359 = vmatpush2.msra.mxu0 0.0
    %3360 = vmatprep.subr.mxu0 0.0
    %3361 = vmatpush2.msra.mxu0 0.0
    %3362 = vmatprep.subr.mxu0 0.0
    %3363 = vmatpush2.msra.mxu0 0.0
    %3364 = vmatprep.subr.mxu0 0.0
    %3365 = vmatpush2.msra.mxu0 0.0
    %3366 = vmatprep.subr.mxu0 0.0
    %3367 = vmatpush2.msra.mxu0 0.0
    %3368 = vmatprep.subr.mxu0 0.0
    %3369 = vmatpush2.msra.mxu0 0.0
    %3370 = vmatprep.subr.mxu0 0.0
    %3371 = vmatpush2.msra.mxu0 0.0
    %3372 = vmatprep.mubr.f32.mxu0 0.0
    %3373 = vmatmul.mubr.f32.gmra.mxu0 %v2646
    %v3374 = vpop.f32.mrf.mxu0
    %v3375 = vadd.f32 %v3306, %v3374
    %v3376 = vpop.f32.mrf.mxu0
    %3377 = vdwg.mxu0
    %v3378 = vadd.f32 %v3294, %v3375
    %v3379 = vxor.u32 %v3378, 2147483648
    %v3380 = vmul.f32 %v3379, 1.442695
    %v3381 = vpow.pop %v3380
    %v3382 = vadd.f32 %v3381, 1.0
    %v3383 = vrcp.pop %v3382
    %v3384 = vmul.f32 1.0, %v3383
    %3386 = vrot.lane.b32.xlu0 %v3375, 64
    %v3387 = vpop.permute.xlu0 %3386
    %v3389 = vmul.f32 %v3384, %v3387
    %3391 = vrot.lane.b32.xlu0 %v3389, 64
    %v3392 = vpop.permute.xlu0 %3391
    %v3394 = vadd.f32 %v3294, %v3392
    %v3395 = vtanh.pop %v3394
    %v3396 = vsub.f32 1.0, %v3384
    %3398 = vrot.lane.b32.xlu0 %v3395, 96
    %v3399 = vpop.permute.xlu0 %3398
    %v3401 = vmul.f32 %v3396, %v3399
    %v3402 = vmul.f32 %v3384, %v2638
    %v3403 = vadd.f32 %v3401, %v3402
    %v3404 = vld [vmem:[%s3] sm:$0xff]
    %v3405 = vld [vmem:[%s3 + $0x8] sm:$0xff]
    %v3406 = vld [vmem:[%s3 + $0x10] sm:$0xff]
    %v3407 = vld [vmem:[%s3 + $0x18] sm:$0xff]
    %3409 = vrot.lane.b32.xlu0 %v3403, 96
    %v3410 = vpop.permute.xlu0 %3409
    %v3411 = vsel %vm239, %v3410, 0
    %3413 = vmatprep.subr.mxu0 0.0
    %3414 = vmatpush1.msra.mxu0 0.0
    %3415 = vmatprep.subr.mxu0 0.0
    %3416 = vmatpush1.msra.mxu0 0.0
    %3417 = vmatprep.subr.mxu0 0.0
    %3418 = vmatpush1.msra.mxu0 0.0
    %3419 = vmatprep.subr.mxu0 0.0
    %3420 = vmatpush1.msra.mxu0 0.0
    %3421 = vmatprep.subr.mxu0 0.0
    %3422 = vmatpush1.msra.mxu0 0.0
    %3423 = vmatprep.subr.mxu0 0.0
    %3424 = vmatpush1.msra.mxu0 0.0
    %3425 = vmatprep.subr.mxu0 0.0
    %3426 = vmatpush1.msra.mxu0 0.0
    %3427 = vmatprep.subr.mxu0 0.0
    %3428 = vmatpush1.msra.mxu0 0.0
    %3429 = vmatprep.subr.mxu0 0.0
    %3430 = vmatpush1.msra.mxu0 0.0
    %3431 = vmatprep.subr.mxu0 0.0
    %3432 = vmatpush1.msra.mxu0 0.0
    %3433 = vmatprep.subr.mxu0 0.0
    %3434 = vmatpush1.msra.mxu0 0.0
    %3435 = vmatprep.subr.mxu0 0.0
    %3436 = vmatpush1.msra.mxu0 0.0
    %3437 = vmatprep.subr.mxu0 0.0
    %3438 = vmatpush1.msra.mxu0 %v3407
    %3439 = vmatprep.subr.mxu0 0.0
    %3440 = vmatpush1.msra.mxu0 %v3406
    %3441 = vmatprep.subr.mxu0 0.0
    %3442 = vmatpush1.msra.mxu0 %v3405
    %3443 = vmatprep.subr.mxu0 0.0
    %3444 = vmatpush1.msra.mxu0 %v3404
    %3445 = vmatprep.subr.mxu0 0.0
    %3446 = vmatpush2.msra.mxu0 0.0
    %3447 = vmatprep.subr.mxu0 0.0
    %3448 = vmatpush2.msra.mxu0 0.0
    %3449 = vmatprep.subr.mxu0 0.0
    %3450 = vmatpush2.msra.mxu0 0.0
    %3451 = vmatprep.subr.mxu0 0.0
    %3452 = vmatpush2.msra.mxu0 0.0
    %3453 = vmatprep.subr.mxu0 0.0
    %3454 = vmatpush2.msra.mxu0 0.0
    %3455 = vmatprep.subr.mxu0 0.0
    %3456 = vmatpush2.msra.mxu0 0.0
    %3457 = vmatprep.subr.mxu0 0.0
    %3458 = vmatpush2.msra.mxu0 0.0
    %3459 = vmatprep.subr.mxu0 0.0
    %3460 = vmatpush2.msra.mxu0 0.0
    %3461 = vmatprep.subr.mxu0 0.0
    %3462 = vmatpush2.msra.mxu0 0.0
    %3463 = vmatprep.subr.mxu0 0.0
    %3464 = vmatpush2.msra.mxu0 0.0
    %3465 = vmatprep.subr.mxu0 0.0
    %3466 = vmatpush2.msra.mxu0 0.0
    %3467 = vmatprep.subr.mxu0 0.0
    %3468 = vmatpush2.msra.mxu0 0.0
    %3469 = vmatprep.subr.mxu0 0.0
    %3470 = vmatpush2.msra.mxu0 0.0
    %3471 = vmatprep.subr.mxu0 0.0
    %3472 = vmatpush2.msra.mxu0 0.0
    %3473 = vmatprep.subr.mxu0 0.0
    %3474 = vmatpush2.msra.mxu0 0.0
    %3475 = vmatprep.subr.mxu0 0.0
    %3476 = vmatpush2.msra.mxu0 0.0
    %3477 = vmatprep.mubr.f32.mxu0 0.0
    %3478 = vmatmul.mubr.f32.gmra.mxu0 %v3411
    %v3479 = vpop.f32.mrf.mxu0
    %v3480 = vadd.f32 0.0, %v3479
    %v3481 = vpop.f32.mrf.mxu0
    %3482 = vdwg.mxu0
    %v3485 = vunpack.c.l.s4 1966171168
    %v3486 = vunpack.c.0.s8 %v3485
    %v3487 = vlaneseq
    %v3488 = vshrl.u32 %v3487, 7
    %v3489 = vsub.s32 %v3486, %v3488
    %v3490 = vrot.slane %v3480, %v3489
    %v3491 = vcombine.high %v3490, %v3490
    %v3493 = vunpack.c.l.s4 1966171168
    %v3494 = vunpack.c.0.s8 %v3493
    %v3495 = vlaneseq
    %v3496 = vshrl.u32 %v3495, 7
    %v3497 = vsub.s32 %v3494, %v3496
    %v3498 = vrot.slane %v3490, %v3497
    %v3500 = vunpack.c.l.s4 1966171168
    %v3501 = vunpack.c.0.s8 %v3500
    %v3502 = vlaneseq
    %v3503 = vshrl.u32 %v3502, 7
    %v3504 = vsub.s32 %v3501, %v3503
    %v3505 = vrot.slane %v3491, %v3504
    %v3506 = vlaneseq
    %v3507 = vshrl.u32 %v3506, 7
    %v3508 = vsub.s32 0, %v3507
    %v3509 = vrot.slane %v3498, %v3508
    %v3510 = vlaneseq
    %v3511 = vshrl.u32 %v3510, 7
    %v3512 = vsub.s32 0, %v3511
    %v3513 = vrot.slane %v3505, %v3512
    %v3516 = vmul.f32 %v3509, %v59
    %v3517 = vmul.f32 %v3513, %v60
    %v3518 = vsel %vm456, %v3516, 0.0
    %3519 = vadd.xlane.f32.xlu0 %v3518
    %v3520 = vpop.xlane.xlu0 %3519
    %v3521 = vsel %vm456, %v3517, 0.0
    %3522 = vadd.xlane.f32.xlu0 %v3521
    %v3523 = vpop.xlane.xlu0 %3522
    %v3526 = vlaneseq
    %v3527 = vshrl.u32 %v3526, 7
    %v3528 = vsub.s32 %v58, %v3527
    %v3529 = vrot.slane %v3520, %v3528
    %v3530 = vlaneseq
    %v3531 = vshrl.u32 %v3530, 7
    %v3532 = vsub.s32 %v58, %v3531
    %v3533 = vrot.slane %v3523, %v3532
    %v3534 = vsel %vm473, %v3533, %v3529
    %v3536 = vsel %vm476, %v3534, -inf
    %3537 = vmax.xlane.f32.xlu0 %v3536
    %v3538 = vpop.xlane.xlu0 %3537
    %v3540 = vlaneseq
    %v3541 = vshrl.u32 %v3540, 7
    %v3542 = vsub.s32 0, %v3541
    %v3543 = vrot.slane %v3538, %v3542
    %v3544 = vlaneseq
    %v3545 = vshrl.u32 %v3544, 7
    %v3546 = vsub.s32 1, %v3545
    %v3547 = vrot.slane %v3538, %v3546
    %v3550 = vsub.f32 %v3520, %v3543
    %v3551 = vsub.f32 %v3523, %v3547
    %v3552 = vmul.f32 %v3550, 1.442695
    %v3553 = vpow.pop %v3552
    %v3554 = vmul.f32 %v3551, 1.442695
    %v3555 = vpow.pop %v3554
    %3558 = vset.pattern.permute.xlu0 0
    %3559 = vperm.xlu0 %3558, %v3553
    %v3560 = vpop.permute.xlu0 %3559
    %3561 = vset.pattern.permute.xlu0 0
    %3562 = vperm.xlu0 %3561, %v3555
    %v3563 = vpop.permute.xlu0 %3562
    %v3564 = vlaneseq
    %v3565 = vshrl.u32 %v3564, 7
    %v3566 = vsub.s32 %v58, %v3565
    %v3567 = vrot.slane %v3560, %v3566
    %v3568 = vlaneseq
    %v3569 = vshrl.u32 %v3568, 7
    %v3570 = vsub.s32 %v58, %v3569
    %v3571 = vrot.slane %v3563, %v3570
    %v3572 = vsel %vm473, %v3571, %v3567
    %v3574 = vsel %vm476, %v3572, 0.0
    %3575 = vadd.xlane.f32.xlu0 %v3574
    %v3576 = vpop.xlane.xlu0 %3575
    %v3578 = vlaneseq
    %v3579 = vshrl.u32 %v3578, 7
    %v3580 = vsub.s32 0, %v3579
    %v3581 = vrot.slane %v3576, %v3580
    %v3582 = vlaneseq
    %v3583 = vshrl.u32 %v3582, 7
    %v3584 = vsub.s32 1, %v3583
    %v3585 = vrot.slane %v3576, %v3584
    %v3588 = vrcp.pop %v3581
    %v3589 = vmul.f32 %v3553, %v3588
    %v3590 = vrcp.pop %v3585
    %v3591 = vmul.f32 %v3555, %v3590
    %3593 = vset.pattern.permute.xlu0 0
    %3594 = vperm.xlu0 %3593, %v3589
    %v3595 = vpop.permute.xlu0 %3594
    %3598 = vset.pattern.permute.xlu0 0
    %3599 = vperm.xlu0 %3598, %v3591
    %v3600 = vpop.permute.xlu0 %3599
    %v3602 = vmul.f32 %v3595, %v59
    %v3603 = vmul.f32 %v3600, %v60
    %v3604 = vsel %vm456, %v3602, 0.0
    %v3605 = vrot.slane %v3604, 4
    %v3606 = vadd.f32 %v3604, %v3605
    %v3607 = vrot.slane %v3606, 2
    %v3608 = vadd.f32 %v3606, %v3607
    %v3609 = vrot.slane %v3608, 1
    %v3610 = vadd.f32 %v3608, %v3609
    %v3611 = vsel %vm456, %v3603, 0.0
    %v3612 = vrot.slane %v3611, 4
    %v3613 = vadd.f32 %v3611, %v3612
    %v3614 = vrot.slane %v3613, 2
    %v3615 = vadd.f32 %v3613, %v3614
    %v3616 = vrot.slane %v3615, 1
    %v3617 = vadd.f32 %v3615, %v3616
    %v3618 = vld [vmem:[%s4] sm:$0xff]
    %v3619 = vld [vmem:[%s4 + $0x8] sm:$0xff]
    %v3620 = vld [vmem:[%s4 + $0x10] sm:$0xff]
    %v3621 = vld [vmem:[%s4 + $0x18] sm:$0xff]
    %v3622 = vld [vmem:[%s5] sm:$0xff]
    %v3623 = vld [vmem:[%s5 + $0x8] sm:$0xff]
    %v3624 = vld [vmem:[%s5 + $0x10] sm:$0xff]
    %v3625 = vld [vmem:[%s5 + $0x18] sm:$0xff]
    %3626 = vmatprep.subr.mxu0 0.0
    %3627 = vmatpush1.msra.mxu0 0.0
    %3628 = vmatprep.subr.mxu0 0.0
    %3629 = vmatpush1.msra.mxu0 0.0
    %3630 = vmatprep.subr.mxu0 0.0
    %3631 = vmatpush1.msra.mxu0 0.0
    %3632 = vmatprep.subr.mxu0 0.0
    %3633 = vmatpush1.msra.mxu0 0.0
    %3634 = vmatprep.subr.mxu0 0.0
    %3635 = vmatpush1.msra.mxu0 0.0
    %3636 = vmatprep.subr.mxu0 0.0
    %3637 = vmatpush1.msra.mxu0 0.0
    %3638 = vmatprep.subr.mxu0 0.0
    %3639 = vmatpush1.msra.mxu0 0.0
    %3640 = vmatprep.subr.mxu0 0.0
    %3641 = vmatpush1.msra.mxu0 0.0
    %3642 = vmatprep.subr.mxu0 0.0
    %3643 = vmatpush1.msra.mxu0 0.0
    %3644 = vmatprep.subr.mxu0 0.0
    %3645 = vmatpush1.msra.mxu0 0.0
    %3646 = vmatprep.subr.mxu0 0.0
    %3647 = vmatpush1.msra.mxu0 0.0
    %3648 = vmatprep.subr.mxu0 0.0
    %3649 = vmatpush1.msra.mxu0 0.0
    %3650 = vmatprep.subr.mxu0 0.0
    %3651 = vmatpush1.msra.mxu0 %v3625
    %3652 = vmatprep.subr.mxu0 0.0
    %3653 = vmatpush1.msra.mxu0 %v3624
    %3654 = vmatprep.subr.mxu0 0.0
    %3655 = vmatpush1.msra.mxu0 %v3623
    %3656 = vmatprep.subr.mxu0 0.0
    %3657 = vmatpush1.msra.mxu0 %v3622
    %3658 = vmatprep.subr.mxu0 0.0
    %3659 = vmatpush2.msra.mxu0 0.0
    %3660 = vmatprep.subr.mxu0 0.0
    %3661 = vmatpush2.msra.mxu0 0.0
    %3662 = vmatprep.subr.mxu0 0.0
    %3663 = vmatpush2.msra.mxu0 0.0
    %3664 = vmatprep.subr.mxu0 0.0
    %3665 = vmatpush2.msra.mxu0 0.0
    %3666 = vmatprep.subr.mxu0 0.0
    %3667 = vmatpush2.msra.mxu0 0.0
    %3668 = vmatprep.subr.mxu0 0.0
    %3669 = vmatpush2.msra.mxu0 0.0
    %3670 = vmatprep.subr.mxu0 0.0
    %3671 = vmatpush2.msra.mxu0 0.0
    %3672 = vmatprep.subr.mxu0 0.0
    %3673 = vmatpush2.msra.mxu0 0.0
    %3674 = vmatprep.subr.mxu0 0.0
    %3675 = vmatpush2.msra.mxu0 0.0
    %3676 = vmatprep.subr.mxu0 0.0
    %3677 = vmatpush2.msra.mxu0 0.0
    %3678 = vmatprep.subr.mxu0 0.0
    %3679 = vmatpush2.msra.mxu0 0.0
    %3680 = vmatprep.subr.mxu0 0.0
    %3681 = vmatpush2.msra.mxu0 0.0
    %3682 = vmatprep.subr.mxu0 0.0
    %3683 = vmatpush2.msra.mxu0 0.0
    %3684 = vmatprep.subr.mxu0 0.0
    %3685 = vmatpush2.msra.mxu0 0.0
    %3686 = vmatprep.subr.mxu0 0.0
    %3687 = vmatpush2.msra.mxu0 0.0
    %3688 = vmatprep.subr.mxu0 0.0
    %3689 = vmatpush2.msra.mxu0 0.0
    %3690 = vmatprep.mubr.f32.mxu0 0.0
    %3691 = vmatmul.mubr.f32.gmra.mxu0 %v3411
    %v3692 = vpop.f32.mrf.mxu0
    %v3693 = vadd.f32 0.0, %v3692
    %v3694 = vpop.f32.mrf.mxu0
    %3695 = vdwg.mxu0
    %v3698 = vsel %vm473, %v3617, %v3610
    %v3699 = vsel %vm239, %v3698, 0
    %3701 = vmatprep.subr.mxu0 0.0
    %3702 = vmatpush1.msra.mxu0 0.0
    %3703 = vmatprep.subr.mxu0 0.0
    %3704 = vmatpush1.msra.mxu0 0.0
    %3705 = vmatprep.subr.mxu0 0.0
    %3706 = vmatpush1.msra.mxu0 0.0
    %3707 = vmatprep.subr.mxu0 0.0
    %3708 = vmatpush1.msra.mxu0 0.0
    %3709 = vmatprep.subr.mxu0 0.0
    %3710 = vmatpush1.msra.mxu0 0.0
    %3711 = vmatprep.subr.mxu0 0.0
    %3712 = vmatpush1.msra.mxu0 0.0
    %3713 = vmatprep.subr.mxu0 0.0
    %3714 = vmatpush1.msra.mxu0 0.0
    %3715 = vmatprep.subr.mxu0 0.0
    %3716 = vmatpush1.msra.mxu0 0.0
    %3717 = vmatprep.subr.mxu0 0.0
    %3718 = vmatpush1.msra.mxu0 0.0
    %3719 = vmatprep.subr.mxu0 0.0
    %3720 = vmatpush1.msra.mxu0 0.0
    %3721 = vmatprep.subr.mxu0 0.0
    %3722 = vmatpush1.msra.mxu0 0.0
    %3723 = vmatprep.subr.mxu0 0.0
    %3724 = vmatpush1.msra.mxu0 0.0
    %3725 = vmatprep.subr.mxu0 0.0
    %3726 = vmatpush1.msra.mxu0 %v3621
    %3727 = vmatprep.subr.mxu0 0.0
    %3728 = vmatpush1.msra.mxu0 %v3620
    %3729 = vmatprep.subr.mxu0 0.0
    %3730 = vmatpush1.msra.mxu0 %v3619
    %3731 = vmatprep.subr.mxu0 0.0
    %3732 = vmatpush1.msra.mxu0 %v3618
    %3733 = vmatprep.subr.mxu0 0.0
    %3734 = vmatpush2.msra.mxu0 0.0
    %3735 = vmatprep.subr.mxu0 0.0
    %3736 = vmatpush2.msra.mxu0 0.0
    %3737 = vmatprep.subr.mxu0 0.0
    %3738 = vmatpush2.msra.mxu0 0.0
    %3739 = vmatprep.subr.mxu0 0.0
    %3740 = vmatpush2.msra.mxu0 0.0
    %3741 = vmatprep.subr.mxu0 0.0
    %3742 = vmatpush2.msra.mxu0 0.0
    %3743 = vmatprep.subr.mxu0 0.0
    %3744 = vmatpush2.msra.mxu0 0.0
    %3745 = vmatprep.subr.mxu0 0.0
    %3746 = vmatpush2.msra.mxu0 0.0
    %3747 = vmatprep.subr.mxu0 0.0
    %3748 = vmatpush2.msra.mxu0 0.0
    %3749 = vmatprep.subr.mxu0 0.0
    %3750 = vmatpush2.msra.mxu0 0.0
    %3751 = vmatprep.subr.mxu0 0.0
    %3752 = vmatpush2.msra.mxu0 0.0
    %3753 = vmatprep.subr.mxu0 0.0
    %3754 = vmatpush2.msra.mxu0 0.0
    %3755 = vmatprep.subr.mxu0 0.0
    %3756 = vmatpush2.msra.mxu0 0.0
    %3757 = vmatprep.subr.mxu0 0.0
    %3758 = vmatpush2.msra.mxu0 0.0
    %3759 = vmatprep.subr.mxu0 0.0
    %3760 = vmatpush2.msra.mxu0 0.0
    %3761 = vmatprep.subr.mxu0 0.0
    %3762 = vmatpush2.msra.mxu0 0.0
    %3763 = vmatprep.subr.mxu0 0.0
    %3764 = vmatpush2.msra.mxu0 0.0
    %3765 = vmatprep.mubr.f32.mxu0 0.0
    %3766 = vmatmul.mubr.f32.gmra.mxu0 %v3699
    %v3767 = vpop.f32.mrf.mxu0
    %v3768 = vadd.f32 %v3693, %v3767
    %v3769 = vpop.f32.mrf.mxu0
    %3770 = vdwg.mxu0
    %v3771 = vld [vmem:[%s6] sm:$0x1]
    %v3773 = vlaneseq
    %v3774 = vshrl.u32 %v3773, 7
    %v3775 = vsub.s32 0, %v3774
    %v3776 = vrot.slane %v3771, %v3775
    %v3778 = vadd.f32 %v3768, %v3776
    %v3779 = vtanh.pop %v3778
    %v3780 = vld [vmem:[%s7] sm:$0xff]
    %v3781 = vld [vmem:[%s7 + $0x8] sm:$0xff]
    %v3782 = vld [vmem:[%s7 + $0x10] sm:$0xff]
    %v3783 = vld [vmem:[%s7 + $0x18] sm:$0xff]
    %v3784 = vld [vmem:[%s7 + $0x20] sm:$0xff]
    %v3785 = vld [vmem:[%s7 + $0x28] sm:$0xff]
    %v3786 = vld [vmem:[%s7 + $0x30] sm:$0xff]
    %v3787 = vld [vmem:[%s7 + $0x38] sm:$0xff]
    %v3788 = vld [vmem:[%s8] sm:$0x1]
    %v3790 = vlaneseq
    %v3791 = vshrl.u32 %v3790, 7
    %v3792 = vsub.s32 0, %v3791
    %v3793 = vrot.slane %v3788, %v3792
    %v3796 = vsel %vm736, %v3779, 0
    %3798 = vmatprep.subr.mxu0 0.0
    %3799 = vmatpush1.msra.mxu0 0.0
    %3800 = vmatprep.subr.mxu0 0.0
    %3801 = vmatpush1.msra.mxu0 0.0
    %3802 = vmatprep.subr.mxu0 0.0
    %3803 = vmatpush1.msra.mxu0 0.0
    %3804 = vmatprep.subr.mxu0 0.0
    %3805 = vmatpush1.msra.mxu0 0.0
    %3806 = vmatprep.subr.mxu0 0.0
    %3807 = vmatpush1.msra.mxu0 0.0
    %3808 = vmatprep.subr.mxu0 0.0
    %3809 = vmatpush1.msra.mxu0 0.0
    %3810 = vmatprep.subr.mxu0 0.0
    %3811 = vmatpush1.msra.mxu0 0.0
    %3812 = vmatprep.subr.mxu0 0.0
    %3813 = vmatpush1.msra.mxu0 0.0
    %3814 = vmatprep.subr.mxu0 0.0
    %3815 = vmatpush1.msra.mxu0 %v3787
    %3816 = vmatprep.subr.mxu0 0.0
    %3817 = vmatpush1.msra.mxu0 %v3786
    %3818 = vmatprep.subr.mxu0 0.0
    %3819 = vmatpush1.msra.mxu0 %v3785
    %3820 = vmatprep.subr.mxu0 0.0
    %3821 = vmatpush1.msra.mxu0 %v3784
    %3822 = vmatprep.subr.mxu0 0.0
    %3823 = vmatpush1.msra.mxu0 %v3783
    %3824 = vmatprep.subr.mxu0 0.0
    %3825 = vmatpush1.msra.mxu0 %v3782
    %3826 = vmatprep.subr.mxu0 0.0
    %3827 = vmatpush1.msra.mxu0 %v3781
    %3828 = vmatprep.subr.mxu0 0.0
    %3829 = vmatpush1.msra.mxu0 %v3780
    %3830 = vmatprep.subr.mxu0 0.0
    %3831 = vmatpush2.msra.mxu0 0.0
    %3832 = vmatprep.subr.mxu0 0.0
    %3833 = vmatpush2.msra.mxu0 0.0
    %3834 = vmatprep.subr.mxu0 0.0
    %3835 = vmatpush2.msra.mxu0 0.0
    %3836 = vmatprep.subr.mxu0 0.0
    %3837 = vmatpush2.msra.mxu0 0.0
    %3838 = vmatprep.subr.mxu0 0.0
    %3839 = vmatpush2.msra.mxu0 0.0
    %3840 = vmatprep.subr.mxu0 0.0
    %3841 = vmatpush2.msra.mxu0 0.0
    %3842 = vmatprep.subr.mxu0 0.0
    %3843 = vmatpush2.msra.mxu0 0.0
    %3844 = vmatprep.subr.mxu0 0.0
    %3845 = vmatpush2.msra.mxu0 0.0
    %3846 = vmatprep.subr.mxu0 0.0
    %3847 = vmatpush2.msra.mxu0 0.0
    %3848 = vmatprep.subr.mxu0 0.0
    %3849 = vmatpush2.msra.mxu0 0.0
    %3850 = vmatprep.subr.mxu0 0.0
    %3851 = vmatpush2.msra.mxu0 0.0
    %3852 = vmatprep.subr.mxu0 0.0
    %3853 = vmatpush2.msra.mxu0 0.0
    %3854 = vmatprep.subr.mxu0 0.0
    %3855 = vmatpush2.msra.mxu0 0.0
    %3856 = vmatprep.subr.mxu0 0.0
    %3857 = vmatpush2.msra.mxu0 0.0
    %3858 = vmatprep.subr.mxu0 0.0
    %3859 = vmatpush2.msra.mxu0 0.0
    %3860 = vmatprep.subr.mxu0 0.0
    %3861 = vmatpush2.msra.mxu0 0.0
    %3862 = vmatprep.mubr.f32.mxu0 0.0
    %3863 = vmatmul.mubr.f32.gmra.mxu0 %v3796
    %v3864 = vpop.f32.mrf.mxu0
    %v3865 = vadd.f32 %v3793, %v3864
    %v3866 = vpop.f32.mrf.mxu0
    %3867 = vdwg.mxu0
    %3868 = vst.msk [vmem:[#allocation2 + $0x1] sm:$0x1] %vm810, %v3865
    %3870 = vrot.lane.b32.xlu0 %v3865, 12
    %v3871 = vpop.permute.xlu0 %3870
    %3873 = vst.msk [vmem:[#allocation2] sm:$0x2] %vm816, %v3871
    %v3874 = vsel %vm818, %v3865, -inf
    %3875 = vmax.xlane.f32.xlu0 %v3874
    %v3876 = vpop.xlane.xlu0 %3875
    %vm3877 = vcmp.eq.f32.partialorder %v3865, %v3876
    %v3878 = vsel %vm3877, %v58, 12
    %v3879 = vsel %vm818, %v3878, 2147483647
    %v3880 = vand.u32 %v3879, 65535
    %v3881 = vshra.s32 %v3879, 16
    %v3882 = vcvt.s32.f32 %v3880
    %v3883 = vcvt.s32.f32 %v3881
    %3884 = vmin.xlane.f32.xlu0 %v3883
    %v3885 = vpop.xlane.xlu0 %3884
    %vm3886 = vcmp.eq.f32.partialorder %v3883, %v3885
    %v3887 = vsel %vm3886, %v3882, inf
    %3888 = vmin.xlane.f32.xlu0 %v3887
    %v3889 = vpop.xlane.xlu0 %3888
    %v3890 = vcvt.f32.s32 %v3889
    %v3891 = vcvt.f32.s32 %v3885
    %v3892 = vshll.u32 %v3891, 16
    %v3893 = vadd.s32 %v3892, %v3890
    %vm3894 = vcmp.eq.s32.totalorder %v58, %v3893
    %v3895 = vsel %vm3894, 1, 0
    %v3896 = vcvt.s32.f32 %v3895
    %v3897 = vld [vmem:[%s0] sm:$0xff]
    %v3898 = vld [vmem:[%s0 + $0x8] sm:$0xf]
    %v3900 = vsel %vm67, %v3896, 0
    %v3903 = vsel %vm71, %v3898, 0
    %3905 = vmatprep.subr.mxu0 0.0
    %3906 = vmatpush1.msra.mxu0 0.0
    %3907 = vmatprep.subr.mxu0 0.0
    %3908 = vmatpush1.msra.mxu0 0.0
    %3909 = vmatprep.subr.mxu0 0.0
    %3910 = vmatpush1.msra.mxu0 0.0
    %3911 = vmatprep.subr.mxu0 0.0
    %3912 = vmatpush1.msra.mxu0 0.0
    %3913 = vmatprep.subr.mxu0 0.0
    %3914 = vmatpush1.msra.mxu0 0.0
    %3915 = vmatprep.subr.mxu0 0.0
    %3916 = vmatpush1.msra.mxu0 0.0
    %3917 = vmatprep.subr.mxu0 0.0
    %3918 = vmatpush1.msra.mxu0 0.0
    %3919 = vmatprep.subr.mxu0 0.0
    %3920 = vmatpush1.msra.mxu0 0.0
    %3921 = vmatprep.subr.mxu0 0.0
    %3922 = vmatpush1.msra.mxu0 0.0
    %3923 = vmatprep.subr.mxu0 0.0
    %3924 = vmatpush1.msra.mxu0 0.0
    %3925 = vmatprep.subr.mxu0 0.0
    %3926 = vmatpush1.msra.mxu0 0.0
    %3927 = vmatprep.subr.mxu0 0.0
    %3928 = vmatpush1.msra.mxu0 0.0
    %3929 = vmatprep.subr.mxu0 0.0
    %3930 = vmatpush1.msra.mxu0 0.0
    %3931 = vmatprep.subr.mxu0 0.0
    %3932 = vmatpush1.msra.mxu0 0.0
    %3933 = vmatprep.subr.mxu0 0.0
    %3934 = vmatpush1.msra.mxu0 %v3903
    %3935 = vmatprep.subr.mxu0 0.0
    %3936 = vmatpush1.msra.mxu0 %v3897
    %3937 = vmatprep.subr.mxu0 0.0
    %3938 = vmatpush2.msra.mxu0 0.0
    %3939 = vmatprep.subr.mxu0 0.0
    %3940 = vmatpush2.msra.mxu0 0.0
    %3941 = vmatprep.subr.mxu0 0.0
    %3942 = vmatpush2.msra.mxu0 0.0
    %3943 = vmatprep.subr.mxu0 0.0
    %3944 = vmatpush2.msra.mxu0 0.0
    %3945 = vmatprep.subr.mxu0 0.0
    %3946 = vmatpush2.msra.mxu0 0.0
    %3947 = vmatprep.subr.mxu0 0.0
    %3948 = vmatpush2.msra.mxu0 0.0
    %3949 = vmatprep.subr.mxu0 0.0
    %3950 = vmatpush2.msra.mxu0 0.0
    %3951 = vmatprep.subr.mxu0 0.0
    %3952 = vmatpush2.msra.mxu0 0.0
    %3953 = vmatprep.subr.mxu0 0.0
    %3954 = vmatpush2.msra.mxu0 0.0
    %3955 = vmatprep.subr.mxu0 0.0
    %3956 = vmatpush2.msra.mxu0 0.0
    %3957 = vmatprep.subr.mxu0 0.0
    %3958 = vmatpush2.msra.mxu0 0.0
    %3959 = vmatprep.subr.mxu0 0.0
    %3960 = vmatpush2.msra.mxu0 0.0
    %3961 = vmatprep.subr.mxu0 0.0
    %3962 = vmatpush2.msra.mxu0 0.0
    %3963 = vmatprep.subr.mxu0 0.0
    %3964 = vmatpush2.msra.mxu0 0.0
    %3965 = vmatprep.subr.mxu0 0.0
    %3966 = vmatpush2.msra.mxu0 0.0
    %3967 = vmatprep.subr.mxu0 0.0
    %3968 = vmatpush2.msra.mxu0 0.0
    %3969 = vmatprep.mubr.f32.mxu0 0.0
    %3970 = vmatmul.mubr.f32.gmra.mxu0 %v3900
    %v3971 = vpop.f32.mrf.mxu0
    %v3972 = vadd.f32 0.0, %v3971
    %v3973 = vpop.f32.mrf.mxu0
    %3974 = vdwg.mxu0
    %v3975 = vld [vmem:[%s13] sm:$0xff]
    %v3976 = vld [vmem:[%s13 + $0x8] sm:$0xff]
    %v3977 = vld [vmem:[%s14] sm:$0x1]
    %v3979 = vlaneseq
    %v3980 = vshrl.u32 %v3979, 7
    %v3981 = vsub.s32 0, %v3980
    %v3982 = vrot.slane %v3977, %v3981
    %v3985 = vsel %vm154, %v3972, 0
    %3987 = vmatprep.subr.mxu0 0.0
    %3988 = vmatpush1.msra.mxu0 0.0
    %3989 = vmatprep.subr.mxu0 0.0
    %3990 = vmatpush1.msra.mxu0 0.0
    %3991 = vmatprep.subr.mxu0 0.0
    %3992 = vmatpush1.msra.mxu0 0.0
    %3993 = vmatprep.subr.mxu0 0.0
    %3994 = vmatpush1.msra.mxu0 0.0
    %3995 = vmatprep.subr.mxu0 0.0
    %3996 = vmatpush1.msra.mxu0 0.0
    %3997 = vmatprep.subr.mxu0 0.0
    %3998 = vmatpush1.msra.mxu0 0.0
    %3999 = vmatprep.subr.mxu0 0.0
    %4000 = vmatpush1.msra.mxu0 0.0
    %4001 = vmatprep.subr.mxu0 0.0
    %4002 = vmatpush1.msra.mxu0 0.0
    %4003 = vmatprep.subr.mxu0 0.0
    %4004 = vmatpush1.msra.mxu0 0.0
    %4005 = vmatprep.subr.mxu0 0.0
    %4006 = vmatpush1.msra.mxu0 0.0
    %4007 = vmatprep.subr.mxu0 0.0
    %4008 = vmatpush1.msra.mxu0 0.0
    %4009 = vmatprep.subr.mxu0 0.0
    %4010 = vmatpush1.msra.mxu0 0.0
    %4011 = vmatprep.subr.mxu0 0.0
    %4012 = vmatpush1.msra.mxu0 0.0
    %4013 = vmatprep.subr.mxu0 0.0
    %4014 = vmatpush1.msra.mxu0 0.0
    %4015 = vmatprep.subr.mxu0 0.0
    %4016 = vmatpush1.msra.mxu0 %v3976
    %4017 = vmatprep.subr.mxu0 0.0
    %4018 = vmatpush1.msra.mxu0 %v3975
    %4019 = vmatprep.subr.mxu0 0.0
    %4020 = vmatpush2.msra.mxu0 0.0
    %4021 = vmatprep.subr.mxu0 0.0
    %4022 = vmatpush2.msra.mxu0 0.0
    %4023 = vmatprep.subr.mxu0 0.0
    %4024 = vmatpush2.msra.mxu0 0.0
    %4025 = vmatprep.subr.mxu0 0.0
    %4026 = vmatpush2.msra.mxu0 0.0
    %4027 = vmatprep.subr.mxu0 0.0
    %4028 = vmatpush2.msra.mxu0 0.0
    %4029 = vmatprep.subr.mxu0 0.0
    %4030 = vmatpush2.msra.mxu0 0.0
    %4031 = vmatprep.subr.mxu0 0.0
    %4032 = vmatpush2.msra.mxu0 0.0
    %4033 = vmatprep.subr.mxu0 0.0
    %4034 = vmatpush2.msra.mxu0 0.0
    %4035 = vmatprep.subr.mxu0 0.0
    %4036 = vmatpush2.msra.mxu0 0.0
    %4037 = vmatprep.subr.mxu0 0.0
    %4038 = vmatpush2.msra.mxu0 0.0
    %4039 = vmatprep.subr.mxu0 0.0
    %4040 = vmatpush2.msra.mxu0 0.0
    %4041 = vmatprep.subr.mxu0 0.0
    %4042 = vmatpush2.msra.mxu0 0.0
    %4043 = vmatprep.subr.mxu0 0.0
    %4044 = vmatpush2.msra.mxu0 0.0
    %4045 = vmatprep.subr.mxu0 0.0
    %4046 = vmatpush2.msra.mxu0 0.0
    %4047 = vmatprep.subr.mxu0 0.0
    %4048 = vmatpush2.msra.mxu0 0.0
    %4049 = vmatprep.subr.mxu0 0.0
    %4050 = vmatpush2.msra.mxu0 0.0
    %4051 = vmatprep.mubr.f32.mxu0 0.0
    %4052 = vmatmul.mubr.f32.gmra.mxu0 %v3985
    %v4053 = vpop.f32.mrf.mxu0
    %v4054 = vadd.f32 %v3982, %v4053
    %v4055 = vpop.f32.mrf.mxu0
    %4056 = vdwg.mxu0
    %v4057 = vld [vmem:[%s15] sm:$0xff]
    %v4058 = vld [vmem:[%s15 + $0x8] sm:$0xff]
    %v4059 = vld [vmem:[%s15 + $0x10] sm:$0xff]
    %v4060 = vld [vmem:[%s15 + $0x18] sm:$0xff]
    %v4061 = vld [vmem:[%s16] sm:$0x1]
    %v4063 = vlaneseq
    %v4064 = vshrl.u32 %v4063, 7
    %v4065 = vsub.s32 0, %v4064
    %v4066 = vrot.slane %v4061, %v4065
    %4068 = vmatprep.subr.mxu0 0.0
    %4069 = vmatpush1.msra.mxu0 0.0
    %4070 = vmatprep.subr.mxu0 0.0
    %4071 = vmatpush1.msra.mxu0 0.0
    %4072 = vmatprep.subr.mxu0 0.0
    %4073 = vmatpush1.msra.mxu0 0.0
    %4074 = vmatprep.subr.mxu0 0.0
    %4075 = vmatpush1.msra.mxu0 0.0
    %4076 = vmatprep.subr.mxu0 0.0
    %4077 = vmatpush1.msra.mxu0 0.0
    %4078 = vmatprep.subr.mxu0 0.0
    %4079 = vmatpush1.msra.mxu0 0.0
    %4080 = vmatprep.subr.mxu0 0.0
    %4081 = vmatpush1.msra.mxu0 0.0
    %4082 = vmatprep.subr.mxu0 0.0
    %4083 = vmatpush1.msra.mxu0 0.0
    %4084 = vmatprep.subr.mxu0 0.0
    %4085 = vmatpush1.msra.mxu0 0.0
    %4086 = vmatprep.subr.mxu0 0.0
    %4087 = vmatpush1.msra.mxu0 0.0
    %4088 = vmatprep.subr.mxu0 0.0
    %4089 = vmatpush1.msra.mxu0 0.0
    %4090 = vmatprep.subr.mxu0 0.0
    %4091 = vmatpush1.msra.mxu0 0.0
    %4092 = vmatprep.subr.mxu0 0.0
    %4093 = vmatpush1.msra.mxu0 %v4060
    %4094 = vmatprep.subr.mxu0 0.0
    %4095 = vmatpush1.msra.mxu0 %v4059
    %4096 = vmatprep.subr.mxu0 0.0
    %4097 = vmatpush1.msra.mxu0 %v4058
    %4098 = vmatprep.subr.mxu0 0.0
    %4099 = vmatpush1.msra.mxu0 %v4057
    %4100 = vmatprep.subr.mxu0 0.0
    %4101 = vmatpush2.msra.mxu0 0.0
    %4102 = vmatprep.subr.mxu0 0.0
    %4103 = vmatpush2.msra.mxu0 0.0
    %4104 = vmatprep.subr.mxu0 0.0
    %4105 = vmatpush2.msra.mxu0 0.0
    %4106 = vmatprep.subr.mxu0 0.0
    %4107 = vmatpush2.msra.mxu0 0.0
    %4108 = vmatprep.subr.mxu0 0.0
    %4109 = vmatpush2.msra.mxu0 0.0
    %4110 = vmatprep.subr.mxu0 0.0
    %4111 = vmatpush2.msra.mxu0 0.0
    %4112 = vmatprep.subr.mxu0 0.0
    %4113 = vmatpush2.msra.mxu0 0.0
    %4114 = vmatprep.subr.mxu0 0.0
    %4115 = vmatpush2.msra.mxu0 0.0
    %4116 = vmatprep.subr.mxu0 0.0
    %4117 = vmatpush2.msra.mxu0 0.0
    %4118 = vmatprep.subr.mxu0 0.0
    %4119 = vmatpush2.msra.mxu0 0.0
    %4120 = vmatprep.subr.mxu0 0.0
    %4121 = vmatpush2.msra.mxu0 0.0
    %4122 = vmatprep.subr.mxu0 0.0
    %4123 = vmatpush2.msra.mxu0 0.0
    %4124 = vmatprep.subr.mxu0 0.0
    %4125 = vmatpush2.msra.mxu0 0.0
    %4126 = vmatprep.subr.mxu0 0.0
    %4127 = vmatpush2.msra.mxu0 0.0
    %4128 = vmatprep.subr.mxu0 0.0
    %4129 = vmatpush2.msra.mxu0 0.0
    %4130 = vmatprep.subr.mxu0 0.0
    %4131 = vmatpush2.msra.mxu0 0.0
    %4132 = vmatprep.mubr.f32.mxu0 0.0
    %4133 = vmatmul.mubr.f32.gmra.mxu0 %v3411
    %v4134 = vpop.f32.mrf.mxu0
    %v4135 = vadd.f32 %v4066, %v4134
    %v4136 = vpop.f32.mrf.mxu0
    %4137 = vdwg.mxu0
    %v4138 = vadd.f32 %v4054, %v4135
    %v4139 = vxor.u32 %v4138, 2147483648
    %v4140 = vmul.f32 %v4139, 1.442695
    %v4141 = vpow.pop %v4140
    %v4142 = vadd.f32 %v4141, 1.0
    %v4143 = vrcp.pop %v4142
    %v4144 = vmul.f32 1.0, %v4143
    %4146 = vrot.lane.b32.xlu0 %v4135, 64
    %v4147 = vpop.permute.xlu0 %4146
    %v4149 = vmul.f32 %v4144, %v4147
    %4151 = vrot.lane.b32.xlu0 %v4149, 64
    %v4152 = vpop.permute.xlu0 %4151
    %v4154 = vadd.f32 %v4054, %v4152
    %v4155 = vtanh.pop %v4154
    %v4156 = vsub.f32 1.0, %v4144
    %4158 = vrot.lane.b32.xlu0 %v4155, 96
    %v4159 = vpop.permute.xlu0 %4158
    %v4161 = vmul.f32 %v4156, %v4159
    %v4162 = vmul.f32 %v4144, %v3403
    %v4163 = vadd.f32 %v4161, %v4162
    %v4164 = vld [vmem:[%s3] sm:$0xff]
    %v4165 = vld [vmem:[%s3 + $0x8] sm:$0xff]
    %v4166 = vld [vmem:[%s3 + $0x10] sm:$0xff]
    %v4167 = vld [vmem:[%s3 + $0x18] sm:$0xff]
    %4169 = vrot.lane.b32.xlu0 %v4163, 96
    %v4170 = vpop.permute.xlu0 %4169
    %v4171 = vsel %vm239, %v4170, 0
    %4173 = vmatprep.subr.mxu0 0.0
    %4174 = vmatpush1.msra.mxu0 0.0
    %4175 = vmatprep.subr.mxu0 0.0
    %4176 = vmatpush1.msra.mxu0 0.0
    %4177 = vmatprep.subr.mxu0 0.0
    %4178 = vmatpush1.msra.mxu0 0.0
    %4179 = vmatprep.subr.mxu0 0.0
    %4180 = vmatpush1.msra.mxu0 0.0
    %4181 = vmatprep.subr.mxu0 0.0
    %4182 = vmatpush1.msra.mxu0 0.0
    %4183 = vmatprep.subr.mxu0 0.0
    %4184 = vmatpush1.msra.mxu0 0.0
    %4185 = vmatprep.subr.mxu0 0.0
    %4186 = vmatpush1.msra.mxu0 0.0
    %4187 = vmatprep.subr.mxu0 0.0
    %4188 = vmatpush1.msra.mxu0 0.0
    %4189 = vmatprep.subr.mxu0 0.0
    %4190 = vmatpush1.msra.mxu0 0.0
    %4191 = vmatprep.subr.mxu0 0.0
    %4192 = vmatpush1.msra.mxu0 0.0
    %4193 = vmatprep.subr.mxu0 0.0
    %4194 = vmatpush1.msra.mxu0 0.0
    %4195 = vmatprep.subr.mxu0 0.0
    %4196 = vmatpush1.msra.mxu0 0.0
    %4197 = vmatprep.subr.mxu0 0.0
    %4198 = vmatpush1.msra.mxu0 %v4167
    %4199 = vmatprep.subr.mxu0 0.0
    %4200 = vmatpush1.msra.mxu0 %v4166
    %4201 = vmatprep.subr.mxu0 0.0
    %4202 = vmatpush1.msra.mxu0 %v4165
    %4203 = vmatprep.subr.mxu0 0.0
    %4204 = vmatpush1.msra.mxu0 %v4164
    %4205 = vmatprep.subr.mxu0 0.0
    %4206 = vmatpush2.msra.mxu0 0.0
    %4207 = vmatprep.subr.mxu0 0.0
    %4208 = vmatpush2.msra.mxu0 0.0
    %4209 = vmatprep.subr.mxu0 0.0
    %4210 = vmatpush2.msra.mxu0 0.0
    %4211 = vmatprep.subr.mxu0 0.0
    %4212 = vmatpush2.msra.mxu0 0.0
    %4213 = vmatprep.subr.mxu0 0.0
    %4214 = vmatpush2.msra.mxu0 0.0
    %4215 = vmatprep.subr.mxu0 0.0
    %4216 = vmatpush2.msra.mxu0 0.0
    %4217 = vmatprep.subr.mxu0 0.0
    %4218 = vmatpush2.msra.mxu0 0.0
    %4219 = vmatprep.subr.mxu0 0.0
    %4220 = vmatpush2.msra.mxu0 0.0
    %4221 = vmatprep.subr.mxu0 0.0
    %4222 = vmatpush2.msra.mxu0 0.0
    %4223 = vmatprep.subr.mxu0 0.0
    %4224 = vmatpush2.msra.mxu0 0.0
    %4225 = vmatprep.subr.mxu0 0.0
    %4226 = vmatpush2.msra.mxu0 0.0
    %4227 = vmatprep.subr.mxu0 0.0
    %4228 = vmatpush2.msra.mxu0 0.0
    %4229 = vmatprep.subr.mxu0 0.0
    %4230 = vmatpush2.msra.mxu0 0.0
    %4231 = vmatprep.subr.mxu0 0.0
    %4232 = vmatpush2.msra.mxu0 0.0
    %4233 = vmatprep.subr.mxu0 0.0
    %4234 = vmatpush2.msra.mxu0 0.0
    %4235 = vmatprep.subr.mxu0 0.0
    %4236 = vmatpush2.msra.mxu0 0.0
    %4237 = vmatprep.mubr.f32.mxu0 0.0
    %4238 = vmatmul.mubr.f32.gmra.mxu0 %v4171
    %v4239 = vpop.f32.mrf.mxu0
    %v4240 = vadd.f32 0.0, %v4239
    %v4241 = vpop.f32.mrf.mxu0
    %4242 = vdwg.mxu0
    %v4245 = vunpack.c.l.s4 1966171168
    %v4246 = vunpack.c.0.s8 %v4245
    %v4247 = vlaneseq
    %v4248 = vshrl.u32 %v4247, 7
    %v4249 = vsub.s32 %v4246, %v4248
    %v4250 = vrot.slane %v4240, %v4249
    %v4251 = vcombine.high %v4250, %v4250
    %v4253 = vunpack.c.l.s4 1966171168
    %v4254 = vunpack.c.0.s8 %v4253
    %v4255 = vlaneseq
    %v4256 = vshrl.u32 %v4255, 7
    %v4257 = vsub.s32 %v4254, %v4256
    %v4258 = vrot.slane %v4250, %v4257
    %v4260 = vunpack.c.l.s4 1966171168
    %v4261 = vunpack.c.0.s8 %v4260
    %v4262 = vlaneseq
    %v4263 = vshrl.u32 %v4262, 7
    %v4264 = vsub.s32 %v4261, %v4263
    %v4265 = vrot.slane %v4251, %v4264
    %v4266 = vlaneseq
    %v4267 = vshrl.u32 %v4266, 7
    %v4268 = vsub.s32 0, %v4267
    %v4269 = vrot.slane %v4258, %v4268
    %v4270 = vlaneseq
    %v4271 = vshrl.u32 %v4270, 7
    %v4272 = vsub.s32 0, %v4271
    %v4273 = vrot.slane %v4265, %v4272
    %v4276 = vmul.f32 %v4269, %v59
    %v4277 = vmul.f32 %v4273, %v60
    %v4278 = vsel %vm456, %v4276, 0.0
    %4279 = vadd.xlane.f32.xlu0 %v4278
    %v4280 = vpop.xlane.xlu0 %4279
    %v4281 = vsel %vm456, %v4277, 0.0
    %4282 = vadd.xlane.f32.xlu0 %v4281
    %v4283 = vpop.xlane.xlu0 %4282
    %v4286 = vlaneseq
    %v4287 = vshrl.u32 %v4286, 7
    %v4288 = vsub.s32 %v58, %v4287
    %v4289 = vrot.slane %v4280, %v4288
    %v4290 = vlaneseq
    %v4291 = vshrl.u32 %v4290, 7
    %v4292 = vsub.s32 %v58, %v4291
    %v4293 = vrot.slane %v4283, %v4292
    %v4294 = vsel %vm473, %v4293, %v4289
    %v4296 = vsel %vm476, %v4294, -inf
    %4297 = vmax.xlane.f32.xlu0 %v4296
    %v4298 = vpop.xlane.xlu0 %4297
    %v4300 = vlaneseq
    %v4301 = vshrl.u32 %v4300, 7
    %v4302 = vsub.s32 0, %v4301
    %v4303 = vrot.slane %v4298, %v4302
    %v4304 = vlaneseq
    %v4305 = vshrl.u32 %v4304, 7
    %v4306 = vsub.s32 1, %v4305
    %v4307 = vrot.slane %v4298, %v4306
    %v4310 = vsub.f32 %v4280, %v4303
    %v4311 = vsub.f32 %v4283, %v4307
    %v4312 = vmul.f32 %v4310, 1.442695
    %v4313 = vpow.pop %v4312
    %v4314 = vmul.f32 %v4311, 1.442695
    %v4315 = vpow.pop %v4314
    %4318 = vset.pattern.permute.xlu0 0
    %4319 = vperm.xlu0 %4318, %v4313
    %v4320 = vpop.permute.xlu0 %4319
    %4321 = vset.pattern.permute.xlu0 0
    %4322 = vperm.xlu0 %4321, %v4315
    %v4323 = vpop.permute.xlu0 %4322
    %v4324 = vlaneseq
    %v4325 = vshrl.u32 %v4324, 7
    %v4326 = vsub.s32 %v58, %v4325
    %v4327 = vrot.slane %v4320, %v4326
    %v4328 = vlaneseq
    %v4329 = vshrl.u32 %v4328, 7
    %v4330 = vsub.s32 %v58, %v4329
    %v4331 = vrot.slane %v4323, %v4330
    %v4332 = vsel %vm473, %v4331, %v4327
    %v4334 = vsel %vm476, %v4332, 0.0
    %4335 = vadd.xlane.f32.xlu0 %v4334
    %v4336 = vpop.xlane.xlu0 %4335
    %v4338 = vlaneseq
    %v4339 = vshrl.u32 %v4338, 7
    %v4340 = vsub.s32 0, %v4339
    %v4341 = vrot.slane %v4336, %v4340
    %v4342 = vlaneseq
    %v4343 = vshrl.u32 %v4342, 7
    %v4344 = vsub.s32 1, %v4343
    %v4345 = vrot.slane %v4336, %v4344
    %v4348 = vrcp.pop %v4341
    %v4349 = vmul.f32 %v4313, %v4348
    %v4350 = vrcp.pop %v4345
    %v4351 = vmul.f32 %v4315, %v4350
    %4353 = vset.pattern.permute.xlu0 0
    %4354 = vperm.xlu0 %4353, %v4349
    %v4355 = vpop.permute.xlu0 %4354
    %4358 = vset.pattern.permute.xlu0 0
    %4359 = vperm.xlu0 %4358, %v4351
    %v4360 = vpop.permute.xlu0 %4359
    %v4362 = vmul.f32 %v4355, %v59
    %v4363 = vmul.f32 %v4360, %v60
    %v4364 = vsel %vm456, %v4362, 0.0
    %v4365 = vrot.slane %v4364, 4
    %v4366 = vadd.f32 %v4364, %v4365
    %v4367 = vrot.slane %v4366, 2
    %v4368 = vadd.f32 %v4366, %v4367
    %v4369 = vrot.slane %v4368, 1
    %v4370 = vadd.f32 %v4368, %v4369
    %v4371 = vsel %vm456, %v4363, 0.0
    %v4372 = vrot.slane %v4371, 4
    %v4373 = vadd.f32 %v4371, %v4372
    %v4374 = vrot.slane %v4373, 2
    %v4375 = vadd.f32 %v4373, %v4374
    %v4376 = vrot.slane %v4375, 1
    %v4377 = vadd.f32 %v4375, %v4376
    %v4378 = vld [vmem:[%s4] sm:$0xff]
    %v4379 = vld [vmem:[%s4 + $0x8] sm:$0xff]
    %v4380 = vld [vmem:[%s4 + $0x10] sm:$0xff]
    %v4381 = vld [vmem:[%s4 + $0x18] sm:$0xff]
    %v4382 = vld [vmem:[%s5] sm:$0xff]
    %v4383 = vld [vmem:[%s5 + $0x8] sm:$0xff]
    %v4384 = vld [vmem:[%s5 + $0x10] sm:$0xff]
    %v4385 = vld [vmem:[%s5 + $0x18] sm:$0xff]
    %4386 = vmatprep.subr.mxu0 0.0
    %4387 = vmatpush1.msra.mxu0 0.0
    %4388 = vmatprep.subr.mxu0 0.0
    %4389 = vmatpush1.msra.mxu0 0.0
    %4390 = vmatprep.subr.mxu0 0.0
    %4391 = vmatpush1.msra.mxu0 0.0
    %4392 = vmatprep.subr.mxu0 0.0
    %4393 = vmatpush1.msra.mxu0 0.0
    %4394 = vmatprep.subr.mxu0 0.0
    %4395 = vmatpush1.msra.mxu0 0.0
    %4396 = vmatprep.subr.mxu0 0.0
    %4397 = vmatpush1.msra.mxu0 0.0
    %4398 = vmatprep.subr.mxu0 0.0
    %4399 = vmatpush1.msra.mxu0 0.0
    %4400 = vmatprep.subr.mxu0 0.0
    %4401 = vmatpush1.msra.mxu0 0.0
    %4402 = vmatprep.subr.mxu0 0.0
    %4403 = vmatpush1.msra.mxu0 0.0
    %4404 = vmatprep.subr.mxu0 0.0
    %4405 = vmatpush1.msra.mxu0 0.0
    %4406 = vmatprep.subr.mxu0 0.0
    %4407 = vmatpush1.msra.mxu0 0.0
    %4408 = vmatprep.subr.mxu0 0.0
    %4409 = vmatpush1.msra.mxu0 0.0
    %4410 = vmatprep.subr.mxu0 0.0
    %4411 = vmatpush1.msra.mxu0 %v4385
    %4412 = vmatprep.subr.mxu0 0.0
    %4413 = vmatpush1.msra.mxu0 %v4384
    %4414 = vmatprep.subr.mxu0 0.0
    %4415 = vmatpush1.msra.mxu0 %v4383
    %4416 = vmatprep.subr.mxu0 0.0
    %4417 = vmatpush1.msra.mxu0 %v4382
    %4418 = vmatprep.subr.mxu0 0.0
    %4419 = vmatpush2.msra.mxu0 0.0
    %4420 = vmatprep.subr.mxu0 0.0
    %4421 = vmatpush2.msra.mxu0 0.0
    %4422 = vmatprep.subr.mxu0 0.0
    %4423 = vmatpush2.msra.mxu0 0.0
    %4424 = vmatprep.subr.mxu0 0.0
    %4425 = vmatpush2.msra.mxu0 0.0
    %4426 = vmatprep.subr.mxu0 0.0
    %4427 = vmatpush2.msra.mxu0 0.0
    %4428 = vmatprep.subr.mxu0 0.0
    %4429 = vmatpush2.msra.mxu0 0.0
    %4430 = vmatprep.subr.mxu0 0.0
    %4431 = vmatpush2.msra.mxu0 0.0
    %4432 = vmatprep.subr.mxu0 0.0
    %4433 = vmatpush2.msra.mxu0 0.0
    %4434 = vmatprep.subr.mxu0 0.0
    %4435 = vmatpush2.msra.mxu0 0.0
    %4436 = vmatprep.subr.mxu0 0.0
    %4437 = vmatpush2.msra.mxu0 0.0
    %4438 = vmatprep.subr.mxu0 0.0
    %4439 = vmatpush2.msra.mxu0 0.0
    %4440 = vmatprep.subr.mxu0 0.0
    %4441 = vmatpush2.msra.mxu0 0.0
    %4442 = vmatprep.subr.mxu0 0.0
    %4443 = vmatpush2.msra.mxu0 0.0
    %4444 = vmatprep.subr.mxu0 0.0
    %4445 = vmatpush2.msra.mxu0 0.0
    %4446 = vmatprep.subr.mxu0 0.0
    %4447 = vmatpush2.msra.mxu0 0.0
    %4448 = vmatprep.subr.mxu0 0.0
    %4449 = vmatpush2.msra.mxu0 0.0
    %4450 = vmatprep.mubr.f32.mxu0 0.0
    %4451 = vmatmul.mubr.f32.gmra.mxu0 %v4171
    %v4452 = vpop.f32.mrf.mxu0
    %v4453 = vadd.f32 0.0, %v4452
    %v4454 = vpop.f32.mrf.mxu0
    %4455 = vdwg.mxu0
    %v4458 = vsel %vm473, %v4377, %v4370
    %v4459 = vsel %vm239, %v4458, 0
    %4461 = vmatprep.subr.mxu0 0.0
    %4462 = vmatpush1.msra.mxu0 0.0
    %4463 = vmatprep.subr.mxu0 0.0
    %4464 = vmatpush1.msra.mxu0 0.0
    %4465 = vmatprep.subr.mxu0 0.0
    %4466 = vmatpush1.msra.mxu0 0.0
    %4467 = vmatprep.subr.mxu0 0.0
    %4468 = vmatpush1.msra.mxu0 0.0
    %4469 = vmatprep.subr.mxu0 0.0
    %4470 = vmatpush1.msra.mxu0 0.0
    %4471 = vmatprep.subr.mxu0 0.0
    %4472 = vmatpush1.msra.mxu0 0.0
    %4473 = vmatprep.subr.mxu0 0.0
    %4474 = vmatpush1.msra.mxu0 0.0
    %4475 = vmatprep.subr.mxu0 0.0
    %4476 = vmatpush1.msra.mxu0 0.0
    %4477 = vmatprep.subr.mxu0 0.0
    %4478 = vmatpush1.msra.mxu0 0.0
    %4479 = vmatprep.subr.mxu0 0.0
    %4480 = vmatpush1.msra.mxu0 0.0
    %4481 = vmatprep.subr.mxu0 0.0
    %4482 = vmatpush1.msra.mxu0 0.0
    %4483 = vmatprep.subr.mxu0 0.0
    %4484 = vmatpush1.msra.mxu0 0.0
    %4485 = vmatprep.subr.mxu0 0.0
    %4486 = vmatpush1.msra.mxu0 %v4381
    %4487 = vmatprep.subr.mxu0 0.0
    %4488 = vmatpush1.msra.mxu0 %v4380
    %4489 = vmatprep.subr.mxu0 0.0
    %4490 = vmatpush1.msra.mxu0 %v4379
    %4491 = vmatprep.subr.mxu0 0.0
    %4492 = vmatpush1.msra.mxu0 %v4378
    %4493 = vmatprep.subr.mxu0 0.0
    %4494 = vmatpush2.msra.mxu0 0.0
    %4495 = vmatprep.subr.mxu0 0.0
    %4496 = vmatpush2.msra.mxu0 0.0
    %4497 = vmatprep.subr.mxu0 0.0
    %4498 = vmatpush2.msra.mxu0 0.0
    %4499 = vmatprep.subr.mxu0 0.0
    %4500 = vmatpush2.msra.mxu0 0.0
    %4501 = vmatprep.subr.mxu0 0.0
    %4502 = vmatpush2.msra.mxu0 0.0
    %4503 = vmatprep.subr.mxu0 0.0
    %4504 = vmatpush2.msra.mxu0 0.0
    %4505 = vmatprep.subr.mxu0 0.0
    %4506 = vmatpush2.msra.mxu0 0.0
    %4507 = vmatprep.subr.mxu0 0.0
    %4508 = vmatpush2.msra.mxu0 0.0
    %4509 = vmatprep.subr.mxu0 0.0
    %4510 = vmatpush2.msra.mxu0 0.0
    %4511 = vmatprep.subr.mxu0 0.0
    %4512 = vmatpush2.msra.mxu0 0.0
    %4513 = vmatprep.subr.mxu0 0.0
    %4514 = vmatpush2.msra.mxu0 0.0
    %4515 = vmatprep.subr.mxu0 0.0
    %4516 = vmatpush2.msra.mxu0 0.0
    %4517 = vmatprep.subr.mxu0 0.0
    %4518 = vmatpush2.msra.mxu0 0.0
    %4519 = vmatprep.subr.mxu0 0.0
    %4520 = vmatpush2.msra.mxu0 0.0
    %4521 = vmatprep.subr.mxu0 0.0
    %4522 = vmatpush2.msra.mxu0 0.0
    %4523 = vmatprep.subr.mxu0 0.0
    %4524 = vmatpush2.msra.mxu0 0.0
    %4525 = vmatprep.mubr.f32.mxu0 0.0
    %4526 = vmatmul.mubr.f32.gmra.mxu0 %v4459
    %v4527 = vpop.f32.mrf.mxu0
    %v4528 = vadd.f32 %v4453, %v4527
    %v4529 = vpop.f32.mrf.mxu0
    %4530 = vdwg.mxu0
    %v4531 = vld [vmem:[%s6] sm:$0x1]
    %v4533 = vlaneseq
    %v4534 = vshrl.u32 %v4533, 7
    %v4535 = vsub.s32 0, %v4534
    %v4536 = vrot.slane %v4531, %v4535
    %v4538 = vadd.f32 %v4528, %v4536
    %v4539 = vtanh.pop %v4538
    %v4540 = vld [vmem:[%s7] sm:$0xff]
    %v4541 = vld [vmem:[%s7 + $0x8] sm:$0xff]
    %v4542 = vld [vmem:[%s7 + $0x10] sm:$0xff]
    %v4543 = vld [vmem:[%s7 + $0x18] sm:$0xff]
    %v4544 = vld [vmem:[%s7 + $0x20] sm:$0xff]
    %v4545 = vld [vmem:[%s7 + $0x28] sm:$0xff]
    %v4546 = vld [vmem:[%s7 + $0x30] sm:$0xff]
    %v4547 = vld [vmem:[%s7 + $0x38] sm:$0xff]
    %v4548 = vld [vmem:[%s8] sm:$0x1]
    %v4550 = vlaneseq
    %v4551 = vshrl.u32 %v4550, 7
    %v4552 = vsub.s32 0, %v4551
    %v4553 = vrot.slane %v4548, %v4552
    %v4556 = vsel %vm736, %v4539, 0
    %4558 = vmatprep.subr.mxu0 0.0
    %4559 = vmatpush1.msra.mxu0 0.0
    %4560 = vmatprep.subr.mxu0 0.0
    %4561 = vmatpush1.msra.mxu0 0.0
    %4562 = vmatprep.subr.mxu0 0.0
    %4563 = vmatpush1.msra.mxu0 0.0
    %4564 = vmatprep.subr.mxu0 0.0
    %4565 = vmatpush1.msra.mxu0 0.0
    %4566 = vmatprep.subr.mxu0 0.0
    %4567 = vmatpush1.msra.mxu0 0.0
    %4568 = vmatprep.subr.mxu0 0.0
    %4569 = vmatpush1.msra.mxu0 0.0
    %4570 = vmatprep.subr.mxu0 0.0
    %4571 = vmatpush1.msra.mxu0 0.0
    %4572 = vmatprep.subr.mxu0 0.0
    %4573 = vmatpush1.msra.mxu0 0.0
    %4574 = vmatprep.subr.mxu0 0.0
    %4575 = vmatpush1.msra.mxu0 %v4547
    %4576 = vmatprep.subr.mxu0 0.0
    %4577 = vmatpush1.msra.mxu0 %v4546
    %4578 = vmatprep.subr.mxu0 0.0
    %4579 = vmatpush1.msra.mxu0 %v4545
    %4580 = vmatprep.subr.mxu0 0.0
    %4581 = vmatpush1.msra.mxu0 %v4544
    %4582 = vmatprep.subr.mxu0 0.0
    %4583 = vmatpush1.msra.mxu0 %v4543
    %4584 = vmatprep.subr.mxu0 0.0
    %4585 = vmatpush1.msra.mxu0 %v4542
    %4586 = vmatprep.subr.mxu0 0.0
    %4587 = vmatpush1.msra.mxu0 %v4541
    %4588 = vmatprep.subr.mxu0 0.0
    %4589 = vmatpush1.msra.mxu0 %v4540
    %4590 = vmatprep.subr.mxu0 0.0
    %4591 = vmatpush2.msra.mxu0 0.0
    %4592 = vmatprep.subr.mxu0 0.0
    %4593 = vmatpush2.msra.mxu0 0.0
    %4594 = vmatprep.subr.mxu0 0.0
    %4595 = vmatpush2.msra.mxu0 0.0
    %4596 = vmatprep.subr.mxu0 0.0
    %4597 = vmatpush2.msra.mxu0 0.0
    %4598 = vmatprep.subr.mxu0 0.0
    %4599 = vmatpush2.msra.mxu0 0.0
    %4600 = vmatprep.subr.mxu0 0.0
    %4601 = vmatpush2.msra.mxu0 0.0
    %4602 = vmatprep.subr.mxu0 0.0
    %4603 = vmatpush2.msra.mxu0 0.0
    %4604 = vmatprep.subr.mxu0 0.0
    %4605 = vmatpush2.msra.mxu0 0.0
    %4606 = vmatprep.subr.mxu0 0.0
    %4607 = vmatpush2.msra.mxu0 0.0
    %4608 = vmatprep.subr.mxu0 0.0
    %4609 = vmatpush2.msra.mxu0 0.0
    %4610 = vmatprep.subr.mxu0 0.0
    %4611 = vmatpush2.msra.mxu0 0.0
    %4612 = vmatprep.subr.mxu0 0.0
    %4613 = vmatpush2.msra.mxu0 0.0
    %4614 = vmatprep.subr.mxu0 0.0
    %4615 = vmatpush2.msra.mxu0 0.0
    %4616 = vmatprep.subr.mxu0 0.0
    %4617 = vmatpush2.msra.mxu0 0.0
    %4618 = vmatprep.subr.mxu0 0.0
    %4619 = vmatpush2.msra.mxu0 0.0
    %4620 = vmatprep.subr.mxu0 0.0
    %4621 = vmatpush2.msra.mxu0 0.0
    %4622 = vmatprep.mubr.f32.mxu0 0.0
    %4623 = vmatmul.mubr.f32.gmra.mxu0 %v4556
    %v4624 = vpop.f32.mrf.mxu0
    %v4625 = vadd.f32 %v4553, %v4624
    %v4626 = vpop.f32.mrf.mxu0
    %4627 = vdwg.mxu0
    %4629 = vrot.lane.b32.xlu0 %v4625, 24
    %v4630 = vpop.permute.xlu0 %4629
    %4632 = vst.msk [vmem:[#allocation2 + $0x1] sm:$0x1] %vm1577, %v4630
    %4633 = vrot.lane.b32.xlu0 %v4625, 36
    %v4634 = vpop.permute.xlu0 %4633
    %4636 = vst.msk [vmem:[#allocation2] sm:$0x2] %vm1582, %v4634
    %v4637 = vsel %vm818, %v4625, -inf
    %4638 = vmax.xlane.f32.xlu0 %v4637
    %v4639 = vpop.xlane.xlu0 %4638
    %vm4640 = vcmp.eq.f32.partialorder %v4625, %v4639
    %v4641 = vsel %vm4640, %v58, 12
    %v4642 = vsel %vm818, %v4641, 2147483647
    %v4643 = vand.u32 %v4642, 65535
    %v4644 = vshra.s32 %v4642, 16
    %v4645 = vcvt.s32.f32 %v4643
    %v4646 = vcvt.s32.f32 %v4644
    %4647 = vmin.xlane.f32.xlu0 %v4646
    %v4648 = vpop.xlane.xlu0 %4647
    %vm4649 = vcmp.eq.f32.partialorder %v4646, %v4648
    %v4650 = vsel %vm4649, %v4645, inf
    %4651 = vmin.xlane.f32.xlu0 %v4650
    %v4652 = vpop.xlane.xlu0 %4651
    %v4653 = vcvt.f32.s32 %v4652
    %v4654 = vcvt.f32.s32 %v4648
    %v4655 = vshll.u32 %v4654, 16
    %v4656 = vadd.s32 %v4655, %v4653
    %vm4657 = vcmp.eq.s32.totalorder %v58, %v4656
    %v4658 = vsel %vm4657, 1, 0
    %v4659 = vcvt.s32.f32 %v4658
    %v4660 = vld [vmem:[%s0] sm:$0xff]
    %v4661 = vld [vmem:[%s0 + $0x8] sm:$0xf]
    %v4663 = vsel %vm67, %v4659, 0
    %v4666 = vsel %vm71, %v4661, 0
    %4668 = vmatprep.subr.mxu0 0.0
    %4669 = vmatpush1.msra.mxu0 0.0
    %4670 = vmatprep.subr.mxu0 0.0
    %4671 = vmatpush1.msra.mxu0 0.0
    %4672 = vmatprep.subr.mxu0 0.0
    %4673 = vmatpush1.msra.mxu0 0.0
    %4674 = vmatprep.subr.mxu0 0.0
    %4675 = vmatpush1.msra.mxu0 0.0
    %4676 = vmatprep.subr.mxu0 0.0
    %4677 = vmatpush1.msra.mxu0 0.0
    %4678 = vmatprep.subr.mxu0 0.0
    %4679 = vmatpush1.msra.mxu0 0.0
    %4680 = vmatprep.subr.mxu0 0.0
    %4681 = vmatpush1.msra.mxu0 0.0
    %4682 = vmatprep.subr.mxu0 0.0
    %4683 = vmatpush1.msra.mxu0 0.0
    %4684 = vmatprep.subr.mxu0 0.0
    %4685 = vmatpush1.msra.mxu0 0.0
    %4686 = vmatprep.subr.mxu0 0.0
    %4687 = vmatpush1.msra.mxu0 0.0
    %4688 = vmatprep.subr.mxu0 0.0
    %4689 = vmatpush1.msra.mxu0 0.0
    %4690 = vmatprep.subr.mxu0 0.0
    %4691 = vmatpush1.msra.mxu0 0.0
    %4692 = vmatprep.subr.mxu0 0.0
    %4693 = vmatpush1.msra.mxu0 0.0
    %4694 = vmatprep.subr.mxu0 0.0
    %4695 = vmatpush1.msra.mxu0 0.0
    %4696 = vmatprep.subr.mxu0 0.0
    %4697 = vmatpush1.msra.mxu0 %v4666
    %4698 = vmatprep.subr.mxu0 0.0
    %4699 = vmatpush1.msra.mxu0 %v4660
    %4700 = vmatprep.subr.mxu0 0.0
    %4701 = vmatpush2.msra.mxu0 0.0
    %4702 = vmatprep.subr.mxu0 0.0
    %4703 = vmatpush2.msra.mxu0 0.0
    %4704 = vmatprep.subr.mxu0 0.0
    %4705 = vmatpush2.msra.mxu0 0.0
    %4706 = vmatprep.subr.mxu0 0.0
    %4707 = vmatpush2.msra.mxu0 0.0
    %4708 = vmatprep.subr.mxu0 0.0
    %4709 = vmatpush2.msra.mxu0 0.0
    %4710 = vmatprep.subr.mxu0 0.0
    %4711 = vmatpush2.msra.mxu0 0.0
    %4712 = vmatprep.subr.mxu0 0.0
    %4713 = vmatpush2.msra.mxu0 0.0
    %4714 = vmatprep.subr.mxu0 0.0
    %4715 = vmatpush2.msra.mxu0 0.0
    %4716 = vmatprep.subr.mxu0 0.0
    %4717 = vmatpush2.msra.mxu0 0.0
    %4718 = vmatprep.subr.mxu0 0.0
    %4719 = vmatpush2.msra.mxu0 0.0
    %4720 = vmatprep.subr.mxu0 0.0
    %4721 = vmatpush2.msra.mxu0 0.0
    %4722 = vmatprep.subr.mxu0 0.0
    %4723 = vmatpush2.msra.mxu0 0.0
    %4724 = vmatprep.subr.mxu0 0.0
    %4725 = vmatpush2.msra.mxu0 0.0
    %4726 = vmatprep.subr.mxu0 0.0
    %4727 = vmatpush2.msra.mxu0 0.0
    %4728 = vmatprep.subr.mxu0 0.0
    %4729 = vmatpush2.msra.mxu0 0.0
    %4730 = vmatprep.subr.mxu0 0.0
    %4731 = vmatpush2.msra.mxu0 0.0
    %4732 = vmatprep.mubr.f32.mxu0 0.0
    %4733 = vmatmul.mubr.f32.gmra.mxu0 %v4663
    %v4734 = vpop.f32.mrf.mxu0
    %v4735 = vadd.f32 0.0, %v4734
    %v4736 = vpop.f32.mrf.mxu0
    %4737 = vdwg.mxu0
    %v4738 = vld [vmem:[%s13] sm:$0xff]
    %v4739 = vld [vmem:[%s13 + $0x8] sm:$0xff]
    %v4740 = vld [vmem:[%s14] sm:$0x1]
    %v4742 = vlaneseq
    %v4743 = vshrl.u32 %v4742, 7
    %v4744 = vsub.s32 0, %v4743
    %v4745 = vrot.slane %v4740, %v4744
    %v4748 = vsel %vm154, %v4735, 0
    %4750 = vmatprep.subr.mxu0 0.0
    %4751 = vmatpush1.msra.mxu0 0.0
    %4752 = vmatprep.subr.mxu0 0.0
    %4753 = vmatpush1.msra.mxu0 0.0
    %4754 = vmatprep.subr.mxu0 0.0
    %4755 = vmatpush1.msra.mxu0 0.0
    %4756 = vmatprep.subr.mxu0 0.0
    %4757 = vmatpush1.msra.mxu0 0.0
    %4758 = vmatprep.subr.mxu0 0.0
    %4759 = vmatpush1.msra.mxu0 0.0
    %4760 = vmatprep.subr.mxu0 0.0
    %4761 = vmatpush1.msra.mxu0 0.0
    %4762 = vmatprep.subr.mxu0 0.0
    %4763 = vmatpush1.msra.mxu0 0.0
    %4764 = vmatprep.subr.mxu0 0.0
    %4765 = vmatpush1.msra.mxu0 0.0
    %4766 = vmatprep.subr.mxu0 0.0
    %4767 = vmatpush1.msra.mxu0 0.0
    %4768 = vmatprep.subr.mxu0 0.0
    %4769 = vmatpush1.msra.mxu0 0.0
    %4770 = vmatprep.subr.mxu0 0.0
    %4771 = vmatpush1.msra.mxu0 0.0
    %4772 = vmatprep.subr.mxu0 0.0
    %4773 = vmatpush1.msra.mxu0 0.0
    %4774 = vmatprep.subr.mxu0 0.0
    %4775 = vmatpush1.msra.mxu0 0.0
    %4776 = vmatprep.subr.mxu0 0.0
    %4777 = vmatpush1.msra.mxu0 0.0
    %4778 = vmatprep.subr.mxu0 0.0
    %4779 = vmatpush1.msra.mxu0 %v4739
    %4780 = vmatprep.subr.mxu0 0.0
    %4781 = vmatpush1.msra.mxu0 %v4738
    %4782 = vmatprep.subr.mxu0 0.0
    %4783 = vmatpush2.msra.mxu0 0.0
    %4784 = vmatprep.subr.mxu0 0.0
    %4785 = vmatpush2.msra.mxu0 0.0
    %4786 = vmatprep.subr.mxu0 0.0
    %4787 = vmatpush2.msra.mxu0 0.0
    %4788 = vmatprep.subr.mxu0 0.0
    %4789 = vmatpush2.msra.mxu0 0.0
    %4790 = vmatprep.subr.mxu0 0.0
    %4791 = vmatpush2.msra.mxu0 0.0
    %4792 = vmatprep.subr.mxu0 0.0
    %4793 = vmatpush2.msra.mxu0 0.0
    %4794 = vmatprep.subr.mxu0 0.0
    %4795 = vmatpush2.msra.mxu0 0.0
    %4796 = vmatprep.subr.mxu0 0.0
    %4797 = vmatpush2.msra.mxu0 0.0
    %4798 = vmatprep.subr.mxu0 0.0
    %4799 = vmatpush2.msra.mxu0 0.0
    %4800 = vmatprep.subr.mxu0 0.0
    %4801 = vmatpush2.msra.mxu0 0.0
    %4802 = vmatprep.subr.mxu0 0.0
    %4803 = vmatpush2.msra.mxu0 0.0
    %4804 = vmatprep.subr.mxu0 0.0
    %4805 = vmatpush2.msra.mxu0 0.0
    %4806 = vmatprep.subr.mxu0 0.0
    %4807 = vmatpush2.msra.mxu0 0.0
    %4808 = vmatprep.subr.mxu0 0.0
    %4809 = vmatpush2.msra.mxu0 0.0
    %4810 = vmatprep.subr.mxu0 0.0
    %4811 = vmatpush2.msra.mxu0 0.0
    %4812 = vmatprep.subr.mxu0 0.0
    %4813 = vmatpush2.msra.mxu0 0.0
    %4814 = vmatprep.mubr.f32.mxu0 0.0
    %4815 = vmatmul.mubr.f32.gmra.mxu0 %v4748
    %v4816 = vpop.f32.mrf.mxu0
    %v4817 = vadd.f32 %v4745, %v4816
    %v4818 = vpop.f32.mrf.mxu0
    %4819 = vdwg.mxu0
    %v4820 = vld [vmem:[%s15] sm:$0xff]
    %v4821 = vld [vmem:[%s15 + $0x8] sm:$0xff]
    %v4822 = vld [vmem:[%s15 + $0x10] sm:$0xff]
    %v4823 = vld [vmem:[%s15 + $0x18] sm:$0xff]
    %v4824 = vld [vmem:[%s16] sm:$0x1]
    %v4826 = vlaneseq
    %v4827 = vshrl.u32 %v4826, 7
    %v4828 = vsub.s32 0, %v4827
    %v4829 = vrot.slane %v4824, %v4828
    %4831 = vmatprep.subr.mxu0 0.0
    %4832 = vmatpush1.msra.mxu0 0.0
    %4833 = vmatprep.subr.mxu0 0.0
    %4834 = vmatpush1.msra.mxu0 0.0
    %4835 = vmatprep.subr.mxu0 0.0
    %4836 = vmatpush1.msra.mxu0 0.0
    %4837 = vmatprep.subr.mxu0 0.0
    %4838 = vmatpush1.msra.mxu0 0.0
    %4839 = vmatprep.subr.mxu0 0.0
    %4840 = vmatpush1.msra.mxu0 0.0
    %4841 = vmatprep.subr.mxu0 0.0
    %4842 = vmatpush1.msra.mxu0 0.0
    %4843 = vmatprep.subr.mxu0 0.0
    %4844 = vmatpush1.msra.mxu0 0.0
    %4845 = vmatprep.subr.mxu0 0.0
    %4846 = vmatpush1.msra.mxu0 0.0
    %4847 = vmatprep.subr.mxu0 0.0
    %4848 = vmatpush1.msra.mxu0 0.0
    %4849 = vmatprep.subr.mxu0 0.0
    %4850 = vmatpush1.msra.mxu0 0.0
    %4851 = vmatprep.subr.mxu0 0.0
    %4852 = vmatpush1.msra.mxu0 0.0
    %4853 = vmatprep.subr.mxu0 0.0
    %4854 = vmatpush1.msra.mxu0 0.0
    %4855 = vmatprep.subr.mxu0 0.0
    %4856 = vmatpush1.msra.mxu0 %v4823
    %4857 = vmatprep.subr.mxu0 0.0
    %4858 = vmatpush1.msra.mxu0 %v4822
    %4859 = vmatprep.subr.mxu0 0.0
    %4860 = vmatpush1.msra.mxu0 %v4821
    %4861 = vmatprep.subr.mxu0 0.0
    %4862 = vmatpush1.msra.mxu0 %v4820
    %4863 = vmatprep.subr.mxu0 0.0
    %4864 = vmatpush2.msra.mxu0 0.0
    %4865 = vmatprep.subr.mxu0 0.0
    %4866 = vmatpush2.msra.mxu0 0.0
    %4867 = vmatprep.subr.mxu0 0.0
    %4868 = vmatpush2.msra.mxu0 0.0
    %4869 = vmatprep.subr.mxu0 0.0
    %4870 = vmatpush2.msra.mxu0 0.0
    %4871 = vmatprep.subr.mxu0 0.0
    %4872 = vmatpush2.msra.mxu0 0.0
    %4873 = vmatprep.subr.mxu0 0.0
    %4874 = vmatpush2.msra.mxu0 0.0
    %4875 = vmatprep.subr.mxu0 0.0
    %4876 = vmatpush2.msra.mxu0 0.0
    %4877 = vmatprep.subr.mxu0 0.0
    %4878 = vmatpush2.msra.mxu0 0.0
    %4879 = vmatprep.subr.mxu0 0.0
    %4880 = vmatpush2.msra.mxu0 0.0
    %4881 = vmatprep.subr.mxu0 0.0
    %4882 = vmatpush2.msra.mxu0 0.0
    %4883 = vmatprep.subr.mxu0 0.0
    %4884 = vmatpush2.msra.mxu0 0.0
    %4885 = vmatprep.subr.mxu0 0.0
    %4886 = vmatpush2.msra.mxu0 0.0
    %4887 = vmatprep.subr.mxu0 0.0
    %4888 = vmatpush2.msra.mxu0 0.0
    %4889 = vmatprep.subr.mxu0 0.0
    %4890 = vmatpush2.msra.mxu0 0.0
    %4891 = vmatprep.subr.mxu0 0.0
    %4892 = vmatpush2.msra.mxu0 0.0
    %4893 = vmatprep.subr.mxu0 0.0
    %4894 = vmatpush2.msra.mxu0 0.0
    %4895 = vmatprep.mubr.f32.mxu0 0.0
    %4896 = vmatmul.mubr.f32.gmra.mxu0 %v4171
    %v4897 = vpop.f32.mrf.mxu0
    %v4898 = vadd.f32 %v4829, %v4897
    %v4899 = vpop.f32.mrf.mxu0
    %4900 = vdwg.mxu0
    %v4901 = vadd.f32 %v4817, %v4898
    %v4902 = vxor.u32 %v4901, 2147483648
    %v4903 = vmul.f32 %v4902, 1.442695
    %v4904 = vpow.pop %v4903
    %v4905 = vadd.f32 %v4904, 1.0
    %v4906 = vrcp.pop %v4905
    %v4907 = vmul.f32 1.0, %v4906
    %4909 = vrot.lane.b32.xlu0 %v4898, 64
    %v4910 = vpop.permute.xlu0 %4909
    %v4912 = vmul.f32 %v4907, %v4910
    %4914 = vrot.lane.b32.xlu0 %v4912, 64
    %v4915 = vpop.permute.xlu0 %4914
    %v4917 = vadd.f32 %v4817, %v4915
    %v4918 = vtanh.pop %v4917
    %v4919 = vsub.f32 1.0, %v4907
    %4921 = vrot.lane.b32.xlu0 %v4918, 96
    %v4922 = vpop.permute.xlu0 %4921
    %v4924 = vmul.f32 %v4919, %v4922
    %v4925 = vmul.f32 %v4907, %v4163
    %v4926 = vadd.f32 %v4924, %v4925
    %v4927 = vld [vmem:[%s3] sm:$0xff]
    %v4928 = vld [vmem:[%s3 + $0x8] sm:$0xff]
    %v4929 = vld [vmem:[%s3 + $0x10] sm:$0xff]
    %v4930 = vld [vmem:[%s3 + $0x18] sm:$0xff]
    %4932 = vrot.lane.b32.xlu0 %v4926, 96
    %v4933 = vpop.permute.xlu0 %4932
    %v4934 = vsel %vm239, %v4933, 0
    %4936 = vmatprep.subr.mxu0 0.0
    %4937 = vmatpush1.msra.mxu0 0.0
    %4938 = vmatprep.subr.mxu0 0.0
    %4939 = vmatpush1.msra.mxu0 0.0
    %4940 = vmatprep.subr.mxu0 0.0
    %4941 = vmatpush1.msra.mxu0 0.0
    %4942 = vmatprep.subr.mxu0 0.0
    %4943 = vmatpush1.msra.mxu0 0.0
    %4944 = vmatprep.subr.mxu0 0.0
    %4945 = vmatpush1.msra.mxu0 0.0
    %4946 = vmatprep.subr.mxu0 0.0
    %4947 = vmatpush1.msra.mxu0 0.0
    %4948 = vmatprep.subr.mxu0 0.0
    %4949 = vmatpush1.msra.mxu0 0.0
    %4950 = vmatprep.subr.mxu0 0.0
    %4951 = vmatpush1.msra.mxu0 0.0
    %4952 = vmatprep.subr.mxu0 0.0
    %4953 = vmatpush1.msra.mxu0 0.0
    %4954 = vmatprep.subr.mxu0 0.0
    %4955 = vmatpush1.msra.mxu0 0.0
    %4956 = vmatprep.subr.mxu0 0.0
    %4957 = vmatpush1.msra.mxu0 0.0
    %4958 = vmatprep.subr.mxu0 0.0
    %4959 = vmatpush1.msra.mxu0 0.0
    %4960 = vmatprep.subr.mxu0 0.0
    %4961 = vmatpush1.msra.mxu0 %v4930
    %4962 = vmatprep.subr.mxu0 0.0
    %4963 = vmatpush1.msra.mxu0 %v4929
    %4964 = vmatprep.subr.mxu0 0.0
    %4965 = vmatpush1.msra.mxu0 %v4928
    %4966 = vmatprep.subr.mxu0 0.0
    %4967 = vmatpush1.msra.mxu0 %v4927
    %4968 = vmatprep.subr.mxu0 0.0
    %4969 = vmatpush2.msra.mxu0 0.0
    %4970 = vmatprep.subr.mxu0 0.0
    %4971 = vmatpush2.msra.mxu0 0.0
    %4972 = vmatprep.subr.mxu0 0.0
    %4973 = vmatpush2.msra.mxu0 0.0
    %4974 = vmatprep.subr.mxu0 0.0
    %4975 = vmatpush2.msra.mxu0 0.0
    %4976 = vmatprep.subr.mxu0 0.0
    %4977 = vmatpush2.msra.mxu0 0.0
    %4978 = vmatprep.subr.mxu0 0.0
    %4979 = vmatpush2.msra.mxu0 0.0
    %4980 = vmatprep.subr.mxu0 0.0
    %4981 = vmatpush2.msra.mxu0 0.0
    %4982 = vmatprep.subr.mxu0 0.0
    %4983 = vmatpush2.msra.mxu0 0.0
    %4984 = vmatprep.subr.mxu0 0.0
    %4985 = vmatpush2.msra.mxu0 0.0
    %4986 = vmatprep.subr.mxu0 0.0
    %4987 = vmatpush2.msra.mxu0 0.0
    %4988 = vmatprep.subr.mxu0 0.0
    %4989 = vmatpush2.msra.mxu0 0.0
    %4990 = vmatprep.subr.mxu0 0.0
    %4991 = vmatpush2.msra.mxu0 0.0
    %4992 = vmatprep.subr.mxu0 0.0
    %4993 = vmatpush2.msra.mxu0 0.0
    %4994 = vmatprep.subr.mxu0 0.0
    %4995 = vmatpush2.msra.mxu0 0.0
    %4996 = vmatprep.subr.mxu0 0.0
    %4997 = vmatpush2.msra.mxu0 0.0
    %4998 = vmatprep.subr.mxu0 0.0
    %4999 = vmatpush2.msra.mxu0 0.0
    %5000 = vmatprep.mubr.f32.mxu0 0.0
    %5001 = vmatmul.mubr.f32.gmra.mxu0 %v4934
    %v5002 = vpop.f32.mrf.mxu0
    %v5003 = vadd.f32 0.0, %v5002
    %v5004 = vpop.f32.mrf.mxu0
    %5005 = vdwg.mxu0
    %v5008 = vunpack.c.l.s4 1966171168
    %v5009 = vunpack.c.0.s8 %v5008
    %v5010 = vlaneseq
    %v5011 = vshrl.u32 %v5010, 7
    %v5012 = vsub.s32 %v5009, %v5011
    %v5013 = vrot.slane %v5003, %v5012
    %v5014 = vcombine.high %v5013, %v5013
    %v5016 = vunpack.c.l.s4 1966171168
    %v5017 = vunpack.c.0.s8 %v5016
    %v5018 = vlaneseq
    %v5019 = vshrl.u32 %v5018, 7
    %v5020 = vsub.s32 %v5017, %v5019
    %v5021 = vrot.slane %v5013, %v5020
    %v5023 = vunpack.c.l.s4 1966171168
    %v5024 = vunpack.c.0.s8 %v5023
    %v5025 = vlaneseq
    %v5026 = vshrl.u32 %v5025, 7
    %v5027 = vsub.s32 %v5024, %v5026
    %v5028 = vrot.slane %v5014, %v5027
    %v5029 = vlaneseq
    %v5030 = vshrl.u32 %v5029, 7
    %v5031 = vsub.s32 0, %v5030
    %v5032 = vrot.slane %v5021, %v5031
    %v5033 = vlaneseq
    %v5034 = vshrl.u32 %v5033, 7
    %v5035 = vsub.s32 0, %v5034
    %v5036 = vrot.slane %v5028, %v5035
    %v5039 = vmul.f32 %v5032, %v59
    %v5040 = vmul.f32 %v5036, %v60
    %v5041 = vsel %vm456, %v5039, 0.0
    %5042 = vadd.xlane.f32.xlu0 %v5041
    %v5043 = vpop.xlane.xlu0 %5042
    %v5044 = vsel %vm456, %v5040, 0.0
    %5045 = vadd.xlane.f32.xlu0 %v5044
    %v5046 = vpop.xlane.xlu0 %5045
    %v5049 = vlaneseq
    %v5050 = vshrl.u32 %v5049, 7
    %v5051 = vsub.s32 %v58, %v5050
    %v5052 = vrot.slane %v5043, %v5051
    %v5053 = vlaneseq
    %v5054 = vshrl.u32 %v5053, 7
    %v5055 = vsub.s32 %v58, %v5054
    %v5056 = vrot.slane %v5046, %v5055
    %v5057 = vsel %vm473, %v5056, %v5052
    %v5059 = vsel %vm476, %v5057, -inf
    %5060 = vmax.xlane.f32.xlu0 %v5059
    %v5061 = vpop.xlane.xlu0 %5060
    %v5063 = vlaneseq
    %v5064 = vshrl.u32 %v5063, 7
    %v5065 = vsub.s32 0, %v5064
    %v5066 = vrot.slane %v5061, %v5065
    %v5067 = vlaneseq
    %v5068 = vshrl.u32 %v5067, 7
    %v5069 = vsub.s32 1, %v5068
    %v5070 = vrot.slane %v5061, %v5069
    %v5073 = vsub.f32 %v5043, %v5066
    %v5074 = vsub.f32 %v5046, %v5070
    %v5075 = vmul.f32 %v5073, 1.442695
    %v5076 = vpow.pop %v5075
    %v5077 = vmul.f32 %v5074, 1.442695
    %v5078 = vpow.pop %v5077
    %5081 = vset.pattern.permute.xlu0 0
    %5082 = vperm.xlu0 %5081, %v5076
    %v5083 = vpop.permute.xlu0 %5082
    %5084 = vset.pattern.permute.xlu0 0
    %5085 = vperm.xlu0 %5084, %v5078
    %v5086 = vpop.permute.xlu0 %5085
    %v5087 = vlaneseq
    %v5088 = vshrl.u32 %v5087, 7
    %v5089 = vsub.s32 %v58, %v5088
    %v5090 = vrot.slane %v5083, %v5089
    %v5091 = vlaneseq
    %v5092 = vshrl.u32 %v5091, 7
    %v5093 = vsub.s32 %v58, %v5092
    %v5094 = vrot.slane %v5086, %v5093
    %v5095 = vsel %vm473, %v5094, %v5090
    %v5097 = vsel %vm476, %v5095, 0.0
    %5098 = vadd.xlane.f32.xlu0 %v5097
    %v5099 = vpop.xlane.xlu0 %5098
    %v5101 = vlaneseq
    %v5102 = vshrl.u32 %v5101, 7
    %v5103 = vsub.s32 0, %v5102
    %v5104 = vrot.slane %v5099, %v5103
    %v5105 = vlaneseq
    %v5106 = vshrl.u32 %v5105, 7
    %v5107 = vsub.s32 1, %v5106
    %v5108 = vrot.slane %v5099, %v5107
    %v5111 = vrcp.pop %v5104
    %v5112 = vmul.f32 %v5076, %v5111
    %v5113 = vrcp.pop %v5108
    %v5114 = vmul.f32 %v5078, %v5113
    %5116 = vset.pattern.permute.xlu0 0
    %5117 = vperm.xlu0 %5116, %v5112
    %v5118 = vpop.permute.xlu0 %5117
    %5121 = vset.pattern.permute.xlu0 0
    %5122 = vperm.xlu0 %5121, %v5114
    %v5123 = vpop.permute.xlu0 %5122
    %v5125 = vmul.f32 %v5118, %v59
    %v5126 = vmul.f32 %v5123, %v60
    %v5127 = vsel %vm456, %v5125, 0.0
    %v5128 = vrot.slane %v5127, 4
    %v5129 = vadd.f32 %v5127, %v5128
    %v5130 = vrot.slane %v5129, 2
    %v5131 = vadd.f32 %v5129, %v5130
    %v5132 = vrot.slane %v5131, 1
    %v5133 = vadd.f32 %v5131, %v5132
    %v5134 = vsel %vm456, %v5126, 0.0
    %v5135 = vrot.slane %v5134, 4
    %v5136 = vadd.f32 %v5134, %v5135
    %v5137 = vrot.slane %v5136, 2
    %v5138 = vadd.f32 %v5136, %v5137
    %v5139 = vrot.slane %v5138, 1
    %v5140 = vadd.f32 %v5138, %v5139
    %v5141 = vld [vmem:[%s4] sm:$0xff]
    %v5142 = vld [vmem:[%s4 + $0x8] sm:$0xff]
    %v5143 = vld [vmem:[%s4 + $0x10] sm:$0xff]
    %v5144 = vld [vmem:[%s4 + $0x18] sm:$0xff]
    %v5145 = vld [vmem:[%s5] sm:$0xff]
    %v5146 = vld [vmem:[%s5 + $0x8] sm:$0xff]
    %v5147 = vld [vmem:[%s5 + $0x10] sm:$0xff]
    %v5148 = vld [vmem:[%s5 + $0x18] sm:$0xff]
    %5149 = vmatprep.subr.mxu0 0.0
    %5150 = vmatpush1.msra.mxu0 0.0
    %5151 = vmatprep.subr.mxu0 0.0
    %5152 = vmatpush1.msra.mxu0 0.0
    %5153 = vmatprep.subr.mxu0 0.0
    %5154 = vmatpush1.msra.mxu0 0.0
    %5155 = vmatprep.subr.mxu0 0.0
    %5156 = vmatpush1.msra.mxu0 0.0
    %5157 = vmatprep.subr.mxu0 0.0
    %5158 = vmatpush1.msra.mxu0 0.0
    %5159 = vmatprep.subr.mxu0 0.0
    %5160 = vmatpush1.msra.mxu0 0.0
    %5161 = vmatprep.subr.mxu0 0.0
    %5162 = vmatpush1.msra.mxu0 0.0
    %5163 = vmatprep.subr.mxu0 0.0
    %5164 = vmatpush1.msra.mxu0 0.0
    %5165 = vmatprep.subr.mxu0 0.0
    %5166 = vmatpush1.msra.mxu0 0.0
    %5167 = vmatprep.subr.mxu0 0.0
    %5168 = vmatpush1.msra.mxu0 0.0
    %5169 = vmatprep.subr.mxu0 0.0
    %5170 = vmatpush1.msra.mxu0 0.0
    %5171 = vmatprep.subr.mxu0 0.0
    %5172 = vmatpush1.msra.mxu0 0.0
    %5173 = vmatprep.subr.mxu0 0.0
    %5174 = vmatpush1.msra.mxu0 %v5148
    %5175 = vmatprep.subr.mxu0 0.0
    %5176 = vmatpush1.msra.mxu0 %v5147
    %5177 = vmatprep.subr.mxu0 0.0
    %5178 = vmatpush1.msra.mxu0 %v5146
    %5179 = vmatprep.subr.mxu0 0.0
    %5180 = vmatpush1.msra.mxu0 %v5145
    %5181 = vmatprep.subr.mxu0 0.0
    %5182 = vmatpush2.msra.mxu0 0.0
    %5183 = vmatprep.subr.mxu0 0.0
    %5184 = vmatpush2.msra.mxu0 0.0
    %5185 = vmatprep.subr.mxu0 0.0
    %5186 = vmatpush2.msra.mxu0 0.0
    %5187 = vmatprep.subr.mxu0 0.0
    %5188 = vmatpush2.msra.mxu0 0.0
    %5189 = vmatprep.subr.mxu0 0.0
    %5190 = vmatpush2.msra.mxu0 0.0
    %5191 = vmatprep.subr.mxu0 0.0
    %5192 = vmatpush2.msra.mxu0 0.0
    %5193 = vmatprep.subr.mxu0 0.0
    %5194 = vmatpush2.msra.mxu0 0.0
    %5195 = vmatprep.subr.mxu0 0.0
    %5196 = vmatpush2.msra.mxu0 0.0
    %5197 = vmatprep.subr.mxu0 0.0
    %5198 = vmatpush2.msra.mxu0 0.0
    %5199 = vmatprep.subr.mxu0 0.0
    %5200 = vmatpush2.msra.mxu0 0.0
    %5201 = vmatprep.subr.mxu0 0.0
    %5202 = vmatpush2.msra.mxu0 0.0
    %5203 = vmatprep.subr.mxu0 0.0
    %5204 = vmatpush2.msra.mxu0 0.0
    %5205 = vmatprep.subr.mxu0 0.0
    %5206 = vmatpush2.msra.mxu0 0.0
    %5207 = vmatprep.subr.mxu0 0.0
    %5208 = vmatpush2.msra.mxu0 0.0
    %5209 = vmatprep.subr.mxu0 0.0
    %5210 = vmatpush2.msra.mxu0 0.0
    %5211 = vmatprep.subr.mxu0 0.0
    %5212 = vmatpush2.msra.mxu0 0.0
    %5213 = vmatprep.mubr.f32.mxu0 0.0
    %5214 = vmatmul.mubr.f32.gmra.mxu0 %v4934
    %v5215 = vpop.f32.mrf.mxu0
    %v5216 = vadd.f32 0.0, %v5215
    %v5217 = vpop.f32.mrf.mxu0
    %5218 = vdwg.mxu0
    %v5221 = vsel %vm473, %v5140, %v5133
    %v5222 = vsel %vm239, %v5221, 0
    %5224 = vmatprep.subr.mxu0 0.0
    %5225 = vmatpush1.msra.mxu0 0.0
    %5226 = vmatprep.subr.mxu0 0.0
    %5227 = vmatpush1.msra.mxu0 0.0
    %5228 = vmatprep.subr.mxu0 0.0
    %5229 = vmatpush1.msra.mxu0 0.0
    %5230 = vmatprep.subr.mxu0 0.0
    %5231 = vmatpush1.msra.mxu0 0.0
    %5232 = vmatprep.subr.mxu0 0.0
    %5233 = vmatpush1.msra.mxu0 0.0
    %5234 = vmatprep.subr.mxu0 0.0
    %5235 = vmatpush1.msra.mxu0 0.0
    %5236 = vmatprep.subr.mxu0 0.0
    %5237 = vmatpush1.msra.mxu0 0.0
    %5238 = vmatprep.subr.mxu0 0.0
    %5239 = vmatpush1.msra.mxu0 0.0
    %5240 = vmatprep.subr.mxu0 0.0
    %5241 = vmatpush1.msra.mxu0 0.0
    %5242 = vmatprep.subr.mxu0 0.0
    %5243 = vmatpush1.msra.mxu0 0.0
    %5244 = vmatprep.subr.mxu0 0.0
    %5245 = vmatpush1.msra.mxu0 0.0
    %5246 = vmatprep.subr.mxu0 0.0
    %5247 = vmatpush1.msra.mxu0 0.0
    %5248 = vmatprep.subr.mxu0 0.0
    %5249 = vmatpush1.msra.mxu0 %v5144
    %5250 = vmatprep.subr.mxu0 0.0
    %5251 = vmatpush1.msra.mxu0 %v5143
    %5252 = vmatprep.subr.mxu0 0.0
    %5253 = vmatpush1.msra.mxu0 %v5142
    %5254 = vmatprep.subr.mxu0 0.0
    %5255 = vmatpush1.msra.mxu0 %v5141
    %5256 = vmatprep.subr.mxu0 0.0
    %5257 = vmatpush2.msra.mxu0 0.0
    %5258 = vmatprep.subr.mxu0 0.0
    %5259 = vmatpush2.msra.mxu0 0.0
    %5260 = vmatprep.subr.mxu0 0.0
    %5261 = vmatpush2.msra.mxu0 0.0
    %5262 = vmatprep.subr.mxu0 0.0
    %5263 = vmatpush2.msra.mxu0 0.0
    %5264 = vmatprep.subr.mxu0 0.0
    %5265 = vmatpush2.msra.mxu0 0.0
    %5266 = vmatprep.subr.mxu0 0.0
    %5267 = vmatpush2.msra.mxu0 0.0
    %5268 = vmatprep.subr.mxu0 0.0
    %5269 = vmatpush2.msra.mxu0 0.0
    %5270 = vmatprep.subr.mxu0 0.0
    %5271 = vmatpush2.msra.mxu0 0.0
    %5272 = vmatprep.subr.mxu0 0.0
    %5273 = vmatpush2.msra.mxu0 0.0
    %5274 = vmatprep.subr.mxu0 0.0
    %5275 = vmatpush2.msra.mxu0 0.0
    %5276 = vmatprep.subr.mxu0 0.0
    %5277 = vmatpush2.msra.mxu0 0.0
    %5278 = vmatprep.subr.mxu0 0.0
    %5279 = vmatpush2.msra.mxu0 0.0
    %5280 = vmatprep.subr.mxu0 0.0
    %5281 = vmatpush2.msra.mxu0 0.0
    %5282 = vmatprep.subr.mxu0 0.0
    %5283 = vmatpush2.msra.mxu0 0.0
    %5284 = vmatprep.subr.mxu0 0.0
    %5285 = vmatpush2.msra.mxu0 0.0
    %5286 = vmatprep.subr.mxu0 0.0
    %5287 = vmatpush2.msra.mxu0 0.0
    %5288 = vmatprep.mubr.f32.mxu0 0.0
    %5289 = vmatmul.mubr.f32.gmra.mxu0 %v5222
    %v5290 = vpop.f32.mrf.mxu0
    %v5291 = vadd.f32 %v5216, %v5290
    %v5292 = vpop.f32.mrf.mxu0
    %5293 = vdwg.mxu0
    %v5294 = vld [vmem:[%s6] sm:$0x1]
    %v5296 = vlaneseq
    %v5297 = vshrl.u32 %v5296, 7
    %v5298 = vsub.s32 0, %v5297
    %v5299 = vrot.slane %v5294, %v5298
    %v5301 = vadd.f32 %v5291, %v5299
    %v5302 = vtanh.pop %v5301
    %v5303 = vld [vmem:[%s7] sm:$0xff]
    %v5304 = vld [vmem:[%s7 + $0x8] sm:$0xff]
    %v5305 = vld [vmem:[%s7 + $0x10] sm:$0xff]
    %v5306 = vld [vmem:[%s7 + $0x18] sm:$0xff]
    %v5307 = vld [vmem:[%s7 + $0x20] sm:$0xff]
    %v5308 = vld [vmem:[%s7 + $0x28] sm:$0xff]
    %v5309 = vld [vmem:[%s7 + $0x30] sm:$0xff]
    %v5310 = vld [vmem:[%s7 + $0x38] sm:$0xff]
    %v5311 = vld [vmem:[%s8] sm:$0x1]
    %v5313 = vlaneseq
    %v5314 = vshrl.u32 %v5313, 7
    %v5315 = vsub.s32 0, %v5314
    %v5316 = vrot.slane %v5311, %v5315
    %v5319 = vsel %vm736, %v5302, 0
    %5321 = vmatprep.subr.mxu0 0.0
    %5322 = vmatpush1.msra.mxu0 0.0
    %5323 = vmatprep.subr.mxu0 0.0
    %5324 = vmatpush1.msra.mxu0 0.0
    %5325 = vmatprep.subr.mxu0 0.0
    %5326 = vmatpush1.msra.mxu0 0.0
    %5327 = vmatprep.subr.mxu0 0.0
    %5328 = vmatpush1.msra.mxu0 0.0
    %5329 = vmatprep.subr.mxu0 0.0
    %5330 = vmatpush1.msra.mxu0 0.0
    %5331 = vmatprep.subr.mxu0 0.0
    %5332 = vmatpush1.msra.mxu0 0.0
    %5333 = vmatprep.subr.mxu0 0.0
    %5334 = vmatpush1.msra.mxu0 0.0
    %5335 = vmatprep.subr.mxu0 0.0
    %5336 = vmatpush1.msra.mxu0 0.0
    %5337 = vmatprep.subr.mxu0 0.0
    %5338 = vmatpush1.msra.mxu0 %v5310
    %5339 = vmatprep.subr.mxu0 0.0
    %5340 = vmatpush1.msra.mxu0 %v5309
    %5341 = vmatprep.subr.mxu0 0.0
    %5342 = vmatpush1.msra.mxu0 %v5308
    %5343 = vmatprep.subr.mxu0 0.0
    %5344 = vmatpush1.msra.mxu0 %v5307
    %5345 = vmatprep.subr.mxu0 0.0
    %5346 = vmatpush1.msra.mxu0 %v5306
    %5347 = vmatprep.subr.mxu0 0.0
    %5348 = vmatpush1.msra.mxu0 %v5305
    %5349 = vmatprep.subr.mxu0 0.0
    %5350 = vmatpush1.msra.mxu0 %v5304
    %5351 = vmatprep.subr.mxu0 0.0
    %5352 = vmatpush1.msra.mxu0 %v5303
    %5353 = vmatprep.subr.mxu0 0.0
    %5354 = vmatpush2.msra.mxu0 0.0
    %5355 = vmatprep.subr.mxu0 0.0
    %5356 = vmatpush2.msra.mxu0 0.0
    %5357 = vmatprep.subr.mxu0 0.0
    %5358 = vmatpush2.msra.mxu0 0.0
    %5359 = vmatprep.subr.mxu0 0.0
    %5360 = vmatpush2.msra.mxu0 0.0
    %5361 = vmatprep.subr.mxu0 0.0
    %5362 = vmatpush2.msra.mxu0 0.0
    %5363 = vmatprep.subr.mxu0 0.0
    %5364 = vmatpush2.msra.mxu0 0.0
    %5365 = vmatprep.subr.mxu0 0.0
    %5366 = vmatpush2.msra.mxu0 0.0
    %5367 = vmatprep.subr.mxu0 0.0
    %5368 = vmatpush2.msra.mxu0 0.0
    %5369 = vmatprep.subr.mxu0 0.0
    %5370 = vmatpush2.msra.mxu0 0.0
    %5371 = vmatprep.subr.mxu0 0.0
    %5372 = vmatpush2.msra.mxu0 0.0
    %5373 = vmatprep.subr.mxu0 0.0
    %5374 = vmatpush2.msra.mxu0 0.0
    %5375 = vmatprep.subr.mxu0 0.0
    %5376 = vmatpush2.msra.mxu0 0.0
    %5377 = vmatprep.subr.mxu0 0.0
    %5378 = vmatpush2.msra.mxu0 0.0
    %5379 = vmatprep.subr.mxu0 0.0
    %5380 = vmatpush2.msra.mxu0 0.0
    %5381 = vmatprep.subr.mxu0 0.0
    %5382 = vmatpush2.msra.mxu0 0.0
    %5383 = vmatprep.subr.mxu0 0.0
    %5384 = vmatpush2.msra.mxu0 0.0
    %5385 = vmatprep.mubr.f32.mxu0 0.0
    %5386 = vmatmul.mubr.f32.gmra.mxu0 %v5319
    %v5387 = vpop.f32.mrf.mxu0
    %v5388 = vadd.f32 %v5316, %v5387
    %v5389 = vpop.f32.mrf.mxu0
    %5390 = vdwg.mxu0
    %5392 = vrot.lane.b32.xlu0 %v5388, 48
    %v5393 = vpop.permute.xlu0 %5392
    %5395 = vst.msk [vmem:[#allocation2 + $0x1] sm:$0x1] %vm2342, %v5393
    %5396 = vrot.lane.b32.xlu0 %v5388, 60
    %v5397 = vpop.permute.xlu0 %5396
    %5399 = vst.msk [vmem:[#allocation2] sm:$0x2] %vm2347, %v5397
    %v5400 = vsel %vm818, %v5388, -inf
    %5401 = vmax.xlane.f32.xlu0 %v5400
    %v5402 = vpop.xlane.xlu0 %5401
    %vm5403 = vcmp.eq.f32.partialorder %v5388, %v5402
    %v5404 = vsel %vm5403, %v58, 12
    %v5405 = vsel %vm818, %v5404, 2147483647
    %v5406 = vand.u32 %v5405, 65535
    %v5407 = vshra.s32 %v5405, 16
    %v5408 = vcvt.s32.f32 %v5406
    %v5409 = vcvt.s32.f32 %v5407
    %5410 = vmin.xlane.f32.xlu0 %v5409
    %v5411 = vpop.xlane.xlu0 %5410
    %vm5412 = vcmp.eq.f32.partialorder %v5409, %v5411
    %v5413 = vsel %vm5412, %v5408, inf
    %5414 = vmin.xlane.f32.xlu0 %v5413
    %v5415 = vpop.xlane.xlu0 %5414
    %v5416 = vcvt.f32.s32 %v5415
    %v5417 = vcvt.f32.s32 %v5411
    %v5418 = vshll.u32 %v5417, 16
    %v5419 = vadd.s32 %v5418, %v5416
    %vm5420 = vcmp.eq.s32.totalorder %v58, %v5419
    %v5421 = vsel %vm5420, 1, 0
    %v5422 = vcvt.s32.f32 %v5421
    %v5423 = vld [vmem:[%s0] sm:$0xff]
    %v5424 = vld [vmem:[%s0 + $0x8] sm:$0xf]
    %v5426 = vsel %vm67, %v5422, 0
    %v5429 = vsel %vm71, %v5424, 0
    %5431 = vmatprep.subr.mxu0 0.0
    %5432 = vmatpush1.msra.mxu0 0.0
    %5433 = vmatprep.subr.mxu0 0.0
    %5434 = vmatpush1.msra.mxu0 0.0
    %5435 = vmatprep.subr.mxu0 0.0
    %5436 = vmatpush1.msra.mxu0 0.0
    %5437 = vmatprep.subr.mxu0 0.0
    %5438 = vmatpush1.msra.mxu0 0.0
    %5439 = vmatprep.subr.mxu0 0.0
    %5440 = vmatpush1.msra.mxu0 0.0
    %5441 = vmatprep.subr.mxu0 0.0
    %5442 = vmatpush1.msra.mxu0 0.0
    %5443 = vmatprep.subr.mxu0 0.0
    %5444 = vmatpush1.msra.mxu0 0.0
    %5445 = vmatprep.subr.mxu0 0.0
    %5446 = vmatpush1.msra.mxu0 0.0
    %5447 = vmatprep.subr.mxu0 0.0
    %5448 = vmatpush1.msra.mxu0 0.0
    %5449 = vmatprep.subr.mxu0 0.0
    %5450 = vmatpush1.msra.mxu0 0.0
    %5451 = vmatprep.subr.mxu0 0.0
    %5452 = vmatpush1.msra.mxu0 0.0
    %5453 = vmatprep.subr.mxu0 0.0
    %5454 = vmatpush1.msra.mxu0 0.0
    %5455 = vmatprep.subr.mxu0 0.0
    %5456 = vmatpush1.msra.mxu0 0.0
    %5457 = vmatprep.subr.mxu0 0.0
    %5458 = vmatpush1.msra.mxu0 0.0
    %5459 = vmatprep.subr.mxu0 0.0
    %5460 = vmatpush1.msra.mxu0 %v5429
    %5461 = vmatprep.subr.mxu0 0.0
    %5462 = vmatpush1.msra.mxu0 %v5423
    %5463 = vmatprep.subr.mxu0 0.0
    %5464 = vmatpush2.msra.mxu0 0.0
    %5465 = vmatprep.subr.mxu0 0.0
    %5466 = vmatpush2.msra.mxu0 0.0
    %5467 = vmatprep.subr.mxu0 0.0
    %5468 = vmatpush2.msra.mxu0 0.0
    %5469 = vmatprep.subr.mxu0 0.0
    %5470 = vmatpush2.msra.mxu0 0.0
    %5471 = vmatprep.subr.mxu0 0.0
    %5472 = vmatpush2.msra.mxu0 0.0
    %5473 = vmatprep.subr.mxu0 0.0
    %5474 = vmatpush2.msra.mxu0 0.0
    %5475 = vmatprep.subr.mxu0 0.0
    %5476 = vmatpush2.msra.mxu0 0.0
    %5477 = vmatprep.subr.mxu0 0.0
    %5478 = vmatpush2.msra.mxu0 0.0
    %5479 = vmatprep.subr.mxu0 0.0
    %5480 = vmatpush2.msra.mxu0 0.0
    %5481 = vmatprep.subr.mxu0 0.0
    %5482 = vmatpush2.msra.mxu0 0.0
    %5483 = vmatprep.subr.mxu0 0.0
    %5484 = vmatpush2.msra.mxu0 0.0
    %5485 = vmatprep.subr.mxu0 0.0
    %5486 = vmatpush2.msra.mxu0 0.0
    %5487 = vmatprep.subr.mxu0 0.0
    %5488 = vmatpush2.msra.mxu0 0.0
    %5489 = vmatprep.subr.mxu0 0.0
    %5490 = vmatpush2.msra.mxu0 0.0
    %5491 = vmatprep.subr.mxu0 0.0
    %5492 = vmatpush2.msra.mxu0 0.0
    %5493 = vmatprep.subr.mxu0 0.0
    %5494 = vmatpush2.msra.mxu0 0.0
    %5495 = vmatprep.mubr.f32.mxu0 0.0
    %5496 = vmatmul.mubr.f32.gmra.mxu0 %v5426
    %v5497 = vpop.f32.mrf.mxu0
    %v5498 = vadd.f32 0.0, %v5497
    %v5499 = vpop.f32.mrf.mxu0
    %5500 = vdwg.mxu0
    %v5501 = vld [vmem:[%s13] sm:$0xff]
    %v5502 = vld [vmem:[%s13 + $0x8] sm:$0xff]
    %v5503 = vld [vmem:[%s14] sm:$0x1]
    %v5505 = vlaneseq
    %v5506 = vshrl.u32 %v5505, 7
    %v5507 = vsub.s32 0, %v5506
    %v5508 = vrot.slane %v5503, %v5507
    %v5511 = vsel %vm154, %v5498, 0
    %5513 = vmatprep.subr.mxu0 0.0
    %5514 = vmatpush1.msra.mxu0 0.0
    %5515 = vmatprep.subr.mxu0 0.0
    %5516 = vmatpush1.msra.mxu0 0.0
    %5517 = vmatprep.subr.mxu0 0.0
    %5518 = vmatpush1.msra.mxu0 0.0
    %5519 = vmatprep.subr.mxu0 0.0
    %5520 = vmatpush1.msra.mxu0 0.0
    %5521 = vmatprep.subr.mxu0 0.0
    %5522 = vmatpush1.msra.mxu0 0.0
    %5523 = vmatprep.subr.mxu0 0.0
    %5524 = vmatpush1.msra.mxu0 0.0
    %5525 = vmatprep.subr.mxu0 0.0
    %5526 = vmatpush1.msra.mxu0 0.0
    %5527 = vmatprep.subr.mxu0 0.0
    %5528 = vmatpush1.msra.mxu0 0.0
    %5529 = vmatprep.subr.mxu0 0.0
    %5530 = vmatpush1.msra.mxu0 0.0
    %5531 = vmatprep.subr.mxu0 0.0
    %5532 = vmatpush1.msra.mxu0 0.0
    %5533 = vmatprep.subr.mxu0 0.0
    %5534 = vmatpush1.msra.mxu0 0.0
    %5535 = vmatprep.subr.mxu0 0.0
    %5536 = vmatpush1.msra.mxu0 0.0
    %5537 = vmatprep.subr.mxu0 0.0
    %5538 = vmatpush1.msra.mxu0 0.0
    %5539 = vmatprep.subr.mxu0 0.0
    %5540 = vmatpush1.msra.mxu0 0.0
    %5541 = vmatprep.subr.mxu0 0.0
    %5542 = vmatpush1.msra.mxu0 %v5502
    %5543 = vmatprep.subr.mxu0 0.0
    %5544 = vmatpush1.msra.mxu0 %v5501
    %5545 = vmatprep.subr.mxu0 0.0
    %5546 = vmatpush2.msra.mxu0 0.0
    %5547 = vmatprep.subr.mxu0 0.0
    %5548 = vmatpush2.msra.mxu0 0.0
    %5549 = vmatprep.subr.mxu0 0.0
    %5550 = vmatpush2.msra.mxu0 0.0
    %5551 = vmatprep.subr.mxu0 0.0
    %5552 = vmatpush2.msra.mxu0 0.0
    %5553 = vmatprep.subr.mxu0 0.0
    %5554 = vmatpush2.msra.mxu0 0.0
    %5555 = vmatprep.subr.mxu0 0.0
    %5556 = vmatpush2.msra.mxu0 0.0
    %5557 = vmatprep.subr.mxu0 0.0
    %5558 = vmatpush2.msra.mxu0 0.0
    %5559 = vmatprep.subr.mxu0 0.0
    %5560 = vmatpush2.msra.mxu0 0.0
    %5561 = vmatprep.subr.mxu0 0.0
    %5562 = vmatpush2.msra.mxu0 0.0
    %5563 = vmatprep.subr.mxu0 0.0
    %5564 = vmatpush2.msra.mxu0 0.0
    %5565 = vmatprep.subr.mxu0 0.0
    %5566 = vmatpush2.msra.mxu0 0.0
    %5567 = vmatprep.subr.mxu0 0.0
    %5568 = vmatpush2.msra.mxu0 0.0
    %5569 = vmatprep.subr.mxu0 0.0
    %5570 = vmatpush2.msra.mxu0 0.0
    %5571 = vmatprep.subr.mxu0 0.0
    %5572 = vmatpush2.msra.mxu0 0.0
    %5573 = vmatprep.subr.mxu0 0.0
    %5574 = vmatpush2.msra.mxu0 0.0
    %5575 = vmatprep.subr.mxu0 0.0
    %5576 = vmatpush2.msra.mxu0 0.0
    %5577 = vmatprep.mubr.f32.mxu0 0.0
    %5578 = vmatmul.mubr.f32.gmra.mxu0 %v5511
    %v5579 = vpop.f32.mrf.mxu0
    %v5580 = vadd.f32 %v5508, %v5579
    %v5581 = vpop.f32.mrf.mxu0
    %5582 = vdwg.mxu0
    %v5583 = vld [vmem:[%s15] sm:$0xff]
    %v5584 = vld [vmem:[%s15 + $0x8] sm:$0xff]
    %v5585 = vld [vmem:[%s15 + $0x10] sm:$0xff]
    %v5586 = vld [vmem:[%s15 + $0x18] sm:$0xff]
    %v5587 = vld [vmem:[%s16] sm:$0x1]
    %v5589 = vlaneseq
    %v5590 = vshrl.u32 %v5589, 7
    %v5591 = vsub.s32 0, %v5590
    %v5592 = vrot.slane %v5587, %v5591
    %5594 = vmatprep.subr.mxu0 0.0
    %5595 = vmatpush1.msra.mxu0 0.0
    %5596 = vmatprep.subr.mxu0 0.0
    %5597 = vmatpush1.msra.mxu0 0.0
    %5598 = vmatprep.subr.mxu0 0.0
    %5599 = vmatpush1.msra.mxu0 0.0
    %5600 = vmatprep.subr.mxu0 0.0
    %5601 = vmatpush1.msra.mxu0 0.0
    %5602 = vmatprep.subr.mxu0 0.0
    %5603 = vmatpush1.msra.mxu0 0.0
    %5604 = vmatprep.subr.mxu0 0.0
    %5605 = vmatpush1.msra.mxu0 0.0
    %5606 = vmatprep.subr.mxu0 0.0
    %5607 = vmatpush1.msra.mxu0 0.0
    %5608 = vmatprep.subr.mxu0 0.0
    %5609 = vmatpush1.msra.mxu0 0.0
    %5610 = vmatprep.subr.mxu0 0.0
    %5611 = vmatpush1.msra.mxu0 0.0
    %5612 = vmatprep.subr.mxu0 0.0
    %5613 = vmatpush1.msra.mxu0 0.0
    %5614 = vmatprep.subr.mxu0 0.0
    %5615 = vmatpush1.msra.mxu0 0.0
    %5616 = vmatprep.subr.mxu0 0.0
    %5617 = vmatpush1.msra.mxu0 0.0
    %5618 = vmatprep.subr.mxu0 0.0
    %5619 = vmatpush1.msra.mxu0 %v5586
    %5620 = vmatprep.subr.mxu0 0.0
    %5621 = vmatpush1.msra.mxu0 %v5585
    %5622 = vmatprep.subr.mxu0 0.0
    %5623 = vmatpush1.msra.mxu0 %v5584
    %5624 = vmatprep.subr.mxu0 0.0
    %5625 = vmatpush1.msra.mxu0 %v5583
    %5626 = vmatprep.subr.mxu0 0.0
    %5627 = vmatpush2.msra.mxu0 0.0
    %5628 = vmatprep.subr.mxu0 0.0
    %5629 = vmatpush2.msra.mxu0 0.0
    %5630 = vmatprep.subr.mxu0 0.0
    %5631 = vmatpush2.msra.mxu0 0.0
    %5632 = vmatprep.subr.mxu0 0.0
    %5633 = vmatpush2.msra.mxu0 0.0
    %5634 = vmatprep.subr.mxu0 0.0
    %5635 = vmatpush2.msra.mxu0 0.0
    %5636 = vmatprep.subr.mxu0 0.0
    %5637 = vmatpush2.msra.mxu0 0.0
    %5638 = vmatprep.subr.mxu0 0.0
    %5639 = vmatpush2.msra.mxu0 0.0
    %5640 = vmatprep.subr.mxu0 0.0
    %5641 = vmatpush2.msra.mxu0 0.0
    %5642 = vmatprep.subr.mxu0 0.0
    %5643 = vmatpush2.msra.mxu0 0.0
    %5644 = vmatprep.subr.mxu0 0.0
    %5645 = vmatpush2.msra.mxu0 0.0
    %5646 = vmatprep.subr.mxu0 0.0
    %5647 = vmatpush2.msra.mxu0 0.0
    %5648 = vmatprep.subr.mxu0 0.0
    %5649 = vmatpush2.msra.mxu0 0.0
    %5650 = vmatprep.subr.mxu0 0.0
    %5651 = vmatpush2.msra.mxu0 0.0
    %5652 = vmatprep.subr.mxu0 0.0
    %5653 = vmatpush2.msra.mxu0 0.0
    %5654 = vmatprep.subr.mxu0 0.0
    %5655 = vmatpush2.msra.mxu0 0.0
    %5656 = vmatprep.subr.mxu0 0.0
    %5657 = vmatpush2.msra.mxu0 0.0
    %5658 = vmatprep.mubr.f32.mxu0 0.0
    %5659 = vmatmul.mubr.f32.gmra.mxu0 %v4934
    %v5660 = vpop.f32.mrf.mxu0
    %v5661 = vadd.f32 %v5592, %v5660
    %v5662 = vpop.f32.mrf.mxu0
    %5663 = vdwg.mxu0
    %v5664 = vadd.f32 %v5580, %v5661
    %v5665 = vxor.u32 %v5664, 2147483648
    %v5666 = vmul.f32 %v5665, 1.442695
    %v5667 = vpow.pop %v5666
    %v5668 = vadd.f32 %v5667, 1.0
    %v5669 = vrcp.pop %v5668
    %v5670 = vmul.f32 1.0, %v5669
    %5672 = vrot.lane.b32.xlu0 %v5661, 64
    %v5673 = vpop.permute.xlu0 %5672
    %v5675 = vmul.f32 %v5670, %v5673
    %5677 = vrot.lane.b32.xlu0 %v5675, 64
    %v5678 = vpop.permute.xlu0 %5677
    %v5680 = vadd.f32 %v5580, %v5678
    %v5681 = vtanh.pop %v5680
    %v5682 = vsub.f32 1.0, %v5670
    %5684 = vrot.lane.b32.xlu0 %v5681, 96
    %v5685 = vpop.permute.xlu0 %5684
    %v5687 = vmul.f32 %v5682, %v5685
    %v5688 = vmul.f32 %v5670, %v4926
    %v5689 = vadd.f32 %v5687, %v5688
    %v5690 = vld [vmem:[%s3] sm:$0xff]
    %v5691 = vld [vmem:[%s3 + $0x8] sm:$0xff]
    %v5692 = vld [vmem:[%s3 + $0x10] sm:$0xff]
    %v5693 = vld [vmem:[%s3 + $0x18] sm:$0xff]
    %5695 = vrot.lane.b32.xlu0 %v5689, 96
    %v5696 = vpop.permute.xlu0 %5695
    %v5697 = vsel %vm239, %v5696, 0
    %5699 = vmatprep.subr.mxu0 0.0
    %5700 = vmatpush1.msra.mxu0 0.0
    %5701 = vmatprep.subr.mxu0 0.0
    %5702 = vmatpush1.msra.mxu0 0.0
    %5703 = vmatprep.subr.mxu0 0.0
    %5704 = vmatpush1.msra.mxu0 0.0
    %5705 = vmatprep.subr.mxu0 0.0
    %5706 = vmatpush1.msra.mxu0 0.0
    %5707 = vmatprep.subr.mxu0 0.0
    %5708 = vmatpush1.msra.mxu0 0.0
    %5709 = vmatprep.subr.mxu0 0.0
    %5710 = vmatpush1.msra.mxu0 0.0
    %5711 = vmatprep.subr.mxu0 0.0
    %5712 = vmatpush1.msra.mxu0 0.0
    %5713 = vmatprep.subr.mxu0 0.0
    %5714 = vmatpush1.msra.mxu0 0.0
    %5715 = vmatprep.subr.mxu0 0.0
    %5716 = vmatpush1.msra.mxu0 0.0
    %5717 = vmatprep.subr.mxu0 0.0
    %5718 = vmatpush1.msra.mxu0 0.0
    %5719 = vmatprep.subr.mxu0 0.0
    %5720 = vmatpush1.msra.mxu0 0.0
    %5721 = vmatprep.subr.mxu0 0.0
    %5722 = vmatpush1.msra.mxu0 0.0
    %5723 = vmatprep.subr.mxu0 0.0
    %5724 = vmatpush1.msra.mxu0 %v5693
    %5725 = vmatprep.subr.mxu0 0.0
    %5726 = vmatpush1.msra.mxu0 %v5692
    %5727 = vmatprep.subr.mxu0 0.0
    %5728 = vmatpush1.msra.mxu0 %v5691
    %5729 = vmatprep.subr.mxu0 0.0
    %5730 = vmatpush1.msra.mxu0 %v5690
    %5731 = vmatprep.subr.mxu0 0.0
    %5732 = vmatpush2.msra.mxu0 0.0
    %5733 = vmatprep.subr.mxu0 0.0
    %5734 = vmatpush2.msra.mxu0 0.0
    %5735 = vmatprep.subr.mxu0 0.0
    %5736 = vmatpush2.msra.mxu0 0.0
    %5737 = vmatprep.subr.mxu0 0.0
    %5738 = vmatpush2.msra.mxu0 0.0
    %5739 = vmatprep.subr.mxu0 0.0
    %5740 = vmatpush2.msra.mxu0 0.0
    %5741 = vmatprep.subr.mxu0 0.0
    %5742 = vmatpush2.msra.mxu0 0.0
    %5743 = vmatprep.subr.mxu0 0.0
    %5744 = vmatpush2.msra.mxu0 0.0
    %5745 = vmatprep.subr.mxu0 0.0
    %5746 = vmatpush2.msra.mxu0 0.0
    %5747 = vmatprep.subr.mxu0 0.0
    %5748 = vmatpush2.msra.mxu0 0.0
    %5749 = vmatprep.subr.mxu0 0.0
    %5750 = vmatpush2.msra.mxu0 0.0
    %5751 = vmatprep.subr.mxu0 0.0
    %5752 = vmatpush2.msra.mxu0 0.0
    %5753 = vmatprep.subr.mxu0 0.0
    %5754 = vmatpush2.msra.mxu0 0.0
    %5755 = vmatprep.subr.mxu0 0.0
    %5756 = vmatpush2.msra.mxu0 0.0
    %5757 = vmatprep.subr.mxu0 0.0
    %5758 = vmatpush2.msra.mxu0 0.0
    %5759 = vmatprep.subr.mxu0 0.0
    %5760 = vmatpush2.msra.mxu0 0.0
    %5761 = vmatprep.subr.mxu0 0.0
    %5762 = vmatpush2.msra.mxu0 0.0
    %5763 = vmatprep.mubr.f32.mxu0 0.0
    %5764 = vmatmul.mubr.f32.gmra.mxu0 %v5697
    %v5765 = vpop.f32.mrf.mxu0
    %v5766 = vadd.f32 0.0, %v5765
    %v5767 = vpop.f32.mrf.mxu0
    %5768 = vdwg.mxu0
    %v5771 = vunpack.c.l.s4 1966171168
    %v5772 = vunpack.c.0.s8 %v5771
    %v5773 = vlaneseq
    %v5774 = vshrl.u32 %v5773, 7
    %v5775 = vsub.s32 %v5772, %v5774
    %v5776 = vrot.slane %v5766, %v5775
    %v5777 = vcombine.high %v5776, %v5776
    %v5779 = vunpack.c.l.s4 1966171168
    %v5780 = vunpack.c.0.s8 %v5779
    %v5781 = vlaneseq
    %v5782 = vshrl.u32 %v5781, 7
    %v5783 = vsub.s32 %v5780, %v5782
    %v5784 = vrot.slane %v5776, %v5783
    %v5786 = vunpack.c.l.s4 1966171168
    %v5787 = vunpack.c.0.s8 %v5786
    %v5788 = vlaneseq
    %v5789 = vshrl.u32 %v5788, 7
    %v5790 = vsub.s32 %v5787, %v5789
    %v5791 = vrot.slane %v5777, %v5790
    %v5792 = vlaneseq
    %v5793 = vshrl.u32 %v5792, 7
    %v5794 = vsub.s32 0, %v5793
    %v5795 = vrot.slane %v5784, %v5794
    %v5796 = vlaneseq
    %v5797 = vshrl.u32 %v5796, 7
    %v5798 = vsub.s32 0, %v5797
    %v5799 = vrot.slane %v5791, %v5798
    %v5802 = vmul.f32 %v5795, %v59
    %v5803 = vmul.f32 %v5799, %v60
    %v5804 = vsel %vm456, %v5802, 0.0
    %5805 = vadd.xlane.f32.xlu0 %v5804
    %v5806 = vpop.xlane.xlu0 %5805
    %v5807 = vsel %vm456, %v5803, 0.0
    %5808 = vadd.xlane.f32.xlu0 %v5807
    %v5809 = vpop.xlane.xlu0 %5808
    %v5812 = vlaneseq
    %v5813 = vshrl.u32 %v5812, 7
    %v5814 = vsub.s32 %v58, %v5813
    %v5815 = vrot.slane %v5806, %v5814
    %v5816 = vlaneseq
    %v5817 = vshrl.u32 %v5816, 7
    %v5818 = vsub.s32 %v58, %v5817
    %v5819 = vrot.slane %v5809, %v5818
    %v5820 = vsel %vm473, %v5819, %v5815
    %v5822 = vsel %vm476, %v5820, -inf
    %5823 = vmax.xlane.f32.xlu0 %v5822
    %v5824 = vpop.xlane.xlu0 %5823
    %v5826 = vlaneseq
    %v5827 = vshrl.u32 %v5826, 7
    %v5828 = vsub.s32 0, %v5827
    %v5829 = vrot.slane %v5824, %v5828
    %v5830 = vlaneseq
    %v5831 = vshrl.u32 %v5830, 7
    %v5832 = vsub.s32 1, %v5831
    %v5833 = vrot.slane %v5824, %v5832
    %v5836 = vsub.f32 %v5806, %v5829
    %v5837 = vsub.f32 %v5809, %v5833
    %v5838 = vmul.f32 %v5836, 1.442695
    %v5839 = vpow.pop %v5838
    %v5840 = vmul.f32 %v5837, 1.442695
    %v5841 = vpow.pop %v5840
    %5844 = vset.pattern.permute.xlu0 0
    %5845 = vperm.xlu0 %5844, %v5839
    %v5846 = vpop.permute.xlu0 %5845
    %5847 = vset.pattern.permute.xlu0 0
    %5848 = vperm.xlu0 %5847, %v5841
    %v5849 = vpop.permute.xlu0 %5848
    %v5850 = vlaneseq
    %v5851 = vshrl.u32 %v5850, 7
    %v5852 = vsub.s32 %v58, %v5851
    %v5853 = vrot.slane %v5846, %v5852
    %v5854 = vlaneseq
    %v5855 = vshrl.u32 %v5854, 7
    %v5856 = vsub.s32 %v58, %v5855
    %v5857 = vrot.slane %v5849, %v5856
    %v5858 = vsel %vm473, %v5857, %v5853
    %v5860 = vsel %vm476, %v5858, 0.0
    %5861 = vadd.xlane.f32.xlu0 %v5860
    %v5862 = vpop.xlane.xlu0 %5861
    %v5864 = vlaneseq
    %v5865 = vshrl.u32 %v5864, 7
    %v5866 = vsub.s32 0, %v5865
    %v5867 = vrot.slane %v5862, %v5866
    %v5868 = vlaneseq
    %v5869 = vshrl.u32 %v5868, 7
    %v5870 = vsub.s32 1, %v5869
    %v5871 = vrot.slane %v5862, %v5870
    %v5874 = vrcp.pop %v5867
    %v5875 = vmul.f32 %v5839, %v5874
    %v5876 = vrcp.pop %v5871
    %v5877 = vmul.f32 %v5841, %v5876
    %5879 = vset.pattern.permute.xlu0 0
    %5880 = vperm.xlu0 %5879, %v5875
    %v5881 = vpop.permute.xlu0 %5880
    %5884 = vset.pattern.permute.xlu0 0
    %5885 = vperm.xlu0 %5884, %v5877
    %v5886 = vpop.permute.xlu0 %5885
    %v5888 = vmul.f32 %v5881, %v59
    %v5889 = vmul.f32 %v5886, %v60
    %v5890 = vsel %vm456, %v5888, 0.0
    %v5891 = vrot.slane %v5890, 4
    %v5892 = vadd.f32 %v5890, %v5891
    %v5893 = vrot.slane %v5892, 2
    %v5894 = vadd.f32 %v5892, %v5893
    %v5895 = vrot.slane %v5894, 1
    %v5896 = vadd.f32 %v5894, %v5895
    %v5897 = vsel %vm456, %v5889, 0.0
    %v5898 = vrot.slane %v5897, 4
    %v5899 = vadd.f32 %v5897, %v5898
    %v5900 = vrot.slane %v5899, 2
    %v5901 = vadd.f32 %v5899, %v5900
    %v5902 = vrot.slane %v5901, 1
    %v5903 = vadd.f32 %v5901, %v5902
    %v5904 = vld [vmem:[%s4] sm:$0xff]
    %v5905 = vld [vmem:[%s4 + $0x8] sm:$0xff]
    %v5906 = vld [vmem:[%s4 + $0x10] sm:$0xff]
    %v5907 = vld [vmem:[%s4 + $0x18] sm:$0xff]
    %v5908 = vld [vmem:[%s5] sm:$0xff]
    %v5909 = vld [vmem:[%s5 + $0x8] sm:$0xff]
    %v5910 = vld [vmem:[%s5 + $0x10] sm:$0xff]
    %v5911 = vld [vmem:[%s5 + $0x18] sm:$0xff]
    %5912 = vmatprep.subr.mxu0 0.0
    %5913 = vmatpush1.msra.mxu0 0.0
    %5914 = vmatprep.subr.mxu0 0.0
    %5915 = vmatpush1.msra.mxu0 0.0
    %5916 = vmatprep.subr.mxu0 0.0
    %5917 = vmatpush1.msra.mxu0 0.0
    %5918 = vmatprep.subr.mxu0 0.0
    %5919 = vmatpush1.msra.mxu0 0.0
    %5920 = vmatprep.subr.mxu0 0.0
    %5921 = vmatpush1.msra.mxu0 0.0
    %5922 = vmatprep.subr.mxu0 0.0
    %5923 = vmatpush1.msra.mxu0 0.0
    %5924 = vmatprep.subr.mxu0 0.0
    %5925 = vmatpush1.msra.mxu0 0.0
    %5926 = vmatprep.subr.mxu0 0.0
    %5927 = vmatpush1.msra.mxu0 0.0
    %5928 = vmatprep.subr.mxu0 0.0
    %5929 = vmatpush1.msra.mxu0 0.0
    %5930 = vmatprep.subr.mxu0 0.0
    %5931 = vmatpush1.msra.mxu0 0.0
    %5932 = vmatprep.subr.mxu0 0.0
    %5933 = vmatpush1.msra.mxu0 0.0
    %5934 = vmatprep.subr.mxu0 0.0
    %5935 = vmatpush1.msra.mxu0 0.0
    %5936 = vmatprep.subr.mxu0 0.0
    %5937 = vmatpush1.msra.mxu0 %v5911
    %5938 = vmatprep.subr.mxu0 0.0
    %5939 = vmatpush1.msra.mxu0 %v5910
    %5940 = vmatprep.subr.mxu0 0.0
    %5941 = vmatpush1.msra.mxu0 %v5909
    %5942 = vmatprep.subr.mxu0 0.0
    %5943 = vmatpush1.msra.mxu0 %v5908
    %5944 = vmatprep.subr.mxu0 0.0
    %5945 = vmatpush2.msra.mxu0 0.0
    %5946 = vmatprep.subr.mxu0 0.0
    %5947 = vmatpush2.msra.mxu0 0.0
    %5948 = vmatprep.subr.mxu0 0.0
    %5949 = vmatpush2.msra.mxu0 0.0
    %5950 = vmatprep.subr.mxu0 0.0
    %5951 = vmatpush2.msra.mxu0 0.0
    %5952 = vmatprep.subr.mxu0 0.0
    %5953 = vmatpush2.msra.mxu0 0.0
    %5954 = vmatprep.subr.mxu0 0.0
    %5955 = vmatpush2.msra.mxu0 0.0
    %5956 = vmatprep.subr.mxu0 0.0
    %5957 = vmatpush2.msra.mxu0 0.0
    %5958 = vmatprep.subr.mxu0 0.0
    %5959 = vmatpush2.msra.mxu0 0.0
    %5960 = vmatprep.subr.mxu0 0.0
    %5961 = vmatpush2.msra.mxu0 0.0
    %5962 = vmatprep.subr.mxu0 0.0
    %5963 = vmatpush2.msra.mxu0 0.0
    %5964 = vmatprep.subr.mxu0 0.0
    %5965 = vmatpush2.msra.mxu0 0.0
    %5966 = vmatprep.subr.mxu0 0.0
    %5967 = vmatpush2.msra.mxu0 0.0
    %5968 = vmatprep.subr.mxu0 0.0
    %5969 = vmatpush2.msra.mxu0 0.0
    %5970 = vmatprep.subr.mxu0 0.0
    %5971 = vmatpush2.msra.mxu0 0.0
    %5972 = vmatprep.subr.mxu0 0.0
    %5973 = vmatpush2.msra.mxu0 0.0
    %5974 = vmatprep.subr.mxu0 0.0
    %5975 = vmatpush2.msra.mxu0 0.0
    %5976 = vmatprep.mubr.f32.mxu0 0.0
    %5977 = vmatmul.mubr.f32.gmra.mxu0 %v5697
    %v5978 = vpop.f32.mrf.mxu0
    %v5979 = vadd.f32 0.0, %v5978
    %v5980 = vpop.f32.mrf.mxu0
    %5981 = vdwg.mxu0
    %v5984 = vsel %vm473, %v5903, %v5896
    %v5985 = vsel %vm239, %v5984, 0
    %5987 = vmatprep.subr.mxu0 0.0
    %5988 = vmatpush1.msra.mxu0 0.0
    %5989 = vmatprep.subr.mxu0 0.0
    %5990 = vmatpush1.msra.mxu0 0.0
    %5991 = vmatprep.subr.mxu0 0.0
    %5992 = vmatpush1.msra.mxu0 0.0
    %5993 = vmatprep.subr.mxu0 0.0
    %5994 = vmatpush1.msra.mxu0 0.0
    %5995 = vmatprep.subr.mxu0 0.0
    %5996 = vmatpush1.msra.mxu0 0.0
    %5997 = vmatprep.subr.mxu0 0.0
    %5998 = vmatpush1.msra.mxu0 0.0
    %5999 = vmatprep.subr.mxu0 0.0
    %6000 = vmatpush1.msra.mxu0 0.0
    %6001 = vmatprep.subr.mxu0 0.0
    %6002 = vmatpush1.msra.mxu0 0.0
    %6003 = vmatprep.subr.mxu0 0.0
    %6004 = vmatpush1.msra.mxu0 0.0
    %6005 = vmatprep.subr.mxu0 0.0
    %6006 = vmatpush1.msra.mxu0 0.0
    %6007 = vmatprep.subr.mxu0 0.0
    %6008 = vmatpush1.msra.mxu0 0.0
    %6009 = vmatprep.subr.mxu0 0.0
    %6010 = vmatpush1.msra.mxu0 0.0
    %6011 = vmatprep.subr.mxu0 0.0
    %6012 = vmatpush1.msra.mxu0 %v5907
    %6013 = vmatprep.subr.mxu0 0.0
    %6014 = vmatpush1.msra.mxu0 %v5906
    %6015 = vmatprep.subr.mxu0 0.0
    %6016 = vmatpush1.msra.mxu0 %v5905
    %6017 = vmatprep.subr.mxu0 0.0
    %6018 = vmatpush1.msra.mxu0 %v5904
    %6019 = vmatprep.subr.mxu0 0.0
    %6020 = vmatpush2.msra.mxu0 0.0
    %6021 = vmatprep.subr.mxu0 0.0
    %6022 = vmatpush2.msra.mxu0 0.0
    %6023 = vmatprep.subr.mxu0 0.0
    %6024 = vmatpush2.msra.mxu0 0.0
    %6025 = vmatprep.subr.mxu0 0.0
    %6026 = vmatpush2.msra.mxu0 0.0
    %6027 = vmatprep.subr.mxu0 0.0
    %6028 = vmatpush2.msra.mxu0 0.0
    %6029 = vmatprep.subr.mxu0 0.0
    %6030 = vmatpush2.msra.mxu0 0.0
    %6031 = vmatprep.subr.mxu0 0.0
    %6032 = vmatpush2.msra.mxu0 0.0
    %6033 = vmatprep.subr.mxu0 0.0
    %6034 = vmatpush2.msra.mxu0 0.0
    %6035 = vmatprep.subr.mxu0 0.0
    %6036 = vmatpush2.msra.mxu0 0.0
    %6037 = vmatprep.subr.mxu0 0.0
    %6038 = vmatpush2.msra.mxu0 0.0
    %6039 = vmatprep.subr.mxu0 0.0
    %6040 = vmatpush2.msra.mxu0 0.0
    %6041 = vmatprep.subr.mxu0 0.0
    %6042 = vmatpush2.msra.mxu0 0.0
    %6043 = vmatprep.subr.mxu0 0.0
    %6044 = vmatpush2.msra.mxu0 0.0
    %6045 = vmatprep.subr.mxu0 0.0
    %6046 = vmatpush2.msra.mxu0 0.0
    %6047 = vmatprep.subr.mxu0 0.0
    %6048 = vmatpush2.msra.mxu0 0.0
    %6049 = vmatprep.subr.mxu0 0.0
    %6050 = vmatpush2.msra.mxu0 0.0
    %6051 = vmatprep.mubr.f32.mxu0 0.0
    %6052 = vmatmul.mubr.f32.gmra.mxu0 %v5985
    %v6053 = vpop.f32.mrf.mxu0
    %v6054 = vadd.f32 %v5979, %v6053
    %v6055 = vpop.f32.mrf.mxu0
    %6056 = vdwg.mxu0
    %v6057 = vld [vmem:[%s6] sm:$0x1]
    %v6059 = vlaneseq
    %v6060 = vshrl.u32 %v6059, 7
    %v6061 = vsub.s32 0, %v6060
    %v6062 = vrot.slane %v6057, %v6061
    %v6064 = vadd.f32 %v6054, %v6062
    %v6065 = vtanh.pop %v6064
    %v6066 = vld [vmem:[%s7] sm:$0xff]
    %v6067 = vld [vmem:[%s7 + $0x8] sm:$0xff]
    %v6068 = vld [vmem:[%s7 + $0x10] sm:$0xff]
    %v6069 = vld [vmem:[%s7 + $0x18] sm:$0xff]
    %v6070 = vld [vmem:[%s7 + $0x20] sm:$0xff]
    %v6071 = vld [vmem:[%s7 + $0x28] sm:$0xff]
    %v6072 = vld [vmem:[%s7 + $0x30] sm:$0xff]
    %v6073 = vld [vmem:[%s7 + $0x38] sm:$0xff]
    %v6074 = vld [vmem:[%s8] sm:$0x1]
    %v6076 = vlaneseq
    %v6077 = vshrl.u32 %v6076, 7
    %v6078 = vsub.s32 0, %v6077
    %v6079 = vrot.slane %v6074, %v6078
    %v6082 = vsel %vm736, %v6065, 0
    %6084 = vmatprep.subr.mxu0 0.0
    %6085 = vmatpush1.msra.mxu0 0.0
    %6086 = vmatprep.subr.mxu0 0.0
    %6087 = vmatpush1.msra.mxu0 0.0
    %6088 = vmatprep.subr.mxu0 0.0
    %6089 = vmatpush1.msra.mxu0 0.0
    %6090 = vmatprep.subr.mxu0 0.0
    %6091 = vmatpush1.msra.mxu0 0.0
    %6092 = vmatprep.subr.mxu0 0.0
    %6093 = vmatpush1.msra.mxu0 0.0
    %6094 = vmatprep.subr.mxu0 0.0
    %6095 = vmatpush1.msra.mxu0 0.0
    %6096 = vmatprep.subr.mxu0 0.0
    %6097 = vmatpush1.msra.mxu0 0.0
    %6098 = vmatprep.subr.mxu0 0.0
    %6099 = vmatpush1.msra.mxu0 0.0
    %6100 = vmatprep.subr.mxu0 0.0
    %6101 = vmatpush1.msra.mxu0 %v6073
    %6102 = vmatprep.subr.mxu0 0.0
    %6103 = vmatpush1.msra.mxu0 %v6072
    %6104 = vmatprep.subr.mxu0 0.0
    %6105 = vmatpush1.msra.mxu0 %v6071
    %6106 = vmatprep.subr.mxu0 0.0
    %6107 = vmatpush1.msra.mxu0 %v6070
    %6108 = vmatprep.subr.mxu0 0.0
    %6109 = vmatpush1.msra.mxu0 %v6069
    %6110 = vmatprep.subr.mxu0 0.0
    %6111 = vmatpush1.msra.mxu0 %v6068
    %6112 = vmatprep.subr.mxu0 0.0
    %6113 = vmatpush1.msra.mxu0 %v6067
    %6114 = vmatprep.subr.mxu0 0.0
    %6115 = vmatpush1.msra.mxu0 %v6066
    %6116 = vmatprep.subr.mxu0 0.0
    %6117 = vmatpush2.msra.mxu0 0.0
    %6118 = vmatprep.subr.mxu0 0.0
    %6119 = vmatpush2.msra.mxu0 0.0
    %6120 = vmatprep.subr.mxu0 0.0
    %6121 = vmatpush2.msra.mxu0 0.0
    %6122 = vmatprep.subr.mxu0 0.0
    %6123 = vmatpush2.msra.mxu0 0.0
    %6124 = vmatprep.subr.mxu0 0.0
    %6125 = vmatpush2.msra.mxu0 0.0
    %6126 = vmatprep.subr.mxu0 0.0
    %6127 = vmatpush2.msra.mxu0 0.0
    %6128 = vmatprep.subr.mxu0 0.0
    %6129 = vmatpush2.msra.mxu0 0.0
    %6130 = vmatprep.subr.mxu0 0.0
    %6131 = vmatpush2.msra.mxu0 0.0
    %6132 = vmatprep.subr.mxu0 0.0
    %6133 = vmatpush2.msra.mxu0 0.0
    %6134 = vmatprep.subr.mxu0 0.0
    %6135 = vmatpush2.msra.mxu0 0.0
    %6136 = vmatprep.subr.mxu0 0.0
    %6137 = vmatpush2.msra.mxu0 0.0
    %6138 = vmatprep.subr.mxu0 0.0
    %6139 = vmatpush2.msra.mxu0 0.0
    %6140 = vmatprep.subr.mxu0 0.0
    %6141 = vmatpush2.msra.mxu0 0.0
    %6142 = vmatprep.subr.mxu0 0.0
    %6143 = vmatpush2.msra.mxu0 0.0
    %6144 = vmatprep.subr.mxu0 0.0
    %6145 = vmatpush2.msra.mxu0 0.0
    %6146 = vmatprep.subr.mxu0 0.0
    %6147 = vmatpush2.msra.mxu0 0.0
    %6148 = vmatprep.mubr.f32.mxu0 0.0
    %6149 = vmatmul.mubr.f32.gmra.mxu0 %v6082
    %v6150 = vpop.f32.mrf.mxu0
    %v6151 = vadd.f32 %v6079, %v6150
    %v6152 = vpop.f32.mrf.mxu0
    %6153 = vdwg.mxu0
    %6155 = vrot.lane.b32.xlu0 %v6151, 72
    %v6156 = vpop.permute.xlu0 %6155
    %6158 = vst.msk [vmem:[#allocation2 + $0x1] sm:$0x1] %vm3107, %v6156
    %6159 = vrot.lane.b32.xlu0 %v6151, 84
    %v6160 = vpop.permute.xlu0 %6159
    %6162 = vst.msk [vmem:[#allocation2] sm:$0x2] %vm3112, %v6160
    %v6163 = vld [vmem:[#allocation2] sm:$0x3]
    %v6164 = vld [vmem:[%s9] sm:$0xff]
    %v6165 = vld [vmem:[%s9 + $0x8] sm:$0xff]
    %v6166 = vld [vmem:[%s9 + $0x10] sm:$0xff]
    %v6167 = vld [vmem:[%s9 + $0x18] sm:$0xff]
    %v6168 = vld [vmem:[%s9 + $0x20] sm:$0xff]
    %v6169 = vld [vmem:[%s9 + $0x28] sm:$0xff]
    %v6170 = vld [vmem:[%s9 + $0x30] sm:$0xff]
    %v6171 = vld [vmem:[%s9 + $0x38] sm:$0xff]
    %v6172 = vld [vmem:[%s9 + $0x40] sm:$0xff]
    %v6173 = vld [vmem:[%s9 + $0x48] sm:$0xff]
    %v6174 = vld [vmem:[%s9 + $0x50] sm:$0xff]
    %v6175 = vld [vmem:[%s9 + $0x58] sm:$0xff]
    %v6176 = vld [vmem:[%s9 + $0x60] sm:$0xff]
    %v6177 = vld [vmem:[%s9 + $0x68] sm:$0xff]
    %v6178 = vld [vmem:[%s9 + $0x70] sm:$0xff]
    %v6179 = vld [vmem:[%s9 + $0x78] sm:$0xff]
    %v6180 = vld [vmem:[%s9 + $0x80] sm:$0xff]
    %v6181 = vld [vmem:[%s9 + $0x88] sm:$0xff]
    %v6182 = vld [vmem:[%s9 + $0x90] sm:$0xff]
    %v6183 = vld [vmem:[%s9 + $0x98] sm:$0xff]
    %v6184 = vld [vmem:[%s9 + $0xa0] sm:$0xff]
    %v6185 = vld [vmem:[%s9 + $0xa8] sm:$0xff]
    %v6186 = vld [vmem:[%s9 + $0xb0] sm:$0xff]
    %v6187 = vld [vmem:[%s9 + $0xb8] sm:$0xff]
    %v6188 = vld [vmem:[%s10] sm:$0x3]
    %v6190 = vlaneseq
    %v6191 = vshrl.u32 %v6190, 7
    %v6192 = vsub.s32 0, %v6191
    %v6193 = vrot.slane %v6188, %v6192
    %v6194 = vlaneseq
    %v6195 = vshrl.u32 %v6194, 7
    %v6196 = vsub.s32 1, %v6195
    %v6197 = vrot.slane %v6188, %v6196
    %vm6200 = vcmask 785408
    %v6202 = vsel %vm6200, %v6163, 0
    %6204 = vmatprep.subr.mxu0 0.0
    %6205 = vmatpush1.msra.mxu0 0.0
    %6206 = vmatprep.subr.mxu0 0.0
    %6207 = vmatpush1.msra.mxu0 0.0
    %6208 = vmatprep.subr.mxu0 0.0
    %6209 = vmatpush1.msra.mxu0 0.0
    %6210 = vmatprep.subr.mxu0 0.0
    %6211 = vmatpush1.msra.mxu0 0.0
    %6212 = vmatprep.subr.mxu0 %v6187
    %6213 = vmatpush1.msra.mxu0 %v6186
    %6214 = vmatprep.subr.mxu0 %v6185
    %6215 = vmatpush1.msra.mxu0 %v6184
    %6216 = vmatprep.subr.mxu0 %v6183
    %6217 = vmatpush1.msra.mxu0 %v6182
    %6218 = vmatprep.subr.mxu0 %v6181
    %6219 = vmatpush1.msra.mxu0 %v6180
    %6220 = vmatprep.subr.mxu0 %v6179
    %6221 = vmatpush1.msra.mxu0 %v6178
    %6222 = vmatprep.subr.mxu0 %v6177
    %6223 = vmatpush1.msra.mxu0 %v6176
    %6224 = vmatprep.subr.mxu0 %v6175
    %6225 = vmatpush1.msra.mxu0 %v6174
    %6226 = vmatprep.subr.mxu0 %v6173
    %6227 = vmatpush1.msra.mxu0 %v6172
    %6228 = vmatprep.subr.mxu0 %v6171
    %6229 = vmatpush1.msra.mxu0 %v6170
    %6230 = vmatprep.subr.mxu0 %v6169
    %6231 = vmatpush1.msra.mxu0 %v6168
    %6232 = vmatprep.subr.mxu0 %v6167
    %6233 = vmatpush1.msra.mxu0 %v6166
    %6234 = vmatprep.subr.mxu0 %v6165
    %6235 = vmatpush1.msra.mxu0 %v6164
    %6236 = vmatprep.subr.mxu0 0.0
    %6237 = vmatpush2.msra.mxu0 0.0
    %6238 = vmatprep.subr.mxu0 0.0
    %6239 = vmatpush2.msra.mxu0 0.0
    %6240 = vmatprep.subr.mxu0 0.0
    %6241 = vmatpush2.msra.mxu0 0.0
    %6242 = vmatprep.subr.mxu0 0.0
    %6243 = vmatpush2.msra.mxu0 0.0
    %6244 = vmatprep.subr.mxu0 0.0
    %6245 = vmatpush2.msra.mxu0 0.0
    %6246 = vmatprep.subr.mxu0 0.0
    %6247 = vmatpush2.msra.mxu0 0.0
    %6248 = vmatprep.subr.mxu0 0.0
    %6249 = vmatpush2.msra.mxu0 0.0
    %6250 = vmatprep.subr.mxu0 0.0
    %6251 = vmatpush2.msra.mxu0 0.0
    %6252 = vmatprep.subr.mxu0 0.0
    %6253 = vmatpush2.msra.mxu0 0.0
    %6254 = vmatprep.subr.mxu0 0.0
    %6255 = vmatpush2.msra.mxu0 0.0
    %6256 = vmatprep.subr.mxu0 0.0
    %6257 = vmatpush2.msra.mxu0 0.0
    %6258 = vmatprep.subr.mxu0 0.0
    %6259 = vmatpush2.msra.mxu0 0.0
    %6260 = vmatprep.subr.mxu0 0.0
    %6261 = vmatpush2.msra.mxu0 0.0
    %6262 = vmatprep.subr.mxu0 0.0
    %6263 = vmatpush2.msra.mxu0 0.0
    %6264 = vmatprep.subr.mxu0 0.0
    %6265 = vmatpush2.msra.mxu0 0.0
    %6266 = vmatprep.subr.mxu0 0.0
    %6267 = vmatpush2.msra.mxu0 0.0
    %6268 = vmatprep.mubr.f32.mxu0 0.0
    %6269 = vmatmul.mubr.f32.gmra.mxu0 %v6202
    %v6270 = vpop.f32.mrf.mxu0
    %v6271 = vadd.f32 %v6193, %v6270
    %v6272 = vpop.f32.mrf.mxu0
    %v6273 = vadd.f32 %v6197, %v6272
    %6274 = vdwg.mxu0
    %v6275 = vmax.f32 %v6271, 0.0
    %v6276 = vmax.f32 %v6273, 0.0
    %v6277 = vld [vmem:[%s11] sm:$0xff]
    %v6278 = vld [vmem:[%s11 + $0x8] sm:$0xff]
    %v6279 = vld [vmem:[%s11 + $0x10] sm:$0xff]
    %v6280 = vld [vmem:[%s11 + $0x18] sm:$0xff]
    %v6281 = vld [vmem:[%s11 + $0x20] sm:$0xff]
    %v6282 = vld [vmem:[%s11 + $0x28] sm:$0xff]
    %v6283 = vld [vmem:[%s11 + $0x30] sm:$0xff]
    %v6284 = vld [vmem:[%s11 + $0x38] sm:$0xff]
    %v6285 = vld [vmem:[%s11 + $0x40] sm:$0xff]
    %v6286 = vld [vmem:[%s11 + $0x48] sm:$0xff]
    %v6287 = vld [vmem:[%s11 + $0x50] sm:$0xff]
    %v6288 = vld [vmem:[%s11 + $0x58] sm:$0xff]
    %v6289 = vld [vmem:[%s11 + $0x60] sm:$0xff]
    %v6290 = vld [vmem:[%s11 + $0x68] sm:$0xff]
    %v6291 = vld [vmem:[%s11 + $0x70] sm:$0xff]
    %v6292 = vld [vmem:[%s11 + $0x78] sm:$0xff]
    %v6293 = vld [vmem:[%s11 + $0x80] sm:$0xff]
    %v6294 = vld [vmem:[%s11 + $0x88] sm:$0xff]
    %v6295 = vld [vmem:[%s11 + $0x90] sm:$0xff]
    %v6296 = vld [vmem:[%s11 + $0x98] sm:$0xff]
    %v6297 = vld [vmem:[%s11 + $0xa0] sm:$0xff]
    %v6298 = vld [vmem:[%s11 + $0xa8] sm:$0xff]
    %v6299 = vld [vmem:[%s11 + $0xb0] sm:$0xff]
    %v6300 = vld [vmem:[%s11 + $0xb8] sm:$0xff]
    %v6301 = vld [vmem:[%s11 + $0xc0] sm:$0xff]
    %v6302 = vld [vmem:[%s11 + $0xc8] sm:$0xff]
    %v6303 = vld [vmem:[%s11 + $0xd0] sm:$0xff]
    %v6304 = vld [vmem:[%s11 + $0xd8] sm:$0xff]
    %v6305 = vld [vmem:[%s11 + $0xe0] sm:$0xff]
    %v6306 = vld [vmem:[%s11 + $0xe8] sm:$0xff]
    %v6307 = vld [vmem:[%s11 + $0xf0] sm:$0xff]
    %v6308 = vld [vmem:[%s11 + $0xf8] sm:$0xff]
    %v6309 = vld [vmem:[%s12] sm:$0x1]
    %v6311 = vlaneseq
    %v6312 = vshrl.u32 %v6311, 7
    %v6313 = vsub.s32 0, %v6312
    %v6314 = vrot.slane %v6309, %v6313
    %6316 = vmatprep.subr.mxu0 0.0
    %6317 = vmatpush1.msra.mxu0 %v6292
    %6318 = vmatprep.subr.mxu0 0.0
    %6319 = vmatpush1.msra.mxu0 %v6291
    %6320 = vmatprep.subr.mxu0 0.0
    %6321 = vmatpush1.msra.mxu0 %v6290
    %6322 = vmatprep.subr.mxu0 0.0
    %6323 = vmatpush1.msra.mxu0 %v6289
    %6324 = vmatprep.subr.mxu0 0.0
    %6325 = vmatpush1.msra.mxu0 %v6288
    %6326 = vmatprep.subr.mxu0 0.0
    %6327 = vmatpush1.msra.mxu0 %v6287
    %6328 = vmatprep.subr.mxu0 0.0
    %6329 = vmatpush1.msra.mxu0 %v6286
    %6330 = vmatprep.subr.mxu0 0.0
    %6331 = vmatpush1.msra.mxu0 %v6285
    %6332 = vmatprep.subr.mxu0 0.0
    %6333 = vmatpush1.msra.mxu0 %v6284
    %6334 = vmatprep.subr.mxu0 0.0
    %6335 = vmatpush1.msra.mxu0 %v6283
    %6336 = vmatprep.subr.mxu0 0.0
    %6337 = vmatpush1.msra.mxu0 %v6282
    %6338 = vmatprep.subr.mxu0 0.0
    %6339 = vmatpush1.msra.mxu0 %v6281
    %6340 = vmatprep.subr.mxu0 0.0
    %6341 = vmatpush1.msra.mxu0 %v6280
    %6342 = vmatprep.subr.mxu0 0.0
    %6343 = vmatpush1.msra.mxu0 %v6279
    %6344 = vmatprep.subr.mxu0 0.0
    %6345 = vmatpush1.msra.mxu0 %v6278
    %6346 = vmatprep.subr.mxu0 0.0
    %6347 = vmatpush1.msra.mxu0 %v6277
    %6348 = vmatprep.subr.mxu0 0.0
    %6349 = vmatpush2.msra.mxu0 %v6308
    %6350 = vmatprep.subr.mxu0 0.0
    %6351 = vmatpush2.msra.mxu0 %v6307
    %6352 = vmatprep.subr.mxu0 0.0
    %6353 = vmatpush2.msra.mxu0 %v6306
    %6354 = vmatprep.subr.mxu0 0.0
    %6355 = vmatpush2.msra.mxu0 %v6305
    %6356 = vmatprep.subr.mxu0 0.0
    %6357 = vmatpush2.msra.mxu0 %v6304
    %6358 = vmatprep.subr.mxu0 0.0
    %6359 = vmatpush2.msra.mxu0 %v6303
    %6360 = vmatprep.subr.mxu0 0.0
    %6361 = vmatpush2.msra.mxu0 %v6302
    %6362 = vmatprep.subr.mxu0 0.0
    %6363 = vmatpush2.msra.mxu0 %v6301
    %6364 = vmatprep.subr.mxu0 0.0
    %6365 = vmatpush2.msra.mxu0 %v6300
    %6366 = vmatprep.subr.mxu0 0.0
    %6367 = vmatpush2.msra.mxu0 %v6299
    %6368 = vmatprep.subr.mxu0 0.0
    %6369 = vmatpush2.msra.mxu0 %v6298
    %6370 = vmatprep.subr.mxu0 0.0
    %6371 = vmatpush2.msra.mxu0 %v6297
    %6372 = vmatprep.subr.mxu0 0.0
    %6373 = vmatpush2.msra.mxu0 %v6296
    %6374 = vmatprep.subr.mxu0 0.0
    %6375 = vmatpush2.msra.mxu0 %v6295
    %6376 = vmatprep.subr.mxu0 0.0
    %6377 = vmatpush2.msra.mxu0 %v6294
    %6378 = vmatprep.subr.mxu0 0.0
    %6379 = vmatpush2.msra.mxu0 %v6293
    %6380 = vmatprep.mubr.f32.mxu0 %v6276
    %6381 = vmatmul.mubr.f32.gmra.mxu0 %v6275
    %v6382 = vpop.f32.mrf.mxu0
    %v6383 = vadd.f32 %v6314, %v6382
    %v6384 = vpop.f32.mrf.mxu0
    %6385 = vdwg.mxu0
    %6386 = vst.msk [vmem:[#allocation3] sm:$0x3] %vm818, %v6383
    // Predicated region
    $region70: #{encoder_decoder_forward.3} parent=1 // pred_check
      _
    $region71: #{encoder_decoder_forward.3} parent=1 // pred_check_branch
      %6388 = sbr.rel (0) target = $region73
    $region72: #{encoder_decoder_forward.3} parent=1 // pred_region
      %s6390 = ssub.s32 32, 32
      %6391 = vsyncadd [#allocation4], %s6390
      %s6393 = sshll.u32 [#allocation3], 4
      %s6394 = int_to_ptr.vmem [resolvable:$true] %s6393
      %6396 = dma.vmem_to_hbm [thread:$0]  %s6394, 32, %s17, [#allocation4]
    $region73: #{encoder_decoder_forward.3} parent=1 // pred_fallthru
      _
    // Predicated region
    $region74: #{encoder_decoder_forward.3} parent=1 // pred_check
      _
    $region75: #{encoder_decoder_forward.3} parent=1 // pred_check_branch
      %6398 = sbr.rel (0) target = $region77
    $region76: #{encoder_decoder_forward.3} parent=1 // pred_region
      %6399 = dma.done [#allocation4], 32
    $region77: #{encoder_decoder_forward.3} parent=1 // pred_fallthru
      _
    %6400 = vsyncpa [#allocation4], 1

</llo_original>
